<compile_context>
chip_gen: v6e
topology: v6e:2x2x1
jax: 0.10.0
libtpu: 0.0.40
codegen_flags: <defaults>
</compile_context>

<pallas_src>
import jax
import jax.numpy as jnp
from jax.experimental import pallas as pl
from jax.experimental.pallas import tpu as pltpu


# ----------------------------------------------------------------------------
# Kernels
# ----------------------------------------------------------------------------
def _clamp_scale_kernel(xp_ref, xf_ref, shift_ref, iscale_ref,
                        clamp_ref, sp_ref, sf_ref):
    # Lane-dense NCHW slab [rows, H*W]; rows = B*C, per-row shift / inv_scale.
    # clamp to [-1, 1] (torch.clamp), then LPIPS ScalingLayer (x - shift) * inv_scale.
    xp = jnp.clip(xp_ref[...], -1.0, 1.0)
    xf = jnp.clip(xf_ref[...], -1.0, 1.0)
    clamp_ref[...] = xp                                    # 'pred' (NCHW, f32)
    sh = shift_ref[...]                                    # [r_blk, 1]
    isc = iscale_ref[...]                                  # [r_blk, 1] (precomputed 1/scale)
    sp_ref[...] = ((xp - sh) * isc).astype(sp_ref.dtype)   # bf16 conv operand
    sf_ref[...] = ((xf - sh) * isc).astype(sf_ref.dtype)   # scale-only for x_future


def _make_conv3x3_kernel(H, W, cout):
    """3x3 'same' conv + bias + ReLU with im2col fused in-kernel.

    Input block: the zero-padded image flattened to [(H+3)*(W+2), Cin]; tap (di, dj)
    is the contiguous row-slab starting at di*(W+2)+dj of length H*(W+2). Output is in
    the 'extended' [H*(W+2), Cout] layout; the 2 junk columns per row are zeroed via a
    precomputed column mask.
    """
    P = W + 2
    HP = H * P

    def kernel(x_ref, w_ref, b_ref, mask_ref, o_ref):
        acc = jnp.zeros((HP, cout), jnp.float32)
        for t in range(9):                                  # static unroll (9 taps)
            di, dj = divmod(t, 3)
            off = di * P + dj
            lhs = x_ref[0, off:off + HP, :]                 # [HP, Cin] bf16 slab
            acc = acc + jnp.dot(lhs, w_ref[t],
                                preferred_element_type=jnp.float32)
        y = jnp.maximum(acc + b_ref[...], 0.0) * mask_ref[...]   # f32 epilogue, zero junk cols
        o_ref[0] = y.astype(o_ref.dtype)

    return kernel


def _make_lpips_stage_kernel(inv_m, eps=1e-10):
    """LPIPS stage distance between the prev half and future half of a feature batch."""

    def kernel(f0_ref, f1_ref, w_ref, o_ref, acc_ref):
        b = pl.program_id(0)

        @pl.when(b == 0)
        def _():
            acc_ref[...] = jnp.zeros_like(acc_ref)

        f0 = f0_ref[0].astype(jnp.float32)                  # [HP, C]
        f1 = f1_ref[0].astype(jnp.float32)
        # normalize_tensor via rsqrt (single EUP op); junk columns are exactly 0 -> contribute 0.
        n0 = f0 * jax.lax.rsqrt(jnp.sum(f0 * f0, axis=-1, keepdims=True) + eps * eps)
        n1 = f1 * jax.lax.rsqrt(jnp.sum(f1 * f1, axis=-1, keepdims=True) + eps * eps)
        d = (n0 - n1) ** 2
        wd = jnp.sum(d * w_ref[...], axis=-1, keepdims=True)     # [HP, 1]
        acc_ref[...] += jnp.sum(wd).reshape(1, 1)

        # Single store on the last step (no per-step masked 1-lane vst).
        @pl.when(b == pl.num_programs(0) - 1)
        def _():
            o_ref[...] = acc_ref[...] * inv_m

    return kernel


# ----------------------------------------------------------------------------
# Pallas-call wrappers
# ----------------------------------------------------------------------------
def perceptual_forward(x):
    """PerceptualLoss.forward: identity — no Pallas copy (saves a full HBM round trip)."""
    return x


def _row_tile(rows, bytes_per_row, budget_bytes=1 << 20):
    """Largest row tile (full rows, or a multiple of 8) under a per-buffer VMEM budget."""
    if rows * bytes_per_row <= budget_bytes or rows <= 8:
        return rows
    t = (budget_bytes // bytes_per_row) // 8 * 8
    return int(max(8, min(t, rows)))


def clamp_and_scale(xp2, xf2, shift_rows, iscale_rows):
    rows, hw = xp2.shape
    r_blk = _row_tile(rows, hw * 4)
    grid = (pl.cdiv(rows, r_blk),)        # edge block (if any) is elementwise-safe
    row_spec = pl.BlockSpec((r_blk, hw), lambda i: (i, 0))
    vec_spec = pl.BlockSpec((r_blk, 1), lambda i: (i, 0))
    return pl.pallas_call(
        _clamp_scale_kernel,
        out_shape=(jax.ShapeDtypeStruct((rows, hw), xp2.dtype),     # clamped x_prev (pred)
                   jax.ShapeDtypeStruct((rows, hw), jnp.bfloat16),  # scaled x_prev
                   jax.ShapeDtypeStruct((rows, hw), jnp.bfloat16)), # scaled x_future
        grid=grid,
        in_specs=[row_spec, row_spec, vec_spec, vec_spec],
        out_specs=(row_spec, row_spec, row_spec),
        compiler_params=pltpu.CompilerParams(dimension_semantics=("parallel",)),
    )(xp2, xf2, shift_rows, iscale_rows)


def conv3x3_relu(x_flat, w, b, col_mask, H, W, cout):
    """x_flat: [N, (H+3)*(W+2), Cin] bf16 (padded+flattened NHWC) -> [N, H*(W+2), cout] bf16."""
    N, L, cin = x_flat.shape
    HP = H * (W + 2)
    kernel = _make_conv3x3_kernel(H, W, cout)
    return pl.pallas_call(
        kernel,
        out_shape=jax.ShapeDtypeStruct((N, HP, cout), jnp.bfloat16),
        grid=(N,),
        in_specs=[
            pl.BlockSpec((1, L, cin), lambda n: (n, 0, 0)),
            pl.BlockSpec((9, cin, cout), lambda n: (0, 0, 0)),
            pl.BlockSpec((1, cout), lambda n: (0, 0)),
            pl.BlockSpec((HP, 1), lambda n: (0, 0)),
        ],
        out_specs=pl.BlockSpec((1, HP, cout), lambda n: (n, 0, 0)),
        compiler_params=pltpu.CompilerParams(dimension_semantics=("parallel",)),
    )(x_flat, w, b, col_mask)


def lpips_stage_distance(feat_ext, lin_w, b_img, inv_m):
    """feat_ext: [2*b_img, HP, C] (prev images first, future images second)."""
    _, HP, C = feat_ext.shape
    kernel = _make_lpips_stage_kernel(float(inv_m))
    out = pl.pallas_call(
        kernel,
        out_shape=jax.ShapeDtypeStruct((1, 1), jnp.float32),
        grid=(b_img,),
        in_specs=[
            pl.BlockSpec((1, HP, C), lambda i: (i, 0, 0)),
            pl.BlockSpec((1, HP, C), lambda i: (i + b_img, 0, 0)),
            pl.BlockSpec((1, C), lambda i: (0, 0)),
        ],
        out_specs=pl.BlockSpec((1, 1), lambda i: (0, 0)),
        scratch_shapes=[pltpu.VMEM((1, 1), jnp.float32)],
        # sequential reduction into scratch -> must stay "arbitrary" (no megacore race)
        compiler_params=pltpu.CompilerParams(dimension_semantics=("arbitrary",)),
    )(feat_ext, feat_ext, lin_w)
    return out[0, 0]


# ----------------------------------------------------------------------------
# Glue (plain JAX, small): padding/flatten, maxpool, parameters
# ----------------------------------------------------------------------------
def _pad_flatten(x_nhwc):
    """[N, H, W, C] -> [N, (H+3)*(W+2), C] (1-pixel halo + 2 extra bottom rows for the
    extended-slab conv formulation)."""
    N, H, W, C = x_nhwc.shape
    xp = jnp.pad(x_nhwc, ((0, 0), (1, 2), (1, 1), (0, 0)))
    return xp.reshape(N, (H + 3) * (W + 2), C)


def _valid_col_mask(H, W):
    """[H*(W+2), 1] f32: 1.0 for real output columns, 0.0 for the 2 junk columns per row."""
    P = W + 2
    col = jnp.arange(H * P, dtype=jnp.int32) % P
    return (col < W).astype(jnp.float32).reshape(H * P, 1)


def maxpool2x2(x):
    """[N, H, W, C] -> [N, H//2, W//2, C]."""
    # TODO(synk): fuse this 2x2 maxpool into the conv1 epilogue; left as XLA glue because
    # the required strided sublane relayout inside the kernel is lowering-fragile.
    N, H, W, C = x.shape
    return x.reshape(N, H // 2, 2, W // 2, 2, C).max(axis=(2, 4))


def make_params(key):
    """Deterministic synthetic stand-ins for LPIPS VGG + lin weights."""
    ks = jax.random.split(key, 6)
    c1_in, c1_out = 3, 16
    c2_in, c2_out = 16, 32
    # conv weights stored as [9, Cin, Cout] (tap order t = 3*di + dj), bf16 MXU operands.
    w1 = (jax.random.normal(ks[0], (9, c1_in, c1_out), jnp.float32)
          * (2.0 / (9 * c1_in)) ** 0.5).astype(jnp.bfloat16)
    b1 = jax.random.normal(ks[1], (1, c1_out), jnp.float32) * 0.01
    w2 = (jax.random.normal(ks[2], (9, c2_in, c2_out), jnp.float32)
          * (2.0 / (9 * c2_in)) ** 0.5).astype(jnp.bfloat16)
    b2 = jax.random.normal(ks[3], (1, c2_out), jnp.float32) * 0.01
    # LPIPS "lin" layers: non-negative 1x1 conv weights per stage.
    lin1 = jnp.abs(jax.random.normal(ks[4], (1, c1_out), jnp.float32))
    lin2 = jnp.abs(jax.random.normal(ks[5], (1, c2_out), jnp.float32))
    # LPIPS ScalingLayer constants (inv_scale precomputed: multiply instead of divide).
    shift = jnp.array([-0.030, -0.088, -0.188], jnp.float32)
    inv_scale = 1.0 / jnp.array([0.458, 0.448, 0.450], jnp.float32)
    return dict(w1=w1, b1=b1, w2=w2, b2=b2, lin1=lin1, lin2=lin2,
                shift=shift, inv_scale=inv_scale)


# ----------------------------------------------------------------------------
# Loss function (mirrors PerceptualLoss.loss_function); inputs are NCHW [B, 3, H, W]
# ----------------------------------------------------------------------------
def perceptual_loss_function(x_prev_nchw, x_future_nchw, params):
    assert x_prev_nchw.ndim == 4 and x_future_nchw.ndim == 4
    assert x_prev_nchw.shape == x_future_nchw.shape
    B, C, H, W = x_prev_nchw.shape
    assert H % 2 == 0 and W % 2 == 0, "2x2 maxpool stage requires even H, W"
    rows, hw = B * C, H * W

    # ---- clamp + scaling layer: lane-dense NCHW slab, both streams in one call ----
    shift_rows = jnp.tile(params["shift"], B).reshape(rows, 1)
    iscale_rows = jnp.tile(params["inv_scale"], B).reshape(rows, 1)
    xp_clamped, xp_scaled, xf_scaled = clamp_and_scale(
        x_prev_nchw.reshape(rows, hw), x_future_nchw.reshape(rows, hw),
        shift_rows, iscale_rows)
    pred = xp_clamped.reshape(B, C, H, W)          # NCHW, no transpose

    # ---- feature stack: prev+future concatenated along batch, im2col fused in-kernel ----
    def to_nhwc(s2d):                              # small layout op for the conv path
        return jnp.transpose(s2d.reshape(B, C, H, W), (0, 2, 3, 1))

    xcat = jnp.concatenate([to_nhwc(xp_scaled), to_nhwc(xf_scaled)], axis=0)  # [2B,H,W,3] bf16
    N = 2 * B

    feat1_ext = conv3x3_relu(_pad_flatten(xcat), params["w1"], params["b1"],
                             _valid_col_mask(H, W), H, W, 16)     # [2B, H*(W+2), 16]

    # strip junk columns + 2x2 maxpool, then stage-2 conv
    f1 = feat1_ext.reshape(N, H, W + 2, 16)[:, :, :W, :]
    pooled = maxpool2x2(f1)                                       # [2B, H/2, W/2, 16]
    H2, W2 = H // 2, W // 2
    feat2_ext = conv3x3_relu(_pad_flatten(pooled), params["w2"], params["b2"],
                             _valid_col_mask(H2, W2), H2, W2, 32) # [2B, H2*(W2+2), 32]

    # ---- LPIPS distances (junk columns are zero -> contribute nothing) ----
    loss = (lpips_stage_distance(feat1_ext, params["lin1"], B, 1.0 / (B * H * W)) +
            lpips_stage_distance(feat2_ext, params["lin2"], B, 1.0 / (B * H2 * W2)))

    return {"pred_loss": loss, "pred": pred}


# ----------------------------------------------------------------------------
if __name__ == "__main__":
    key = jax.random.PRNGKey(0)
    k_params, k_prev, k_future = jax.random.split(key, 3)

    params = make_params(k_params)
    x_prev = jax.random.uniform(k_prev, (2, 3, 16, 16), jnp.float32,
                                minval=-1.5, maxval=1.5)
    x_future = jax.random.uniform(k_future, (2, 3, 16, 16), jnp.float32,
                                  minval=-1.5, maxval=1.5)

    # forward() — identity pass-through.
    y = perceptual_forward(x_prev)
    jax.block_until_ready(y)
    assert y.shape == x_prev.shape

    # loss_function()
    loss_fn = jax.jit(perceptual_loss_function)
    out = loss_fn(x_prev, x_future, params)
    jax.block_until_ready(out["pred_loss"])
    jax.block_until_ready(out["pred"])

    assert out["pred"].shape == x_prev.shape
    assert out["pred_loss"].shape == ()
    assert bool(jnp.isfinite(out["pred_loss"]))
    # 'pred' must be exactly the clamped input (clamp done in-kernel in f32).
    assert bool(jnp.allclose(out["pred"], jnp.clip(x_prev, -1.0, 1.0)))

    print("KERNEL_OK")
</pallas_src>

<mosaic_0001>
module attributes {stable_mosaic.version = 11 : i64} {
  func.func @_clamp_scale_kernel(%arg0: i32, %arg1: memref<6x256xf32, #tpu.memory_space<vmem>>, %arg2: memref<6x256xf32, #tpu.memory_space<vmem>>, %arg3: memref<6x1xf32, #tpu.memory_space<vmem>>, %arg4: memref<6x1xf32, #tpu.memory_space<vmem>>, %arg5: memref<6x256xf32, #tpu.memory_space<vmem>>, %arg6: memref<6x256xbf16, #tpu.memory_space<vmem>>, %arg7: memref<6x256xbf16, #tpu.memory_space<vmem>>) attributes {dimension_semantics = [#tpu.dimension_semantics<parallel>], iteration_bounds = array<i64: 1>, scalar_prefetch = 0 : i64, scratch_operands = 0 : i64, tpu.core_type = #tpu.core_type<tc>, window_params = [{transform_indices = @transform_0, window_bounds = array<i64: 6, 256>}, {transform_indices = @transform_1, window_bounds = array<i64: 6, 256>}, {transform_indices = @transform_2, window_bounds = array<i64: 6, 1>}, {transform_indices = @transform_3, window_bounds = array<i64: 6, 1>}, {transform_indices = @transform_4, window_bounds = array<i64: 6, 256>}, {transform_indices = @transform_5, window_bounds = array<i64: 6, 256>}, {transform_indices = @transform_6, window_bounds = array<i64: 6, 256>}]} {
    %c0 = arith.constant 0 : index
    %c0_0 = arith.constant 0 : index
    %0 = vector.load %arg1[%c0, %c0_0] : memref<6x256xf32, #tpu.memory_space<vmem>>, vector<6x256xf32>
    %cst = arith.constant -1.000000e+00 : f32
    %cst_1 = arith.constant 1.000000e+00 : f32
    %1 = vector.broadcast %cst : f32 to vector<6x256xf32>
    %2 = arith.maximumf %1, %0 : vector<6x256xf32>
    %3 = vector.broadcast %cst_1 : f32 to vector<6x256xf32>
    %4 = arith.minimumf %3, %2 : vector<6x256xf32>
    %c0_2 = arith.constant 0 : index
    %c0_3 = arith.constant 0 : index
    %5 = vector.load %arg2[%c0_2, %c0_3] : memref<6x256xf32, #tpu.memory_space<vmem>>, vector<6x256xf32>
    %cst_4 = arith.constant -1.000000e+00 : f32
    %cst_5 = arith.constant 1.000000e+00 : f32
    %6 = vector.broadcast %cst_4 : f32 to vector<6x256xf32>
    %7 = arith.maximumf %6, %5 : vector<6x256xf32>
    %8 = vector.broadcast %cst_5 : f32 to vector<6x256xf32>
    %9 = arith.minimumf %8, %7 : vector<6x256xf32>
    %c0_6 = arith.constant 0 : index
    %c0_7 = arith.constant 0 : index
    %10 = vector.load %arg5[%c0_6, %c0_7] : memref<6x256xf32, #tpu.memory_space<vmem>>, vector<6x256xf32>
    tpu.vector_store %arg5[%c0_6, %c0_7], %4 {strides = array<i32>} : memref<6x256xf32, #tpu.memory_space<vmem>>, vector<6x256xf32>,
    %c0_8 = arith.constant 0 : index
    %c0_9 = arith.constant 0 : index
    %11 = vector.load %arg3[%c0_8, %c0_9] : memref<6x1xf32, #tpu.memory_space<vmem>>, vector<6x1xf32>
    %c0_10 = arith.constant 0 : index
    %c0_11 = arith.constant 0 : index
    %12 = vector.load %arg4[%c0_10, %c0_11] : memref<6x1xf32, #tpu.memory_space<vmem>>, vector<6x1xf32>
    %13 = vector.broadcast %11 : vector<6x1xf32> to vector<6x256xf32>
    %14 = arith.subf %4, %13 : vector<6x256xf32>
    %15 = vector.broadcast %12 : vector<6x1xf32> to vector<6x256xf32>
    %16 = arith.mulf %14, %15 : vector<6x256xf32>
    %17 = arith.truncf %16 : vector<6x256xf32> to vector<6x256xbf16>
    %c0_12 = arith.constant 0 : index
    %c0_13 = arith.constant 0 : index
    %18 = vector.load %arg6[%c0_12, %c0_13] : memref<6x256xbf16, #tpu.memory_space<vmem>>, vector<6x256xbf16>
    tpu.vector_store %arg6[%c0_12, %c0_13], %17 {strides = array<i32>} : memref<6x256xbf16, #tpu.memory_space<vmem>>, vector<6x256xbf16>,
    %19 = vector.broadcast %11 : vector<6x1xf32> to vector<6x256xf32>
    %20 = arith.subf %9, %19 : vector<6x256xf32>
    %21 = vector.broadcast %12 : vector<6x1xf32> to vector<6x256xf32>
    %22 = arith.mulf %20, %21 : vector<6x256xf32>
    %23 = arith.truncf %22 : vector<6x256xf32> to vector<6x256xbf16>
    %c0_14 = arith.constant 0 : index
    %c0_15 = arith.constant 0 : index
    %24 = vector.load %arg7[%c0_14, %c0_15] : memref<6x256xbf16, #tpu.memory_space<vmem>>, vector<6x256xbf16>
    tpu.vector_store %arg7[%c0_14, %c0_15], %23 {strides = array<i32>} : memref<6x256xbf16, #tpu.memory_space<vmem>>, vector<6x256xbf16>,
    return
  }
  func.func @transform_0(%arg0: i32) -> (i32, i32) {
    %c0_i32 = arith.constant 0 : i32
    %c0_i32_0 = arith.constant 0 : i32
    return %arg0, %c0_i32 : i32, i32
  }
  func.func @transform_1(%arg0: i32) -> (i32, i32) {
    %c0_i32 = arith.constant 0 : i32
    %c0_i32_0 = arith.constant 0 : i32
    return %arg0, %c0_i32 : i32, i32
  }
  func.func @transform_2(%arg0: i32) -> (i32, i32) {
    %c0_i32 = arith.constant 0 : i32
    %c0_i32_0 = arith.constant 0 : i32
    return %arg0, %c0_i32 : i32, i32
  }
  func.func @transform_3(%arg0: i32) -> (i32, i32) {
    %c0_i32 = arith.constant 0 : i32
    %c0_i32_0 = arith.constant 0 : i32
    return %arg0, %c0_i32 : i32, i32
  }
  func.func @transform_4(%arg0: i32) -> (i32, i32) {
    %c0_i32 = arith.constant 0 : i32
    %c0_i32_0 = arith.constant 0 : i32
    return %arg0, %c0_i32 : i32, i32
  }
  func.func @transform_5(%arg0: i32) -> (i32, i32) {
    %c0_i32 = arith.constant 0 : i32
    %c0_i32_0 = arith.constant 0 : i32
    return %arg0, %c0_i32 : i32, i32
  }
  func.func @transform_6(%arg0: i32) -> (i32, i32) {
    %c0_i32 = arith.constant 0 : i32
    %c0_i32_0 = arith.constant 0 : i32
    return %arg0, %c0_i32 : i32, i32
  }
}

module attributes {stable_mosaic.version = 11 : i64} {
  func.func @kernel(%arg0: i32, %arg1: memref<1x342x3xbf16, #tpu.memory_space<vmem>>, %arg2: memref<9x3x16xbf16, #tpu.memory_space<vmem>>, %arg3: memref<1x16xf32, #tpu.memory_space<vmem>>, %arg4: memref<288x1xf32, #tpu.memory_space<vmem>>, %arg5: memref<1x288x16xbf16, #tpu.memory_space<vmem>>) attributes {dimension_semantics = [#tpu.dimension_semantics<parallel>], iteration_bounds = array<i64: 4>, scalar_prefetch = 0 : i64, scratch_operands = 0 : i64, tpu.core_type = #tpu.core_type<tc>, window_params = [{transform_indices = @transform_0, window_bounds = array<i64: 1, 342, 3>}, {pipeline_mode = #tpu.pipeline_mode<synchronous>, transform_indices = @transform_1, window_bounds = array<i64: 9, 3, 16>}, {pipeline_mode = #tpu.pipeline_mode<synchronous>, transform_indices = @transform_2, window_bounds = array<i64: 1, 16>}, {pipeline_mode = #tpu.pipeline_mode<synchronous>, transform_indices = @transform_3, window_bounds = array<i64: 288, 1>}, {transform_indices = @transform_4, window_bounds = array<i64: 1, 288, 16>}]} {
    %cst = arith.constant 0.000000e+00 : f32
    %0 = vector.broadcast %cst : f32 to vector<288x16xf32>
    %c0 = arith.constant 0 : index
    %c0_0 = arith.constant 0 : index
    %c0_1 = arith.constant 0 : index
    %1 = vector.load %arg1[%c0, %c0_0, %c0_1] : memref<1x342x3xbf16, #tpu.memory_space<vmem>>, vector<1x288x3xbf16>
    %2 = vector.shape_cast %1 : vector<1x288x3xbf16> to vector<288x3xbf16>
    %c0_2 = arith.constant 0 : index
    %c0_3 = arith.constant 0 : index
    %c0_4 = arith.constant 0 : index
    %3 = vector.load %arg2[%c0_2, %c0_3, %c0_4] : memref<9x3x16xbf16, #tpu.memory_space<vmem>>, vector<1x3x16xbf16>
    %4 = vector.shape_cast %3 : vector<1x3x16xbf16> to vector<3x16xbf16>
    %cst_5 = arith.constant dense<0.000000e+00> : vector<288x16xf32>
    %5 = tpu.matmul %2, %4, %cst_5 {dimension_numbers = #tpu.dot_dimension_numbers<[1], [0], [0], [1], [0, 0, 1, 1], [], []>} : vector<288x3xbf16>, vector<3x16xbf16>, vector<288x16xf32> -> vector<288x16xf32>
    %6 = arith.addf %0, %5 : vector<288x16xf32>
    %c0_6 = arith.constant 0 : index
    %c1 = arith.constant 1 : index
    %c0_7 = arith.constant 0 : index
    %7 = vector.load %arg1[%c0_6, %c1, %c0_7] : memref<1x342x3xbf16, #tpu.memory_space<vmem>>, vector<1x288x3xbf16>
    %8 = vector.shape_cast %7 : vector<1x288x3xbf16> to vector<288x3xbf16>
    %c1_8 = arith.constant 1 : index
    %c0_9 = arith.constant 0 : index
    %c0_10 = arith.constant 0 : index
    %9 = vector.load %arg2[%c1_8, %c0_9, %c0_10] : memref<9x3x16xbf16, #tpu.memory_space<vmem>>, vector<1x3x16xbf16>
    %10 = vector.shape_cast %9 : vector<1x3x16xbf16> to vector<3x16xbf16>
    %cst_11 = arith.constant dense<0.000000e+00> : vector<288x16xf32>
    %11 = tpu.matmul %8, %10, %cst_11 {dimension_numbers = #tpu.dot_dimension_numbers<[1], [0], [0], [1], [0, 0, 1, 1], [], []>} : vector<288x3xbf16>, vector<3x16xbf16>, vector<288x16xf32> -> vector<288x16xf32>
    %12 = arith.addf %6, %11 : vector<288x16xf32>
    %c0_12 = arith.constant 0 : index
    %c2 = arith.constant 2 : index
    %c0_13 = arith.constant 0 : index
    %13 = vector.load %arg1[%c0_12, %c2, %c0_13] : memref<1x342x3xbf16, #tpu.memory_space<vmem>>, vector<1x288x3xbf16>
    %14 = vector.shape_cast %13 : vector<1x288x3xbf16> to vector<288x3xbf16>
    %c2_14 = arith.constant 2 : index
    %c0_15 = arith.constant 0 : index
    %c0_16 = arith.constant 0 : index
    %15 = vector.load %arg2[%c2_14, %c0_15, %c0_16] : memref<9x3x16xbf16, #tpu.memory_space<vmem>>, vector<1x3x16xbf16>
    %16 = vector.shape_cast %15 : vector<1x3x16xbf16> to vector<3x16xbf16>
    %cst_17 = arith.constant dense<0.000000e+00> : vector<288x16xf32>
    %17 = tpu.matmul %14, %16, %cst_17 {dimension_numbers = #tpu.dot_dimension_numbers<[1], [0], [0], [1], [0, 0, 1, 1], [], []>} : vector<288x3xbf16>, vector<3x16xbf16>, vector<288x16xf32> -> vector<288x16xf32>
    %18 = arith.addf %12, %17 : vector<288x16xf32>
    %c0_18 = arith.constant 0 : index
    %c18 = arith.constant 18 : index
    %c0_19 = arith.constant 0 : index
    %19 = vector.load %arg1[%c0_18, %c18, %c0_19] : memref<1x342x3xbf16, #tpu.memory_space<vmem>>, vector<1x288x3xbf16>
    %20 = vector.shape_cast %19 : vector<1x288x3xbf16> to vector<288x3xbf16>
    %c3 = arith.constant 3 : index
    %c0_20 = arith.constant 0 : index
    %c0_21 = arith.constant 0 : index
    %21 = vector.load %arg2[%c3, %c0_20, %c0_21] : memref<9x3x16xbf16, #tpu.memory_space<vmem>>, vector<1x3x16xbf16>
    %22 = vector.shape_cast %21 : vector<1x3x16xbf16> to vector<3x16xbf16>
    %cst_22 = arith.constant dense<0.000000e+00> : vector<288x16xf32>
    %23 = tpu.matmul %20, %22, %cst_22 {dimension_numbers = #tpu.dot_dimension_numbers<[1], [0], [0], [1], [0, 0, 1, 1], [], []>} : vector<288x3xbf16>, vector<3x16xbf16>, vector<288x16xf32> -> vector<288x16xf32>
    %24 = arith.addf %18, %23 : vector<288x16xf32>
    %c0_23 = arith.constant 0 : index
    %c19 = arith.constant 19 : index
    %c0_24 = arith.constant 0 : index
    %25 = vector.load %arg1[%c0_23, %c19, %c0_24] : memref<1x342x3xbf16, #tpu.memory_space<vmem>>, vector<1x288x3xbf16>
    %26 = vector.shape_cast %25 : vector<1x288x3xbf16> to vector<288x3xbf16>
    %c4 = arith.constant 4 : index
    %c0_25 = arith.constant 0 : index
    %c0_26 = arith.constant 0 : index
    %27 = vector.load %arg2[%c4, %c0_25, %c0_26] : memref<9x3x16xbf16, #tpu.memory_space<vmem>>, vector<1x3x16xbf16>
    %28 = vector.shape_cast %27 : vector<1x3x16xbf16> to vector<3x16xbf16>
    %cst_27 = arith.constant dense<0.000000e+00> : vector<288x16xf32>
    %29 = tpu.matmul %26, %28, %cst_27 {dimension_numbers = #tpu.dot_dimension_numbers<[1], [0], [0], [1], [0, 0, 1, 1], [], []>} : vector<288x3xbf16>, vector<3x16xbf16>, vector<288x16xf32> -> vector<288x16xf32>
    %30 = arith.addf %24, %29 : vector<288x16xf32>
    %c0_28 = arith.constant 0 : index
    %c20 = arith.constant 20 : index
    %c0_29 = arith.constant 0 : index
    %31 = vector.load %arg1[%c0_28, %c20, %c0_29] : memref<1x342x3xbf16, #tpu.memory_space<vmem>>, vector<1x288x3xbf16>
    %32 = vector.shape_cast %31 : vector<1x288x3xbf16> to vector<288x3xbf16>
    %c5 = arith.constant 5 : index
    %c0_30 = arith.constant 0 : index
    %c0_31 = arith.constant 0 : index
    %33 = vector.load %arg2[%c5, %c0_30, %c0_31] : memref<9x3x16xbf16, #tpu.memory_space<vmem>>, vector<1x3x16xbf16>
    %34 = vector.shape_cast %33 : vector<1x3x16xbf16> to vector<3x16xbf16>
    %cst_32 = arith.constant dense<0.000000e+00> : vector<288x16xf32>
    %35 = tpu.matmul %32, %34, %cst_32 {dimension_numbers = #tpu.dot_dimension_numbers<[1], [0], [0], [1], [0, 0, 1, 1], [], []>} : vector<288x3xbf16>, vector<3x16xbf16>, vector<288x16xf32> -> vector<288x16xf32>
    %36 = arith.addf %30, %35 : vector<288x16xf32>
    %c0_33 = arith.constant 0 : index
    %c36 = arith.constant 36 : index
    %c0_34 = arith.constant 0 : index
    %37 = vector.load %arg1[%c0_33, %c36, %c0_34] : memref<1x342x3xbf16, #tpu.memory_space<vmem>>, vector<1x288x3xbf16>
    %38 = vector.shape_cast %37 : vector<1x288x3xbf16> to vector<288x3xbf16>
    %c6 = arith.constant 6 : index
    %c0_35 = arith.constant 0 : index
    %c0_36 = arith.constant 0 : index
    %39 = vector.load %arg2[%c6, %c0_35, %c0_36] : memref<9x3x16xbf16, #tpu.memory_space<vmem>>, vector<1x3x16xbf16>
    %40 = vector.shape_cast %39 : vector<1x3x16xbf16> to vector<3x16xbf16>
    %cst_37 = arith.constant dense<0.000000e+00> : vector<288x16xf32>
    %41 = tpu.matmul %38, %40, %cst_37 {dimension_numbers = #tpu.dot_dimension_numbers<[1], [0], [0], [1], [0, 0, 1, 1], [], []>} : vector<288x3xbf16>, vector<3x16xbf16>, vector<288x16xf32> -> vector<288x16xf32>
    %42 = arith.addf %36, %41 : vector<288x16xf32>
    %c0_38 = arith.constant 0 : index
    %c37 = arith.constant 37 : index
    %c0_39 = arith.constant 0 : index
    %43 = vector.load %arg1[%c0_38, %c37, %c0_39] : memref<1x342x3xbf16, #tpu.memory_space<vmem>>, vector<1x288x3xbf16>
    %44 = vector.shape_cast %43 : vector<1x288x3xbf16> to vector<288x3xbf16>
    %c7 = arith.constant 7 : index
    %c0_40 = arith.constant 0 : index
    %c0_41 = arith.constant 0 : index
    %45 = vector.load %arg2[%c7, %c0_40, %c0_41] : memref<9x3x16xbf16, #tpu.memory_space<vmem>>, vector<1x3x16xbf16>
    %46 = vector.shape_cast %45 : vector<1x3x16xbf16> to vector<3x16xbf16>
    %cst_42 = arith.constant dense<0.000000e+00> : vector<288x16xf32>
    %47 = tpu.matmul %44, %46, %cst_42 {dimension_numbers = #tpu.dot_dimension_numbers<[1], [0], [0], [1], [0, 0, 1, 1], [], []>} : vector<288x3xbf16>, vector<3x16xbf16>, vector<288x16xf32> -> vector<288x16xf32>
    %48 = arith.addf %42, %47 : vector<288x16xf32>
    %c0_43 = arith.constant 0 : index
    %c38 = arith.constant 38 : index
    %c0_44 = arith.constant 0 : index
    %49 = vector.load %arg1[%c0_43, %c38, %c0_44] : memref<1x342x3xbf16, #tpu.memory_space<vmem>>, vector<1x288x3xbf16>
    %50 = vector.shape_cast %49 : vector<1x288x3xbf16> to vector<288x3xbf16>
    %c8 = arith.constant 8 : index
    %c0_45 = arith.constant 0 : index
    %c0_46 = arith.constant 0 : index
    %51 = vector.load %arg2[%c8, %c0_45, %c0_46] : memref<9x3x16xbf16, #tpu.memory_space<vmem>>, vector<1x3x16xbf16>
    %52 = vector.shape_cast %51 : vector<1x3x16xbf16> to vector<3x16xbf16>
    %cst_47 = arith.constant dense<0.000000e+00> : vector<288x16xf32>
    %53 = tpu.matmul %50, %52, %cst_47 {dimension_numbers = #tpu.dot_dimension_numbers<[1], [0], [0], [1], [0, 0, 1, 1], [], []>} : vector<288x3xbf16>, vector<3x16xbf16>, vector<288x16xf32> -> vector<288x16xf32>
    %54 = arith.addf %48, %53 : vector<288x16xf32>
    %c0_48 = arith.constant 0 : index
    %c0_49 = arith.constant 0 : index
    %55 = vector.load %arg3[%c0_48, %c0_49] : memref<1x16xf32, #tpu.memory_space<vmem>>, vector<1x16xf32>
    %56 = vector.broadcast %55 : vector<1x16xf32> to vector<288x16xf32>
    %57 = arith.addf %54, %56 : vector<288x16xf32>
    %cst_50 = arith.constant 0.000000e+00 : f32
    %58 = vector.broadcast %cst_50 : f32 to vector<288x16xf32>
    %59 = arith.maximumf %57, %58 : vector<288x16xf32>
    %c0_51 = arith.constant 0 : index
    %c0_52 = arith.constant 0 : index
    %60 = vector.load %arg4[%c0_51, %c0_52] : memref<288x1xf32, #tpu.memory_space<vmem>>, vector<288x1xf32>
    %61 = vector.broadcast %60 : vector<288x1xf32> to vector<288x16xf32>
    %62 = arith.mulf %59, %61 : vector<288x16xf32>
    %63 = arith.truncf %62 : vector<288x16xf32> to vector<288x16xbf16>
    %c0_53 = arith.constant 0 : index
    %c0_54 = arith.constant 0 : index
    %c0_55 = arith.constant 0 : index
    %64 = vector.load %arg5[%c0_53, %c0_54, %c0_55] : memref<1x288x16xbf16, #tpu.memory_space<vmem>>, vector<1x288x16xbf16>
    %65 = vector.shape_cast %64 : vector<1x288x16xbf16> to vector<288x16xbf16>
    %66 = vector.shape_cast %63 : vector<288x16xbf16> to vector<1x288x16xbf16>
    tpu.vector_store %arg5[%c0_53, %c0_54, %c0_55], %66 {strides = array<i32>} : memref<1x288x16xbf16, #tpu.memory_space<vmem>>, vector<1x288x16xbf16>,
    return
  }
  func.func @transform_0(%arg0: i32) -> (i32, i32, i32) {
    %c0_i32 = arith.constant 0 : i32
    %c0_i32_0 = arith.constant 0 : i32
    %c0_i32_1 = arith.constant 0 : i32
    return %arg0, %c0_i32, %c0_i32_0 : i32, i32, i32
  }
  func.func @transform_1(%arg0: i32) -> (i32, i32, i32) {
    %c0_i32 = arith.constant 0 : i32
    %c0_i32_0 = arith.constant 0 : i32
    %c0_i32_1 = arith.constant 0 : i32
    %c0_i32_2 = arith.constant 0 : i32
    return %c0_i32, %c0_i32_0, %c0_i32_1 : i32, i32, i32
  }
  func.func @transform_2(%arg0: i32) -> (i32, i32) {
    %c0_i32 = arith.constant 0 : i32
    %c0_i32_0 = arith.constant 0 : i32
    %c0_i32_1 = arith.constant 0 : i32
    return %c0_i32, %c0_i32_0 : i32, i32
  }
  func.func @transform_3(%arg0: i32) -> (i32, i32) {
    %c0_i32 = arith.constant 0 : i32
    %c0_i32_0 = arith.constant 0 : i32
    %c0_i32_1 = arith.constant 0 : i32
    return %c0_i32, %c0_i32_0 : i32, i32
  }
  func.func @transform_4(%arg0: i32) -> (i32, i32, i32) {
    %c0_i32 = arith.constant 0 : i32
    %c0_i32_0 = arith.constant 0 : i32
    %c0_i32_1 = arith.constant 0 : i32
    return %arg0, %c0_i32, %c0_i32_0 : i32, i32, i32
  }
}

module attributes {stable_mosaic.version = 11 : i64} {
  func.func @kernel(%arg0: i32, %arg1: memref<1x110x16xbf16, #tpu.memory_space<vmem>>, %arg2: memref<9x16x32xbf16, #tpu.memory_space<vmem>>, %arg3: memref<1x32xf32, #tpu.memory_space<vmem>>, %arg4: memref<80x1xf32, #tpu.memory_space<vmem>>, %arg5: memref<1x80x32xbf16, #tpu.memory_space<vmem>>) attributes {dimension_semantics = [#tpu.dimension_semantics<parallel>], iteration_bounds = array<i64: 4>, scalar_prefetch = 0 : i64, scratch_operands = 0 : i64, tpu.core_type = #tpu.core_type<tc>, window_params = [{transform_indices = @transform_0, window_bounds = array<i64: 1, 110, 16>}, {pipeline_mode = #tpu.pipeline_mode<synchronous>, transform_indices = @transform_1, window_bounds = array<i64: 9, 16, 32>}, {pipeline_mode = #tpu.pipeline_mode<synchronous>, transform_indices = @transform_2, window_bounds = array<i64: 1, 32>}, {pipeline_mode = #tpu.pipeline_mode<synchronous>, transform_indices = @transform_3, window_bounds = array<i64: 80, 1>}, {transform_indices = @transform_4, window_bounds = array<i64: 1, 80, 32>}]} {
    %cst = arith.constant 0.000000e+00 : f32
    %0 = vector.broadcast %cst : f32 to vector<80x32xf32>
    %c0 = arith.constant 0 : index
    %c0_0 = arith.constant 0 : index
    %c0_1 = arith.constant 0 : index
    %1 = vector.load %arg1[%c0, %c0_0, %c0_1] : memref<1x110x16xbf16, #tpu.memory_space<vmem>>, vector<1x80x16xbf16>
    %2 = vector.shape_cast %1 : vector<1x80x16xbf16> to vector<80x16xbf16>
    %c0_2 = arith.constant 0 : index
    %c0_3 = arith.constant 0 : index
    %c0_4 = arith.constant 0 : index
    %3 = vector.load %arg2[%c0_2, %c0_3, %c0_4] : memref<9x16x32xbf16, #tpu.memory_space<vmem>>, vector<1x16x32xbf16>
    %4 = vector.shape_cast %3 : vector<1x16x32xbf16> to vector<16x32xbf16>
    %cst_5 = arith.constant dense<0.000000e+00> : vector<80x32xf32>
    %5 = tpu.matmul %2, %4, %cst_5 {dimension_numbers = #tpu.dot_dimension_numbers<[1], [0], [0], [1], [0, 0, 1, 1], [], []>} : vector<80x16xbf16>, vector<16x32xbf16>, vector<80x32xf32> -> vector<80x32xf32>
    %6 = arith.addf %0, %5 : vector<80x32xf32>
    %c0_6 = arith.constant 0 : index
    %c1 = arith.constant 1 : index
    %c0_7 = arith.constant 0 : index
    %7 = vector.load %arg1[%c0_6, %c1, %c0_7] : memref<1x110x16xbf16, #tpu.memory_space<vmem>>, vector<1x80x16xbf16>
    %8 = vector.shape_cast %7 : vector<1x80x16xbf16> to vector<80x16xbf16>
    %c1_8 = arith.constant 1 : index
    %c0_9 = arith.constant 0 : index
    %c0_10 = arith.constant 0 : index
    %9 = vector.load %arg2[%c1_8, %c0_9, %c0_10] : memref<9x16x32xbf16, #tpu.memory_space<vmem>>, vector<1x16x32xbf16>
    %10 = vector.shape_cast %9 : vector<1x16x32xbf16> to vector<16x32xbf16>
    %cst_11 = arith.constant dense<0.000000e+00> : vector<80x32xf32>
    %11 = tpu.matmul %8, %10, %cst_11 {dimension_numbers = #tpu.dot_dimension_numbers<[1], [0], [0], [1], [0, 0, 1, 1], [], []>} : vector<80x16xbf16>, vector<16x32xbf16>, vector<80x32xf32> -> vector<80x32xf32>
    %12 = arith.addf %6, %11 : vector<80x32xf32>
    %c0_12 = arith.constant 0 : index
    %c2 = arith.constant 2 : index
    %c0_13 = arith.constant 0 : index
    %13 = vector.load %arg1[%c0_12, %c2, %c0_13] : memref<1x110x16xbf16, #tpu.memory_space<vmem>>, vector<1x80x16xbf16>
    %14 = vector.shape_cast %13 : vector<1x80x16xbf16> to vector<80x16xbf16>
    %c2_14 = arith.constant 2 : index
    %c0_15 = arith.constant 0 : index
    %c0_16 = arith.constant 0 : index
    %15 = vector.load %arg2[%c2_14, %c0_15, %c0_16] : memref<9x16x32xbf16, #tpu.memory_space<vmem>>, vector<1x16x32xbf16>
    %16 = vector.shape_cast %15 : vector<1x16x32xbf16> to vector<16x32xbf16>
    %cst_17 = arith.constant dense<0.000000e+00> : vector<80x32xf32>
    %17 = tpu.matmul %14, %16, %cst_17 {dimension_numbers = #tpu.dot_dimension_numbers<[1], [0], [0], [1], [0, 0, 1, 1], [], []>} : vector<80x16xbf16>, vector<16x32xbf16>, vector<80x32xf32> -> vector<80x32xf32>
    %18 = arith.addf %12, %17 : vector<80x32xf32>
    %c0_18 = arith.constant 0 : index
    %c10 = arith.constant 10 : index
    %c0_19 = arith.constant 0 : index
    %19 = vector.load %arg1[%c0_18, %c10, %c0_19] : memref<1x110x16xbf16, #tpu.memory_space<vmem>>, vector<1x80x16xbf16>
    %20 = vector.shape_cast %19 : vector<1x80x16xbf16> to vector<80x16xbf16>
    %c3 = arith.constant 3 : index
    %c0_20 = arith.constant 0 : index
    %c0_21 = arith.constant 0 : index
    %21 = vector.load %arg2[%c3, %c0_20, %c0_21] : memref<9x16x32xbf16, #tpu.memory_space<vmem>>, vector<1x16x32xbf16>
    %22 = vector.shape_cast %21 : vector<1x16x32xbf16> to vector<16x32xbf16>
    %cst_22 = arith.constant dense<0.000000e+00> : vector<80x32xf32>
    %23 = tpu.matmul %20, %22, %cst_22 {dimension_numbers = #tpu.dot_dimension_numbers<[1], [0], [0], [1], [0, 0, 1, 1], [], []>} : vector<80x16xbf16>, vector<16x32xbf16>, vector<80x32xf32> -> vector<80x32xf32>
    %24 = arith.addf %18, %23 : vector<80x32xf32>
    %c0_23 = arith.constant 0 : index
    %c11 = arith.constant 11 : index
    %c0_24 = arith.constant 0 : index
    %25 = vector.load %arg1[%c0_23, %c11, %c0_24] : memref<1x110x16xbf16, #tpu.memory_space<vmem>>, vector<1x80x16xbf16>
    %26 = vector.shape_cast %25 : vector<1x80x16xbf16> to vector<80x16xbf16>
    %c4 = arith.constant 4 : index
    %c0_25 = arith.constant 0 : index
    %c0_26 = arith.constant 0 : index
    %27 = vector.load %arg2[%c4, %c0_25, %c0_26] : memref<9x16x32xbf16, #tpu.memory_space<vmem>>, vector<1x16x32xbf16>
    %28 = vector.shape_cast %27 : vector<1x16x32xbf16> to vector<16x32xbf16>
    %cst_27 = arith.constant dense<0.000000e+00> : vector<80x32xf32>
    %29 = tpu.matmul %26, %28, %cst_27 {dimension_numbers = #tpu.dot_dimension_numbers<[1], [0], [0], [1], [0, 0, 1, 1], [], []>} : vector<80x16xbf16>, vector<16x32xbf16>, vector<80x32xf32> -> vector<80x32xf32>
    %30 = arith.addf %24, %29 : vector<80x32xf32>
    %c0_28 = arith.constant 0 : index
    %c12 = arith.constant 12 : index
    %c0_29 = arith.constant 0 : index
    %31 = vector.load %arg1[%c0_28, %c12, %c0_29] : memref<1x110x16xbf16, #tpu.memory_space<vmem>>, vector<1x80x16xbf16>
    %32 = vector.shape_cast %31 : vector<1x80x16xbf16> to vector<80x16xbf16>
    %c5 = arith.constant 5 : index
    %c0_30 = arith.constant 0 : index
    %c0_31 = arith.constant 0 : index
    %33 = vector.load %arg2[%c5, %c0_30, %c0_31] : memref<9x16x32xbf16, #tpu.memory_space<vmem>>, vector<1x16x32xbf16>
    %34 = vector.shape_cast %33 : vector<1x16x32xbf16> to vector<16x32xbf16>
    %cst_32 = arith.constant dense<0.000000e+00> : vector<80x32xf32>
    %35 = tpu.matmul %32, %34, %cst_32 {dimension_numbers = #tpu.dot_dimension_numbers<[1], [0], [0], [1], [0, 0, 1, 1], [], []>} : vector<80x16xbf16>, vector<16x32xbf16>, vector<80x32xf32> -> vector<80x32xf32>
    %36 = arith.addf %30, %35 : vector<80x32xf32>
    %c0_33 = arith.constant 0 : index
    %c20 = arith.constant 20 : index
    %c0_34 = arith.constant 0 : index
    %37 = vector.load %arg1[%c0_33, %c20, %c0_34] : memref<1x110x16xbf16, #tpu.memory_space<vmem>>, vector<1x80x16xbf16>
    %38 = vector.shape_cast %37 : vector<1x80x16xbf16> to vector<80x16xbf16>
    %c6 = arith.constant 6 : index
    %c0_35 = arith.constant 0 : index
    %c0_36 = arith.constant 0 : index
    %39 = vector.load %arg2[%c6, %c0_35, %c0_36] : memref<9x16x32xbf16, #tpu.memory_space<vmem>>, vector<1x16x32xbf16>
    %40 = vector.shape_cast %39 : vector<1x16x32xbf16> to vector<16x32xbf16>
    %cst_37 = arith.constant dense<0.000000e+00> : vector<80x32xf32>
    %41 = tpu.matmul %38, %40, %cst_37 {dimension_numbers = #tpu.dot_dimension_numbers<[1], [0], [0], [1], [0, 0, 1, 1], [], []>} : vector<80x16xbf16>, vector<16x32xbf16>, vector<80x32xf32> -> vector<80x32xf32>
    %42 = arith.addf %36, %41 : vector<80x32xf32>
    %c0_38 = arith.constant 0 : index
    %c21 = arith.constant 21 : index
    %c0_39 = arith.constant 0 : index
    %43 = vector.load %arg1[%c0_38, %c21, %c0_39] : memref<1x110x16xbf16, #tpu.memory_space<vmem>>, vector<1x80x16xbf16>
    %44 = vector.shape_cast %43 : vector<1x80x16xbf16> to vector<80x16xbf16>
    %c7 = arith.constant 7 : index
    %c0_40 = arith.constant 0 : index
    %c0_41 = arith.constant 0 : index
    %45 = vector.load %arg2[%c7, %c0_40, %c0_41] : memref<9x16x32xbf16, #tpu.memory_space<vmem>>, vector<1x16x32xbf16>
    %46 = vector.shape_cast %45 : vector<1x16x32xbf16> to vector<16x32xbf16>
    %cst_42 = arith.constant dense<0.000000e+00> : vector<80x32xf32>
    %47 = tpu.matmul %44, %46, %cst_42 {dimension_numbers = #tpu.dot_dimension_numbers<[1], [0], [0], [1], [0, 0, 1, 1], [], []>} : vector<80x16xbf16>, vector<16x32xbf16>, vector<80x32xf32> -> vector<80x32xf32>
    %48 = arith.addf %42, %47 : vector<80x32xf32>
    %c0_43 = arith.constant 0 : index
    %c22 = arith.constant 22 : index
    %c0_44 = arith.constant 0 : index
    %49 = vector.load %arg1[%c0_43, %c22, %c0_44] : memref<1x110x16xbf16, #tpu.memory_space<vmem>>, vector<1x80x16xbf16>
    %50 = vector.shape_cast %49 : vector<1x80x16xbf16> to vector<80x16xbf16>
    %c8 = arith.constant 8 : index
    %c0_45 = arith.constant 0 : index
    %c0_46 = arith.constant 0 : index
    %51 = vector.load %arg2[%c8, %c0_45, %c0_46] : memref<9x16x32xbf16, #tpu.memory_space<vmem>>, vector<1x16x32xbf16>
    %52 = vector.shape_cast %51 : vector<1x16x32xbf16> to vector<16x32xbf16>
    %cst_47 = arith.constant dense<0.000000e+00> : vector<80x32xf32>
    %53 = tpu.matmul %50, %52, %cst_47 {dimension_numbers = #tpu.dot_dimension_numbers<[1], [0], [0], [1], [0, 0, 1, 1], [], []>} : vector<80x16xbf16>, vector<16x32xbf16>, vector<80x32xf32> -> vector<80x32xf32>
    %54 = arith.addf %48, %53 : vector<80x32xf32>
    %c0_48 = arith.constant 0 : index
    %c0_49 = arith.constant 0 : index
    %55 = vector.load %arg3[%c0_48, %c0_49] : memref<1x32xf32, #tpu.memory_space<vmem>>, vector<1x32xf32>
    %56 = vector.broadcast %55 : vector<1x32xf32> to vector<80x32xf32>
    %57 = arith.addf %54, %56 : vector<80x32xf32>
    %cst_50 = arith.constant 0.000000e+00 : f32
    %58 = vector.broadcast %cst_50 : f32 to vector<80x32xf32>
    %59 = arith.maximumf %57, %58 : vector<80x32xf32>
    %c0_51 = arith.constant 0 : index
    %c0_52 = arith.constant 0 : index
    %60 = vector.load %arg4[%c0_51, %c0_52] : memref<80x1xf32, #tpu.memory_space<vmem>>, vector<80x1xf32>
    %61 = vector.broadcast %60 : vector<80x1xf32> to vector<80x32xf32>
    %62 = arith.mulf %59, %61 : vector<80x32xf32>
    %63 = arith.truncf %62 : vector<80x32xf32> to vector<80x32xbf16>
    %c0_53 = arith.constant 0 : index
    %c0_54 = arith.constant 0 : index
    %c0_55 = arith.constant 0 : index
    %64 = vector.load %arg5[%c0_53, %c0_54, %c0_55] : memref<1x80x32xbf16, #tpu.memory_space<vmem>>, vector<1x80x32xbf16>
    %65 = vector.shape_cast %64 : vector<1x80x32xbf16> to vector<80x32xbf16>
    %66 = vector.shape_cast %63 : vector<80x32xbf16> to vector<1x80x32xbf16>
    tpu.vector_store %arg5[%c0_53, %c0_54, %c0_55], %66 {strides = array<i32>} : memref<1x80x32xbf16, #tpu.memory_space<vmem>>, vector<1x80x32xbf16>,
    return
  }
  func.func @transform_0(%arg0: i32) -> (i32, i32, i32) {
    %c0_i32 = arith.constant 0 : i32
    %c0_i32_0 = arith.constant 0 : i32
    %c0_i32_1 = arith.constant 0 : i32
    return %arg0, %c0_i32, %c0_i32_0 : i32, i32, i32
  }
  func.func @transform_1(%arg0: i32) -> (i32, i32, i32) {
    %c0_i32 = arith.constant 0 : i32
    %c0_i32_0 = arith.constant 0 : i32
    %c0_i32_1 = arith.constant 0 : i32
    %c0_i32_2 = arith.constant 0 : i32
    return %c0_i32, %c0_i32_0, %c0_i32_1 : i32, i32, i32
  }
  func.func @transform_2(%arg0: i32) -> (i32, i32) {
    %c0_i32 = arith.constant 0 : i32
    %c0_i32_0 = arith.constant 0 : i32
    %c0_i32_1 = arith.constant 0 : i32
    return %c0_i32, %c0_i32_0 : i32, i32
  }
  func.func @transform_3(%arg0: i32) -> (i32, i32) {
    %c0_i32 = arith.constant 0 : i32
    %c0_i32_0 = arith.constant 0 : i32
    %c0_i32_1 = arith.constant 0 : i32
    return %c0_i32, %c0_i32_0 : i32, i32
  }
  func.func @transform_4(%arg0: i32) -> (i32, i32, i32) {
    %c0_i32 = arith.constant 0 : i32
    %c0_i32_0 = arith.constant 0 : i32
    %c0_i32_1 = arith.constant 0 : i32
    return %arg0, %c0_i32, %c0_i32_0 : i32, i32, i32
  }
}

module attributes {stable_mosaic.version = 11 : i64} {
  func.func @kernel(%arg0: i32, %arg1: memref<1x80x32xbf16, #tpu.memory_space<vmem>>, %arg2: memref<1x80x32xbf16, #tpu.memory_space<vmem>>, %arg3: memref<1x32xf32, #tpu.memory_space<vmem>>, %arg4: memref<1x1xf32, #tpu.memory_space<vmem>>, %arg5: memref<1x1xf32, #tpu.memory_space<vmem>>) attributes {dimension_semantics = [#tpu.dimension_semantics<arbitrary>], iteration_bounds = array<i64: 2>, scalar_prefetch = 0 : i64, scratch_operands = 1 : i64, tpu.core_type = #tpu.core_type<tc>, window_params = [{transform_indices = @transform_0, window_bounds = array<i64: 1, 80, 32>}, {transform_indices = @transform_1, window_bounds = array<i64: 1, 80, 32>}, {pipeline_mode = #tpu.pipeline_mode<synchronous>, transform_indices = @transform_2, window_bounds = array<i64: 1, 32>}, {pipeline_mode = #tpu.pipeline_mode<synchronous>, transform_indices = @transform_3, window_bounds = array<i64: 1, 1>}]} {
    %c0_i32 = arith.constant 0 : i32
    %0 = arith.cmpi eq, %arg0, %c0_i32 : i32
    %1 = arith.extui %0 : i1 to i32
    %c0_i32_0 = arith.constant 0 : i32
    %2 = arith.cmpi ne, %1, %c0_i32_0 : i32
    scf.if %2 {
      %cst_18 = arith.constant 0.000000e+00 : f32
      %43 = vector.broadcast %cst_18 : f32 to vector<1x1xf32>
      %c0_19 = arith.constant 0 : index
      %c0_20 = arith.constant 0 : index
      %44 = vector.load %arg5[%c0_19, %c0_20] : memref<1x1xf32, #tpu.memory_space<vmem>>, vector<1x1xf32>
      tpu.vector_store %arg5[%c0_19, %c0_20], %43 {strides = array<i32>} : memref<1x1xf32, #tpu.memory_space<vmem>>, vector<1x1xf32>,
    } else {
    }
    %c0 = arith.constant 0 : index
    %c0_1 = arith.constant 0 : index
    %c0_2 = arith.constant 0 : index
    %3 = vector.load %arg1[%c0, %c0_1, %c0_2] : memref<1x80x32xbf16, #tpu.memory_space<vmem>>, vector<1x80x32xbf16>
    %4 = vector.shape_cast %3 : vector<1x80x32xbf16> to vector<80x32xbf16>
    %5 = arith.extf %4 : vector<80x32xbf16> to vector<80x32xf32>
    %c0_3 = arith.constant 0 : index
    %c0_4 = arith.constant 0 : index
    %c0_5 = arith.constant 0 : index
    %6 = vector.load %arg2[%c0_3, %c0_4, %c0_5] : memref<1x80x32xbf16, #tpu.memory_space<vmem>>, vector<1x80x32xbf16>
    %7 = vector.shape_cast %6 : vector<1x80x32xbf16> to vector<80x32xbf16>
    %8 = arith.extf %7 : vector<80x32xbf16> to vector<80x32xf32>
    %9 = arith.mulf %5, %5 : vector<80x32xf32>
    %cst = arith.constant dense<0.000000e+00> : vector<80xf32>
    %10 = vector.multi_reduction <add>, %9, %cst [1] : vector<80x32xf32> to vector<80xf32>
    %11 = vector.shape_cast %10 : vector<80xf32> to vector<80x1xf32>
    %cst_6 = arith.constant 9.99999968E-21 : f32
    %12 = vector.broadcast %cst_6 : f32 to vector<80x1xf32>
    %13 = arith.addf %11, %12 : vector<80x1xf32>
    %14 = math.rsqrt %13 : vector<80x1xf32>
    %15 = vector.broadcast %14 : vector<80x1xf32> to vector<80x32xf32>
    %16 = arith.mulf %5, %15 : vector<80x32xf32>
    %17 = arith.mulf %8, %8 : vector<80x32xf32>
    %cst_7 = arith.constant dense<0.000000e+00> : vector<80xf32>
    %18 = vector.multi_reduction <add>, %17, %cst_7 [1] : vector<80x32xf32> to vector<80xf32>
    %19 = vector.shape_cast %18 : vector<80xf32> to vector<80x1xf32>
    %cst_8 = arith.constant 9.99999968E-21 : f32
    %20 = vector.broadcast %cst_8 : f32 to vector<80x1xf32>
    %21 = arith.addf %19, %20 : vector<80x1xf32>
    %22 = math.rsqrt %21 : vector<80x1xf32>
    %23 = vector.broadcast %22 : vector<80x1xf32> to vector<80x32xf32>
    %24 = arith.mulf %8, %23 : vector<80x32xf32>
    %25 = arith.subf %16, %24 : vector<80x32xf32>
    %26 = arith.mulf %25, %25 : vector<80x32xf32>
    %c0_9 = arith.constant 0 : index
    %c0_10 = arith.constant 0 : index
    %27 = vector.load %arg3[%c0_9, %c0_10] : memref<1x32xf32, #tpu.memory_space<vmem>>, vector<1x32xf32>
    %28 = vector.broadcast %27 : vector<1x32xf32> to vector<80x32xf32>
    %29 = arith.mulf %26, %28 : vector<80x32xf32>
    %cst_11 = arith.constant dense<0.000000e+00> : vector<80xf32>
    %30 = vector.multi_reduction <add>, %29, %cst_11 [1] : vector<80x32xf32> to vector<80xf32>
    %31 = vector.shape_cast %30 : vector<80xf32> to vector<80x1xf32>
    %c0_12 = arith.constant 0 : index
    %c0_13 = arith.constant 0 : index
    %32 = vector.load %arg5[%c0_12, %c0_13] : memref<1x1xf32, #tpu.memory_space<vmem>>, vector<1x1xf32>
    %33 = vector.shape_cast %31 : vector<80x1xf32> to vector<1x80x1xf32>
    %cst_14 = arith.constant dense<0.000000e+00> : vector<1xf32>
    %34 = vector.multi_reduction <add>, %33, %cst_14 [1, 2] : vector<1x80x1xf32> to vector<1xf32>
    %35 = vector.shape_cast %34 : vector<1xf32> to vector<1x1x1xf32>
    %36 = vector.extract %35[0, 0, 0] : f32 from vector<1x1x1xf32>
    %37 = vector.broadcast %36 : f32 to vector<1x1xf32>
    %38 = arith.addf %32, %37 : vector<1x1xf32>
    %c0_15 = arith.constant 0 : index
    %c0_16 = arith.constant 0 : index
    %39 = vector.load %arg5[%c0_15, %c0_16] : memref<1x1xf32, #tpu.memory_space<vmem>>, vector<1x1xf32>
    tpu.vector_store %arg5[%c0_15, %c0_16], %38 {strides = array<i32>} : memref<1x1xf32, #tpu.memory_space<vmem>>, vector<1x1xf32>,
    %c1_i32 = arith.constant 1 : i32
    %40 = arith.cmpi eq, %arg0, %c1_i32 : i32
    %41 = arith.extui %40 : i1 to i32
    %c0_i32_17 = arith.constant 0 : i32
    %42 = arith.cmpi ne, %41, %c0_i32_17 : i32
    scf.if %42 {
      %c0_18 = arith.constant 0 : index
      %c0_19 = arith.constant 0 : index
      %43 = vector.load %arg5[%c0_18, %c0_19] : memref<1x1xf32, #tpu.memory_space<vmem>>, vector<1x1xf32>
      %cst_20 = arith.constant 7.812500e-03 : f32
      %44 = vector.broadcast %cst_20 : f32 to vector<1x1xf32>
      %45 = arith.mulf %43, %44 : vector<1x1xf32>
      %c0_21 = arith.constant 0 : index
      %c0_22 = arith.constant 0 : index
      %46 = vector.load %arg4[%c0_21, %c0_22] : memref<1x1xf32, #tpu.memory_space<vmem>>, vector<1x1xf32>
      tpu.vector_store %arg4[%c0_21, %c0_22], %45 {strides = array<i32>} : memref<1x1xf32, #tpu.memory_space<vmem>>, vector<1x1xf32>,
    } else {
    }
    return
  }
  func.func @transform_0(%arg0: i32) -> (i32, i32, i32) {
    %c0_i32 = arith.constant 0 : i32
    %c0_i32_0 = arith.constant 0 : i32
    %c0_i32_1 = arith.constant 0 : i32
    return %arg0, %c0_i32, %c0_i32_0 : i32, i32, i32
  }
  func.func @transform_1(%arg0: i32) -> (i32, i32, i32) {
    %c2_i32 = arith.constant 2 : i32
    %0 = arith.addi %arg0, %c2_i32 : i32
    %c0_i32 = arith.constant 0 : i32
    %c0_i32_0 = arith.constant 0 : i32
    %c0_i32_1 = arith.constant 0 : i32
    return %0, %c0_i32, %c0_i32_0 : i32, i32, i32
  }
  func.func @transform_2(%arg0: i32) -> (i32, i32) {
    %c0_i32 = arith.constant 0 : i32
    %c0_i32_0 = arith.constant 0 : i32
    %c0_i32_1 = arith.constant 0 : i32
    return %c0_i32, %c0_i32_0 : i32, i32
  }
  func.func @transform_3(%arg0: i32) -> (i32, i32) {
    %c0_i32 = arith.constant 0 : i32
    %c0_i32_0 = arith.constant 0 : i32
    %c0_i32_1 = arith.constant 0 : i32
    return %c0_i32, %c0_i32_0 : i32, i32
  }
}

module attributes {stable_mosaic.version = 11 : i64} {
  func.func @kernel(%arg0: i32, %arg1: memref<1x288x16xbf16, #tpu.memory_space<vmem>>, %arg2: memref<1x288x16xbf16, #tpu.memory_space<vmem>>, %arg3: memref<1x16xf32, #tpu.memory_space<vmem>>, %arg4: memref<1x1xf32, #tpu.memory_space<vmem>>, %arg5: memref<1x1xf32, #tpu.memory_space<vmem>>) attributes {dimension_semantics = [#tpu.dimension_semantics<arbitrary>], iteration_bounds = array<i64: 2>, scalar_prefetch = 0 : i64, scratch_operands = 1 : i64, tpu.core_type = #tpu.core_type<tc>, window_params = [{transform_indices = @transform_0, window_bounds = array<i64: 1, 288, 16>}, {transform_indices = @transform_1, window_bounds = array<i64: 1, 288, 16>}, {pipeline_mode = #tpu.pipeline_mode<synchronous>, transform_indices = @transform_2, window_bounds = array<i64: 1, 16>}, {pipeline_mode = #tpu.pipeline_mode<synchronous>, transform_indices = @transform_3, window_bounds = array<i64: 1, 1>}]} {
    %c0_i32 = arith.constant 0 : i32
    %0 = arith.cmpi eq, %arg0, %c0_i32 : i32
    %1 = arith.extui %0 : i1 to i32
    %c0_i32_0 = arith.constant 0 : i32
    %2 = arith.cmpi ne, %1, %c0_i32_0 : i32
    scf.if %2 {
      %cst_18 = arith.constant 0.000000e+00 : f32
      %43 = vector.broadcast %cst_18 : f32 to vector<1x1xf32>
      %c0_19 = arith.constant 0 : index
      %c0_20 = arith.constant 0 : index
      %44 = vector.load %arg5[%c0_19, %c0_20] : memref<1x1xf32, #tpu.memory_space<vmem>>, vector<1x1xf32>
      tpu.vector_store %arg5[%c0_19, %c0_20], %43 {strides = array<i32>} : memref<1x1xf32, #tpu.memory_space<vmem>>, vector<1x1xf32>,
    } else {
    }
    %c0 = arith.constant 0 : index
    %c0_1 = arith.constant 0 : index
    %c0_2 = arith.constant 0 : index
    %3 = vector.load %arg1[%c0, %c0_1, %c0_2] : memref<1x288x16xbf16, #tpu.memory_space<vmem>>, vector<1x288x16xbf16>
    %4 = vector.shape_cast %3 : vector<1x288x16xbf16> to vector<288x16xbf16>
    %5 = arith.extf %4 : vector<288x16xbf16> to vector<288x16xf32>
    %c0_3 = arith.constant 0 : index
    %c0_4 = arith.constant 0 : index
    %c0_5 = arith.constant 0 : index
    %6 = vector.load %arg2[%c0_3, %c0_4, %c0_5] : memref<1x288x16xbf16, #tpu.memory_space<vmem>>, vector<1x288x16xbf16>
    %7 = vector.shape_cast %6 : vector<1x288x16xbf16> to vector<288x16xbf16>
    %8 = arith.extf %7 : vector<288x16xbf16> to vector<288x16xf32>
    %9 = arith.mulf %5, %5 : vector<288x16xf32>
    %cst = arith.constant dense<0.000000e+00> : vector<288xf32>
    %10 = vector.multi_reduction <add>, %9, %cst [1] : vector<288x16xf32> to vector<288xf32>
    %11 = vector.shape_cast %10 : vector<288xf32> to vector<288x1xf32>
    %cst_6 = arith.constant 9.99999968E-21 : f32
    %12 = vector.broadcast %cst_6 : f32 to vector<288x1xf32>
    %13 = arith.addf %11, %12 : vector<288x1xf32>
    %14 = math.rsqrt %13 : vector<288x1xf32>
    %15 = vector.broadcast %14 : vector<288x1xf32> to vector<288x16xf32>
    %16 = arith.mulf %5, %15 : vector<288x16xf32>
    %17 = arith.mulf %8, %8 : vector<288x16xf32>
    %cst_7 = arith.constant dense<0.000000e+00> : vector<288xf32>
    %18 = vector.multi_reduction <add>, %17, %cst_7 [1] : vector<288x16xf32> to vector<288xf32>
    %19 = vector.shape_cast %18 : vector<288xf32> to vector<288x1xf32>
    %cst_8 = arith.constant 9.99999968E-21 : f32
    %20 = vector.broadcast %cst_8 : f32 to vector<288x1xf32>
    %21 = arith.addf %19, %20 : vector<288x1xf32>
    %22 = math.rsqrt %21 : vector<288x1xf32>
    %23 = vector.broadcast %22 : vector<288x1xf32> to vector<288x16xf32>
    %24 = arith.mulf %8, %23 : vector<288x16xf32>
    %25 = arith.subf %16, %24 : vector<288x16xf32>
    %26 = arith.mulf %25, %25 : vector<288x16xf32>
    %c0_9 = arith.constant 0 : index
    %c0_10 = arith.constant 0 : index
    %27 = vector.load %arg3[%c0_9, %c0_10] : memref<1x16xf32, #tpu.memory_space<vmem>>, vector<1x16xf32>
    %28 = vector.broadcast %27 : vector<1x16xf32> to vector<288x16xf32>
    %29 = arith.mulf %26, %28 : vector<288x16xf32>
    %cst_11 = arith.constant dense<0.000000e+00> : vector<288xf32>
    %30 = vector.multi_reduction <add>, %29, %cst_11 [1] : vector<288x16xf32> to vector<288xf32>
    %31 = vector.shape_cast %30 : vector<288xf32> to vector<288x1xf32>
    %c0_12 = arith.constant 0 : index
    %c0_13 = arith.constant 0 : index
    %32 = vector.load %arg5[%c0_12, %c0_13] : memref<1x1xf32, #tpu.memory_space<vmem>>, vector<1x1xf32>
    %33 = vector.shape_cast %31 : vector<288x1xf32> to vector<1x288x1xf32>
    %cst_14 = arith.constant dense<0.000000e+00> : vector<1xf32>
    %34 = vector.multi_reduction <add>, %33, %cst_14 [1, 2] : vector<1x288x1xf32> to vector<1xf32>
    %35 = vector.shape_cast %34 : vector<1xf32> to vector<1x1x1xf32>
    %36 = vector.extract %35[0, 0, 0] : f32 from vector<1x1x1xf32>
    %37 = vector.broadcast %36 : f32 to vector<1x1xf32>
    %38 = arith.addf %32, %37 : vector<1x1xf32>
    %c0_15 = arith.constant 0 : index
    %c0_16 = arith.constant 0 : index
    %39 = vector.load %arg5[%c0_15, %c0_16] : memref<1x1xf32, #tpu.memory_space<vmem>>, vector<1x1xf32>
    tpu.vector_store %arg5[%c0_15, %c0_16], %38 {strides = array<i32>} : memref<1x1xf32, #tpu.memory_space<vmem>>, vector<1x1xf32>,
    %c1_i32 = arith.constant 1 : i32
    %40 = arith.cmpi eq, %arg0, %c1_i32 : i32
    %41 = arith.extui %40 : i1 to i32
    %c0_i32_17 = arith.constant 0 : i32
    %42 = arith.cmpi ne, %41, %c0_i32_17 : i32
    scf.if %42 {
      %c0_18 = arith.constant 0 : index
      %c0_19 = arith.constant 0 : index
      %43 = vector.load %arg5[%c0_18, %c0_19] : memref<1x1xf32, #tpu.memory_space<vmem>>, vector<1x1xf32>
      %cst_20 = arith.constant 0.001953125 : f32
      %44 = vector.broadcast %cst_20 : f32 to vector<1x1xf32>
      %45 = arith.mulf %43, %44 : vector<1x1xf32>
      %c0_21 = arith.constant 0 : index
      %c0_22 = arith.constant 0 : index
      %46 = vector.load %arg4[%c0_21, %c0_22] : memref<1x1xf32, #tpu.memory_space<vmem>>, vector<1x1xf32>
      tpu.vector_store %arg4[%c0_21, %c0_22], %45 {strides = array<i32>} : memref<1x1xf32, #tpu.memory_space<vmem>>, vector<1x1xf32>,
    } else {
    }
    return
  }
  func.func @transform_0(%arg0: i32) -> (i32, i32, i32) {
    %c0_i32 = arith.constant 0 : i32
    %c0_i32_0 = arith.constant 0 : i32
    %c0_i32_1 = arith.constant 0 : i32
    return %arg0, %c0_i32, %c0_i32_0 : i32, i32, i32
  }
  func.func @transform_1(%arg0: i32) -> (i32, i32, i32) {
    %c2_i32 = arith.constant 2 : i32
    %0 = arith.addi %arg0, %c2_i32 : i32
    %c0_i32 = arith.constant 0 : i32
    %c0_i32_0 = arith.constant 0 : i32
    %c0_i32_1 = arith.constant 0 : i32
    return %0, %c0_i32, %c0_i32_0 : i32, i32, i32
  }
  func.func @transform_2(%arg0: i32) -> (i32, i32) {
    %c0_i32 = arith.constant 0 : i32
    %c0_i32_0 = arith.constant 0 : i32
    %c0_i32_1 = arith.constant 0 : i32
    return %c0_i32, %c0_i32_0 : i32, i32
  }
  func.func @transform_3(%arg0: i32) -> (i32, i32) {
    %c0_i32 = arith.constant 0 : i32
    %c0_i32_0 = arith.constant 0 : i32
    %c0_i32_1 = arith.constant 0 : i32
    return %c0_i32, %c0_i32_0 : i32, i32
  }
}

</mosaic_0001>

<llo_original>
// kernel: tile.13
$region0: #{tile.13}
  #allocation0 [shape = 's32[1]{0}', space=sflag, size = 0x4, scoped, tag = 'scoped memory for tile.13']
  %s0 = inlined_call_operand.vmem [shape: f32[3], index: 0, kind: input, shape index: {}]
  %s1 = inlined_call_operand.vmem [shape: f32[2,3], index: 1, kind: output, shape index: {}]
  // Predicated region
  $region2: #{tile.13} parent=0 // pred_check
    _
  $region3: #{tile.13} parent=0 // pred_check_branch
    %3 = sbr.rel (0) target = $region5
  $region4: #{tile.13} parent=0 // pred_region
    _
  $region5: #{tile.13} parent=0 // pred_fallthru
    _
  %v4 = vld [vmem:[%s0] ss:$0 sm:$0xff]
  %5 = vst [vmem:[%s1] sm:$0x3] %v4

// kernel: tile.0
$region0: #{tile.0}
  %s0 = inlined_call_operand.vmem [shape: f32[2,3], index: 0, kind: input, shape index: {}]
  %s1 = inlined_call_operand.vmem [shape: f32[6,1], index: 1, kind: output, shape index: {}]
  $region1: #{tile.0} parent=0
    #allocation0 [shape = 'u8[4096]{0}', space=vmem, size = 0x1000, scoped, tag = 'scoped mem for input reshape']
    %s3 = sshll.u32 1, 2
    %s4 = ssub.s32 %s3, 1
    %v5 = vld [vmem:[%s0] sm:%s4]
    %6 = vst [vmem:[#allocation0] sm:%s4] %v5
    %v7 = vld [vmem:[#allocation0] sm:$0x3]
    %vm8 = vcmask 7168
    %9 = vst.msk [vmem:[%s1] ss:$3 sm:$0x3] %vm8, %v7
    %v10 = vld [vmem:[#allocation0] sm:$0x3]
    %11 = vrot.lane.b32.xlu0 %v10, 127
    %v12 = vpop.permute.xlu0 %11
    %vm13 = vcmask 7168
    %s14 = scalar_lea.vmem %s1, 1
    %15 = vst.msk [vmem:[%s14] ss:$3 sm:$0x3] %vm13, %v12
    %v16 = vld [vmem:[#allocation0] sm:$0x3]
    %17 = vrot.lane.b32.xlu0 %v16, 126
    %v18 = vpop.permute.xlu0 %17
    %vm19 = vcmask 7168
    %s20 = scalar_lea.vmem %s1, 2
    %21 = vst.msk [vmem:[%s20] ss:$3 sm:$0x3] %vm19, %v18

// kernel: perceptual_loss_function.5
$region0: #{perceptual_loss_function.5}
  #allocation0 [shape = 'u32[]', space=smem, size = 0x4, offset = 0x4, fixed_abs, tag = 'smem constant byte address 0x4 - core index']
  #allocation1 [shape = 'u32[144,128]{1,0:T(1,128)}', space=vmem, size = 0x12000, scoped, tag = 'internal scratch']
  %s0 = inlined_call_operand.vmem [shape: f32[6,256], index: 0, kind: input, shape index: {}]
  %s1 = inlined_call_operand.vmem [shape: f32[6,256], index: 1, kind: input, shape index: {}]
  %s2 = inlined_call_operand.vmem [shape: f32[6,1], index: 2, kind: input, shape index: {}]
  %s3 = inlined_call_operand.vmem [shape: f32[6,1], index: 3, kind: input, shape index: {}]
  %s4 = inlined_call_operand.vmem [shape: f32[6,256], index: 4, kind: output, shape index: {0}]
  %s5 = inlined_call_operand.vmem [shape: bf16[6,256], index: 5, kind: output, shape index: {1}]
  %s6 = inlined_call_operand.vmem [shape: bf16[6,256], index: 6, kind: output, shape index: {2}]
  %7 = xla_tuple %s4, %s5, %s6
  %s8 = sld [smem:[#allocation0]]
  $region42: #{perceptual_loss_function.5} parent=0
    _
  %s10 = ssub.s32 1, %s8
  %s11 = scalar_select 0, %s10, %s8
  // Predicated region
  $region2: #{perceptual_loss_function.5} parent=0 // pred_check
    _
  $region3: #{perceptual_loss_function.5} parent=0 // pred_check_branch
    %13 = sbr.rel (0) target = $region5
  $region4: #{perceptual_loss_function.5} parent=0 // pred_region
    _
  $region5: #{perceptual_loss_function.5} parent=0 // pred_fallthru
    _
  // Predicated region
  $region6: #{perceptual_loss_function.5} parent=0 // pred_check
    _
  $region7: #{perceptual_loss_function.5} parent=0 // pred_check_branch
    %15 = sbr.rel (0) target = $region9
  $region8: #{perceptual_loss_function.5} parent=0 // pred_region
    _
  $region9: #{perceptual_loss_function.5} parent=0 // pred_fallthru
    _
  // Predicated region
  $region10: #{perceptual_loss_function.5} parent=0 // pred_check
    _
  $region11: #{perceptual_loss_function.5} parent=0 // pred_check_branch
    %17 = sbr.rel (0) target = $region13
  $region12: #{perceptual_loss_function.5} parent=0 // pred_region
    _
  $region13: #{perceptual_loss_function.5} parent=0 // pred_fallthru
    _
  // Predicated region
  $region14: #{perceptual_loss_function.5} parent=0 // pred_check
    _
  $region15: #{perceptual_loss_function.5} parent=0 // pred_check_branch
    %19 = sbr.rel (0) target = $region17
  $region16: #{perceptual_loss_function.5} parent=0 // pred_region
    _
  $region17: #{perceptual_loss_function.5} parent=0 // pred_fallthru
    _
  %v20 = vld [vmem:[%s0] sm:$0x3f]
  %v21 = vld [vmem:[%s0 + $0x8] sm:$0x3f]
  %v22 = vmax.f32 %v20, -1.0
  %v23 = vmax.f32 %v21, -1.0
  %v24 = vmin.f32 %v22, 1.0
  %v25 = vmin.f32 %v23, 1.0
  %v26 = vld [vmem:[%s1] sm:$0x3f]
  %v27 = vld [vmem:[%s1 + $0x8] sm:$0x3f]
  %v28 = vmax.f32 %v26, -1.0
  %v29 = vmax.f32 %v27, -1.0
  %v30 = vmin.f32 %v28, 1.0
  %v31 = vmin.f32 %v29, 1.0
  %32 = vst [vmem:[%s4] sm:$0x3f] %v24
  %33 = vst [vmem:[%s4 + $0x8] sm:$0x3f] %v25
  %v34 = vld [vmem:[%s2] sm:$0x3f]
  %v35 = vld [vmem:[%s3] sm:$0x3f]
  %37 = vset.pattern.permute.xlu0 0
  %38 = vperm.xlu0 %37, %v34
  %v39 = vpop.permute.xlu0 %38
  %v41 = vsub.f32 %v24, %v39
  %v42 = vsub.f32 %v25, %v39
  %44 = vset.pattern.permute.xlu0 0
  %45 = vperm.xlu0 %44, %v35
  %v46 = vpop.permute.xlu0 %45
  %v48 = vmul.f32 %v41, %v46
  %v49 = vmul.f32 %v42, %v46
  %v50 = vpack.c.bf16 %v48, %v48
  %v51 = vpack.c.bf16 %v49, %v49
  %v54 = vunpack.c.l.b16 %v50
  %v55 = vunpack.c.l.b16 %v51
  %v56 = vpack.c.b16 %v55, %v54
  %58 = vst [vmem:[%s5] sm:$0x77] %v56
  %v59 = vsub.f32 %v30, %v39
  %v60 = vsub.f32 %v31, %v39
  %v61 = vmul.f32 %v59, %v46
  %v62 = vmul.f32 %v60, %v46
  %v63 = vpack.c.bf16 %v61, %v61
  %v64 = vpack.c.bf16 %v62, %v62
  %v67 = vunpack.c.l.b16 %v63
  %v68 = vunpack.c.l.b16 %v64
  %v69 = vpack.c.b16 %v68, %v67
  %71 = vst [vmem:[%s6] sm:$0x77] %v69
  // Predicated region
  $region18: #{perceptual_loss_function.5} parent=0 // pred_check
    _
  $region19: #{perceptual_loss_function.5} parent=0 // pred_check_branch
    %73 = sbr.rel (0) target = $region21
  $region20: #{perceptual_loss_function.5} parent=0 // pred_region
    _
  $region21: #{perceptual_loss_function.5} parent=0 // pred_fallthru
    _
  // Predicated region
  $region22: #{perceptual_loss_function.5} parent=0 // pred_check
    _
  $region23: #{perceptual_loss_function.5} parent=0 // pred_check_branch
    %75 = sbr.rel (0) target = $region25
  $region24: #{perceptual_loss_function.5} parent=0 // pred_region
    _
  $region25: #{perceptual_loss_function.5} parent=0 // pred_fallthru
    _
  // Predicated region
  $region26: #{perceptual_loss_function.5} parent=0 // pred_check
    _
  $region27: #{perceptual_loss_function.5} parent=0 // pred_check_branch
    %77 = sbr.rel (0) target = $region29
  $region28: #{perceptual_loss_function.5} parent=0 // pred_region
    _
  $region29: #{perceptual_loss_function.5} parent=0 // pred_fallthru
    _
  // Predicated region
  $region30: #{perceptual_loss_function.5} parent=0 // pred_check
    _
  $region31: #{perceptual_loss_function.5} parent=0 // pred_check_branch
    %79 = sbr.rel (0) target = $region33
  $region32: #{perceptual_loss_function.5} parent=0 // pred_region
    _
  $region33: #{perceptual_loss_function.5} parent=0 // pred_fallthru
    _
  // Predicated region
  $region34: #{perceptual_loss_function.5} parent=0 // pred_check
    _
  $region35: #{perceptual_loss_function.5} parent=0 // pred_check_branch
    %81 = sbr.rel (0) target = $region37
  $region36: #{perceptual_loss_function.5} parent=0 // pred_region
    _
  $region37: #{perceptual_loss_function.5} parent=0 // pred_fallthru
    _
  // Predicated region
  $region38: #{perceptual_loss_function.5} parent=0 // pred_check
    _
  $region39: #{perceptual_loss_function.5} parent=0 // pred_check_branch
    %83 = sbr.rel (0) target = $region41
  $region40: #{perceptual_loss_function.5} parent=0 // pred_region
    _
  $region41: #{perceptual_loss_function.5} parent=0 // pred_fallthru
    _

// kernel: perceptual_loss_function.6
$region0: #{perceptual_loss_function.6}
  #allocation0 [shape = 'u32[]', space=smem, size = 0x4, offset = 0x4, fixed_abs, tag = 'smem constant byte address 0x4 - core index']
  #allocation1 [shape = 'u32[144,128]{1,0:T(1,128)}', space=vmem, size = 0x12000, scoped, tag = 'internal scratch']
  %s0 = inlined_call_operand.vmem [shape: bf16[4,342,3], index: 0, kind: input, shape index: {}]
  %s1 = inlined_call_operand.vmem [shape: bf16[9,3,16], index: 1, kind: input, shape index: {}]
  %s2 = inlined_call_operand.vmem [shape: f32[1,16], index: 2, kind: input, shape index: {}]
  %s3 = inlined_call_operand.vmem [shape: f32[288,1], index: 3, kind: input, shape index: {}]
  %s4 = inlined_call_operand.vmem [shape: bf16[4,288,16], index: 4, kind: output, shape index: {}]
  %s5 = sld [smem:[#allocation0]]
  $region49: #{perceptual_loss_function.6} parent=0
    _
  %s7 = ssub.s32 1, %s5
  %s8 = scalar_select 0, %s7, %s5
  loop: start=0, step=1, limit=6
  $region2: #{perceptual_loss_function.6} parent=0 // loop_pre_header
    _
  $region3: #{perceptual_loss_function.6} parent=0 // loop_header
    %s10 = sphi 0, %s14
    %p11 = scmp.ge.s32.totalorder %s10, 6
    %s20 = sphi 0, %s22
    %s23 = sphi 0, %s20
    %s24 = sphi 0, %s23
    %s40 = sphi 0, %s24
    %s44 = sphi 0, %s44
    %s46 = sphi 0, %s44
    %s47 = sphi 0, %s46
    %s61 = sphi 0, %s47
    %s65 = sphi 0, %s65
    %s67 = sphi 0, %s65
    %s68 = sphi 0, %s67
    %s82 = sphi 0, %s68
    %s86 = sphi 0, %s86
    %s88 = sphi 0, %s86
    %s89 = sphi 0, %s88
    %s103 = sphi 0, %s89
    %s109 = sphi 0, %s111
    %s112 = sphi 0, %s109
    %s113 = sphi 0, %s112
    %s129 = sphi 0, %s113
  $region4: #{perceptual_loss_function.6} parent=0 // loop_header_branch
    %13 = sbr.rel (%p11) target = $region8
  $region5: #{perceptual_loss_function.6} parent=0 // loop_body
    %s15 = ssub.s32 %s10, 1
    %s16 = ssub.s32 %s10, 2
    %s17 = sadd.s32 %s10, 1
    %s18 = ssub.s32 %s10, %s17
    %p19 = scmp.eq.s32.totalorder %s18, 0
    %s21 = sadd.s32 %s20, 1
    %s22 = scalar_select %p19, %s20, %s21
    %p25 = pneg %p19
    %p26 = scmp.eq.s32.totalorder %s10, 3
    %p27 = por %p25, %p26
    %p28 = scmp.ne.s32.totalorder %s20, %s23
    %p29 = scmp.eq.s32.totalorder %s10, 0
    %p30 = por %p28, %p29
    %p31 = scmp.ne.s32.totalorder %s20, %s23
    %p32 = scmp.eq.s32.totalorder %s15, 3
    %p33 = por %p31, %p32
    %p34 = scmp.ne.s32.totalorder %s23, %s24
    %p35 = scmp.eq.s32.totalorder %s15, 0
    %p36 = por %p34, %p35
    %p37 = scmp.ne.s32.totalorder %s23, %s24
    %p38 = scmp.eq.s32.totalorder %s16, 3
    %p39 = por %p37, %p38
    %p41 = scmp.ne.s32.totalorder %s24, %s40
    %p42 = scmp.eq.s32.totalorder %s16, 0
    %p43 = por %p41, %p42
    %s45 = sadd.s32 %s44, 1
    %p48 = scmp.eq.s32.totalorder %s10, 3
    %p49 = scmp.ne.s32.totalorder %s44, %s46
    %p50 = scmp.eq.s32.totalorder %s10, 0
    %p51 = por %p49, %p50
    %p52 = scmp.ne.s32.totalorder %s44, %s46
    %p53 = scmp.eq.s32.totalorder %s15, 3
    %p54 = por %p52, %p53
    %p55 = scmp.ne.s32.totalorder %s46, %s47
    %p56 = scmp.eq.s32.totalorder %s15, 0
    %p57 = por %p55, %p56
    %p58 = scmp.ne.s32.totalorder %s46, %s47
    %p59 = scmp.eq.s32.totalorder %s16, 3
    %p60 = por %p58, %p59
    %p62 = scmp.ne.s32.totalorder %s47, %s61
    %p63 = scmp.eq.s32.totalorder %s16, 0
    %p64 = por %p62, %p63
    %s66 = sadd.s32 %s65, 1
    %p69 = scmp.eq.s32.totalorder %s10, 3
    %p70 = scmp.ne.s32.totalorder %s65, %s67
    %p71 = scmp.eq.s32.totalorder %s10, 0
    %p72 = por %p70, %p71
    %p73 = scmp.ne.s32.totalorder %s65, %s67
    %p74 = scmp.eq.s32.totalorder %s15, 3
    %p75 = por %p73, %p74
    %p76 = scmp.ne.s32.totalorder %s67, %s68
    %p77 = scmp.eq.s32.totalorder %s15, 0
    %p78 = por %p76, %p77
    %p79 = scmp.ne.s32.totalorder %s67, %s68
    %p80 = scmp.eq.s32.totalorder %s16, 3
    %p81 = por %p79, %p80
    %p83 = scmp.ne.s32.totalorder %s68, %s82
    %p84 = scmp.eq.s32.totalorder %s16, 0
    %p85 = por %p83, %p84
    %s87 = sadd.s32 %s86, 1
    %p90 = scmp.eq.s32.totalorder %s10, 3
    %p91 = scmp.ne.s32.totalorder %s86, %s88
    %p92 = scmp.eq.s32.totalorder %s10, 0
    %p93 = por %p91, %p92
    %p94 = scmp.ne.s32.totalorder %s86, %s88
    %p95 = scmp.eq.s32.totalorder %s15, 3
    %p96 = por %p94, %p95
    %p97 = scmp.ne.s32.totalorder %s88, %s89
    %p98 = scmp.eq.s32.totalorder %s15, 0
    %p99 = por %p97, %p98
    %p100 = scmp.ne.s32.totalorder %s88, %s89
    %p101 = scmp.eq.s32.totalorder %s16, 3
    %p102 = por %p100, %p101
    %p104 = scmp.ne.s32.totalorder %s89, %s103
    %p105 = scmp.eq.s32.totalorder %s16, 0
    %p106 = por %p104, %p105
    %s107 = ssub.s32 %s10, %s17
    %p108 = scmp.eq.s32.totalorder %s107, 0
    %s110 = sadd.s32 %s109, 1
    %s111 = scalar_select %p108, %s109, %s110
    %p114 = pneg %p108
    %p115 = scmp.eq.s32.totalorder %s10, 3
    %p116 = por %p114, %p115
    %p117 = scmp.ne.s32.totalorder %s109, %s112
    %p118 = scmp.eq.s32.totalorder %s10, 0
    %p119 = por %p117, %p118
    %p120 = scmp.ne.s32.totalorder %s109, %s112
    %p121 = scmp.eq.s32.totalorder %s15, 3
    %p122 = por %p120, %p121
    %p123 = scmp.ne.s32.totalorder %s112, %s113
    %p124 = scmp.eq.s32.totalorder %s15, 0
    %p125 = por %p123, %p124
    %p126 = scmp.ne.s32.totalorder %s112, %s113
    %p127 = scmp.eq.s32.totalorder %s16, 3
    %p128 = por %p126, %p127
    %p130 = scmp.ne.s32.totalorder %s113, %s129
    %p131 = scmp.eq.s32.totalorder %s16, 0
    %p132 = por %p130, %p131
    %p133 = scmp.le.s32.totalorder 1, %s10
    %p134 = scmp.lt.s32.totalorder %s10, 5
    %p135 = pnand %p133, %p134
    %p136 = pneg %p135
    // Predicated region
    $region9: #{perceptual_loss_function.6} parent=5 // pred_check
      _
    $region10: #{perceptual_loss_function.6} parent=5 // pred_check_branch
      %138 = sbr.rel (%p135) target = $region12
    $region11: #{perceptual_loss_function.6} parent=5 // pred_region
      %s139 = ssub.s32 %s10, 1
      // Predicated region
      $region13: #{perceptual_loss_function.6} parent=11 // pred_check
        %p140 = pneg %p57
      $region14: #{perceptual_loss_function.6} parent=11 // pred_check_branch
        %142 = sbr.rel (%p140) target = $region16
      $region15: #{perceptual_loss_function.6} parent=11 // pred_region
        _
      $region16: #{perceptual_loss_function.6} parent=11 // pred_fallthru
        _
      // Predicated region
      $region17: #{perceptual_loss_function.6} parent=11 // pred_check
        %p143 = pneg %p78
      $region18: #{perceptual_loss_function.6} parent=11 // pred_check_branch
        %145 = sbr.rel (%p143) target = $region20
      $region19: #{perceptual_loss_function.6} parent=11 // pred_region
        _
      $region20: #{perceptual_loss_function.6} parent=11 // pred_fallthru
        _
      // Predicated region
      $region21: #{perceptual_loss_function.6} parent=11 // pred_check
        %p146 = pneg %p99
      $region22: #{perceptual_loss_function.6} parent=11 // pred_check_branch
        %148 = sbr.rel (%p146) target = $region24
      $region23: #{perceptual_loss_function.6} parent=11 // pred_region
        _
      $region24: #{perceptual_loss_function.6} parent=11 // pred_fallthru
        _
    $region12: #{perceptual_loss_function.6} parent=5 // pred_fallthru
      _
    %p149 = scmp.lt.s32.totalorder %s10, 4
    // Predicated region
    $region25: #{perceptual_loss_function.6} parent=5 // pred_check
      %p150 = pneg %p149
    $region26: #{perceptual_loss_function.6} parent=5 // pred_check_branch
      %152 = sbr.rel (%p150) target = $region28
    $region27: #{perceptual_loss_function.6} parent=5 // pred_region
      // Predicated region
      $region29: #{perceptual_loss_function.6} parent=27 // pred_check
        %p153 = pneg %p30
      $region30: #{perceptual_loss_function.6} parent=27 // pred_check_branch
        %155 = sbr.rel (%p153) target = $region32
      $region31: #{perceptual_loss_function.6} parent=27 // pred_region
        %p156 = scmp.lt.s32.totalorder %s10, 3
        %s157 = scalar_select %p156, %s10, 3
        %s158 = smul.addr %s157, 43
        %s159 = smul.addr %s158, 4
        %s160 = scalar_lea.vmem %s0, %s159
      $region32: #{perceptual_loss_function.6} parent=27 // pred_fallthru
        _
    $region28: #{perceptual_loss_function.6} parent=5 // pred_fallthru
      _
    %p161 = scmp.le.s32.totalorder 1, %s10
    %p162 = scmp.lt.s32.totalorder %s10, 5
    %p163 = pnand %p161, %p162
    %p164 = pneg %p163
    // Predicated region
    $region33: #{perceptual_loss_function.6} parent=5 // pred_check
      _
    $region34: #{perceptual_loss_function.6} parent=5 // pred_check_branch
      %166 = sbr.rel (%p163) target = $region36
    $region35: #{perceptual_loss_function.6} parent=5 // pred_region
      %s167 = ssub.s32 %s10, 1
      %p168 = scmp.lt.s32.totalorder %s15, 3
      %s169 = scalar_select %p168, %s15, 3
      %s170 = smul.addr %s169, 43
      %s171 = smul.addr %s170, 4
      %s172 = scalar_lea.vmem %s0, %s171
      %p173 = pneg %p36
      %p174 = pneg %p33
      %p175 = pneg %p57
      %p176 = pneg %p54
      %p177 = pneg %p78
      %p178 = pneg %p75
      %p179 = pneg %p99
      %p180 = pneg %p96
      %p181 = pneg %p125
      %p182 = pneg %p122
      %p183 = scmp.lt.s32.totalorder %s15, 3
      %s184 = scalar_select %p183, %s15, 3
      %s185 = smul.addr %s184, 36
      %s186 = smul.addr %s185, 4
      %s187 = scalar_lea.vmem %s4, %s186
      %p188 = scmp.lt.s32.totalorder %s15, 3
      %s189 = scalar_select %p188, %s15, 3
      %s190 = smul.addr %s189, 43
      %s191 = smul.addr %s190, 4
      %s192 = scalar_lea.vmem %s0, %s191
      %p193 = scmp.lt.s32.totalorder %s15, 3
      %s194 = scalar_select %p193, %s15, 3
      %s195 = smul.addr %s194, 36
      %s196 = smul.addr %s195, 4
      %s197 = scalar_lea.vmem %s4, %s196
      %v199 = vld [vmem:[%s192] sm:$0xf]
      %v200 = vld [vmem:[%s192 + $0x4] sm:$0xf]
      %v201 = vld [vmem:[%s192 + $0x8] sm:$0xf]
      %v202 = vld [vmem:[%s192 + $0xc] sm:$0xf]
      %v203 = vld [vmem:[%s192 + $0x10] sm:$0xf]
      %v204 = vld [vmem:[%s192 + $0x14] sm:$0xf]
      %v205 = vld [vmem:[%s192 + $0x18] sm:$0xf]
      %v206 = vld [vmem:[%s192 + $0x1c] sm:$0xf]
      %v207 = vld [vmem:[%s192 + $0x20] sm:$0xf]
      %v208 = vld [vmem:[%s192 + $0x24] sm:$0xf]
      %v209 = vld [vmem:[%s192 + $0x28] sm:$0xf]
      %v210 = vld [vmem:[%s192 + $0x2c] sm:$0xf]
      %v211 = vld [vmem:[%s192 + $0x30] sm:$0xf]
      %v212 = vld [vmem:[%s192 + $0x34] sm:$0xf]
      %v213 = vld [vmem:[%s192 + $0x38] sm:$0xf]
      %v214 = vld [vmem:[%s192 + $0x3c] sm:$0xf]
      %v215 = vld [vmem:[%s192 + $0x40] sm:$0xf]
      %v216 = vld [vmem:[%s192 + $0x44] sm:$0xf]
      %v217 = vld [vmem:[%s192 + $0x48] sm:$0xf]
      %v218 = vld [vmem:[%s192 + $0x4c] sm:$0xf]
      %v219 = vld [vmem:[%s192 + $0x50] sm:$0xf]
      %v220 = vld [vmem:[%s192 + $0x54] sm:$0xf]
      %v221 = vld [vmem:[%s192 + $0x58] sm:$0xf]
      %v222 = vld [vmem:[%s192 + $0x5c] sm:$0xf]
      %v223 = vld [vmem:[%s192 + $0x60] sm:$0xf]
      %v224 = vld [vmem:[%s192 + $0x64] sm:$0xf]
      %v225 = vld [vmem:[%s192 + $0x68] sm:$0xf]
      %v226 = vld [vmem:[%s192 + $0x6c] sm:$0xf]
      %v227 = vld [vmem:[%s192 + $0x70] sm:$0xf]
      %v228 = vld [vmem:[%s192 + $0x74] sm:$0xf]
      %v229 = vld [vmem:[%s192 + $0x78] sm:$0xf]
      %v230 = vld [vmem:[%s192 + $0x7c] sm:$0xf]
      %v231 = vld [vmem:[%s192 + $0x80] sm:$0xf]
      %v232 = vld [vmem:[%s192 + $0x84] sm:$0xf]
      %v233 = vld [vmem:[%s192 + $0x88] sm:$0xf]
      %v234 = vld [vmem:[%s192 + $0x8c] sm:$0xf]
      %v235 = vld [vmem:[%s1] sm:$0x3]
      %v236 = vld [vmem:[%s192 + $0x90] sm:$0x1]
      %s237 = scalar_lea.vmem %s1, 2
      %v238 = vld [vmem:[%s237] sm:$0x3]
      %v276 = vunpack.c.l.b16 %v199
      %v277 = vunpack.c.l.b16 %v200
      %v278 = vunpack.c.l.b16 %v201
      %v279 = vunpack.c.l.b16 %v202
      %v280 = vunpack.c.l.b16 %v203
      %v281 = vunpack.c.l.b16 %v204
      %v282 = vunpack.c.l.b16 %v205
      %v283 = vunpack.c.l.b16 %v206
      %v284 = vunpack.c.l.b16 %v207
      %v285 = vunpack.c.l.b16 %v208
      %v286 = vunpack.c.l.b16 %v209
      %v287 = vunpack.c.l.b16 %v210
      %v288 = vunpack.c.l.b16 %v211
      %v289 = vunpack.c.l.b16 %v212
      %v290 = vunpack.c.l.b16 %v213
      %v291 = vunpack.c.l.b16 %v214
      %v292 = vunpack.c.l.b16 %v215
      %v293 = vunpack.c.l.b16 %v216
      %v294 = vunpack.c.l.b16 %v217
      %v295 = vunpack.c.l.b16 %v218
      %v296 = vunpack.c.l.b16 %v219
      %v297 = vunpack.c.l.b16 %v220
      %v298 = vunpack.c.l.b16 %v221
      %v299 = vunpack.c.l.b16 %v222
      %v300 = vunpack.c.l.b16 %v223
      %v301 = vunpack.c.l.b16 %v224
      %v302 = vunpack.c.l.b16 %v225
      %v303 = vunpack.c.l.b16 %v226
      %v304 = vunpack.c.l.b16 %v227
      %v305 = vunpack.c.l.b16 %v228
      %v306 = vunpack.c.l.b16 %v229
      %v307 = vunpack.c.l.b16 %v230
      %v308 = vunpack.c.l.b16 %v231
      %v309 = vunpack.c.l.b16 %v232
      %v310 = vunpack.c.l.b16 %v233
      %v311 = vunpack.c.l.b16 %v234
      %v312 = vunpack.c.l.b16 %v236
      %v313 = vpack.c.b16 %v277, %v276
      %v314 = vpack.c.b16 %v279, %v278
      %v315 = vpack.c.b16 %v281, %v280
      %v316 = vpack.c.b16 %v283, %v282
      %v317 = vpack.c.b16 %v285, %v284
      %v318 = vpack.c.b16 %v287, %v286
      %v319 = vpack.c.b16 %v289, %v288
      %v320 = vpack.c.b16 %v291, %v290
      %v321 = vpack.c.b16 %v293, %v292
      %v322 = vpack.c.b16 %v295, %v294
      %v323 = vpack.c.b16 %v297, %v296
      %v324 = vpack.c.b16 %v299, %v298
      %v325 = vpack.c.b16 %v301, %v300
      %v326 = vpack.c.b16 %v303, %v302
      %v327 = vpack.c.b16 %v305, %v304
      %v328 = vpack.c.b16 %v307, %v306
      %v329 = vpack.c.b16 %v309, %v308
      %v330 = vpack.c.b16 %v311, %v310
      %v331 = vpack.c.b16 %v312, %v312
      %vm332 = vsmask.f32 7424
      %v334 = vshrl.u32 %v313, 16
      %v336 = vshll.u32 %v313, 16
      %v338 = vrot.slane %v336, 1
      %v339 = vor.u32 %v334, %v338
      %v341 = vshll.u32 %v314, 16
      %v343 = vrot.slane %v341, 1
      %v344 = vsel %vm332, %v339, %v343
      %v345 = vshrl.u32 %v314, 16
      %v347 = vor.u32 %v345, %v343
      %v349 = vshll.u32 %v315, 16
      %v351 = vrot.slane %v349, 1
      %v352 = vsel %vm332, %v347, %v351
      %v353 = vshrl.u32 %v315, 16
      %v355 = vor.u32 %v353, %v351
      %v357 = vshll.u32 %v316, 16
      %v359 = vrot.slane %v357, 1
      %v360 = vsel %vm332, %v355, %v359
      %v361 = vshrl.u32 %v316, 16
      %v363 = vor.u32 %v361, %v359
      %v365 = vshll.u32 %v317, 16
      %v367 = vrot.slane %v365, 1
      %v368 = vsel %vm332, %v363, %v367
      %v369 = vshrl.u32 %v317, 16
      %v371 = vor.u32 %v369, %v367
      %v373 = vshll.u32 %v318, 16
      %v375 = vrot.slane %v373, 1
      %v376 = vsel %vm332, %v371, %v375
      %v377 = vshrl.u32 %v318, 16
      %v379 = vor.u32 %v377, %v375
      %v381 = vshll.u32 %v319, 16
      %v383 = vrot.slane %v381, 1
      %v384 = vsel %vm332, %v379, %v383
      %v385 = vshrl.u32 %v319, 16
      %v387 = vor.u32 %v385, %v383
      %v389 = vshll.u32 %v320, 16
      %v391 = vrot.slane %v389, 1
      %v392 = vsel %vm332, %v387, %v391
      %v393 = vshrl.u32 %v320, 16
      %v395 = vor.u32 %v393, %v391
      %v397 = vshll.u32 %v321, 16
      %v399 = vrot.slane %v397, 1
      %v400 = vsel %vm332, %v395, %v399
      %v401 = vshrl.u32 %v321, 16
      %v403 = vor.u32 %v401, %v399
      %v405 = vshll.u32 %v322, 16
      %v407 = vrot.slane %v405, 1
      %v408 = vsel %vm332, %v403, %v407
      %v409 = vshrl.u32 %v322, 16
      %v411 = vor.u32 %v409, %v407
      %v413 = vshll.u32 %v323, 16
      %v415 = vrot.slane %v413, 1
      %v416 = vsel %vm332, %v411, %v415
      %v417 = vshrl.u32 %v323, 16
      %v419 = vor.u32 %v417, %v415
      %v421 = vshll.u32 %v324, 16
      %v423 = vrot.slane %v421, 1
      %v424 = vsel %vm332, %v419, %v423
      %v425 = vshrl.u32 %v324, 16
      %v427 = vor.u32 %v425, %v423
      %v429 = vshll.u32 %v325, 16
      %v431 = vrot.slane %v429, 1
      %v432 = vsel %vm332, %v427, %v431
      %v433 = vshrl.u32 %v325, 16
      %v435 = vor.u32 %v433, %v431
      %v437 = vshll.u32 %v326, 16
      %v439 = vrot.slane %v437, 1
      %v440 = vsel %vm332, %v435, %v439
      %v441 = vshrl.u32 %v326, 16
      %v443 = vor.u32 %v441, %v439
      %v445 = vshll.u32 %v327, 16
      %v447 = vrot.slane %v445, 1
      %v448 = vsel %vm332, %v443, %v447
      %v449 = vshrl.u32 %v327, 16
      %v451 = vor.u32 %v449, %v447
      %v453 = vshll.u32 %v328, 16
      %v455 = vrot.slane %v453, 1
      %v456 = vsel %vm332, %v451, %v455
      %v457 = vshrl.u32 %v328, 16
      %v459 = vor.u32 %v457, %v455
      %v461 = vshll.u32 %v329, 16
      %v463 = vrot.slane %v461, 1
      %v464 = vsel %vm332, %v459, %v463
      %v465 = vshrl.u32 %v329, 16
      %v467 = vor.u32 %v465, %v463
      %v469 = vshll.u32 %v330, 16
      %v471 = vrot.slane %v469, 1
      %v472 = vsel %vm332, %v467, %v471
      %v473 = vshrl.u32 %v330, 16
      %v475 = vor.u32 %v473, %v471
      %v477 = vshll.u32 %v331, 16
      %v479 = vrot.slane %v477, 1
      %v480 = vsel %vm332, %v475, %v479
      %vm481 = vcmask 23552
      %v483 = vsel %vm481, %v344, 0
      %v486 = vsel %vm481, %v352, 0
      %v489 = vsel %vm481, %v360, 0
      %v492 = vsel %vm481, %v368, 0
      %v495 = vsel %vm481, %v376, 0
      %v498 = vsel %vm481, %v384, 0
      %v501 = vsel %vm481, %v392, 0
      %v504 = vsel %vm481, %v400, 0
      %v507 = vsel %vm481, %v408, 0
      %v510 = vsel %vm481, %v416, 0
      %v513 = vsel %vm481, %v424, 0
      %v516 = vsel %vm481, %v432, 0
      %v519 = vsel %vm481, %v440, 0
      %v522 = vsel %vm481, %v448, 0
      %v525 = vsel %vm481, %v456, 0
      %v528 = vsel %vm481, %v464, 0
      %v531 = vsel %vm481, %v472, 0
      %v534 = vsel %vm481, %v480, 0
      %vm536 = vcmask 1040384
      %vm537 = vcmask 1041408
      %v538 = vsel %vm536, 4294967295, 65535
      %v539 = vsel %vm537, %v538, 0
      %v541 = vand.u32 %v238, %v539
      %543 = vmatprep.subr.bf16.mxu0 0
      %544 = vmatpush1.bf16.msra.mxu0 0
      %545 = vmatprep.subr.bf16.mxu0 0
      %546 = vmatpush1.bf16.msra.mxu0 0
      %547 = vmatprep.subr.bf16.mxu0 0
      %548 = vmatpush1.bf16.msra.mxu0 0
      %549 = vmatprep.subr.bf16.mxu0 0
      %550 = vmatpush1.bf16.msra.mxu0 0
      %551 = vmatprep.subr.bf16.mxu0 0
      %552 = vmatpush1.bf16.msra.mxu0 0
      %553 = vmatprep.subr.bf16.mxu0 0
      %554 = vmatpush1.bf16.msra.mxu0 0
      %555 = vmatprep.subr.bf16.mxu0 0
      %556 = vmatpush1.bf16.msra.mxu0 0
      %557 = vmatprep.subr.bf16.mxu0 0
      %558 = vmatpush1.bf16.msra.mxu0 %v541
      %559 = vmatprep.subr.bf16.mxu0 0
      %560 = vmatpush2.bf16.msra.mxu0 0
      %561 = vmatprep.subr.bf16.mxu0 0
      %562 = vmatpush2.bf16.msra.mxu0 0
      %563 = vmatprep.subr.bf16.mxu0 0
      %564 = vmatpush2.bf16.msra.mxu0 0
      %565 = vmatprep.subr.bf16.mxu0 0
      %566 = vmatpush2.bf16.msra.mxu0 0
      %567 = vmatprep.subr.bf16.mxu0 0
      %568 = vmatpush2.bf16.msra.mxu0 0
      %569 = vmatprep.subr.bf16.mxu0 0
      %570 = vmatpush2.bf16.msra.mxu0 0
      %571 = vmatprep.subr.bf16.mxu0 0
      %572 = vmatpush2.bf16.msra.mxu0 0
      %573 = vmatprep.subr.bf16.mxu0 0
      %574 = vmatpush2.bf16.msra.mxu0 0
      %575 = vmatprep.mubr.bf16.mxu0 0
      %576 = vmatmul.mubr.bf16.gmra.mxu0 %v483
      %v577 = vpop.f32.mrf.mxu0
      %v578 = vadd.f32 0.0, %v577
      %v579 = vpop.f32.mrf.mxu0
      %v580 = vpop.f32.mrf.mxu0
      %v581 = vadd.f32 0.0, %v580
      %v582 = vpop.f32.mrf.mxu0
      %583 = vmatprep.mubr.bf16.mxu0 0
      %584 = vmatmul.mubr.bf16.gmra.mxu0 %v486
      %v585 = vpop.f32.mrf.mxu0
      %v586 = vadd.f32 0.0, %v585
      %v587 = vpop.f32.mrf.mxu0
      %v588 = vpop.f32.mrf.mxu0
      %v589 = vadd.f32 0.0, %v588
      %v590 = vpop.f32.mrf.mxu0
      %591 = vmatprep.mubr.bf16.mxu0 0
      %592 = vmatmul.mubr.bf16.gmra.mxu0 %v489
      %v593 = vpop.f32.mrf.mxu0
      %v594 = vadd.f32 0.0, %v593
      %v595 = vpop.f32.mrf.mxu0
      %v596 = vpop.f32.mrf.mxu0
      %v597 = vadd.f32 0.0, %v596
      %v598 = vpop.f32.mrf.mxu0
      %599 = vmatprep.mubr.bf16.mxu0 0
      %600 = vmatmul.mubr.bf16.gmra.mxu0 %v492
      %v601 = vpop.f32.mrf.mxu0
      %v602 = vadd.f32 0.0, %v601
      %v603 = vpop.f32.mrf.mxu0
      %v604 = vpop.f32.mrf.mxu0
      %v605 = vadd.f32 0.0, %v604
      %v606 = vpop.f32.mrf.mxu0
      %607 = vmatprep.mubr.bf16.mxu0 0
      %608 = vmatmul.mubr.bf16.gmra.mxu0 %v495
      %v609 = vpop.f32.mrf.mxu0
      %v610 = vadd.f32 0.0, %v609
      %v611 = vpop.f32.mrf.mxu0
      %v612 = vpop.f32.mrf.mxu0
      %v613 = vadd.f32 0.0, %v612
      %v614 = vpop.f32.mrf.mxu0
      %615 = vmatprep.mubr.bf16.mxu0 0
      %616 = vmatmul.mubr.bf16.gmra.mxu0 %v498
      %v617 = vpop.f32.mrf.mxu0
      %v618 = vadd.f32 0.0, %v617
      %v619 = vpop.f32.mrf.mxu0
      %v620 = vpop.f32.mrf.mxu0
      %v621 = vadd.f32 0.0, %v620
      %v622 = vpop.f32.mrf.mxu0
      %623 = vmatprep.mubr.bf16.mxu0 0
      %624 = vmatmul.mubr.bf16.gmra.mxu0 %v501
      %v625 = vpop.f32.mrf.mxu0
      %v626 = vadd.f32 0.0, %v625
      %v627 = vpop.f32.mrf.mxu0
      %v628 = vpop.f32.mrf.mxu0
      %v629 = vadd.f32 0.0, %v628
      %v630 = vpop.f32.mrf.mxu0
      %631 = vmatprep.mubr.bf16.mxu0 0
      %632 = vmatmul.mubr.bf16.gmra.mxu0 %v504
      %v633 = vpop.f32.mrf.mxu0
      %v634 = vadd.f32 0.0, %v633
      %v635 = vpop.f32.mrf.mxu0
      %v636 = vpop.f32.mrf.mxu0
      %v637 = vadd.f32 0.0, %v636
      %v638 = vpop.f32.mrf.mxu0
      %639 = vmatprep.mubr.bf16.mxu0 0
      %640 = vmatmul.mubr.bf16.gmra.mxu0 %v507
      %v641 = vpop.f32.mrf.mxu0
      %v642 = vadd.f32 0.0, %v641
      %v643 = vpop.f32.mrf.mxu0
      %v644 = vpop.f32.mrf.mxu0
      %v645 = vadd.f32 0.0, %v644
      %v646 = vpop.f32.mrf.mxu0
      %647 = vmatprep.mubr.bf16.mxu0 0
      %648 = vmatmul.mubr.bf16.gmra.mxu0 %v510
      %v649 = vpop.f32.mrf.mxu0
      %v650 = vadd.f32 0.0, %v649
      %v651 = vpop.f32.mrf.mxu0
      %v652 = vpop.f32.mrf.mxu0
      %v653 = vadd.f32 0.0, %v652
      %v654 = vpop.f32.mrf.mxu0
      %655 = vmatprep.mubr.bf16.mxu0 0
      %656 = vmatmul.mubr.bf16.gmra.mxu0 %v513
      %v657 = vpop.f32.mrf.mxu0
      %v658 = vadd.f32 0.0, %v657
      %v659 = vpop.f32.mrf.mxu0
      %v660 = vpop.f32.mrf.mxu0
      %v661 = vadd.f32 0.0, %v660
      %v662 = vpop.f32.mrf.mxu0
      %663 = vmatprep.mubr.bf16.mxu0 0
      %664 = vmatmul.mubr.bf16.gmra.mxu0 %v516
      %v665 = vpop.f32.mrf.mxu0
      %v666 = vadd.f32 0.0, %v665
      %v667 = vpop.f32.mrf.mxu0
      %v668 = vpop.f32.mrf.mxu0
      %v669 = vadd.f32 0.0, %v668
      %v670 = vpop.f32.mrf.mxu0
      %671 = vmatprep.mubr.bf16.mxu0 0
      %672 = vmatmul.mubr.bf16.gmra.mxu0 %v519
      %v673 = vpop.f32.mrf.mxu0
      %v674 = vadd.f32 0.0, %v673
      %v675 = vpop.f32.mrf.mxu0
      %v676 = vpop.f32.mrf.mxu0
      %v677 = vadd.f32 0.0, %v676
      %v678 = vpop.f32.mrf.mxu0
      %679 = vmatprep.mubr.bf16.mxu0 0
      %680 = vmatmul.mubr.bf16.gmra.mxu0 %v522
      %v681 = vpop.f32.mrf.mxu0
      %v682 = vadd.f32 0.0, %v681
      %v683 = vpop.f32.mrf.mxu0
      %v684 = vpop.f32.mrf.mxu0
      %v685 = vadd.f32 0.0, %v684
      %v686 = vpop.f32.mrf.mxu0
      %687 = vmatprep.mubr.bf16.mxu0 0
      %688 = vmatmul.mubr.bf16.gmra.mxu0 %v525
      %v689 = vpop.f32.mrf.mxu0
      %v690 = vadd.f32 0.0, %v689
      %v691 = vpop.f32.mrf.mxu0
      %v692 = vpop.f32.mrf.mxu0
      %v693 = vadd.f32 0.0, %v692
      %v694 = vpop.f32.mrf.mxu0
      %695 = vmatprep.mubr.bf16.mxu0 0
      %696 = vmatmul.mubr.bf16.gmra.mxu0 %v528
      %v697 = vpop.f32.mrf.mxu0
      %v698 = vadd.f32 0.0, %v697
      %v699 = vpop.f32.mrf.mxu0
      %v700 = vpop.f32.mrf.mxu0
      %v701 = vadd.f32 0.0, %v700
      %v702 = vpop.f32.mrf.mxu0
      %703 = vmatprep.mubr.bf16.mxu0 0
      %704 = vmatmul.mubr.bf16.gmra.mxu0 %v531
      %v705 = vpop.f32.mrf.mxu0
      %v706 = vadd.f32 0.0, %v705
      %v707 = vpop.f32.mrf.mxu0
      %v708 = vpop.f32.mrf.mxu0
      %v709 = vadd.f32 0.0, %v708
      %v710 = vpop.f32.mrf.mxu0
      %711 = vmatprep.mubr.bf16.mxu0 0
      %712 = vmatmul.mubr.bf16.gmra.mxu0 %v534
      %v713 = vpop.f32.mrf.mxu0
      %v714 = vadd.f32 0.0, %v713
      %v715 = vpop.f32.mrf.mxu0
      %v716 = vpop.f32.mrf.mxu0
      %v717 = vadd.f32 0.0, %v716
      %v718 = vpop.f32.mrf.mxu0
      %719 = vdwg.mxu0
      %v720 = vsel %vm481, %v313, 0
      %v722 = vsel %vm481, %v314, 0
      %v724 = vsel %vm481, %v315, 0
      %v726 = vsel %vm481, %v316, 0
      %v728 = vsel %vm481, %v317, 0
      %v730 = vsel %vm481, %v318, 0
      %v732 = vsel %vm481, %v319, 0
      %v734 = vsel %vm481, %v320, 0
      %v736 = vsel %vm481, %v321, 0
      %v738 = vsel %vm481, %v322, 0
      %v740 = vsel %vm481, %v323, 0
      %v742 = vsel %vm481, %v324, 0
      %v744 = vsel %vm481, %v325, 0
      %v746 = vsel %vm481, %v326, 0
      %v748 = vsel %vm481, %v327, 0
      %v750 = vsel %vm481, %v328, 0
      %v752 = vsel %vm481, %v329, 0
      %v754 = vsel %vm481, %v330, 0
      %v757 = vand.u32 %v235, %v539
      %759 = vmatprep.subr.bf16.mxu0 0
      %760 = vmatpush1.bf16.msra.mxu0 0
      %761 = vmatprep.subr.bf16.mxu0 0
      %762 = vmatpush1.bf16.msra.mxu0 0
      %763 = vmatprep.subr.bf16.mxu0 0
      %764 = vmatpush1.bf16.msra.mxu0 0
      %765 = vmatprep.subr.bf16.mxu0 0
      %766 = vmatpush1.bf16.msra.mxu0 0
      %767 = vmatprep.subr.bf16.mxu0 0
      %768 = vmatpush1.bf16.msra.mxu0 0
      %769 = vmatprep.subr.bf16.mxu0 0
      %770 = vmatpush1.bf16.msra.mxu0 0
      %771 = vmatprep.subr.bf16.mxu0 0
      %772 = vmatpush1.bf16.msra.mxu0 0
      %773 = vmatprep.subr.bf16.mxu0 0
      %774 = vmatpush1.bf16.msra.mxu0 %v757
      %775 = vmatprep.subr.bf16.mxu0 0
      %776 = vmatpush2.bf16.msra.mxu0 0
      %777 = vmatprep.subr.bf16.mxu0 0
      %778 = vmatpush2.bf16.msra.mxu0 0
      %779 = vmatprep.subr.bf16.mxu0 0
      %780 = vmatpush2.bf16.msra.mxu0 0
      %781 = vmatprep.subr.bf16.mxu0 0
      %782 = vmatpush2.bf16.msra.mxu0 0
      %783 = vmatprep.subr.bf16.mxu0 0
      %784 = vmatpush2.bf16.msra.mxu0 0
      %785 = vmatprep.subr.bf16.mxu0 0
      %786 = vmatpush2.bf16.msra.mxu0 0
      %787 = vmatprep.subr.bf16.mxu0 0
      %788 = vmatpush2.bf16.msra.mxu0 0
      %789 = vmatprep.subr.bf16.mxu0 0
      %790 = vmatpush2.bf16.msra.mxu0 0
      %791 = vmatprep.mubr.bf16.mxu0 0
      %792 = vmatmul.mubr.bf16.gmra.mxu0 %v720
      %v793 = vpop.f32.mrf.mxu0
      %v794 = vadd.f32 %v578, %v793
      %v795 = vpop.f32.mrf.mxu0
      %v796 = vpop.f32.mrf.mxu0
      %v797 = vadd.f32 %v581, %v796
      %v798 = vpop.f32.mrf.mxu0
      %799 = vmatprep.mubr.bf16.mxu0 0
      %800 = vmatmul.mubr.bf16.gmra.mxu0 %v722
      %v801 = vpop.f32.mrf.mxu0
      %v802 = vadd.f32 %v586, %v801
      %v803 = vpop.f32.mrf.mxu0
      %v804 = vpop.f32.mrf.mxu0
      %v805 = vadd.f32 %v589, %v804
      %v806 = vpop.f32.mrf.mxu0
      %807 = vmatprep.mubr.bf16.mxu0 0
      %808 = vmatmul.mubr.bf16.gmra.mxu0 %v724
      %v809 = vpop.f32.mrf.mxu0
      %v810 = vadd.f32 %v594, %v809
      %v811 = vpop.f32.mrf.mxu0
      %v812 = vpop.f32.mrf.mxu0
      %v813 = vadd.f32 %v597, %v812
      %v814 = vpop.f32.mrf.mxu0
      %815 = vmatprep.mubr.bf16.mxu0 0
      %816 = vmatmul.mubr.bf16.gmra.mxu0 %v726
      %v817 = vpop.f32.mrf.mxu0
      %v818 = vadd.f32 %v602, %v817
      %v819 = vpop.f32.mrf.mxu0
      %v820 = vpop.f32.mrf.mxu0
      %v821 = vadd.f32 %v605, %v820
      %v822 = vpop.f32.mrf.mxu0
      %823 = vmatprep.mubr.bf16.mxu0 0
      %824 = vmatmul.mubr.bf16.gmra.mxu0 %v728
      %v825 = vpop.f32.mrf.mxu0
      %v826 = vadd.f32 %v610, %v825
      %v827 = vpop.f32.mrf.mxu0
      %v828 = vpop.f32.mrf.mxu0
      %v829 = vadd.f32 %v613, %v828
      %v830 = vpop.f32.mrf.mxu0
      %831 = vmatprep.mubr.bf16.mxu0 0
      %832 = vmatmul.mubr.bf16.gmra.mxu0 %v730
      %v833 = vpop.f32.mrf.mxu0
      %v834 = vadd.f32 %v618, %v833
      %v835 = vpop.f32.mrf.mxu0
      %v836 = vpop.f32.mrf.mxu0
      %v837 = vadd.f32 %v621, %v836
      %v838 = vpop.f32.mrf.mxu0
      %839 = vmatprep.mubr.bf16.mxu0 0
      %840 = vmatmul.mubr.bf16.gmra.mxu0 %v732
      %v841 = vpop.f32.mrf.mxu0
      %v842 = vadd.f32 %v626, %v841
      %v843 = vpop.f32.mrf.mxu0
      %v844 = vpop.f32.mrf.mxu0
      %v845 = vadd.f32 %v629, %v844
      %v846 = vpop.f32.mrf.mxu0
      %847 = vmatprep.mubr.bf16.mxu0 0
      %848 = vmatmul.mubr.bf16.gmra.mxu0 %v734
      %v849 = vpop.f32.mrf.mxu0
      %v850 = vadd.f32 %v634, %v849
      %v851 = vpop.f32.mrf.mxu0
      %v852 = vpop.f32.mrf.mxu0
      %v853 = vadd.f32 %v637, %v852
      %v854 = vpop.f32.mrf.mxu0
      %855 = vmatprep.mubr.bf16.mxu0 0
      %856 = vmatmul.mubr.bf16.gmra.mxu0 %v736
      %v857 = vpop.f32.mrf.mxu0
      %v858 = vadd.f32 %v642, %v857
      %v859 = vpop.f32.mrf.mxu0
      %v860 = vpop.f32.mrf.mxu0
      %v861 = vadd.f32 %v645, %v860
      %v862 = vpop.f32.mrf.mxu0
      %863 = vmatprep.mubr.bf16.mxu0 0
      %864 = vmatmul.mubr.bf16.gmra.mxu0 %v738
      %v865 = vpop.f32.mrf.mxu0
      %v866 = vadd.f32 %v650, %v865
      %v867 = vpop.f32.mrf.mxu0
      %v868 = vpop.f32.mrf.mxu0
      %v869 = vadd.f32 %v653, %v868
      %v870 = vpop.f32.mrf.mxu0
      %871 = vmatprep.mubr.bf16.mxu0 0
      %872 = vmatmul.mubr.bf16.gmra.mxu0 %v740
      %v873 = vpop.f32.mrf.mxu0
      %v874 = vadd.f32 %v658, %v873
      %v875 = vpop.f32.mrf.mxu0
      %v876 = vpop.f32.mrf.mxu0
      %v877 = vadd.f32 %v661, %v876
      %v878 = vpop.f32.mrf.mxu0
      %879 = vmatprep.mubr.bf16.mxu0 0
      %880 = vmatmul.mubr.bf16.gmra.mxu0 %v742
      %v881 = vpop.f32.mrf.mxu0
      %v882 = vadd.f32 %v666, %v881
      %v883 = vpop.f32.mrf.mxu0
      %v884 = vpop.f32.mrf.mxu0
      %v885 = vadd.f32 %v669, %v884
      %v886 = vpop.f32.mrf.mxu0
      %887 = vmatprep.mubr.bf16.mxu0 0
      %888 = vmatmul.mubr.bf16.gmra.mxu0 %v744
      %v889 = vpop.f32.mrf.mxu0
      %v890 = vadd.f32 %v674, %v889
      %v891 = vpop.f32.mrf.mxu0
      %v892 = vpop.f32.mrf.mxu0
      %v893 = vadd.f32 %v677, %v892
      %v894 = vpop.f32.mrf.mxu0
      %895 = vmatprep.mubr.bf16.mxu0 0
      %896 = vmatmul.mubr.bf16.gmra.mxu0 %v746
      %v897 = vpop.f32.mrf.mxu0
      %v898 = vadd.f32 %v682, %v897
      %v899 = vpop.f32.mrf.mxu0
      %v900 = vpop.f32.mrf.mxu0
      %v901 = vadd.f32 %v685, %v900
      %v902 = vpop.f32.mrf.mxu0
      %903 = vmatprep.mubr.bf16.mxu0 0
      %904 = vmatmul.mubr.bf16.gmra.mxu0 %v748
      %v905 = vpop.f32.mrf.mxu0
      %v906 = vadd.f32 %v690, %v905
      %v907 = vpop.f32.mrf.mxu0
      %v908 = vpop.f32.mrf.mxu0
      %v909 = vadd.f32 %v693, %v908
      %v910 = vpop.f32.mrf.mxu0
      %911 = vmatprep.mubr.bf16.mxu0 0
      %912 = vmatmul.mubr.bf16.gmra.mxu0 %v750
      %v913 = vpop.f32.mrf.mxu0
      %v914 = vadd.f32 %v698, %v913
      %v915 = vpop.f32.mrf.mxu0
      %v916 = vpop.f32.mrf.mxu0
      %v917 = vadd.f32 %v701, %v916
      %v918 = vpop.f32.mrf.mxu0
      %919 = vmatprep.mubr.bf16.mxu0 0
      %920 = vmatmul.mubr.bf16.gmra.mxu0 %v752
      %v921 = vpop.f32.mrf.mxu0
      %v922 = vadd.f32 %v706, %v921
      %v923 = vpop.f32.mrf.mxu0
      %v924 = vpop.f32.mrf.mxu0
      %v925 = vadd.f32 %v709, %v924
      %v926 = vpop.f32.mrf.mxu0
      %927 = vmatprep.mubr.bf16.mxu0 0
      %928 = vmatmul.mubr.bf16.gmra.mxu0 %v754
      %v929 = vpop.f32.mrf.mxu0
      %v930 = vadd.f32 %v714, %v929
      %v931 = vpop.f32.mrf.mxu0
      %v932 = vpop.f32.mrf.mxu0
      %v933 = vadd.f32 %v717, %v932
      %v934 = vpop.f32.mrf.mxu0
      %935 = vdwg.mxu0
      %v936 = vld [vmem:[%s192] sm:$0xe]
      %s937 = scalar_lea.vmem %s1, 4
      %v938 = vld [vmem:[%s937] sm:$0x3]
      %v940 = vunpack.c.l.b16 %v936
      %v941 = vpack.c.b16 %v277, %v940
      %vm942 = vcmask 1046528
      %v943 = vrot.slane %v941, 1
      %v944 = vrot.slane %v314, 1
      %v945 = vsel %vm942, %v943, %v944
      %v946 = vrot.slane %v315, 1
      %v947 = vsel %vm942, %v944, %v946
      %v948 = vrot.slane %v316, 1
      %v949 = vsel %vm942, %v946, %v948
      %v950 = vrot.slane %v317, 1
      %v951 = vsel %vm942, %v948, %v950
      %v952 = vrot.slane %v318, 1
      %v953 = vsel %vm942, %v950, %v952
      %v954 = vrot.slane %v319, 1
      %v955 = vsel %vm942, %v952, %v954
      %v956 = vrot.slane %v320, 1
      %v957 = vsel %vm942, %v954, %v956
      %v958 = vrot.slane %v321, 1
      %v959 = vsel %vm942, %v956, %v958
      %v960 = vrot.slane %v322, 1
      %v961 = vsel %vm942, %v958, %v960
      %v962 = vrot.slane %v323, 1
      %v963 = vsel %vm942, %v960, %v962
      %v964 = vrot.slane %v324, 1
      %v965 = vsel %vm942, %v962, %v964
      %v966 = vrot.slane %v325, 1
      %v967 = vsel %vm942, %v964, %v966
      %v968 = vrot.slane %v326, 1
      %v969 = vsel %vm942, %v966, %v968
      %v970 = vrot.slane %v327, 1
      %v971 = vsel %vm942, %v968, %v970
      %v972 = vrot.slane %v328, 1
      %v973 = vsel %vm942, %v970, %v972
      %v974 = vrot.slane %v329, 1
      %v975 = vsel %vm942, %v972, %v974
      %v976 = vrot.slane %v330, 1
      %v977 = vsel %vm942, %v974, %v976
      %v978 = vrot.slane %v331, 1
      %v979 = vsel %vm942, %v976, %v978
      %v981 = vsel %vm481, %v945, 0
      %v984 = vsel %vm481, %v947, 0
      %v987 = vsel %vm481, %v949, 0
      %v990 = vsel %vm481, %v951, 0
      %v993 = vsel %vm481, %v953, 0
      %v996 = vsel %vm481, %v955, 0
      %v999 = vsel %vm481, %v957, 0
      %v1002 = vsel %vm481, %v959, 0
      %v1005 = vsel %vm481, %v961, 0
      %v1008 = vsel %vm481, %v963, 0
      %v1011 = vsel %vm481, %v965, 0
      %v1014 = vsel %vm481, %v967, 0
      %v1017 = vsel %vm481, %v969, 0
      %v1020 = vsel %vm481, %v971, 0
      %v1023 = vsel %vm481, %v973, 0
      %v1026 = vsel %vm481, %v975, 0
      %v1029 = vsel %vm481, %v977, 0
      %v1032 = vsel %vm481, %v979, 0
      %v1035 = vand.u32 %v938, %v539
      %1037 = vmatprep.subr.bf16.mxu0 0
      %1038 = vmatpush1.bf16.msra.mxu0 0
      %1039 = vmatprep.subr.bf16.mxu0 0
      %1040 = vmatpush1.bf16.msra.mxu0 0
      %1041 = vmatprep.subr.bf16.mxu0 0
      %1042 = vmatpush1.bf16.msra.mxu0 0
      %1043 = vmatprep.subr.bf16.mxu0 0
      %1044 = vmatpush1.bf16.msra.mxu0 0
      %1045 = vmatprep.subr.bf16.mxu0 0
      %1046 = vmatpush1.bf16.msra.mxu0 0
      %1047 = vmatprep.subr.bf16.mxu0 0
      %1048 = vmatpush1.bf16.msra.mxu0 0
      %1049 = vmatprep.subr.bf16.mxu0 0
      %1050 = vmatpush1.bf16.msra.mxu0 0
      %1051 = vmatprep.subr.bf16.mxu0 0
      %1052 = vmatpush1.bf16.msra.mxu0 %v1035
      %1053 = vmatprep.subr.bf16.mxu0 0
      %1054 = vmatpush2.bf16.msra.mxu0 0
      %1055 = vmatprep.subr.bf16.mxu0 0
      %1056 = vmatpush2.bf16.msra.mxu0 0
      %1057 = vmatprep.subr.bf16.mxu0 0
      %1058 = vmatpush2.bf16.msra.mxu0 0
      %1059 = vmatprep.subr.bf16.mxu0 0
      %1060 = vmatpush2.bf16.msra.mxu0 0
      %1061 = vmatprep.subr.bf16.mxu0 0
      %1062 = vmatpush2.bf16.msra.mxu0 0
      %1063 = vmatprep.subr.bf16.mxu0 0
      %1064 = vmatpush2.bf16.msra.mxu0 0
      %1065 = vmatprep.subr.bf16.mxu0 0
      %1066 = vmatpush2.bf16.msra.mxu0 0
      %1067 = vmatprep.subr.bf16.mxu0 0
      %1068 = vmatpush2.bf16.msra.mxu0 0
      %1069 = vmatprep.mubr.bf16.mxu0 0
      %1070 = vmatmul.mubr.bf16.gmra.mxu0 %v981
      %v1071 = vpop.f32.mrf.mxu0
      %v1072 = vadd.f32 0.0, %v1071
      %v1073 = vpop.f32.mrf.mxu0
      %v1074 = vpop.f32.mrf.mxu0
      %v1075 = vadd.f32 0.0, %v1074
      %v1076 = vpop.f32.mrf.mxu0
      %1077 = vmatprep.mubr.bf16.mxu0 0
      %1078 = vmatmul.mubr.bf16.gmra.mxu0 %v984
      %v1079 = vpop.f32.mrf.mxu0
      %v1080 = vadd.f32 0.0, %v1079
      %v1081 = vpop.f32.mrf.mxu0
      %v1082 = vpop.f32.mrf.mxu0
      %v1083 = vadd.f32 0.0, %v1082
      %v1084 = vpop.f32.mrf.mxu0
      %1085 = vmatprep.mubr.bf16.mxu0 0
      %1086 = vmatmul.mubr.bf16.gmra.mxu0 %v987
      %v1087 = vpop.f32.mrf.mxu0
      %v1088 = vadd.f32 0.0, %v1087
      %v1089 = vpop.f32.mrf.mxu0
      %v1090 = vpop.f32.mrf.mxu0
      %v1091 = vadd.f32 0.0, %v1090
      %v1092 = vpop.f32.mrf.mxu0
      %1093 = vmatprep.mubr.bf16.mxu0 0
      %1094 = vmatmul.mubr.bf16.gmra.mxu0 %v990
      %v1095 = vpop.f32.mrf.mxu0
      %v1096 = vadd.f32 0.0, %v1095
      %v1097 = vpop.f32.mrf.mxu0
      %v1098 = vpop.f32.mrf.mxu0
      %v1099 = vadd.f32 0.0, %v1098
      %v1100 = vpop.f32.mrf.mxu0
      %1101 = vmatprep.mubr.bf16.mxu0 0
      %1102 = vmatmul.mubr.bf16.gmra.mxu0 %v993
      %v1103 = vpop.f32.mrf.mxu0
      %v1104 = vadd.f32 0.0, %v1103
      %v1105 = vpop.f32.mrf.mxu0
      %v1106 = vpop.f32.mrf.mxu0
      %v1107 = vadd.f32 0.0, %v1106
      %v1108 = vpop.f32.mrf.mxu0
      %1109 = vmatprep.mubr.bf16.mxu0 0
      %1110 = vmatmul.mubr.bf16.gmra.mxu0 %v996
      %v1111 = vpop.f32.mrf.mxu0
      %v1112 = vadd.f32 0.0, %v1111
      %v1113 = vpop.f32.mrf.mxu0
      %v1114 = vpop.f32.mrf.mxu0
      %v1115 = vadd.f32 0.0, %v1114
      %v1116 = vpop.f32.mrf.mxu0
      %1117 = vmatprep.mubr.bf16.mxu0 0
      %1118 = vmatmul.mubr.bf16.gmra.mxu0 %v999
      %v1119 = vpop.f32.mrf.mxu0
      %v1120 = vadd.f32 0.0, %v1119
      %v1121 = vpop.f32.mrf.mxu0
      %v1122 = vpop.f32.mrf.mxu0
      %v1123 = vadd.f32 0.0, %v1122
      %v1124 = vpop.f32.mrf.mxu0
      %1125 = vmatprep.mubr.bf16.mxu0 0
      %1126 = vmatmul.mubr.bf16.gmra.mxu0 %v1002
      %v1127 = vpop.f32.mrf.mxu0
      %v1128 = vadd.f32 0.0, %v1127
      %v1129 = vpop.f32.mrf.mxu0
      %v1130 = vpop.f32.mrf.mxu0
      %v1131 = vadd.f32 0.0, %v1130
      %v1132 = vpop.f32.mrf.mxu0
      %1133 = vmatprep.mubr.bf16.mxu0 0
      %1134 = vmatmul.mubr.bf16.gmra.mxu0 %v1005
      %v1135 = vpop.f32.mrf.mxu0
      %v1136 = vadd.f32 0.0, %v1135
      %v1137 = vpop.f32.mrf.mxu0
      %v1138 = vpop.f32.mrf.mxu0
      %v1139 = vadd.f32 0.0, %v1138
      %v1140 = vpop.f32.mrf.mxu0
      %1141 = vmatprep.mubr.bf16.mxu0 0
      %1142 = vmatmul.mubr.bf16.gmra.mxu0 %v1008
      %v1143 = vpop.f32.mrf.mxu0
      %v1144 = vadd.f32 0.0, %v1143
      %v1145 = vpop.f32.mrf.mxu0
      %v1146 = vpop.f32.mrf.mxu0
      %v1147 = vadd.f32 0.0, %v1146
      %v1148 = vpop.f32.mrf.mxu0
      %1149 = vmatprep.mubr.bf16.mxu0 0
      %1150 = vmatmul.mubr.bf16.gmra.mxu0 %v1011
      %v1151 = vpop.f32.mrf.mxu0
      %v1152 = vadd.f32 0.0, %v1151
      %v1153 = vpop.f32.mrf.mxu0
      %v1154 = vpop.f32.mrf.mxu0
      %v1155 = vadd.f32 0.0, %v1154
      %v1156 = vpop.f32.mrf.mxu0
      %1157 = vmatprep.mubr.bf16.mxu0 0
      %1158 = vmatmul.mubr.bf16.gmra.mxu0 %v1014
      %v1159 = vpop.f32.mrf.mxu0
      %v1160 = vadd.f32 0.0, %v1159
      %v1161 = vpop.f32.mrf.mxu0
      %v1162 = vpop.f32.mrf.mxu0
      %v1163 = vadd.f32 0.0, %v1162
      %v1164 = vpop.f32.mrf.mxu0
      %1165 = vmatprep.mubr.bf16.mxu0 0
      %1166 = vmatmul.mubr.bf16.gmra.mxu0 %v1017
      %v1167 = vpop.f32.mrf.mxu0
      %v1168 = vadd.f32 0.0, %v1167
      %v1169 = vpop.f32.mrf.mxu0
      %v1170 = vpop.f32.mrf.mxu0
      %v1171 = vadd.f32 0.0, %v1170
      %v1172 = vpop.f32.mrf.mxu0
      %1173 = vmatprep.mubr.bf16.mxu0 0
      %1174 = vmatmul.mubr.bf16.gmra.mxu0 %v1020
      %v1175 = vpop.f32.mrf.mxu0
      %v1176 = vadd.f32 0.0, %v1175
      %v1177 = vpop.f32.mrf.mxu0
      %v1178 = vpop.f32.mrf.mxu0
      %v1179 = vadd.f32 0.0, %v1178
      %v1180 = vpop.f32.mrf.mxu0
      %1181 = vmatprep.mubr.bf16.mxu0 0
      %1182 = vmatmul.mubr.bf16.gmra.mxu0 %v1023
      %v1183 = vpop.f32.mrf.mxu0
      %v1184 = vadd.f32 0.0, %v1183
      %v1185 = vpop.f32.mrf.mxu0
      %v1186 = vpop.f32.mrf.mxu0
      %v1187 = vadd.f32 0.0, %v1186
      %v1188 = vpop.f32.mrf.mxu0
      %1189 = vmatprep.mubr.bf16.mxu0 0
      %1190 = vmatmul.mubr.bf16.gmra.mxu0 %v1026
      %v1191 = vpop.f32.mrf.mxu0
      %v1192 = vadd.f32 0.0, %v1191
      %v1193 = vpop.f32.mrf.mxu0
      %v1194 = vpop.f32.mrf.mxu0
      %v1195 = vadd.f32 0.0, %v1194
      %v1196 = vpop.f32.mrf.mxu0
      %1197 = vmatprep.mubr.bf16.mxu0 0
      %1198 = vmatmul.mubr.bf16.gmra.mxu0 %v1029
      %v1199 = vpop.f32.mrf.mxu0
      %v1200 = vadd.f32 0.0, %v1199
      %v1201 = vpop.f32.mrf.mxu0
      %v1202 = vpop.f32.mrf.mxu0
      %v1203 = vadd.f32 0.0, %v1202
      %v1204 = vpop.f32.mrf.mxu0
      %1205 = vmatprep.mubr.bf16.mxu0 0
      %1206 = vmatmul.mubr.bf16.gmra.mxu0 %v1032
      %v1207 = vpop.f32.mrf.mxu0
      %v1208 = vadd.f32 0.0, %v1207
      %v1209 = vpop.f32.mrf.mxu0
      %v1210 = vpop.f32.mrf.mxu0
      %v1211 = vadd.f32 0.0, %v1210
      %v1212 = vpop.f32.mrf.mxu0
      %1213 = vdwg.mxu0
      %v1214 = vadd.f32 %v794, %v1072
      %v1215 = vadd.f32 %v797, %v1075
      %v1216 = vadd.f32 %v802, %v1080
      %v1217 = vadd.f32 %v805, %v1083
      %v1218 = vadd.f32 %v810, %v1088
      %v1219 = vadd.f32 %v813, %v1091
      %v1220 = vadd.f32 %v818, %v1096
      %v1221 = vadd.f32 %v821, %v1099
      %v1222 = vadd.f32 %v826, %v1104
      %v1223 = vadd.f32 %v829, %v1107
      %v1224 = vadd.f32 %v834, %v1112
      %v1225 = vadd.f32 %v837, %v1115
      %v1226 = vadd.f32 %v842, %v1120
      %v1227 = vadd.f32 %v845, %v1123
      %v1228 = vadd.f32 %v850, %v1128
      %v1229 = vadd.f32 %v853, %v1131
      %v1230 = vadd.f32 %v858, %v1136
      %v1231 = vadd.f32 %v861, %v1139
      %v1232 = vadd.f32 %v866, %v1144
      %v1233 = vadd.f32 %v869, %v1147
      %v1234 = vadd.f32 %v874, %v1152
      %v1235 = vadd.f32 %v877, %v1155
      %v1236 = vadd.f32 %v882, %v1160
      %v1237 = vadd.f32 %v885, %v1163
      %v1238 = vadd.f32 %v890, %v1168
      %v1239 = vadd.f32 %v893, %v1171
      %v1240 = vadd.f32 %v898, %v1176
      %v1241 = vadd.f32 %v901, %v1179
      %v1242 = vadd.f32 %v906, %v1184
      %v1243 = vadd.f32 %v909, %v1187
      %v1244 = vadd.f32 %v914, %v1192
      %v1245 = vadd.f32 %v917, %v1195
      %v1246 = vadd.f32 %v922, %v1200
      %v1247 = vadd.f32 %v925, %v1203
      %v1248 = vadd.f32 %v930, %v1208
      %v1249 = vadd.f32 %v933, %v1211
      %v1250 = vld [vmem:[%s192 + $0x8] sm:$0xe]
      %v1251 = vld [vmem:[%s192 + $0xc] sm:$0xf]
      %v1252 = vld [vmem:[%s192 + $0x10] sm:$0xf]
      %v1253 = vld [vmem:[%s192 + $0x14] sm:$0xf]
      %v1254 = vld [vmem:[%s192 + $0x18] sm:$0xf]
      %v1255 = vld [vmem:[%s192 + $0x1c] sm:$0xf]
      %v1256 = vld [vmem:[%s192 + $0x20] sm:$0xf]
      %v1257 = vld [vmem:[%s192 + $0x24] sm:$0xf]
      %v1258 = vld [vmem:[%s192 + $0x28] sm:$0xf]
      %v1259 = vld [vmem:[%s192 + $0x2c] sm:$0xf]
      %v1260 = vld [vmem:[%s192 + $0x30] sm:$0xf]
      %v1261 = vld [vmem:[%s192 + $0x34] sm:$0xf]
      %v1262 = vld [vmem:[%s192 + $0x38] sm:$0xf]
      %v1263 = vld [vmem:[%s192 + $0x3c] sm:$0xf]
      %v1264 = vld [vmem:[%s192 + $0x40] sm:$0xf]
      %v1265 = vld [vmem:[%s192 + $0x44] sm:$0xf]
      %v1266 = vld [vmem:[%s192 + $0x48] sm:$0xf]
      %v1267 = vld [vmem:[%s192 + $0x4c] sm:$0xf]
      %v1268 = vld [vmem:[%s192 + $0x50] sm:$0xf]
      %v1269 = vld [vmem:[%s192 + $0x54] sm:$0xf]
      %v1270 = vld [vmem:[%s192 + $0x58] sm:$0xf]
      %v1271 = vld [vmem:[%s192 + $0x5c] sm:$0xf]
      %v1272 = vld [vmem:[%s192 + $0x60] sm:$0xf]
      %v1273 = vld [vmem:[%s192 + $0x64] sm:$0xf]
      %v1274 = vld [vmem:[%s192 + $0x68] sm:$0xf]
      %v1275 = vld [vmem:[%s192 + $0x6c] sm:$0xf]
      %v1276 = vld [vmem:[%s192 + $0x70] sm:$0xf]
      %v1277 = vld [vmem:[%s192 + $0x74] sm:$0xf]
      %v1278 = vld [vmem:[%s192 + $0x78] sm:$0xf]
      %v1279 = vld [vmem:[%s192 + $0x7c] sm:$0xf]
      %v1280 = vld [vmem:[%s192 + $0x80] sm:$0xf]
      %v1281 = vld [vmem:[%s192 + $0x84] sm:$0xf]
      %v1282 = vld [vmem:[%s192 + $0x88] sm:$0xf]
      %v1283 = vld [vmem:[%s192 + $0x8c] sm:$0xf]
      %v1284 = vld [vmem:[%s192 + $0x90] sm:$0xf]
      %v1285 = vld [vmem:[%s192 + $0x94] sm:$0xf]
      %v1286 = vld [vmem:[%s192 + $0x98] sm:$0x1]
      %s1287 = scalar_lea.vmem %s1, 6
      %v1288 = vld [vmem:[%s1287] sm:$0x3]
      %v1326 = vunpack.c.l.b16 %v1250
      %v1327 = vunpack.c.l.b16 %v1251
      %v1328 = vunpack.c.l.b16 %v1252
      %v1329 = vunpack.c.l.b16 %v1253
      %v1330 = vunpack.c.l.b16 %v1254
      %v1331 = vunpack.c.l.b16 %v1255
      %v1332 = vunpack.c.l.b16 %v1256
      %v1333 = vunpack.c.l.b16 %v1257
      %v1334 = vunpack.c.l.b16 %v1258
      %v1335 = vunpack.c.l.b16 %v1259
      %v1336 = vunpack.c.l.b16 %v1260
      %v1337 = vunpack.c.l.b16 %v1261
      %v1338 = vunpack.c.l.b16 %v1262
      %v1339 = vunpack.c.l.b16 %v1263
      %v1340 = vunpack.c.l.b16 %v1264
      %v1341 = vunpack.c.l.b16 %v1265
      %v1342 = vunpack.c.l.b16 %v1266
      %v1343 = vunpack.c.l.b16 %v1267
      %v1344 = vunpack.c.l.b16 %v1268
      %v1345 = vunpack.c.l.b16 %v1269
      %v1346 = vunpack.c.l.b16 %v1270
      %v1347 = vunpack.c.l.b16 %v1271
      %v1348 = vunpack.c.l.b16 %v1272
      %v1349 = vunpack.c.l.b16 %v1273
      %v1350 = vunpack.c.l.b16 %v1274
      %v1351 = vunpack.c.l.b16 %v1275
      %v1352 = vunpack.c.l.b16 %v1276
      %v1353 = vunpack.c.l.b16 %v1277
      %v1354 = vunpack.c.l.b16 %v1278
      %v1355 = vunpack.c.l.b16 %v1279
      %v1356 = vunpack.c.l.b16 %v1280
      %v1357 = vunpack.c.l.b16 %v1281
      %v1358 = vunpack.c.l.b16 %v1282
      %v1359 = vunpack.c.l.b16 %v1283
      %v1360 = vunpack.c.l.b16 %v1284
      %v1361 = vunpack.c.l.b16 %v1285
      %v1362 = vunpack.c.l.b16 %v1286
      %v1363 = vpack.c.b16 %v1327, %v1326
      %v1364 = vpack.c.b16 %v1329, %v1328
      %v1365 = vpack.c.b16 %v1331, %v1330
      %v1366 = vpack.c.b16 %v1333, %v1332
      %v1367 = vpack.c.b16 %v1335, %v1334
      %v1368 = vpack.c.b16 %v1337, %v1336
      %v1369 = vpack.c.b16 %v1339, %v1338
      %v1370 = vpack.c.b16 %v1341, %v1340
      %v1371 = vpack.c.b16 %v1343, %v1342
      %v1372 = vpack.c.b16 %v1345, %v1344
      %v1373 = vpack.c.b16 %v1347, %v1346
      %v1374 = vpack.c.b16 %v1349, %v1348
      %v1375 = vpack.c.b16 %v1351, %v1350
      %v1376 = vpack.c.b16 %v1353, %v1352
      %v1377 = vpack.c.b16 %v1355, %v1354
      %v1378 = vpack.c.b16 %v1357, %v1356
      %v1379 = vpack.c.b16 %v1359, %v1358
      %v1380 = vpack.c.b16 %v1361, %v1360
      %v1381 = vpack.c.b16 %v1362, %v1362
      %v1382 = vrot.slane %v1363, 1
      %v1383 = vrot.slane %v1364, 1
      %v1384 = vsel %vm942, %v1382, %v1383
      %v1385 = vrot.slane %v1365, 1
      %v1386 = vsel %vm942, %v1383, %v1385
      %v1387 = vrot.slane %v1366, 1
      %v1388 = vsel %vm942, %v1385, %v1387
      %v1389 = vrot.slane %v1367, 1
      %v1390 = vsel %vm942, %v1387, %v1389
      %v1391 = vrot.slane %v1368, 1
      %v1392 = vsel %vm942, %v1389, %v1391
      %v1393 = vrot.slane %v1369, 1
      %v1394 = vsel %vm942, %v1391, %v1393
      %v1395 = vrot.slane %v1370, 1
      %v1396 = vsel %vm942, %v1393, %v1395
      %v1397 = vrot.slane %v1371, 1
      %v1398 = vsel %vm942, %v1395, %v1397
      %v1399 = vrot.slane %v1372, 1
      %v1400 = vsel %vm942, %v1397, %v1399
      %v1401 = vrot.slane %v1373, 1
      %v1402 = vsel %vm942, %v1399, %v1401
      %v1403 = vrot.slane %v1374, 1
      %v1404 = vsel %vm942, %v1401, %v1403
      %v1405 = vrot.slane %v1375, 1
      %v1406 = vsel %vm942, %v1403, %v1405
      %v1407 = vrot.slane %v1376, 1
      %v1408 = vsel %vm942, %v1405, %v1407
      %v1409 = vrot.slane %v1377, 1
      %v1410 = vsel %vm942, %v1407, %v1409
      %v1411 = vrot.slane %v1378, 1
      %v1412 = vsel %vm942, %v1409, %v1411
      %v1413 = vrot.slane %v1379, 1
      %v1414 = vsel %vm942, %v1411, %v1413
      %v1415 = vrot.slane %v1380, 1
      %v1416 = vsel %vm942, %v1413, %v1415
      %v1417 = vrot.slane %v1381, 1
      %v1418 = vsel %vm942, %v1415, %v1417
      %v1420 = vsel %vm481, %v1384, 0
      %v1423 = vsel %vm481, %v1386, 0
      %v1426 = vsel %vm481, %v1388, 0
      %v1429 = vsel %vm481, %v1390, 0
      %v1432 = vsel %vm481, %v1392, 0
      %v1435 = vsel %vm481, %v1394, 0
      %v1438 = vsel %vm481, %v1396, 0
      %v1441 = vsel %vm481, %v1398, 0
      %v1444 = vsel %vm481, %v1400, 0
      %v1447 = vsel %vm481, %v1402, 0
      %v1450 = vsel %vm481, %v1404, 0
      %v1453 = vsel %vm481, %v1406, 0
      %v1456 = vsel %vm481, %v1408, 0
      %v1459 = vsel %vm481, %v1410, 0
      %v1462 = vsel %vm481, %v1412, 0
      %v1465 = vsel %vm481, %v1414, 0
      %v1468 = vsel %vm481, %v1416, 0
      %v1471 = vsel %vm481, %v1418, 0
      %v1474 = vand.u32 %v1288, %v539
      %1476 = vmatprep.subr.bf16.mxu0 0
      %1477 = vmatpush1.bf16.msra.mxu0 0
      %1478 = vmatprep.subr.bf16.mxu0 0
      %1479 = vmatpush1.bf16.msra.mxu0 0
      %1480 = vmatprep.subr.bf16.mxu0 0
      %1481 = vmatpush1.bf16.msra.mxu0 0
      %1482 = vmatprep.subr.bf16.mxu0 0
      %1483 = vmatpush1.bf16.msra.mxu0 0
      %1484 = vmatprep.subr.bf16.mxu0 0
      %1485 = vmatpush1.bf16.msra.mxu0 0
      %1486 = vmatprep.subr.bf16.mxu0 0
      %1487 = vmatpush1.bf16.msra.mxu0 0
      %1488 = vmatprep.subr.bf16.mxu0 0
      %1489 = vmatpush1.bf16.msra.mxu0 0
      %1490 = vmatprep.subr.bf16.mxu0 0
      %1491 = vmatpush1.bf16.msra.mxu0 %v1474
      %1492 = vmatprep.subr.bf16.mxu0 0
      %1493 = vmatpush2.bf16.msra.mxu0 0
      %1494 = vmatprep.subr.bf16.mxu0 0
      %1495 = vmatpush2.bf16.msra.mxu0 0
      %1496 = vmatprep.subr.bf16.mxu0 0
      %1497 = vmatpush2.bf16.msra.mxu0 0
      %1498 = vmatprep.subr.bf16.mxu0 0
      %1499 = vmatpush2.bf16.msra.mxu0 0
      %1500 = vmatprep.subr.bf16.mxu0 0
      %1501 = vmatpush2.bf16.msra.mxu0 0
      %1502 = vmatprep.subr.bf16.mxu0 0
      %1503 = vmatpush2.bf16.msra.mxu0 0
      %1504 = vmatprep.subr.bf16.mxu0 0
      %1505 = vmatpush2.bf16.msra.mxu0 0
      %1506 = vmatprep.subr.bf16.mxu0 0
      %1507 = vmatpush2.bf16.msra.mxu0 0
      %1508 = vmatprep.mubr.bf16.mxu0 0
      %1509 = vmatmul.mubr.bf16.gmra.mxu0 %v1420
      %v1510 = vpop.f32.mrf.mxu0
      %v1511 = vadd.f32 0.0, %v1510
      %v1512 = vpop.f32.mrf.mxu0
      %v1513 = vpop.f32.mrf.mxu0
      %v1514 = vadd.f32 0.0, %v1513
      %v1515 = vpop.f32.mrf.mxu0
      %1516 = vmatprep.mubr.bf16.mxu0 0
      %1517 = vmatmul.mubr.bf16.gmra.mxu0 %v1423
      %v1518 = vpop.f32.mrf.mxu0
      %v1519 = vadd.f32 0.0, %v1518
      %v1520 = vpop.f32.mrf.mxu0
      %v1521 = vpop.f32.mrf.mxu0
      %v1522 = vadd.f32 0.0, %v1521
      %v1523 = vpop.f32.mrf.mxu0
      %1524 = vmatprep.mubr.bf16.mxu0 0
      %1525 = vmatmul.mubr.bf16.gmra.mxu0 %v1426
      %v1526 = vpop.f32.mrf.mxu0
      %v1527 = vadd.f32 0.0, %v1526
      %v1528 = vpop.f32.mrf.mxu0
      %v1529 = vpop.f32.mrf.mxu0
      %v1530 = vadd.f32 0.0, %v1529
      %v1531 = vpop.f32.mrf.mxu0
      %1532 = vmatprep.mubr.bf16.mxu0 0
      %1533 = vmatmul.mubr.bf16.gmra.mxu0 %v1429
      %v1534 = vpop.f32.mrf.mxu0
      %v1535 = vadd.f32 0.0, %v1534
      %v1536 = vpop.f32.mrf.mxu0
      %v1537 = vpop.f32.mrf.mxu0
      %v1538 = vadd.f32 0.0, %v1537
      %v1539 = vpop.f32.mrf.mxu0
      %1540 = vmatprep.mubr.bf16.mxu0 0
      %1541 = vmatmul.mubr.bf16.gmra.mxu0 %v1432
      %v1542 = vpop.f32.mrf.mxu0
      %v1543 = vadd.f32 0.0, %v1542
      %v1544 = vpop.f32.mrf.mxu0
      %v1545 = vpop.f32.mrf.mxu0
      %v1546 = vadd.f32 0.0, %v1545
      %v1547 = vpop.f32.mrf.mxu0
      %1548 = vmatprep.mubr.bf16.mxu0 0
      %1549 = vmatmul.mubr.bf16.gmra.mxu0 %v1435
      %v1550 = vpop.f32.mrf.mxu0
      %v1551 = vadd.f32 0.0, %v1550
      %v1552 = vpop.f32.mrf.mxu0
      %v1553 = vpop.f32.mrf.mxu0
      %v1554 = vadd.f32 0.0, %v1553
      %v1555 = vpop.f32.mrf.mxu0
      %1556 = vmatprep.mubr.bf16.mxu0 0
      %1557 = vmatmul.mubr.bf16.gmra.mxu0 %v1438
      %v1558 = vpop.f32.mrf.mxu0
      %v1559 = vadd.f32 0.0, %v1558
      %v1560 = vpop.f32.mrf.mxu0
      %v1561 = vpop.f32.mrf.mxu0
      %v1562 = vadd.f32 0.0, %v1561
      %v1563 = vpop.f32.mrf.mxu0
      %1564 = vmatprep.mubr.bf16.mxu0 0
      %1565 = vmatmul.mubr.bf16.gmra.mxu0 %v1441
      %v1566 = vpop.f32.mrf.mxu0
      %v1567 = vadd.f32 0.0, %v1566
      %v1568 = vpop.f32.mrf.mxu0
      %v1569 = vpop.f32.mrf.mxu0
      %v1570 = vadd.f32 0.0, %v1569
      %v1571 = vpop.f32.mrf.mxu0
      %1572 = vmatprep.mubr.bf16.mxu0 0
      %1573 = vmatmul.mubr.bf16.gmra.mxu0 %v1444
      %v1574 = vpop.f32.mrf.mxu0
      %v1575 = vadd.f32 0.0, %v1574
      %v1576 = vpop.f32.mrf.mxu0
      %v1577 = vpop.f32.mrf.mxu0
      %v1578 = vadd.f32 0.0, %v1577
      %v1579 = vpop.f32.mrf.mxu0
      %1580 = vmatprep.mubr.bf16.mxu0 0
      %1581 = vmatmul.mubr.bf16.gmra.mxu0 %v1447
      %v1582 = vpop.f32.mrf.mxu0
      %v1583 = vadd.f32 0.0, %v1582
      %v1584 = vpop.f32.mrf.mxu0
      %v1585 = vpop.f32.mrf.mxu0
      %v1586 = vadd.f32 0.0, %v1585
      %v1587 = vpop.f32.mrf.mxu0
      %1588 = vmatprep.mubr.bf16.mxu0 0
      %1589 = vmatmul.mubr.bf16.gmra.mxu0 %v1450
      %v1590 = vpop.f32.mrf.mxu0
      %v1591 = vadd.f32 0.0, %v1590
      %v1592 = vpop.f32.mrf.mxu0
      %v1593 = vpop.f32.mrf.mxu0
      %v1594 = vadd.f32 0.0, %v1593
      %v1595 = vpop.f32.mrf.mxu0
      %1596 = vmatprep.mubr.bf16.mxu0 0
      %1597 = vmatmul.mubr.bf16.gmra.mxu0 %v1453
      %v1598 = vpop.f32.mrf.mxu0
      %v1599 = vadd.f32 0.0, %v1598
      %v1600 = vpop.f32.mrf.mxu0
      %v1601 = vpop.f32.mrf.mxu0
      %v1602 = vadd.f32 0.0, %v1601
      %v1603 = vpop.f32.mrf.mxu0
      %1604 = vmatprep.mubr.bf16.mxu0 0
      %1605 = vmatmul.mubr.bf16.gmra.mxu0 %v1456
      %v1606 = vpop.f32.mrf.mxu0
      %v1607 = vadd.f32 0.0, %v1606
      %v1608 = vpop.f32.mrf.mxu0
      %v1609 = vpop.f32.mrf.mxu0
      %v1610 = vadd.f32 0.0, %v1609
      %v1611 = vpop.f32.mrf.mxu0
      %1612 = vmatprep.mubr.bf16.mxu0 0
      %1613 = vmatmul.mubr.bf16.gmra.mxu0 %v1459
      %v1614 = vpop.f32.mrf.mxu0
      %v1615 = vadd.f32 0.0, %v1614
      %v1616 = vpop.f32.mrf.mxu0
      %v1617 = vpop.f32.mrf.mxu0
      %v1618 = vadd.f32 0.0, %v1617
      %v1619 = vpop.f32.mrf.mxu0
      %1620 = vmatprep.mubr.bf16.mxu0 0
      %1621 = vmatmul.mubr.bf16.gmra.mxu0 %v1462
      %v1622 = vpop.f32.mrf.mxu0
      %v1623 = vadd.f32 0.0, %v1622
      %v1624 = vpop.f32.mrf.mxu0
      %v1625 = vpop.f32.mrf.mxu0
      %v1626 = vadd.f32 0.0, %v1625
      %v1627 = vpop.f32.mrf.mxu0
      %1628 = vmatprep.mubr.bf16.mxu0 0
      %1629 = vmatmul.mubr.bf16.gmra.mxu0 %v1465
      %v1630 = vpop.f32.mrf.mxu0
      %v1631 = vadd.f32 0.0, %v1630
      %v1632 = vpop.f32.mrf.mxu0
      %v1633 = vpop.f32.mrf.mxu0
      %v1634 = vadd.f32 0.0, %v1633
      %v1635 = vpop.f32.mrf.mxu0
      %1636 = vmatprep.mubr.bf16.mxu0 0
      %1637 = vmatmul.mubr.bf16.gmra.mxu0 %v1468
      %v1638 = vpop.f32.mrf.mxu0
      %v1639 = vadd.f32 0.0, %v1638
      %v1640 = vpop.f32.mrf.mxu0
      %v1641 = vpop.f32.mrf.mxu0
      %v1642 = vadd.f32 0.0, %v1641
      %v1643 = vpop.f32.mrf.mxu0
      %1644 = vmatprep.mubr.bf16.mxu0 0
      %1645 = vmatmul.mubr.bf16.gmra.mxu0 %v1471
      %v1646 = vpop.f32.mrf.mxu0
      %v1647 = vadd.f32 0.0, %v1646
      %v1648 = vpop.f32.mrf.mxu0
      %v1649 = vpop.f32.mrf.mxu0
      %v1650 = vadd.f32 0.0, %v1649
      %v1651 = vpop.f32.mrf.mxu0
      %1652 = vdwg.mxu0
      %v1653 = vadd.f32 %v1214, %v1511
      %v1654 = vadd.f32 %v1215, %v1514
      %v1655 = vadd.f32 %v1216, %v1519
      %v1656 = vadd.f32 %v1217, %v1522
      %v1657 = vadd.f32 %v1218, %v1527
      %v1658 = vadd.f32 %v1219, %v1530
      %v1659 = vadd.f32 %v1220, %v1535
      %v1660 = vadd.f32 %v1221, %v1538
      %v1661 = vadd.f32 %v1222, %v1543
      %v1662 = vadd.f32 %v1223, %v1546
      %v1663 = vadd.f32 %v1224, %v1551
      %v1664 = vadd.f32 %v1225, %v1554
      %v1665 = vadd.f32 %v1226, %v1559
      %v1666 = vadd.f32 %v1227, %v1562
      %v1667 = vadd.f32 %v1228, %v1567
      %v1668 = vadd.f32 %v1229, %v1570
      %v1669 = vadd.f32 %v1230, %v1575
      %v1670 = vadd.f32 %v1231, %v1578
      %v1671 = vadd.f32 %v1232, %v1583
      %v1672 = vadd.f32 %v1233, %v1586
      %v1673 = vadd.f32 %v1234, %v1591
      %v1674 = vadd.f32 %v1235, %v1594
      %v1675 = vadd.f32 %v1236, %v1599
      %v1676 = vadd.f32 %v1237, %v1602
      %v1677 = vadd.f32 %v1238, %v1607
      %v1678 = vadd.f32 %v1239, %v1610
      %v1679 = vadd.f32 %v1240, %v1615
      %v1680 = vadd.f32 %v1241, %v1618
      %v1681 = vadd.f32 %v1242, %v1623
      %v1682 = vadd.f32 %v1243, %v1626
      %v1683 = vadd.f32 %v1244, %v1631
      %v1684 = vadd.f32 %v1245, %v1634
      %v1685 = vadd.f32 %v1246, %v1639
      %v1686 = vadd.f32 %v1247, %v1642
      %v1687 = vadd.f32 %v1248, %v1647
      %v1688 = vadd.f32 %v1249, %v1650
      %v1689 = vld [vmem:[%s192 + $0x98] sm:$0x3]
      %s1690 = scalar_lea.vmem %s1, 8
      %v1691 = vld [vmem:[%s1690] sm:$0x3]
      %v1693 = vunpack.c.l.b16 %v1689
      %v1694 = vpack.c.b16 %v1693, %v1693
      %vm1695 = vsmask.f32 6400
      %v1697 = vshrl.u32 %v1363, 16
      %v1699 = vrot.slane %v1697, 1
      %v1700 = vshll.u32 %v1363, 16
      %v1702 = vrot.slane %v1700, 2
      %v1703 = vor.u32 %v1699, %v1702
      %v1705 = vshrl.u32 %v1364, 16
      %v1707 = vrot.slane %v1705, 1
      %v1708 = vshll.u32 %v1364, 16
      %v1710 = vrot.slane %v1708, 2
      %v1711 = vor.u32 %v1707, %v1710
      %v1712 = vsel %vm1695, %v1703, %v1711
      %v1714 = vshrl.u32 %v1365, 16
      %v1716 = vrot.slane %v1714, 1
      %v1717 = vshll.u32 %v1365, 16
      %v1719 = vrot.slane %v1717, 2
      %v1720 = vor.u32 %v1716, %v1719
      %v1721 = vsel %vm1695, %v1711, %v1720
      %v1723 = vshrl.u32 %v1366, 16
      %v1725 = vrot.slane %v1723, 1
      %v1726 = vshll.u32 %v1366, 16
      %v1728 = vrot.slane %v1726, 2
      %v1729 = vor.u32 %v1725, %v1728
      %v1730 = vsel %vm1695, %v1720, %v1729
      %v1732 = vshrl.u32 %v1367, 16
      %v1734 = vrot.slane %v1732, 1
      %v1735 = vshll.u32 %v1367, 16
      %v1737 = vrot.slane %v1735, 2
      %v1738 = vor.u32 %v1734, %v1737
      %v1739 = vsel %vm1695, %v1729, %v1738
      %v1741 = vshrl.u32 %v1368, 16
      %v1743 = vrot.slane %v1741, 1
      %v1744 = vshll.u32 %v1368, 16
      %v1746 = vrot.slane %v1744, 2
      %v1747 = vor.u32 %v1743, %v1746
      %v1748 = vsel %vm1695, %v1738, %v1747
      %v1750 = vshrl.u32 %v1369, 16
      %v1752 = vrot.slane %v1750, 1
      %v1753 = vshll.u32 %v1369, 16
      %v1755 = vrot.slane %v1753, 2
      %v1756 = vor.u32 %v1752, %v1755
      %v1757 = vsel %vm1695, %v1747, %v1756
      %v1759 = vshrl.u32 %v1370, 16
      %v1761 = vrot.slane %v1759, 1
      %v1762 = vshll.u32 %v1370, 16
      %v1764 = vrot.slane %v1762, 2
      %v1765 = vor.u32 %v1761, %v1764
      %v1766 = vsel %vm1695, %v1756, %v1765
      %v1768 = vshrl.u32 %v1371, 16
      %v1770 = vrot.slane %v1768, 1
      %v1771 = vshll.u32 %v1371, 16
      %v1773 = vrot.slane %v1771, 2
      %v1774 = vor.u32 %v1770, %v1773
      %v1775 = vsel %vm1695, %v1765, %v1774
      %v1777 = vshrl.u32 %v1372, 16
      %v1779 = vrot.slane %v1777, 1
      %v1780 = vshll.u32 %v1372, 16
      %v1782 = vrot.slane %v1780, 2
      %v1783 = vor.u32 %v1779, %v1782
      %v1784 = vsel %vm1695, %v1774, %v1783
      %v1786 = vshrl.u32 %v1373, 16
      %v1788 = vrot.slane %v1786, 1
      %v1789 = vshll.u32 %v1373, 16
      %v1791 = vrot.slane %v1789, 2
      %v1792 = vor.u32 %v1788, %v1791
      %v1793 = vsel %vm1695, %v1783, %v1792
      %v1795 = vshrl.u32 %v1374, 16
      %v1797 = vrot.slane %v1795, 1
      %v1798 = vshll.u32 %v1374, 16
      %v1800 = vrot.slane %v1798, 2
      %v1801 = vor.u32 %v1797, %v1800
      %v1802 = vsel %vm1695, %v1792, %v1801
      %v1804 = vshrl.u32 %v1375, 16
      %v1806 = vrot.slane %v1804, 1
      %v1807 = vshll.u32 %v1375, 16
      %v1809 = vrot.slane %v1807, 2
      %v1810 = vor.u32 %v1806, %v1809
      %v1811 = vsel %vm1695, %v1801, %v1810
      %v1813 = vshrl.u32 %v1376, 16
      %v1815 = vrot.slane %v1813, 1
      %v1816 = vshll.u32 %v1376, 16
      %v1818 = vrot.slane %v1816, 2
      %v1819 = vor.u32 %v1815, %v1818
      %v1820 = vsel %vm1695, %v1810, %v1819
      %v1822 = vshrl.u32 %v1377, 16
      %v1824 = vrot.slane %v1822, 1
      %v1825 = vshll.u32 %v1377, 16
      %v1827 = vrot.slane %v1825, 2
      %v1828 = vor.u32 %v1824, %v1827
      %v1829 = vsel %vm1695, %v1819, %v1828
      %v1831 = vshrl.u32 %v1378, 16
      %v1833 = vrot.slane %v1831, 1
      %v1834 = vshll.u32 %v1378, 16
      %v1836 = vrot.slane %v1834, 2
      %v1837 = vor.u32 %v1833, %v1836
      %v1838 = vsel %vm1695, %v1828, %v1837
      %v1840 = vshrl.u32 %v1379, 16
      %v1842 = vrot.slane %v1840, 1
      %v1843 = vshll.u32 %v1379, 16
      %v1845 = vrot.slane %v1843, 2
      %v1846 = vor.u32 %v1842, %v1845
      %v1847 = vsel %vm1695, %v1837, %v1846
      %v1849 = vshrl.u32 %v1380, 16
      %v1851 = vrot.slane %v1849, 1
      %v1852 = vshll.u32 %v1380, 16
      %v1854 = vrot.slane %v1852, 2
      %v1855 = vor.u32 %v1851, %v1854
      %v1856 = vsel %vm1695, %v1846, %v1855
      %v1858 = vshrl.u32 %v1694, 16
      %v1860 = vrot.slane %v1858, 1
      %v1861 = vshll.u32 %v1694, 16
      %v1863 = vrot.slane %v1861, 2
      %v1864 = vor.u32 %v1860, %v1863
      %v1865 = vsel %vm1695, %v1855, %v1864
      %v1867 = vsel %vm481, %v1712, 0
      %v1870 = vsel %vm481, %v1721, 0
      %v1873 = vsel %vm481, %v1730, 0
      %v1876 = vsel %vm481, %v1739, 0
      %v1879 = vsel %vm481, %v1748, 0
      %v1882 = vsel %vm481, %v1757, 0
      %v1885 = vsel %vm481, %v1766, 0
      %v1888 = vsel %vm481, %v1775, 0
      %v1891 = vsel %vm481, %v1784, 0
      %v1894 = vsel %vm481, %v1793, 0
      %v1897 = vsel %vm481, %v1802, 0
      %v1900 = vsel %vm481, %v1811, 0
      %v1903 = vsel %vm481, %v1820, 0
      %v1906 = vsel %vm481, %v1829, 0
      %v1909 = vsel %vm481, %v1838, 0
      %v1912 = vsel %vm481, %v1847, 0
      %v1915 = vsel %vm481, %v1856, 0
      %v1918 = vsel %vm481, %v1865, 0
      %v1921 = vand.u32 %v1691, %v539
      %1923 = vmatprep.subr.bf16.mxu0 0
      %1924 = vmatpush1.bf16.msra.mxu0 0
      %1925 = vmatprep.subr.bf16.mxu0 0
      %1926 = vmatpush1.bf16.msra.mxu0 0
      %1927 = vmatprep.subr.bf16.mxu0 0
      %1928 = vmatpush1.bf16.msra.mxu0 0
      %1929 = vmatprep.subr.bf16.mxu0 0
      %1930 = vmatpush1.bf16.msra.mxu0 0
      %1931 = vmatprep.subr.bf16.mxu0 0
      %1932 = vmatpush1.bf16.msra.mxu0 0
      %1933 = vmatprep.subr.bf16.mxu0 0
      %1934 = vmatpush1.bf16.msra.mxu0 0
      %1935 = vmatprep.subr.bf16.mxu0 0
      %1936 = vmatpush1.bf16.msra.mxu0 0
      %1937 = vmatprep.subr.bf16.mxu0 0
      %1938 = vmatpush1.bf16.msra.mxu0 %v1921
      %1939 = vmatprep.subr.bf16.mxu0 0
      %1940 = vmatpush2.bf16.msra.mxu0 0
      %1941 = vmatprep.subr.bf16.mxu0 0
      %1942 = vmatpush2.bf16.msra.mxu0 0
      %1943 = vmatprep.subr.bf16.mxu0 0
      %1944 = vmatpush2.bf16.msra.mxu0 0
      %1945 = vmatprep.subr.bf16.mxu0 0
      %1946 = vmatpush2.bf16.msra.mxu0 0
      %1947 = vmatprep.subr.bf16.mxu0 0
      %1948 = vmatpush2.bf16.msra.mxu0 0
      %1949 = vmatprep.subr.bf16.mxu0 0
      %1950 = vmatpush2.bf16.msra.mxu0 0
      %1951 = vmatprep.subr.bf16.mxu0 0
      %1952 = vmatpush2.bf16.msra.mxu0 0
      %1953 = vmatprep.subr.bf16.mxu0 0
      %1954 = vmatpush2.bf16.msra.mxu0 0
      %1955 = vmatprep.mubr.bf16.mxu0 0
      %1956 = vmatmul.mubr.bf16.gmra.mxu0 %v1867
      %v1957 = vpop.f32.mrf.mxu0
      %v1958 = vadd.f32 0.0, %v1957
      %v1959 = vpop.f32.mrf.mxu0
      %v1960 = vpop.f32.mrf.mxu0
      %v1961 = vadd.f32 0.0, %v1960
      %v1962 = vpop.f32.mrf.mxu0
      %1963 = vmatprep.mubr.bf16.mxu0 0
      %1964 = vmatmul.mubr.bf16.gmra.mxu0 %v1870
      %v1965 = vpop.f32.mrf.mxu0
      %v1966 = vadd.f32 0.0, %v1965
      %v1967 = vpop.f32.mrf.mxu0
      %v1968 = vpop.f32.mrf.mxu0
      %v1969 = vadd.f32 0.0, %v1968
      %v1970 = vpop.f32.mrf.mxu0
      %1971 = vmatprep.mubr.bf16.mxu0 0
      %1972 = vmatmul.mubr.bf16.gmra.mxu0 %v1873
      %v1973 = vpop.f32.mrf.mxu0
      %v1974 = vadd.f32 0.0, %v1973
      %v1975 = vpop.f32.mrf.mxu0
      %v1976 = vpop.f32.mrf.mxu0
      %v1977 = vadd.f32 0.0, %v1976
      %v1978 = vpop.f32.mrf.mxu0
      %1979 = vmatprep.mubr.bf16.mxu0 0
      %1980 = vmatmul.mubr.bf16.gmra.mxu0 %v1876
      %v1981 = vpop.f32.mrf.mxu0
      %v1982 = vadd.f32 0.0, %v1981
      %v1983 = vpop.f32.mrf.mxu0
      %v1984 = vpop.f32.mrf.mxu0
      %v1985 = vadd.f32 0.0, %v1984
      %v1986 = vpop.f32.mrf.mxu0
      %1987 = vmatprep.mubr.bf16.mxu0 0
      %1988 = vmatmul.mubr.bf16.gmra.mxu0 %v1879
      %v1989 = vpop.f32.mrf.mxu0
      %v1990 = vadd.f32 0.0, %v1989
      %v1991 = vpop.f32.mrf.mxu0
      %v1992 = vpop.f32.mrf.mxu0
      %v1993 = vadd.f32 0.0, %v1992
      %v1994 = vpop.f32.mrf.mxu0
      %1995 = vmatprep.mubr.bf16.mxu0 0
      %1996 = vmatmul.mubr.bf16.gmra.mxu0 %v1882
      %v1997 = vpop.f32.mrf.mxu0
      %v1998 = vadd.f32 0.0, %v1997
      %v1999 = vpop.f32.mrf.mxu0
      %v2000 = vpop.f32.mrf.mxu0
      %v2001 = vadd.f32 0.0, %v2000
      %v2002 = vpop.f32.mrf.mxu0
      %2003 = vmatprep.mubr.bf16.mxu0 0
      %2004 = vmatmul.mubr.bf16.gmra.mxu0 %v1885
      %v2005 = vpop.f32.mrf.mxu0
      %v2006 = vadd.f32 0.0, %v2005
      %v2007 = vpop.f32.mrf.mxu0
      %v2008 = vpop.f32.mrf.mxu0
      %v2009 = vadd.f32 0.0, %v2008
      %v2010 = vpop.f32.mrf.mxu0
      %2011 = vmatprep.mubr.bf16.mxu0 0
      %2012 = vmatmul.mubr.bf16.gmra.mxu0 %v1888
      %v2013 = vpop.f32.mrf.mxu0
      %v2014 = vadd.f32 0.0, %v2013
      %v2015 = vpop.f32.mrf.mxu0
      %v2016 = vpop.f32.mrf.mxu0
      %v2017 = vadd.f32 0.0, %v2016
      %v2018 = vpop.f32.mrf.mxu0
      %2019 = vmatprep.mubr.bf16.mxu0 0
      %2020 = vmatmul.mubr.bf16.gmra.mxu0 %v1891
      %v2021 = vpop.f32.mrf.mxu0
      %v2022 = vadd.f32 0.0, %v2021
      %v2023 = vpop.f32.mrf.mxu0
      %v2024 = vpop.f32.mrf.mxu0
      %v2025 = vadd.f32 0.0, %v2024
      %v2026 = vpop.f32.mrf.mxu0
      %2027 = vmatprep.mubr.bf16.mxu0 0
      %2028 = vmatmul.mubr.bf16.gmra.mxu0 %v1894
      %v2029 = vpop.f32.mrf.mxu0
      %v2030 = vadd.f32 0.0, %v2029
      %v2031 = vpop.f32.mrf.mxu0
      %v2032 = vpop.f32.mrf.mxu0
      %v2033 = vadd.f32 0.0, %v2032
      %v2034 = vpop.f32.mrf.mxu0
      %2035 = vmatprep.mubr.bf16.mxu0 0
      %2036 = vmatmul.mubr.bf16.gmra.mxu0 %v1897
      %v2037 = vpop.f32.mrf.mxu0
      %v2038 = vadd.f32 0.0, %v2037
      %v2039 = vpop.f32.mrf.mxu0
      %v2040 = vpop.f32.mrf.mxu0
      %v2041 = vadd.f32 0.0, %v2040
      %v2042 = vpop.f32.mrf.mxu0
      %2043 = vmatprep.mubr.bf16.mxu0 0
      %2044 = vmatmul.mubr.bf16.gmra.mxu0 %v1900
      %v2045 = vpop.f32.mrf.mxu0
      %v2046 = vadd.f32 0.0, %v2045
      %v2047 = vpop.f32.mrf.mxu0
      %v2048 = vpop.f32.mrf.mxu0
      %v2049 = vadd.f32 0.0, %v2048
      %v2050 = vpop.f32.mrf.mxu0
      %2051 = vmatprep.mubr.bf16.mxu0 0
      %2052 = vmatmul.mubr.bf16.gmra.mxu0 %v1903
      %v2053 = vpop.f32.mrf.mxu0
      %v2054 = vadd.f32 0.0, %v2053
      %v2055 = vpop.f32.mrf.mxu0
      %v2056 = vpop.f32.mrf.mxu0
      %v2057 = vadd.f32 0.0, %v2056
      %v2058 = vpop.f32.mrf.mxu0
      %2059 = vmatprep.mubr.bf16.mxu0 0
      %2060 = vmatmul.mubr.bf16.gmra.mxu0 %v1906
      %v2061 = vpop.f32.mrf.mxu0
      %v2062 = vadd.f32 0.0, %v2061
      %v2063 = vpop.f32.mrf.mxu0
      %v2064 = vpop.f32.mrf.mxu0
      %v2065 = vadd.f32 0.0, %v2064
      %v2066 = vpop.f32.mrf.mxu0
      %2067 = vmatprep.mubr.bf16.mxu0 0
      %2068 = vmatmul.mubr.bf16.gmra.mxu0 %v1909
      %v2069 = vpop.f32.mrf.mxu0
      %v2070 = vadd.f32 0.0, %v2069
      %v2071 = vpop.f32.mrf.mxu0
      %v2072 = vpop.f32.mrf.mxu0
      %v2073 = vadd.f32 0.0, %v2072
      %v2074 = vpop.f32.mrf.mxu0
      %2075 = vmatprep.mubr.bf16.mxu0 0
      %2076 = vmatmul.mubr.bf16.gmra.mxu0 %v1912
      %v2077 = vpop.f32.mrf.mxu0
      %v2078 = vadd.f32 0.0, %v2077
      %v2079 = vpop.f32.mrf.mxu0
      %v2080 = vpop.f32.mrf.mxu0
      %v2081 = vadd.f32 0.0, %v2080
      %v2082 = vpop.f32.mrf.mxu0
      %2083 = vmatprep.mubr.bf16.mxu0 0
      %2084 = vmatmul.mubr.bf16.gmra.mxu0 %v1915
      %v2085 = vpop.f32.mrf.mxu0
      %v2086 = vadd.f32 0.0, %v2085
      %v2087 = vpop.f32.mrf.mxu0
      %v2088 = vpop.f32.mrf.mxu0
      %v2089 = vadd.f32 0.0, %v2088
      %v2090 = vpop.f32.mrf.mxu0
      %2091 = vmatprep.mubr.bf16.mxu0 0
      %2092 = vmatmul.mubr.bf16.gmra.mxu0 %v1918
      %v2093 = vpop.f32.mrf.mxu0
      %v2094 = vadd.f32 0.0, %v2093
      %v2095 = vpop.f32.mrf.mxu0
      %v2096 = vpop.f32.mrf.mxu0
      %v2097 = vadd.f32 0.0, %v2096
      %v2098 = vpop.f32.mrf.mxu0
      %2099 = vdwg.mxu0
      %v2100 = vadd.f32 %v1653, %v1958
      %v2101 = vadd.f32 %v1654, %v1961
      %v2102 = vadd.f32 %v1655, %v1966
      %v2103 = vadd.f32 %v1656, %v1969
      %v2104 = vadd.f32 %v1657, %v1974
      %v2105 = vadd.f32 %v1658, %v1977
      %v2106 = vadd.f32 %v1659, %v1982
      %v2107 = vadd.f32 %v1660, %v1985
      %v2108 = vadd.f32 %v1661, %v1990
      %v2109 = vadd.f32 %v1662, %v1993
      %v2110 = vadd.f32 %v1663, %v1998
      %v2111 = vadd.f32 %v1664, %v2001
      %v2112 = vadd.f32 %v1665, %v2006
      %v2113 = vadd.f32 %v1666, %v2009
      %v2114 = vadd.f32 %v1667, %v2014
      %v2115 = vadd.f32 %v1668, %v2017
      %v2116 = vadd.f32 %v1669, %v2022
      %v2117 = vadd.f32 %v1670, %v2025
      %v2118 = vadd.f32 %v1671, %v2030
      %v2119 = vadd.f32 %v1672, %v2033
      %v2120 = vadd.f32 %v1673, %v2038
      %v2121 = vadd.f32 %v1674, %v2041
      %v2122 = vadd.f32 %v1675, %v2046
      %v2123 = vadd.f32 %v1676, %v2049
      %v2124 = vadd.f32 %v1677, %v2054
      %v2125 = vadd.f32 %v1678, %v2057
      %v2126 = vadd.f32 %v1679, %v2062
      %v2127 = vadd.f32 %v1680, %v2065
      %v2128 = vadd.f32 %v1681, %v2070
      %v2129 = vadd.f32 %v1682, %v2073
      %v2130 = vadd.f32 %v1683, %v2078
      %v2131 = vadd.f32 %v1684, %v2081
      %v2132 = vadd.f32 %v1685, %v2086
      %v2133 = vadd.f32 %v1686, %v2089
      %v2134 = vadd.f32 %v1687, %v2094
      %v2135 = vadd.f32 %v1688, %v2097
      %v2136 = vld [vmem:[%s192 + $0x8] sm:$0xc]
      %s2137 = scalar_lea.vmem %s1, 10
      %v2138 = vld [vmem:[%s2137] sm:$0x3]
      %v2140 = vunpack.c.l.b16 %v2136
      %v2141 = vpack.c.b16 %v1327, %v2140
      %vm2142 = vcmask 1045504
      %v2143 = vrot.slane %v2141, 2
      %v2144 = vrot.slane %v1364, 2
      %v2145 = vsel %vm2142, %v2143, %v2144
      %v2146 = vrot.slane %v1365, 2
      %v2147 = vsel %vm2142, %v2144, %v2146
      %v2148 = vrot.slane %v1366, 2
      %v2149 = vsel %vm2142, %v2146, %v2148
      %v2150 = vrot.slane %v1367, 2
      %v2151 = vsel %vm2142, %v2148, %v2150
      %v2152 = vrot.slane %v1368, 2
      %v2153 = vsel %vm2142, %v2150, %v2152
      %v2154 = vrot.slane %v1369, 2
      %v2155 = vsel %vm2142, %v2152, %v2154
      %v2156 = vrot.slane %v1370, 2
      %v2157 = vsel %vm2142, %v2154, %v2156
      %v2158 = vrot.slane %v1371, 2
      %v2159 = vsel %vm2142, %v2156, %v2158
      %v2160 = vrot.slane %v1372, 2
      %v2161 = vsel %vm2142, %v2158, %v2160
      %v2162 = vrot.slane %v1373, 2
      %v2163 = vsel %vm2142, %v2160, %v2162
      %v2164 = vrot.slane %v1374, 2
      %v2165 = vsel %vm2142, %v2162, %v2164
      %v2166 = vrot.slane %v1375, 2
      %v2167 = vsel %vm2142, %v2164, %v2166
      %v2168 = vrot.slane %v1376, 2
      %v2169 = vsel %vm2142, %v2166, %v2168
      %v2170 = vrot.slane %v1377, 2
      %v2171 = vsel %vm2142, %v2168, %v2170
      %v2172 = vrot.slane %v1378, 2
      %v2173 = vsel %vm2142, %v2170, %v2172
      %v2174 = vrot.slane %v1379, 2
      %v2175 = vsel %vm2142, %v2172, %v2174
      %v2176 = vrot.slane %v1380, 2
      %v2177 = vsel %vm2142, %v2174, %v2176
      %v2178 = vrot.slane %v1694, 2
      %v2179 = vsel %vm2142, %v2176, %v2178
      %v2181 = vsel %vm481, %v2145, 0
      %v2184 = vsel %vm481, %v2147, 0
      %v2187 = vsel %vm481, %v2149, 0
      %v2190 = vsel %vm481, %v2151, 0
      %v2193 = vsel %vm481, %v2153, 0
      %v2196 = vsel %vm481, %v2155, 0
      %v2199 = vsel %vm481, %v2157, 0
      %v2202 = vsel %vm481, %v2159, 0
      %v2205 = vsel %vm481, %v2161, 0
      %v2208 = vsel %vm481, %v2163, 0
      %v2211 = vsel %vm481, %v2165, 0
      %v2214 = vsel %vm481, %v2167, 0
      %v2217 = vsel %vm481, %v2169, 0
      %v2220 = vsel %vm481, %v2171, 0
      %v2223 = vsel %vm481, %v2173, 0
      %v2226 = vsel %vm481, %v2175, 0
      %v2229 = vsel %vm481, %v2177, 0
      %v2232 = vsel %vm481, %v2179, 0
      %v2235 = vand.u32 %v2138, %v539
      %2237 = vmatprep.subr.bf16.mxu0 0
      %2238 = vmatpush1.bf16.msra.mxu0 0
      %2239 = vmatprep.subr.bf16.mxu0 0
      %2240 = vmatpush1.bf16.msra.mxu0 0
      %2241 = vmatprep.subr.bf16.mxu0 0
      %2242 = vmatpush1.bf16.msra.mxu0 0
      %2243 = vmatprep.subr.bf16.mxu0 0
      %2244 = vmatpush1.bf16.msra.mxu0 0
      %2245 = vmatprep.subr.bf16.mxu0 0
      %2246 = vmatpush1.bf16.msra.mxu0 0
      %2247 = vmatprep.subr.bf16.mxu0 0
      %2248 = vmatpush1.bf16.msra.mxu0 0
      %2249 = vmatprep.subr.bf16.mxu0 0
      %2250 = vmatpush1.bf16.msra.mxu0 0
      %2251 = vmatprep.subr.bf16.mxu0 0
      %2252 = vmatpush1.bf16.msra.mxu0 %v2235
      %2253 = vmatprep.subr.bf16.mxu0 0
      %2254 = vmatpush2.bf16.msra.mxu0 0
      %2255 = vmatprep.subr.bf16.mxu0 0
      %2256 = vmatpush2.bf16.msra.mxu0 0
      %2257 = vmatprep.subr.bf16.mxu0 0
      %2258 = vmatpush2.bf16.msra.mxu0 0
      %2259 = vmatprep.subr.bf16.mxu0 0
      %2260 = vmatpush2.bf16.msra.mxu0 0
      %2261 = vmatprep.subr.bf16.mxu0 0
      %2262 = vmatpush2.bf16.msra.mxu0 0
      %2263 = vmatprep.subr.bf16.mxu0 0
      %2264 = vmatpush2.bf16.msra.mxu0 0
      %2265 = vmatprep.subr.bf16.mxu0 0
      %2266 = vmatpush2.bf16.msra.mxu0 0
      %2267 = vmatprep.subr.bf16.mxu0 0
      %2268 = vmatpush2.bf16.msra.mxu0 0
      %2269 = vmatprep.mubr.bf16.mxu0 0
      %2270 = vmatmul.mubr.bf16.gmra.mxu0 %v2181
      %v2271 = vpop.f32.mrf.mxu0
      %v2272 = vadd.f32 0.0, %v2271
      %v2273 = vpop.f32.mrf.mxu0
      %v2274 = vpop.f32.mrf.mxu0
      %v2275 = vadd.f32 0.0, %v2274
      %v2276 = vpop.f32.mrf.mxu0
      %2277 = vmatprep.mubr.bf16.mxu0 0
      %2278 = vmatmul.mubr.bf16.gmra.mxu0 %v2184
      %v2279 = vpop.f32.mrf.mxu0
      %v2280 = vadd.f32 0.0, %v2279
      %v2281 = vpop.f32.mrf.mxu0
      %v2282 = vpop.f32.mrf.mxu0
      %v2283 = vadd.f32 0.0, %v2282
      %v2284 = vpop.f32.mrf.mxu0
      %2285 = vmatprep.mubr.bf16.mxu0 0
      %2286 = vmatmul.mubr.bf16.gmra.mxu0 %v2187
      %v2287 = vpop.f32.mrf.mxu0
      %v2288 = vadd.f32 0.0, %v2287
      %v2289 = vpop.f32.mrf.mxu0
      %v2290 = vpop.f32.mrf.mxu0
      %v2291 = vadd.f32 0.0, %v2290
      %v2292 = vpop.f32.mrf.mxu0
      %2293 = vmatprep.mubr.bf16.mxu0 0
      %2294 = vmatmul.mubr.bf16.gmra.mxu0 %v2190
      %v2295 = vpop.f32.mrf.mxu0
      %v2296 = vadd.f32 0.0, %v2295
      %v2297 = vpop.f32.mrf.mxu0
      %v2298 = vpop.f32.mrf.mxu0
      %v2299 = vadd.f32 0.0, %v2298
      %v2300 = vpop.f32.mrf.mxu0
      %2301 = vmatprep.mubr.bf16.mxu0 0
      %2302 = vmatmul.mubr.bf16.gmra.mxu0 %v2193
      %v2303 = vpop.f32.mrf.mxu0
      %v2304 = vadd.f32 0.0, %v2303
      %v2305 = vpop.f32.mrf.mxu0
      %v2306 = vpop.f32.mrf.mxu0
      %v2307 = vadd.f32 0.0, %v2306
      %v2308 = vpop.f32.mrf.mxu0
      %2309 = vmatprep.mubr.bf16.mxu0 0
      %2310 = vmatmul.mubr.bf16.gmra.mxu0 %v2196
      %v2311 = vpop.f32.mrf.mxu0
      %v2312 = vadd.f32 0.0, %v2311
      %v2313 = vpop.f32.mrf.mxu0
      %v2314 = vpop.f32.mrf.mxu0
      %v2315 = vadd.f32 0.0, %v2314
      %v2316 = vpop.f32.mrf.mxu0
      %2317 = vmatprep.mubr.bf16.mxu0 0
      %2318 = vmatmul.mubr.bf16.gmra.mxu0 %v2199
      %v2319 = vpop.f32.mrf.mxu0
      %v2320 = vadd.f32 0.0, %v2319
      %v2321 = vpop.f32.mrf.mxu0
      %v2322 = vpop.f32.mrf.mxu0
      %v2323 = vadd.f32 0.0, %v2322
      %v2324 = vpop.f32.mrf.mxu0
      %2325 = vmatprep.mubr.bf16.mxu0 0
      %2326 = vmatmul.mubr.bf16.gmra.mxu0 %v2202
      %v2327 = vpop.f32.mrf.mxu0
      %v2328 = vadd.f32 0.0, %v2327
      %v2329 = vpop.f32.mrf.mxu0
      %v2330 = vpop.f32.mrf.mxu0
      %v2331 = vadd.f32 0.0, %v2330
      %v2332 = vpop.f32.mrf.mxu0
      %2333 = vmatprep.mubr.bf16.mxu0 0
      %2334 = vmatmul.mubr.bf16.gmra.mxu0 %v2205
      %v2335 = vpop.f32.mrf.mxu0
      %v2336 = vadd.f32 0.0, %v2335
      %v2337 = vpop.f32.mrf.mxu0
      %v2338 = vpop.f32.mrf.mxu0
      %v2339 = vadd.f32 0.0, %v2338
      %v2340 = vpop.f32.mrf.mxu0
      %2341 = vmatprep.mubr.bf16.mxu0 0
      %2342 = vmatmul.mubr.bf16.gmra.mxu0 %v2208
      %v2343 = vpop.f32.mrf.mxu0
      %v2344 = vadd.f32 0.0, %v2343
      %v2345 = vpop.f32.mrf.mxu0
      %v2346 = vpop.f32.mrf.mxu0
      %v2347 = vadd.f32 0.0, %v2346
      %v2348 = vpop.f32.mrf.mxu0
      %2349 = vmatprep.mubr.bf16.mxu0 0
      %2350 = vmatmul.mubr.bf16.gmra.mxu0 %v2211
      %v2351 = vpop.f32.mrf.mxu0
      %v2352 = vadd.f32 0.0, %v2351
      %v2353 = vpop.f32.mrf.mxu0
      %v2354 = vpop.f32.mrf.mxu0
      %v2355 = vadd.f32 0.0, %v2354
      %v2356 = vpop.f32.mrf.mxu0
      %2357 = vmatprep.mubr.bf16.mxu0 0
      %2358 = vmatmul.mubr.bf16.gmra.mxu0 %v2214
      %v2359 = vpop.f32.mrf.mxu0
      %v2360 = vadd.f32 0.0, %v2359
      %v2361 = vpop.f32.mrf.mxu0
      %v2362 = vpop.f32.mrf.mxu0
      %v2363 = vadd.f32 0.0, %v2362
      %v2364 = vpop.f32.mrf.mxu0
      %2365 = vmatprep.mubr.bf16.mxu0 0
      %2366 = vmatmul.mubr.bf16.gmra.mxu0 %v2217
      %v2367 = vpop.f32.mrf.mxu0
      %v2368 = vadd.f32 0.0, %v2367
      %v2369 = vpop.f32.mrf.mxu0
      %v2370 = vpop.f32.mrf.mxu0
      %v2371 = vadd.f32 0.0, %v2370
      %v2372 = vpop.f32.mrf.mxu0
      %2373 = vmatprep.mubr.bf16.mxu0 0
      %2374 = vmatmul.mubr.bf16.gmra.mxu0 %v2220
      %v2375 = vpop.f32.mrf.mxu0
      %v2376 = vadd.f32 0.0, %v2375
      %v2377 = vpop.f32.mrf.mxu0
      %v2378 = vpop.f32.mrf.mxu0
      %v2379 = vadd.f32 0.0, %v2378
      %v2380 = vpop.f32.mrf.mxu0
      %2381 = vmatprep.mubr.bf16.mxu0 0
      %2382 = vmatmul.mubr.bf16.gmra.mxu0 %v2223
      %v2383 = vpop.f32.mrf.mxu0
      %v2384 = vadd.f32 0.0, %v2383
      %v2385 = vpop.f32.mrf.mxu0
      %v2386 = vpop.f32.mrf.mxu0
      %v2387 = vadd.f32 0.0, %v2386
      %v2388 = vpop.f32.mrf.mxu0
      %2389 = vmatprep.mubr.bf16.mxu0 0
      %2390 = vmatmul.mubr.bf16.gmra.mxu0 %v2226
      %v2391 = vpop.f32.mrf.mxu0
      %v2392 = vadd.f32 0.0, %v2391
      %v2393 = vpop.f32.mrf.mxu0
      %v2394 = vpop.f32.mrf.mxu0
      %v2395 = vadd.f32 0.0, %v2394
      %v2396 = vpop.f32.mrf.mxu0
      %2397 = vmatprep.mubr.bf16.mxu0 0
      %2398 = vmatmul.mubr.bf16.gmra.mxu0 %v2229
      %v2399 = vpop.f32.mrf.mxu0
      %v2400 = vadd.f32 0.0, %v2399
      %v2401 = vpop.f32.mrf.mxu0
      %v2402 = vpop.f32.mrf.mxu0
      %v2403 = vadd.f32 0.0, %v2402
      %v2404 = vpop.f32.mrf.mxu0
      %2405 = vmatprep.mubr.bf16.mxu0 0
      %2406 = vmatmul.mubr.bf16.gmra.mxu0 %v2232
      %v2407 = vpop.f32.mrf.mxu0
      %v2408 = vadd.f32 0.0, %v2407
      %v2409 = vpop.f32.mrf.mxu0
      %v2410 = vpop.f32.mrf.mxu0
      %v2411 = vadd.f32 0.0, %v2410
      %v2412 = vpop.f32.mrf.mxu0
      %2413 = vdwg.mxu0
      %v2414 = vadd.f32 %v2100, %v2272
      %v2415 = vadd.f32 %v2101, %v2275
      %v2416 = vadd.f32 %v2102, %v2280
      %v2417 = vadd.f32 %v2103, %v2283
      %v2418 = vadd.f32 %v2104, %v2288
      %v2419 = vadd.f32 %v2105, %v2291
      %v2420 = vadd.f32 %v2106, %v2296
      %v2421 = vadd.f32 %v2107, %v2299
      %v2422 = vadd.f32 %v2108, %v2304
      %v2423 = vadd.f32 %v2109, %v2307
      %v2424 = vadd.f32 %v2110, %v2312
      %v2425 = vadd.f32 %v2111, %v2315
      %v2426 = vadd.f32 %v2112, %v2320
      %v2427 = vadd.f32 %v2113, %v2323
      %v2428 = vadd.f32 %v2114, %v2328
      %v2429 = vadd.f32 %v2115, %v2331
      %v2430 = vadd.f32 %v2116, %v2336
      %v2431 = vadd.f32 %v2117, %v2339
      %v2432 = vadd.f32 %v2118, %v2344
      %v2433 = vadd.f32 %v2119, %v2347
      %v2434 = vadd.f32 %v2120, %v2352
      %v2435 = vadd.f32 %v2121, %v2355
      %v2436 = vadd.f32 %v2122, %v2360
      %v2437 = vadd.f32 %v2123, %v2363
      %v2438 = vadd.f32 %v2124, %v2368
      %v2439 = vadd.f32 %v2125, %v2371
      %v2440 = vadd.f32 %v2126, %v2376
      %v2441 = vadd.f32 %v2127, %v2379
      %v2442 = vadd.f32 %v2128, %v2384
      %v2443 = vadd.f32 %v2129, %v2387
      %v2444 = vadd.f32 %v2130, %v2392
      %v2445 = vadd.f32 %v2131, %v2395
      %v2446 = vadd.f32 %v2132, %v2400
      %v2447 = vadd.f32 %v2133, %v2403
      %v2448 = vadd.f32 %v2134, %v2408
      %v2449 = vadd.f32 %v2135, %v2411
      %v2450 = vld [vmem:[%s192 + $0x10] sm:$0xc]
      %v2451 = vld [vmem:[%s192 + $0x14] sm:$0xf]
      %v2452 = vld [vmem:[%s192 + $0x18] sm:$0xf]
      %v2453 = vld [vmem:[%s192 + $0x1c] sm:$0xf]
      %v2454 = vld [vmem:[%s192 + $0x20] sm:$0xf]
      %v2455 = vld [vmem:[%s192 + $0x24] sm:$0xf]
      %v2456 = vld [vmem:[%s192 + $0x28] sm:$0xf]
      %v2457 = vld [vmem:[%s192 + $0x2c] sm:$0xf]
      %v2458 = vld [vmem:[%s192 + $0x30] sm:$0xf]
      %v2459 = vld [vmem:[%s192 + $0x34] sm:$0xf]
      %v2460 = vld [vmem:[%s192 + $0x38] sm:$0xf]
      %v2461 = vld [vmem:[%s192 + $0x3c] sm:$0xf]
      %v2462 = vld [vmem:[%s192 + $0x40] sm:$0xf]
      %v2463 = vld [vmem:[%s192 + $0x44] sm:$0xf]
      %v2464 = vld [vmem:[%s192 + $0x48] sm:$0xf]
      %v2465 = vld [vmem:[%s192 + $0x4c] sm:$0xf]
      %v2466 = vld [vmem:[%s192 + $0x50] sm:$0xf]
      %v2467 = vld [vmem:[%s192 + $0x54] sm:$0xf]
      %v2468 = vld [vmem:[%s192 + $0x58] sm:$0xf]
      %v2469 = vld [vmem:[%s192 + $0x5c] sm:$0xf]
      %v2470 = vld [vmem:[%s192 + $0x60] sm:$0xf]
      %v2471 = vld [vmem:[%s192 + $0x64] sm:$0xf]
      %v2472 = vld [vmem:[%s192 + $0x68] sm:$0xf]
      %v2473 = vld [vmem:[%s192 + $0x6c] sm:$0xf]
      %v2474 = vld [vmem:[%s192 + $0x70] sm:$0xf]
      %v2475 = vld [vmem:[%s192 + $0x74] sm:$0xf]
      %v2476 = vld [vmem:[%s192 + $0x78] sm:$0xf]
      %v2477 = vld [vmem:[%s192 + $0x7c] sm:$0xf]
      %v2478 = vld [vmem:[%s192 + $0x80] sm:$0xf]
      %v2479 = vld [vmem:[%s192 + $0x84] sm:$0xf]
      %v2480 = vld [vmem:[%s192 + $0x88] sm:$0xf]
      %v2481 = vld [vmem:[%s192 + $0x8c] sm:$0xf]
      %v2482 = vld [vmem:[%s192 + $0x90] sm:$0xf]
      %v2483 = vld [vmem:[%s192 + $0x94] sm:$0xf]
      %v2484 = vld [vmem:[%s192 + $0x98] sm:$0xf]
      %v2485 = vld [vmem:[%s192 + $0x9c] sm:$0xf]
      %v2486 = vld [vmem:[%s192 + $0xa0] sm:$0x3]
      %s2487 = scalar_lea.vmem %s1, 12
      %v2488 = vld [vmem:[%s2487] sm:$0x3]
      %v2526 = vunpack.c.l.b16 %v2450
      %v2527 = vunpack.c.l.b16 %v2451
      %v2528 = vunpack.c.l.b16 %v2452
      %v2529 = vunpack.c.l.b16 %v2453
      %v2530 = vunpack.c.l.b16 %v2454
      %v2531 = vunpack.c.l.b16 %v2455
      %v2532 = vunpack.c.l.b16 %v2456
      %v2533 = vunpack.c.l.b16 %v2457
      %v2534 = vunpack.c.l.b16 %v2458
      %v2535 = vunpack.c.l.b16 %v2459
      %v2536 = vunpack.c.l.b16 %v2460
      %v2537 = vunpack.c.l.b16 %v2461
      %v2538 = vunpack.c.l.b16 %v2462
      %v2539 = vunpack.c.l.b16 %v2463
      %v2540 = vunpack.c.l.b16 %v2464
      %v2541 = vunpack.c.l.b16 %v2465
      %v2542 = vunpack.c.l.b16 %v2466
      %v2543 = vunpack.c.l.b16 %v2467
      %v2544 = vunpack.c.l.b16 %v2468
      %v2545 = vunpack.c.l.b16 %v2469
      %v2546 = vunpack.c.l.b16 %v2470
      %v2547 = vunpack.c.l.b16 %v2471
      %v2548 = vunpack.c.l.b16 %v2472
      %v2549 = vunpack.c.l.b16 %v2473
      %v2550 = vunpack.c.l.b16 %v2474
      %v2551 = vunpack.c.l.b16 %v2475
      %v2552 = vunpack.c.l.b16 %v2476
      %v2553 = vunpack.c.l.b16 %v2477
      %v2554 = vunpack.c.l.b16 %v2478
      %v2555 = vunpack.c.l.b16 %v2479
      %v2556 = vunpack.c.l.b16 %v2480
      %v2557 = vunpack.c.l.b16 %v2481
      %v2558 = vunpack.c.l.b16 %v2482
      %v2559 = vunpack.c.l.b16 %v2483
      %v2560 = vunpack.c.l.b16 %v2484
      %v2561 = vunpack.c.l.b16 %v2485
      %v2562 = vunpack.c.l.b16 %v2486
      %v2563 = vpack.c.b16 %v2527, %v2526
      %v2564 = vpack.c.b16 %v2529, %v2528
      %v2565 = vpack.c.b16 %v2531, %v2530
      %v2566 = vpack.c.b16 %v2533, %v2532
      %v2567 = vpack.c.b16 %v2535, %v2534
      %v2568 = vpack.c.b16 %v2537, %v2536
      %v2569 = vpack.c.b16 %v2539, %v2538
      %v2570 = vpack.c.b16 %v2541, %v2540
      %v2571 = vpack.c.b16 %v2543, %v2542
      %v2572 = vpack.c.b16 %v2545, %v2544
      %v2573 = vpack.c.b16 %v2547, %v2546
      %v2574 = vpack.c.b16 %v2549, %v2548
      %v2575 = vpack.c.b16 %v2551, %v2550
      %v2576 = vpack.c.b16 %v2553, %v2552
      %v2577 = vpack.c.b16 %v2555, %v2554
      %v2578 = vpack.c.b16 %v2557, %v2556
      %v2579 = vpack.c.b16 %v2559, %v2558
      %v2580 = vpack.c.b16 %v2561, %v2560
      %v2581 = vpack.c.b16 %v2562, %v2562
      %v2582 = vrot.slane %v2563, 2
      %v2583 = vrot.slane %v2564, 2
      %v2584 = vsel %vm2142, %v2582, %v2583
      %v2585 = vrot.slane %v2565, 2
      %v2586 = vsel %vm2142, %v2583, %v2585
      %v2587 = vrot.slane %v2566, 2
      %v2588 = vsel %vm2142, %v2585, %v2587
      %v2589 = vrot.slane %v2567, 2
      %v2590 = vsel %vm2142, %v2587, %v2589
      %v2591 = vrot.slane %v2568, 2
      %v2592 = vsel %vm2142, %v2589, %v2591
      %v2593 = vrot.slane %v2569, 2
      %v2594 = vsel %vm2142, %v2591, %v2593
      %v2595 = vrot.slane %v2570, 2
      %v2596 = vsel %vm2142, %v2593, %v2595
      %v2597 = vrot.slane %v2571, 2
      %v2598 = vsel %vm2142, %v2595, %v2597
      %v2599 = vrot.slane %v2572, 2
      %v2600 = vsel %vm2142, %v2597, %v2599
      %v2601 = vrot.slane %v2573, 2
      %v2602 = vsel %vm2142, %v2599, %v2601
      %v2603 = vrot.slane %v2574, 2
      %v2604 = vsel %vm2142, %v2601, %v2603
      %v2605 = vrot.slane %v2575, 2
      %v2606 = vsel %vm2142, %v2603, %v2605
      %v2607 = vrot.slane %v2576, 2
      %v2608 = vsel %vm2142, %v2605, %v2607
      %v2609 = vrot.slane %v2577, 2
      %v2610 = vsel %vm2142, %v2607, %v2609
      %v2611 = vrot.slane %v2578, 2
      %v2612 = vsel %vm2142, %v2609, %v2611
      %v2613 = vrot.slane %v2579, 2
      %v2614 = vsel %vm2142, %v2611, %v2613
      %v2615 = vrot.slane %v2580, 2
      %v2616 = vsel %vm2142, %v2613, %v2615
      %v2617 = vrot.slane %v2581, 2
      %v2618 = vsel %vm2142, %v2615, %v2617
      %v2620 = vsel %vm481, %v2584, 0
      %v2623 = vsel %vm481, %v2586, 0
      %v2626 = vsel %vm481, %v2588, 0
      %v2629 = vsel %vm481, %v2590, 0
      %v2632 = vsel %vm481, %v2592, 0
      %v2635 = vsel %vm481, %v2594, 0
      %v2638 = vsel %vm481, %v2596, 0
      %v2641 = vsel %vm481, %v2598, 0
      %v2644 = vsel %vm481, %v2600, 0
      %v2647 = vsel %vm481, %v2602, 0
      %v2650 = vsel %vm481, %v2604, 0
      %v2653 = vsel %vm481, %v2606, 0
      %v2656 = vsel %vm481, %v2608, 0
      %v2659 = vsel %vm481, %v2610, 0
      %v2662 = vsel %vm481, %v2612, 0
      %v2665 = vsel %vm481, %v2614, 0
      %v2668 = vsel %vm481, %v2616, 0
      %v2671 = vsel %vm481, %v2618, 0
      %v2674 = vand.u32 %v2488, %v539
      %2676 = vmatprep.subr.bf16.mxu0 0
      %2677 = vmatpush1.bf16.msra.mxu0 0
      %2678 = vmatprep.subr.bf16.mxu0 0
      %2679 = vmatpush1.bf16.msra.mxu0 0
      %2680 = vmatprep.subr.bf16.mxu0 0
      %2681 = vmatpush1.bf16.msra.mxu0 0
      %2682 = vmatprep.subr.bf16.mxu0 0
      %2683 = vmatpush1.bf16.msra.mxu0 0
      %2684 = vmatprep.subr.bf16.mxu0 0
      %2685 = vmatpush1.bf16.msra.mxu0 0
      %2686 = vmatprep.subr.bf16.mxu0 0
      %2687 = vmatpush1.bf16.msra.mxu0 0
      %2688 = vmatprep.subr.bf16.mxu0 0
      %2689 = vmatpush1.bf16.msra.mxu0 0
      %2690 = vmatprep.subr.bf16.mxu0 0
      %2691 = vmatpush1.bf16.msra.mxu0 %v2674
      %2692 = vmatprep.subr.bf16.mxu0 0
      %2693 = vmatpush2.bf16.msra.mxu0 0
      %2694 = vmatprep.subr.bf16.mxu0 0
      %2695 = vmatpush2.bf16.msra.mxu0 0
      %2696 = vmatprep.subr.bf16.mxu0 0
      %2697 = vmatpush2.bf16.msra.mxu0 0
      %2698 = vmatprep.subr.bf16.mxu0 0
      %2699 = vmatpush2.bf16.msra.mxu0 0
      %2700 = vmatprep.subr.bf16.mxu0 0
      %2701 = vmatpush2.bf16.msra.mxu0 0
      %2702 = vmatprep.subr.bf16.mxu0 0
      %2703 = vmatpush2.bf16.msra.mxu0 0
      %2704 = vmatprep.subr.bf16.mxu0 0
      %2705 = vmatpush2.bf16.msra.mxu0 0
      %2706 = vmatprep.subr.bf16.mxu0 0
      %2707 = vmatpush2.bf16.msra.mxu0 0
      %2708 = vmatprep.mubr.bf16.mxu0 0
      %2709 = vmatmul.mubr.bf16.gmra.mxu0 %v2620
      %v2710 = vpop.f32.mrf.mxu0
      %v2711 = vadd.f32 0.0, %v2710
      %v2712 = vpop.f32.mrf.mxu0
      %v2713 = vpop.f32.mrf.mxu0
      %v2714 = vadd.f32 0.0, %v2713
      %v2715 = vpop.f32.mrf.mxu0
      %2716 = vmatprep.mubr.bf16.mxu0 0
      %2717 = vmatmul.mubr.bf16.gmra.mxu0 %v2623
      %v2718 = vpop.f32.mrf.mxu0
      %v2719 = vadd.f32 0.0, %v2718
      %v2720 = vpop.f32.mrf.mxu0
      %v2721 = vpop.f32.mrf.mxu0
      %v2722 = vadd.f32 0.0, %v2721
      %v2723 = vpop.f32.mrf.mxu0
      %2724 = vmatprep.mubr.bf16.mxu0 0
      %2725 = vmatmul.mubr.bf16.gmra.mxu0 %v2626
      %v2726 = vpop.f32.mrf.mxu0
      %v2727 = vadd.f32 0.0, %v2726
      %v2728 = vpop.f32.mrf.mxu0
      %v2729 = vpop.f32.mrf.mxu0
      %v2730 = vadd.f32 0.0, %v2729
      %v2731 = vpop.f32.mrf.mxu0
      %2732 = vmatprep.mubr.bf16.mxu0 0
      %2733 = vmatmul.mubr.bf16.gmra.mxu0 %v2629
      %v2734 = vpop.f32.mrf.mxu0
      %v2735 = vadd.f32 0.0, %v2734
      %v2736 = vpop.f32.mrf.mxu0
      %v2737 = vpop.f32.mrf.mxu0
      %v2738 = vadd.f32 0.0, %v2737
      %v2739 = vpop.f32.mrf.mxu0
      %2740 = vmatprep.mubr.bf16.mxu0 0
      %2741 = vmatmul.mubr.bf16.gmra.mxu0 %v2632
      %v2742 = vpop.f32.mrf.mxu0
      %v2743 = vadd.f32 0.0, %v2742
      %v2744 = vpop.f32.mrf.mxu0
      %v2745 = vpop.f32.mrf.mxu0
      %v2746 = vadd.f32 0.0, %v2745
      %v2747 = vpop.f32.mrf.mxu0
      %2748 = vmatprep.mubr.bf16.mxu0 0
      %2749 = vmatmul.mubr.bf16.gmra.mxu0 %v2635
      %v2750 = vpop.f32.mrf.mxu0
      %v2751 = vadd.f32 0.0, %v2750
      %v2752 = vpop.f32.mrf.mxu0
      %v2753 = vpop.f32.mrf.mxu0
      %v2754 = vadd.f32 0.0, %v2753
      %v2755 = vpop.f32.mrf.mxu0
      %2756 = vmatprep.mubr.bf16.mxu0 0
      %2757 = vmatmul.mubr.bf16.gmra.mxu0 %v2638
      %v2758 = vpop.f32.mrf.mxu0
      %v2759 = vadd.f32 0.0, %v2758
      %v2760 = vpop.f32.mrf.mxu0
      %v2761 = vpop.f32.mrf.mxu0
      %v2762 = vadd.f32 0.0, %v2761
      %v2763 = vpop.f32.mrf.mxu0
      %2764 = vmatprep.mubr.bf16.mxu0 0
      %2765 = vmatmul.mubr.bf16.gmra.mxu0 %v2641
      %v2766 = vpop.f32.mrf.mxu0
      %v2767 = vadd.f32 0.0, %v2766
      %v2768 = vpop.f32.mrf.mxu0
      %v2769 = vpop.f32.mrf.mxu0
      %v2770 = vadd.f32 0.0, %v2769
      %v2771 = vpop.f32.mrf.mxu0
      %2772 = vmatprep.mubr.bf16.mxu0 0
      %2773 = vmatmul.mubr.bf16.gmra.mxu0 %v2644
      %v2774 = vpop.f32.mrf.mxu0
      %v2775 = vadd.f32 0.0, %v2774
      %v2776 = vpop.f32.mrf.mxu0
      %v2777 = vpop.f32.mrf.mxu0
      %v2778 = vadd.f32 0.0, %v2777
      %v2779 = vpop.f32.mrf.mxu0
      %2780 = vmatprep.mubr.bf16.mxu0 0
      %2781 = vmatmul.mubr.bf16.gmra.mxu0 %v2647
      %v2782 = vpop.f32.mrf.mxu0
      %v2783 = vadd.f32 0.0, %v2782
      %v2784 = vpop.f32.mrf.mxu0
      %v2785 = vpop.f32.mrf.mxu0
      %v2786 = vadd.f32 0.0, %v2785
      %v2787 = vpop.f32.mrf.mxu0
      %2788 = vmatprep.mubr.bf16.mxu0 0
      %2789 = vmatmul.mubr.bf16.gmra.mxu0 %v2650
      %v2790 = vpop.f32.mrf.mxu0
      %v2791 = vadd.f32 0.0, %v2790
      %v2792 = vpop.f32.mrf.mxu0
      %v2793 = vpop.f32.mrf.mxu0
      %v2794 = vadd.f32 0.0, %v2793
      %v2795 = vpop.f32.mrf.mxu0
      %2796 = vmatprep.mubr.bf16.mxu0 0
      %2797 = vmatmul.mubr.bf16.gmra.mxu0 %v2653
      %v2798 = vpop.f32.mrf.mxu0
      %v2799 = vadd.f32 0.0, %v2798
      %v2800 = vpop.f32.mrf.mxu0
      %v2801 = vpop.f32.mrf.mxu0
      %v2802 = vadd.f32 0.0, %v2801
      %v2803 = vpop.f32.mrf.mxu0
      %2804 = vmatprep.mubr.bf16.mxu0 0
      %2805 = vmatmul.mubr.bf16.gmra.mxu0 %v2656
      %v2806 = vpop.f32.mrf.mxu0
      %v2807 = vadd.f32 0.0, %v2806
      %v2808 = vpop.f32.mrf.mxu0
      %v2809 = vpop.f32.mrf.mxu0
      %v2810 = vadd.f32 0.0, %v2809
      %v2811 = vpop.f32.mrf.mxu0
      %2812 = vmatprep.mubr.bf16.mxu0 0
      %2813 = vmatmul.mubr.bf16.gmra.mxu0 %v2659
      %v2814 = vpop.f32.mrf.mxu0
      %v2815 = vadd.f32 0.0, %v2814
      %v2816 = vpop.f32.mrf.mxu0
      %v2817 = vpop.f32.mrf.mxu0
      %v2818 = vadd.f32 0.0, %v2817
      %v2819 = vpop.f32.mrf.mxu0
      %2820 = vmatprep.mubr.bf16.mxu0 0
      %2821 = vmatmul.mubr.bf16.gmra.mxu0 %v2662
      %v2822 = vpop.f32.mrf.mxu0
      %v2823 = vadd.f32 0.0, %v2822
      %v2824 = vpop.f32.mrf.mxu0
      %v2825 = vpop.f32.mrf.mxu0
      %v2826 = vadd.f32 0.0, %v2825
      %v2827 = vpop.f32.mrf.mxu0
      %2828 = vmatprep.mubr.bf16.mxu0 0
      %2829 = vmatmul.mubr.bf16.gmra.mxu0 %v2665
      %v2830 = vpop.f32.mrf.mxu0
      %v2831 = vadd.f32 0.0, %v2830
      %v2832 = vpop.f32.mrf.mxu0
      %v2833 = vpop.f32.mrf.mxu0
      %v2834 = vadd.f32 0.0, %v2833
      %v2835 = vpop.f32.mrf.mxu0
      %2836 = vmatprep.mubr.bf16.mxu0 0
      %2837 = vmatmul.mubr.bf16.gmra.mxu0 %v2668
      %v2838 = vpop.f32.mrf.mxu0
      %v2839 = vadd.f32 0.0, %v2838
      %v2840 = vpop.f32.mrf.mxu0
      %v2841 = vpop.f32.mrf.mxu0
      %v2842 = vadd.f32 0.0, %v2841
      %v2843 = vpop.f32.mrf.mxu0
      %2844 = vmatprep.mubr.bf16.mxu0 0
      %2845 = vmatmul.mubr.bf16.gmra.mxu0 %v2671
      %v2846 = vpop.f32.mrf.mxu0
      %v2847 = vadd.f32 0.0, %v2846
      %v2848 = vpop.f32.mrf.mxu0
      %v2849 = vpop.f32.mrf.mxu0
      %v2850 = vadd.f32 0.0, %v2849
      %v2851 = vpop.f32.mrf.mxu0
      %2852 = vdwg.mxu0
      %v2853 = vadd.f32 %v2414, %v2711
      %v2854 = vadd.f32 %v2415, %v2714
      %v2855 = vadd.f32 %v2416, %v2719
      %v2856 = vadd.f32 %v2417, %v2722
      %v2857 = vadd.f32 %v2418, %v2727
      %v2858 = vadd.f32 %v2419, %v2730
      %v2859 = vadd.f32 %v2420, %v2735
      %v2860 = vadd.f32 %v2421, %v2738
      %v2861 = vadd.f32 %v2422, %v2743
      %v2862 = vadd.f32 %v2423, %v2746
      %v2863 = vadd.f32 %v2424, %v2751
      %v2864 = vadd.f32 %v2425, %v2754
      %v2865 = vadd.f32 %v2426, %v2759
      %v2866 = vadd.f32 %v2427, %v2762
      %v2867 = vadd.f32 %v2428, %v2767
      %v2868 = vadd.f32 %v2429, %v2770
      %v2869 = vadd.f32 %v2430, %v2775
      %v2870 = vadd.f32 %v2431, %v2778
      %v2871 = vadd.f32 %v2432, %v2783
      %v2872 = vadd.f32 %v2433, %v2786
      %v2873 = vadd.f32 %v2434, %v2791
      %v2874 = vadd.f32 %v2435, %v2794
      %v2875 = vadd.f32 %v2436, %v2799
      %v2876 = vadd.f32 %v2437, %v2802
      %v2877 = vadd.f32 %v2438, %v2807
      %v2878 = vadd.f32 %v2439, %v2810
      %v2879 = vadd.f32 %v2440, %v2815
      %v2880 = vadd.f32 %v2441, %v2818
      %v2881 = vadd.f32 %v2442, %v2823
      %v2882 = vadd.f32 %v2443, %v2826
      %v2883 = vadd.f32 %v2444, %v2831
      %v2884 = vadd.f32 %v2445, %v2834
      %v2885 = vadd.f32 %v2446, %v2839
      %v2886 = vadd.f32 %v2447, %v2842
      %v2887 = vadd.f32 %v2448, %v2847
      %v2888 = vadd.f32 %v2449, %v2850
      %v2889 = vld [vmem:[%s192 + $0xa0] sm:$0x7]
      %s2890 = scalar_lea.vmem %s1, 14
      %v2891 = vld [vmem:[%s2890] sm:$0x3]
      %v2893 = vunpack.c.l.b16 %v2889
      %v2894 = vpack.c.b16 %v2893, %v2893
      %vm2895 = vsmask.f32 5376
      %v2897 = vshrl.u32 %v2563, 16
      %v2899 = vrot.slane %v2897, 2
      %v2900 = vshll.u32 %v2563, 16
      %v2902 = vrot.slane %v2900, 3
      %v2903 = vor.u32 %v2899, %v2902
      %v2905 = vshrl.u32 %v2564, 16
      %v2907 = vrot.slane %v2905, 2
      %v2908 = vshll.u32 %v2564, 16
      %v2910 = vrot.slane %v2908, 3
      %v2911 = vor.u32 %v2907, %v2910
      %v2912 = vsel %vm2895, %v2903, %v2911
      %v2914 = vshrl.u32 %v2565, 16
      %v2916 = vrot.slane %v2914, 2
      %v2917 = vshll.u32 %v2565, 16
      %v2919 = vrot.slane %v2917, 3
      %v2920 = vor.u32 %v2916, %v2919
      %v2921 = vsel %vm2895, %v2911, %v2920
      %v2923 = vshrl.u32 %v2566, 16
      %v2925 = vrot.slane %v2923, 2
      %v2926 = vshll.u32 %v2566, 16
      %v2928 = vrot.slane %v2926, 3
      %v2929 = vor.u32 %v2925, %v2928
      %v2930 = vsel %vm2895, %v2920, %v2929
      %v2932 = vshrl.u32 %v2567, 16
      %v2934 = vrot.slane %v2932, 2
      %v2935 = vshll.u32 %v2567, 16
      %v2937 = vrot.slane %v2935, 3
      %v2938 = vor.u32 %v2934, %v2937
      %v2939 = vsel %vm2895, %v2929, %v2938
      %v2941 = vshrl.u32 %v2568, 16
      %v2943 = vrot.slane %v2941, 2
      %v2944 = vshll.u32 %v2568, 16
      %v2946 = vrot.slane %v2944, 3
      %v2947 = vor.u32 %v2943, %v2946
      %v2948 = vsel %vm2895, %v2938, %v2947
      %v2950 = vshrl.u32 %v2569, 16
      %v2952 = vrot.slane %v2950, 2
      %v2953 = vshll.u32 %v2569, 16
      %v2955 = vrot.slane %v2953, 3
      %v2956 = vor.u32 %v2952, %v2955
      %v2957 = vsel %vm2895, %v2947, %v2956
      %v2959 = vshrl.u32 %v2570, 16
      %v2961 = vrot.slane %v2959, 2
      %v2962 = vshll.u32 %v2570, 16
      %v2964 = vrot.slane %v2962, 3
      %v2965 = vor.u32 %v2961, %v2964
      %v2966 = vsel %vm2895, %v2956, %v2965
      %v2968 = vshrl.u32 %v2571, 16
      %v2970 = vrot.slane %v2968, 2
      %v2971 = vshll.u32 %v2571, 16
      %v2973 = vrot.slane %v2971, 3
      %v2974 = vor.u32 %v2970, %v2973
      %v2975 = vsel %vm2895, %v2965, %v2974
      %v2977 = vshrl.u32 %v2572, 16
      %v2979 = vrot.slane %v2977, 2
      %v2980 = vshll.u32 %v2572, 16
      %v2982 = vrot.slane %v2980, 3
      %v2983 = vor.u32 %v2979, %v2982
      %v2984 = vsel %vm2895, %v2974, %v2983
      %v2986 = vshrl.u32 %v2573, 16
      %v2988 = vrot.slane %v2986, 2
      %v2989 = vshll.u32 %v2573, 16
      %v2991 = vrot.slane %v2989, 3
      %v2992 = vor.u32 %v2988, %v2991
      %v2993 = vsel %vm2895, %v2983, %v2992
      %v2995 = vshrl.u32 %v2574, 16
      %v2997 = vrot.slane %v2995, 2
      %v2998 = vshll.u32 %v2574, 16
      %v3000 = vrot.slane %v2998, 3
      %v3001 = vor.u32 %v2997, %v3000
      %v3002 = vsel %vm2895, %v2992, %v3001
      %v3004 = vshrl.u32 %v2575, 16
      %v3006 = vrot.slane %v3004, 2
      %v3007 = vshll.u32 %v2575, 16
      %v3009 = vrot.slane %v3007, 3
      %v3010 = vor.u32 %v3006, %v3009
      %v3011 = vsel %vm2895, %v3001, %v3010
      %v3013 = vshrl.u32 %v2576, 16
      %v3015 = vrot.slane %v3013, 2
      %v3016 = vshll.u32 %v2576, 16
      %v3018 = vrot.slane %v3016, 3
      %v3019 = vor.u32 %v3015, %v3018
      %v3020 = vsel %vm2895, %v3010, %v3019
      %v3022 = vshrl.u32 %v2577, 16
      %v3024 = vrot.slane %v3022, 2
      %v3025 = vshll.u32 %v2577, 16
      %v3027 = vrot.slane %v3025, 3
      %v3028 = vor.u32 %v3024, %v3027
      %v3029 = vsel %vm2895, %v3019, %v3028
      %v3031 = vshrl.u32 %v2578, 16
      %v3033 = vrot.slane %v3031, 2
      %v3034 = vshll.u32 %v2578, 16
      %v3036 = vrot.slane %v3034, 3
      %v3037 = vor.u32 %v3033, %v3036
      %v3038 = vsel %vm2895, %v3028, %v3037
      %v3040 = vshrl.u32 %v2579, 16
      %v3042 = vrot.slane %v3040, 2
      %v3043 = vshll.u32 %v2579, 16
      %v3045 = vrot.slane %v3043, 3
      %v3046 = vor.u32 %v3042, %v3045
      %v3047 = vsel %vm2895, %v3037, %v3046
      %v3049 = vshrl.u32 %v2580, 16
      %v3051 = vrot.slane %v3049, 2
      %v3052 = vshll.u32 %v2580, 16
      %v3054 = vrot.slane %v3052, 3
      %v3055 = vor.u32 %v3051, %v3054
      %v3056 = vsel %vm2895, %v3046, %v3055
      %v3058 = vshrl.u32 %v2894, 16
      %v3060 = vrot.slane %v3058, 2
      %v3061 = vshll.u32 %v2894, 16
      %v3063 = vrot.slane %v3061, 3
      %v3064 = vor.u32 %v3060, %v3063
      %v3065 = vsel %vm2895, %v3055, %v3064
      %v3067 = vsel %vm481, %v2912, 0
      %v3070 = vsel %vm481, %v2921, 0
      %v3073 = vsel %vm481, %v2930, 0
      %v3076 = vsel %vm481, %v2939, 0
      %v3079 = vsel %vm481, %v2948, 0
      %v3082 = vsel %vm481, %v2957, 0
      %v3085 = vsel %vm481, %v2966, 0
      %v3088 = vsel %vm481, %v2975, 0
      %v3091 = vsel %vm481, %v2984, 0
      %v3094 = vsel %vm481, %v2993, 0
      %v3097 = vsel %vm481, %v3002, 0
      %v3100 = vsel %vm481, %v3011, 0
      %v3103 = vsel %vm481, %v3020, 0
      %v3106 = vsel %vm481, %v3029, 0
      %v3109 = vsel %vm481, %v3038, 0
      %v3112 = vsel %vm481, %v3047, 0
      %v3115 = vsel %vm481, %v3056, 0
      %v3118 = vsel %vm481, %v3065, 0
      %v3121 = vand.u32 %v2891, %v539
      %3123 = vmatprep.subr.bf16.mxu0 0
      %3124 = vmatpush1.bf16.msra.mxu0 0
      %3125 = vmatprep.subr.bf16.mxu0 0
      %3126 = vmatpush1.bf16.msra.mxu0 0
      %3127 = vmatprep.subr.bf16.mxu0 0
      %3128 = vmatpush1.bf16.msra.mxu0 0
      %3129 = vmatprep.subr.bf16.mxu0 0
      %3130 = vmatpush1.bf16.msra.mxu0 0
      %3131 = vmatprep.subr.bf16.mxu0 0
      %3132 = vmatpush1.bf16.msra.mxu0 0
      %3133 = vmatprep.subr.bf16.mxu0 0
      %3134 = vmatpush1.bf16.msra.mxu0 0
      %3135 = vmatprep.subr.bf16.mxu0 0
      %3136 = vmatpush1.bf16.msra.mxu0 0
      %3137 = vmatprep.subr.bf16.mxu0 0
      %3138 = vmatpush1.bf16.msra.mxu0 %v3121
      %3139 = vmatprep.subr.bf16.mxu0 0
      %3140 = vmatpush2.bf16.msra.mxu0 0
      %3141 = vmatprep.subr.bf16.mxu0 0
      %3142 = vmatpush2.bf16.msra.mxu0 0
      %3143 = vmatprep.subr.bf16.mxu0 0
      %3144 = vmatpush2.bf16.msra.mxu0 0
      %3145 = vmatprep.subr.bf16.mxu0 0
      %3146 = vmatpush2.bf16.msra.mxu0 0
      %3147 = vmatprep.subr.bf16.mxu0 0
      %3148 = vmatpush2.bf16.msra.mxu0 0
      %3149 = vmatprep.subr.bf16.mxu0 0
      %3150 = vmatpush2.bf16.msra.mxu0 0
      %3151 = vmatprep.subr.bf16.mxu0 0
      %3152 = vmatpush2.bf16.msra.mxu0 0
      %3153 = vmatprep.subr.bf16.mxu0 0
      %3154 = vmatpush2.bf16.msra.mxu0 0
      %3155 = vmatprep.mubr.bf16.mxu0 0
      %3156 = vmatmul.mubr.bf16.gmra.mxu0 %v3067
      %v3157 = vpop.f32.mrf.mxu0
      %v3158 = vadd.f32 0.0, %v3157
      %v3159 = vpop.f32.mrf.mxu0
      %v3160 = vpop.f32.mrf.mxu0
      %v3161 = vadd.f32 0.0, %v3160
      %v3162 = vpop.f32.mrf.mxu0
      %3163 = vmatprep.mubr.bf16.mxu0 0
      %3164 = vmatmul.mubr.bf16.gmra.mxu0 %v3070
      %v3165 = vpop.f32.mrf.mxu0
      %v3166 = vadd.f32 0.0, %v3165
      %v3167 = vpop.f32.mrf.mxu0
      %v3168 = vpop.f32.mrf.mxu0
      %v3169 = vadd.f32 0.0, %v3168
      %v3170 = vpop.f32.mrf.mxu0
      %3171 = vmatprep.mubr.bf16.mxu0 0
      %3172 = vmatmul.mubr.bf16.gmra.mxu0 %v3073
      %v3173 = vpop.f32.mrf.mxu0
      %v3174 = vadd.f32 0.0, %v3173
      %v3175 = vpop.f32.mrf.mxu0
      %v3176 = vpop.f32.mrf.mxu0
      %v3177 = vadd.f32 0.0, %v3176
      %v3178 = vpop.f32.mrf.mxu0
      %3179 = vmatprep.mubr.bf16.mxu0 0
      %3180 = vmatmul.mubr.bf16.gmra.mxu0 %v3076
      %v3181 = vpop.f32.mrf.mxu0
      %v3182 = vadd.f32 0.0, %v3181
      %v3183 = vpop.f32.mrf.mxu0
      %v3184 = vpop.f32.mrf.mxu0
      %v3185 = vadd.f32 0.0, %v3184
      %v3186 = vpop.f32.mrf.mxu0
      %3187 = vmatprep.mubr.bf16.mxu0 0
      %3188 = vmatmul.mubr.bf16.gmra.mxu0 %v3079
      %v3189 = vpop.f32.mrf.mxu0
      %v3190 = vadd.f32 0.0, %v3189
      %v3191 = vpop.f32.mrf.mxu0
      %v3192 = vpop.f32.mrf.mxu0
      %v3193 = vadd.f32 0.0, %v3192
      %v3194 = vpop.f32.mrf.mxu0
      %3195 = vmatprep.mubr.bf16.mxu0 0
      %3196 = vmatmul.mubr.bf16.gmra.mxu0 %v3082
      %v3197 = vpop.f32.mrf.mxu0
      %v3198 = vadd.f32 0.0, %v3197
      %v3199 = vpop.f32.mrf.mxu0
      %v3200 = vpop.f32.mrf.mxu0
      %v3201 = vadd.f32 0.0, %v3200
      %v3202 = vpop.f32.mrf.mxu0
      %3203 = vmatprep.mubr.bf16.mxu0 0
      %3204 = vmatmul.mubr.bf16.gmra.mxu0 %v3085
      %v3205 = vpop.f32.mrf.mxu0
      %v3206 = vadd.f32 0.0, %v3205
      %v3207 = vpop.f32.mrf.mxu0
      %v3208 = vpop.f32.mrf.mxu0
      %v3209 = vadd.f32 0.0, %v3208
      %v3210 = vpop.f32.mrf.mxu0
      %3211 = vmatprep.mubr.bf16.mxu0 0
      %3212 = vmatmul.mubr.bf16.gmra.mxu0 %v3088
      %v3213 = vpop.f32.mrf.mxu0
      %v3214 = vadd.f32 0.0, %v3213
      %v3215 = vpop.f32.mrf.mxu0
      %v3216 = vpop.f32.mrf.mxu0
      %v3217 = vadd.f32 0.0, %v3216
      %v3218 = vpop.f32.mrf.mxu0
      %3219 = vmatprep.mubr.bf16.mxu0 0
      %3220 = vmatmul.mubr.bf16.gmra.mxu0 %v3091
      %v3221 = vpop.f32.mrf.mxu0
      %v3222 = vadd.f32 0.0, %v3221
      %v3223 = vpop.f32.mrf.mxu0
      %v3224 = vpop.f32.mrf.mxu0
      %v3225 = vadd.f32 0.0, %v3224
      %v3226 = vpop.f32.mrf.mxu0
      %3227 = vmatprep.mubr.bf16.mxu0 0
      %3228 = vmatmul.mubr.bf16.gmra.mxu0 %v3094
      %v3229 = vpop.f32.mrf.mxu0
      %v3230 = vadd.f32 0.0, %v3229
      %v3231 = vpop.f32.mrf.mxu0
      %v3232 = vpop.f32.mrf.mxu0
      %v3233 = vadd.f32 0.0, %v3232
      %v3234 = vpop.f32.mrf.mxu0
      %3235 = vmatprep.mubr.bf16.mxu0 0
      %3236 = vmatmul.mubr.bf16.gmra.mxu0 %v3097
      %v3237 = vpop.f32.mrf.mxu0
      %v3238 = vadd.f32 0.0, %v3237
      %v3239 = vpop.f32.mrf.mxu0
      %v3240 = vpop.f32.mrf.mxu0
      %v3241 = vadd.f32 0.0, %v3240
      %v3242 = vpop.f32.mrf.mxu0
      %3243 = vmatprep.mubr.bf16.mxu0 0
      %3244 = vmatmul.mubr.bf16.gmra.mxu0 %v3100
      %v3245 = vpop.f32.mrf.mxu0
      %v3246 = vadd.f32 0.0, %v3245
      %v3247 = vpop.f32.mrf.mxu0
      %v3248 = vpop.f32.mrf.mxu0
      %v3249 = vadd.f32 0.0, %v3248
      %v3250 = vpop.f32.mrf.mxu0
      %3251 = vmatprep.mubr.bf16.mxu0 0
      %3252 = vmatmul.mubr.bf16.gmra.mxu0 %v3103
      %v3253 = vpop.f32.mrf.mxu0
      %v3254 = vadd.f32 0.0, %v3253
      %v3255 = vpop.f32.mrf.mxu0
      %v3256 = vpop.f32.mrf.mxu0
      %v3257 = vadd.f32 0.0, %v3256
      %v3258 = vpop.f32.mrf.mxu0
      %3259 = vmatprep.mubr.bf16.mxu0 0
      %3260 = vmatmul.mubr.bf16.gmra.mxu0 %v3106
      %v3261 = vpop.f32.mrf.mxu0
      %v3262 = vadd.f32 0.0, %v3261
      %v3263 = vpop.f32.mrf.mxu0
      %v3264 = vpop.f32.mrf.mxu0
      %v3265 = vadd.f32 0.0, %v3264
      %v3266 = vpop.f32.mrf.mxu0
      %3267 = vmatprep.mubr.bf16.mxu0 0
      %3268 = vmatmul.mubr.bf16.gmra.mxu0 %v3109
      %v3269 = vpop.f32.mrf.mxu0
      %v3270 = vadd.f32 0.0, %v3269
      %v3271 = vpop.f32.mrf.mxu0
      %v3272 = vpop.f32.mrf.mxu0
      %v3273 = vadd.f32 0.0, %v3272
      %v3274 = vpop.f32.mrf.mxu0
      %3275 = vmatprep.mubr.bf16.mxu0 0
      %3276 = vmatmul.mubr.bf16.gmra.mxu0 %v3112
      %v3277 = vpop.f32.mrf.mxu0
      %v3278 = vadd.f32 0.0, %v3277
      %v3279 = vpop.f32.mrf.mxu0
      %v3280 = vpop.f32.mrf.mxu0
      %v3281 = vadd.f32 0.0, %v3280
      %v3282 = vpop.f32.mrf.mxu0
      %3283 = vmatprep.mubr.bf16.mxu0 0
      %3284 = vmatmul.mubr.bf16.gmra.mxu0 %v3115
      %v3285 = vpop.f32.mrf.mxu0
      %v3286 = vadd.f32 0.0, %v3285
      %v3287 = vpop.f32.mrf.mxu0
      %v3288 = vpop.f32.mrf.mxu0
      %v3289 = vadd.f32 0.0, %v3288
      %v3290 = vpop.f32.mrf.mxu0
      %3291 = vmatprep.mubr.bf16.mxu0 0
      %3292 = vmatmul.mubr.bf16.gmra.mxu0 %v3118
      %v3293 = vpop.f32.mrf.mxu0
      %v3294 = vadd.f32 0.0, %v3293
      %v3295 = vpop.f32.mrf.mxu0
      %v3296 = vpop.f32.mrf.mxu0
      %v3297 = vadd.f32 0.0, %v3296
      %v3298 = vpop.f32.mrf.mxu0
      %3299 = vdwg.mxu0
      %v3300 = vadd.f32 %v2853, %v3158
      %v3301 = vadd.f32 %v2854, %v3161
      %v3302 = vadd.f32 %v2855, %v3166
      %v3303 = vadd.f32 %v2856, %v3169
      %v3304 = vadd.f32 %v2857, %v3174
      %v3305 = vadd.f32 %v2858, %v3177
      %v3306 = vadd.f32 %v2859, %v3182
      %v3307 = vadd.f32 %v2860, %v3185
      %v3308 = vadd.f32 %v2861, %v3190
      %v3309 = vadd.f32 %v2862, %v3193
      %v3310 = vadd.f32 %v2863, %v3198
      %v3311 = vadd.f32 %v2864, %v3201
      %v3312 = vadd.f32 %v2865, %v3206
      %v3313 = vadd.f32 %v2866, %v3209
      %v3314 = vadd.f32 %v2867, %v3214
      %v3315 = vadd.f32 %v2868, %v3217
      %v3316 = vadd.f32 %v2869, %v3222
      %v3317 = vadd.f32 %v2870, %v3225
      %v3318 = vadd.f32 %v2871, %v3230
      %v3319 = vadd.f32 %v2872, %v3233
      %v3320 = vadd.f32 %v2873, %v3238
      %v3321 = vadd.f32 %v2874, %v3241
      %v3322 = vadd.f32 %v2875, %v3246
      %v3323 = vadd.f32 %v2876, %v3249
      %v3324 = vadd.f32 %v2877, %v3254
      %v3325 = vadd.f32 %v2878, %v3257
      %v3326 = vadd.f32 %v2879, %v3262
      %v3327 = vadd.f32 %v2880, %v3265
      %v3328 = vadd.f32 %v2881, %v3270
      %v3329 = vadd.f32 %v2882, %v3273
      %v3330 = vadd.f32 %v2883, %v3278
      %v3331 = vadd.f32 %v2884, %v3281
      %v3332 = vadd.f32 %v2885, %v3286
      %v3333 = vadd.f32 %v2886, %v3289
      %v3334 = vadd.f32 %v2887, %v3294
      %v3335 = vadd.f32 %v2888, %v3297
      %v3336 = vld [vmem:[%s192 + $0x10] sm:$0x8]
      %s3337 = scalar_lea.vmem %s1, 16
      %v3338 = vld [vmem:[%s3337] sm:$0x3]
      %v3340 = vunpack.c.l.b16 %v3336
      %v3341 = vpack.c.b16 %v2527, %v3340
      %vm3342 = vcmask 1044480
      %v3343 = vrot.slane %v3341, 3
      %v3344 = vrot.slane %v2564, 3
      %v3345 = vsel %vm3342, %v3343, %v3344
      %v3346 = vrot.slane %v2565, 3
      %v3347 = vsel %vm3342, %v3344, %v3346
      %v3348 = vrot.slane %v2566, 3
      %v3349 = vsel %vm3342, %v3346, %v3348
      %v3350 = vrot.slane %v2567, 3
      %v3351 = vsel %vm3342, %v3348, %v3350
      %v3352 = vrot.slane %v2568, 3
      %v3353 = vsel %vm3342, %v3350, %v3352
      %v3354 = vrot.slane %v2569, 3
      %v3355 = vsel %vm3342, %v3352, %v3354
      %v3356 = vrot.slane %v2570, 3
      %v3357 = vsel %vm3342, %v3354, %v3356
      %v3358 = vrot.slane %v2571, 3
      %v3359 = vsel %vm3342, %v3356, %v3358
      %v3360 = vrot.slane %v2572, 3
      %v3361 = vsel %vm3342, %v3358, %v3360
      %v3362 = vrot.slane %v2573, 3
      %v3363 = vsel %vm3342, %v3360, %v3362
      %v3364 = vrot.slane %v2574, 3
      %v3365 = vsel %vm3342, %v3362, %v3364
      %v3366 = vrot.slane %v2575, 3
      %v3367 = vsel %vm3342, %v3364, %v3366
      %v3368 = vrot.slane %v2576, 3
      %v3369 = vsel %vm3342, %v3366, %v3368
      %v3370 = vrot.slane %v2577, 3
      %v3371 = vsel %vm3342, %v3368, %v3370
      %v3372 = vrot.slane %v2578, 3
      %v3373 = vsel %vm3342, %v3370, %v3372
      %v3374 = vrot.slane %v2579, 3
      %v3375 = vsel %vm3342, %v3372, %v3374
      %v3376 = vrot.slane %v2580, 3
      %v3377 = vsel %vm3342, %v3374, %v3376
      %v3378 = vrot.slane %v2894, 3
      %v3379 = vsel %vm3342, %v3376, %v3378
      %v3381 = vsel %vm481, %v3345, 0
      %v3384 = vsel %vm481, %v3347, 0
      %v3387 = vsel %vm481, %v3349, 0
      %v3390 = vsel %vm481, %v3351, 0
      %v3393 = vsel %vm481, %v3353, 0
      %v3396 = vsel %vm481, %v3355, 0
      %v3399 = vsel %vm481, %v3357, 0
      %v3402 = vsel %vm481, %v3359, 0
      %v3405 = vsel %vm481, %v3361, 0
      %v3408 = vsel %vm481, %v3363, 0
      %v3411 = vsel %vm481, %v3365, 0
      %v3414 = vsel %vm481, %v3367, 0
      %v3417 = vsel %vm481, %v3369, 0
      %v3420 = vsel %vm481, %v3371, 0
      %v3423 = vsel %vm481, %v3373, 0
      %v3426 = vsel %vm481, %v3375, 0
      %v3429 = vsel %vm481, %v3377, 0
      %v3432 = vsel %vm481, %v3379, 0
      %v3435 = vand.u32 %v3338, %v539
      %3437 = vmatprep.subr.bf16.mxu0 0
      %3438 = vmatpush1.bf16.msra.mxu0 0
      %3439 = vmatprep.subr.bf16.mxu0 0
      %3440 = vmatpush1.bf16.msra.mxu0 0
      %3441 = vmatprep.subr.bf16.mxu0 0
      %3442 = vmatpush1.bf16.msra.mxu0 0
      %3443 = vmatprep.subr.bf16.mxu0 0
      %3444 = vmatpush1.bf16.msra.mxu0 0
      %3445 = vmatprep.subr.bf16.mxu0 0
      %3446 = vmatpush1.bf16.msra.mxu0 0
      %3447 = vmatprep.subr.bf16.mxu0 0
      %3448 = vmatpush1.bf16.msra.mxu0 0
      %3449 = vmatprep.subr.bf16.mxu0 0
      %3450 = vmatpush1.bf16.msra.mxu0 0
      %3451 = vmatprep.subr.bf16.mxu0 0
      %3452 = vmatpush1.bf16.msra.mxu0 %v3435
      %3453 = vmatprep.subr.bf16.mxu0 0
      %3454 = vmatpush2.bf16.msra.mxu0 0
      %3455 = vmatprep.subr.bf16.mxu0 0
      %3456 = vmatpush2.bf16.msra.mxu0 0
      %3457 = vmatprep.subr.bf16.mxu0 0
      %3458 = vmatpush2.bf16.msra.mxu0 0
      %3459 = vmatprep.subr.bf16.mxu0 0
      %3460 = vmatpush2.bf16.msra.mxu0 0
      %3461 = vmatprep.subr.bf16.mxu0 0
      %3462 = vmatpush2.bf16.msra.mxu0 0
      %3463 = vmatprep.subr.bf16.mxu0 0
      %3464 = vmatpush2.bf16.msra.mxu0 0
      %3465 = vmatprep.subr.bf16.mxu0 0
      %3466 = vmatpush2.bf16.msra.mxu0 0
      %3467 = vmatprep.subr.bf16.mxu0 0
      %3468 = vmatpush2.bf16.msra.mxu0 0
      %3469 = vmatprep.mubr.bf16.mxu0 0
      %3470 = vmatmul.mubr.bf16.gmra.mxu0 %v3381
      %v3471 = vpop.f32.mrf.mxu0
      %v3472 = vadd.f32 0.0, %v3471
      %v3473 = vpop.f32.mrf.mxu0
      %v3474 = vpop.f32.mrf.mxu0
      %v3475 = vadd.f32 0.0, %v3474
      %v3476 = vpop.f32.mrf.mxu0
      %3477 = vmatprep.mubr.bf16.mxu0 0
      %3478 = vmatmul.mubr.bf16.gmra.mxu0 %v3384
      %v3479 = vpop.f32.mrf.mxu0
      %v3480 = vadd.f32 0.0, %v3479
      %v3481 = vpop.f32.mrf.mxu0
      %v3482 = vpop.f32.mrf.mxu0
      %v3483 = vadd.f32 0.0, %v3482
      %v3484 = vpop.f32.mrf.mxu0
      %3485 = vmatprep.mubr.bf16.mxu0 0
      %3486 = vmatmul.mubr.bf16.gmra.mxu0 %v3387
      %v3487 = vpop.f32.mrf.mxu0
      %v3488 = vadd.f32 0.0, %v3487
      %v3489 = vpop.f32.mrf.mxu0
      %v3490 = vpop.f32.mrf.mxu0
      %v3491 = vadd.f32 0.0, %v3490
      %v3492 = vpop.f32.mrf.mxu0
      %3493 = vmatprep.mubr.bf16.mxu0 0
      %3494 = vmatmul.mubr.bf16.gmra.mxu0 %v3390
      %v3495 = vpop.f32.mrf.mxu0
      %v3496 = vadd.f32 0.0, %v3495
      %v3497 = vpop.f32.mrf.mxu0
      %v3498 = vpop.f32.mrf.mxu0
      %v3499 = vadd.f32 0.0, %v3498
      %v3500 = vpop.f32.mrf.mxu0
      %3501 = vmatprep.mubr.bf16.mxu0 0
      %3502 = vmatmul.mubr.bf16.gmra.mxu0 %v3393
      %v3503 = vpop.f32.mrf.mxu0
      %v3504 = vadd.f32 0.0, %v3503
      %v3505 = vpop.f32.mrf.mxu0
      %v3506 = vpop.f32.mrf.mxu0
      %v3507 = vadd.f32 0.0, %v3506
      %v3508 = vpop.f32.mrf.mxu0
      %3509 = vmatprep.mubr.bf16.mxu0 0
      %3510 = vmatmul.mubr.bf16.gmra.mxu0 %v3396
      %v3511 = vpop.f32.mrf.mxu0
      %v3512 = vadd.f32 0.0, %v3511
      %v3513 = vpop.f32.mrf.mxu0
      %v3514 = vpop.f32.mrf.mxu0
      %v3515 = vadd.f32 0.0, %v3514
      %v3516 = vpop.f32.mrf.mxu0
      %3517 = vmatprep.mubr.bf16.mxu0 0
      %3518 = vmatmul.mubr.bf16.gmra.mxu0 %v3399
      %v3519 = vpop.f32.mrf.mxu0
      %v3520 = vadd.f32 0.0, %v3519
      %v3521 = vpop.f32.mrf.mxu0
      %v3522 = vpop.f32.mrf.mxu0
      %v3523 = vadd.f32 0.0, %v3522
      %v3524 = vpop.f32.mrf.mxu0
      %3525 = vmatprep.mubr.bf16.mxu0 0
      %3526 = vmatmul.mubr.bf16.gmra.mxu0 %v3402
      %v3527 = vpop.f32.mrf.mxu0
      %v3528 = vadd.f32 0.0, %v3527
      %v3529 = vpop.f32.mrf.mxu0
      %v3530 = vpop.f32.mrf.mxu0
      %v3531 = vadd.f32 0.0, %v3530
      %v3532 = vpop.f32.mrf.mxu0
      %3533 = vmatprep.mubr.bf16.mxu0 0
      %3534 = vmatmul.mubr.bf16.gmra.mxu0 %v3405
      %v3535 = vpop.f32.mrf.mxu0
      %v3536 = vadd.f32 0.0, %v3535
      %v3537 = vpop.f32.mrf.mxu0
      %v3538 = vpop.f32.mrf.mxu0
      %v3539 = vadd.f32 0.0, %v3538
      %v3540 = vpop.f32.mrf.mxu0
      %3541 = vmatprep.mubr.bf16.mxu0 0
      %3542 = vmatmul.mubr.bf16.gmra.mxu0 %v3408
      %v3543 = vpop.f32.mrf.mxu0
      %v3544 = vadd.f32 0.0, %v3543
      %v3545 = vpop.f32.mrf.mxu0
      %v3546 = vpop.f32.mrf.mxu0
      %v3547 = vadd.f32 0.0, %v3546
      %v3548 = vpop.f32.mrf.mxu0
      %3549 = vmatprep.mubr.bf16.mxu0 0
      %3550 = vmatmul.mubr.bf16.gmra.mxu0 %v3411
      %v3551 = vpop.f32.mrf.mxu0
      %v3552 = vadd.f32 0.0, %v3551
      %v3553 = vpop.f32.mrf.mxu0
      %v3554 = vpop.f32.mrf.mxu0
      %v3555 = vadd.f32 0.0, %v3554
      %v3556 = vpop.f32.mrf.mxu0
      %3557 = vmatprep.mubr.bf16.mxu0 0
      %3558 = vmatmul.mubr.bf16.gmra.mxu0 %v3414
      %v3559 = vpop.f32.mrf.mxu0
      %v3560 = vadd.f32 0.0, %v3559
      %v3561 = vpop.f32.mrf.mxu0
      %v3562 = vpop.f32.mrf.mxu0
      %v3563 = vadd.f32 0.0, %v3562
      %v3564 = vpop.f32.mrf.mxu0
      %3565 = vmatprep.mubr.bf16.mxu0 0
      %3566 = vmatmul.mubr.bf16.gmra.mxu0 %v3417
      %v3567 = vpop.f32.mrf.mxu0
      %v3568 = vadd.f32 0.0, %v3567
      %v3569 = vpop.f32.mrf.mxu0
      %v3570 = vpop.f32.mrf.mxu0
      %v3571 = vadd.f32 0.0, %v3570
      %v3572 = vpop.f32.mrf.mxu0
      %3573 = vmatprep.mubr.bf16.mxu0 0
      %3574 = vmatmul.mubr.bf16.gmra.mxu0 %v3420
      %v3575 = vpop.f32.mrf.mxu0
      %v3576 = vadd.f32 0.0, %v3575
      %v3577 = vpop.f32.mrf.mxu0
      %v3578 = vpop.f32.mrf.mxu0
      %v3579 = vadd.f32 0.0, %v3578
      %v3580 = vpop.f32.mrf.mxu0
      %3581 = vmatprep.mubr.bf16.mxu0 0
      %3582 = vmatmul.mubr.bf16.gmra.mxu0 %v3423
      %v3583 = vpop.f32.mrf.mxu0
      %v3584 = vadd.f32 0.0, %v3583
      %v3585 = vpop.f32.mrf.mxu0
      %v3586 = vpop.f32.mrf.mxu0
      %v3587 = vadd.f32 0.0, %v3586
      %v3588 = vpop.f32.mrf.mxu0
      %3589 = vmatprep.mubr.bf16.mxu0 0
      %3590 = vmatmul.mubr.bf16.gmra.mxu0 %v3426
      %v3591 = vpop.f32.mrf.mxu0
      %v3592 = vadd.f32 0.0, %v3591
      %v3593 = vpop.f32.mrf.mxu0
      %v3594 = vpop.f32.mrf.mxu0
      %v3595 = vadd.f32 0.0, %v3594
      %v3596 = vpop.f32.mrf.mxu0
      %3597 = vmatprep.mubr.bf16.mxu0 0
      %3598 = vmatmul.mubr.bf16.gmra.mxu0 %v3429
      %v3599 = vpop.f32.mrf.mxu0
      %v3600 = vadd.f32 0.0, %v3599
      %v3601 = vpop.f32.mrf.mxu0
      %v3602 = vpop.f32.mrf.mxu0
      %v3603 = vadd.f32 0.0, %v3602
      %v3604 = vpop.f32.mrf.mxu0
      %3605 = vmatprep.mubr.bf16.mxu0 0
      %3606 = vmatmul.mubr.bf16.gmra.mxu0 %v3432
      %v3607 = vpop.f32.mrf.mxu0
      %v3608 = vadd.f32 0.0, %v3607
      %v3609 = vpop.f32.mrf.mxu0
      %v3610 = vpop.f32.mrf.mxu0
      %v3611 = vadd.f32 0.0, %v3610
      %v3612 = vpop.f32.mrf.mxu0
      %3613 = vdwg.mxu0
      %v3614 = vadd.f32 %v3300, %v3472
      %v3615 = vadd.f32 %v3301, %v3475
      %v3616 = vadd.f32 %v3302, %v3480
      %v3617 = vadd.f32 %v3303, %v3483
      %v3618 = vadd.f32 %v3304, %v3488
      %v3619 = vadd.f32 %v3305, %v3491
      %v3620 = vadd.f32 %v3306, %v3496
      %v3621 = vadd.f32 %v3307, %v3499
      %v3622 = vadd.f32 %v3308, %v3504
      %v3623 = vadd.f32 %v3309, %v3507
      %v3624 = vadd.f32 %v3310, %v3512
      %v3625 = vadd.f32 %v3311, %v3515
      %v3626 = vadd.f32 %v3312, %v3520
      %v3627 = vadd.f32 %v3313, %v3523
      %v3628 = vadd.f32 %v3314, %v3528
      %v3629 = vadd.f32 %v3315, %v3531
      %v3630 = vadd.f32 %v3316, %v3536
      %v3631 = vadd.f32 %v3317, %v3539
      %v3632 = vadd.f32 %v3318, %v3544
      %v3633 = vadd.f32 %v3319, %v3547
      %v3634 = vadd.f32 %v3320, %v3552
      %v3635 = vadd.f32 %v3321, %v3555
      %v3636 = vadd.f32 %v3322, %v3560
      %v3637 = vadd.f32 %v3323, %v3563
      %v3638 = vadd.f32 %v3324, %v3568
      %v3639 = vadd.f32 %v3325, %v3571
      %v3640 = vadd.f32 %v3326, %v3576
      %v3641 = vadd.f32 %v3327, %v3579
      %v3642 = vadd.f32 %v3328, %v3584
      %v3643 = vadd.f32 %v3329, %v3587
      %v3644 = vadd.f32 %v3330, %v3592
      %v3645 = vadd.f32 %v3331, %v3595
      %v3646 = vadd.f32 %v3332, %v3600
      %v3647 = vadd.f32 %v3333, %v3603
      %v3648 = vadd.f32 %v3334, %v3608
      %v3649 = vadd.f32 %v3335, %v3611
      %v3650 = vld [vmem:[%s2] sm:$0x1]
      %v3652 = vlaneseq
      %v3653 = vshrl.u32 %v3652, 7
      %v3654 = vsub.s32 0, %v3653
      %v3655 = vrot.slane %v3650, %v3654
      %v3657 = vadd.f32 %v3614, %v3655
      %v3658 = vadd.f32 %v3615, %v3655
      %v3659 = vadd.f32 %v3616, %v3655
      %v3660 = vadd.f32 %v3617, %v3655
      %v3661 = vadd.f32 %v3618, %v3655
      %v3662 = vadd.f32 %v3619, %v3655
      %v3663 = vadd.f32 %v3620, %v3655
      %v3664 = vadd.f32 %v3621, %v3655
      %v3665 = vadd.f32 %v3622, %v3655
      %v3666 = vadd.f32 %v3623, %v3655
      %v3667 = vadd.f32 %v3624, %v3655
      %v3668 = vadd.f32 %v3625, %v3655
      %v3669 = vadd.f32 %v3626, %v3655
      %v3670 = vadd.f32 %v3627, %v3655
      %v3671 = vadd.f32 %v3628, %v3655
      %v3672 = vadd.f32 %v3629, %v3655
      %v3673 = vadd.f32 %v3630, %v3655
      %v3674 = vadd.f32 %v3631, %v3655
      %v3675 = vadd.f32 %v3632, %v3655
      %v3676 = vadd.f32 %v3633, %v3655
      %v3677 = vadd.f32 %v3634, %v3655
      %v3678 = vadd.f32 %v3635, %v3655
      %v3679 = vadd.f32 %v3636, %v3655
      %v3680 = vadd.f32 %v3637, %v3655
      %v3681 = vadd.f32 %v3638, %v3655
      %v3682 = vadd.f32 %v3639, %v3655
      %v3683 = vadd.f32 %v3640, %v3655
      %v3684 = vadd.f32 %v3641, %v3655
      %v3685 = vadd.f32 %v3642, %v3655
      %v3686 = vadd.f32 %v3643, %v3655
      %v3687 = vadd.f32 %v3644, %v3655
      %v3688 = vadd.f32 %v3645, %v3655
      %v3689 = vadd.f32 %v3646, %v3655
      %v3690 = vadd.f32 %v3647, %v3655
      %v3691 = vadd.f32 %v3648, %v3655
      %v3692 = vadd.f32 %v3649, %v3655
      %v3693 = vmax.f32 %v3657, 0.0
      %v3694 = vmax.f32 %v3658, 0.0
      %v3695 = vmax.f32 %v3659, 0.0
      %v3696 = vmax.f32 %v3660, 0.0
      %v3697 = vmax.f32 %v3661, 0.0
      %v3698 = vmax.f32 %v3662, 0.0
      %v3699 = vmax.f32 %v3663, 0.0
      %v3700 = vmax.f32 %v3664, 0.0
      %v3701 = vmax.f32 %v3665, 0.0
      %v3702 = vmax.f32 %v3666, 0.0
      %v3703 = vmax.f32 %v3667, 0.0
      %v3704 = vmax.f32 %v3668, 0.0
      %v3705 = vmax.f32 %v3669, 0.0
      %v3706 = vmax.f32 %v3670, 0.0
      %v3707 = vmax.f32 %v3671, 0.0
      %v3708 = vmax.f32 %v3672, 0.0
      %v3709 = vmax.f32 %v3673, 0.0
      %v3710 = vmax.f32 %v3674, 0.0
      %v3711 = vmax.f32 %v3675, 0.0
      %v3712 = vmax.f32 %v3676, 0.0
      %v3713 = vmax.f32 %v3677, 0.0
      %v3714 = vmax.f32 %v3678, 0.0
      %v3715 = vmax.f32 %v3679, 0.0
      %v3716 = vmax.f32 %v3680, 0.0
      %v3717 = vmax.f32 %v3681, 0.0
      %v3718 = vmax.f32 %v3682, 0.0
      %v3719 = vmax.f32 %v3683, 0.0
      %v3720 = vmax.f32 %v3684, 0.0
      %v3721 = vmax.f32 %v3685, 0.0
      %v3722 = vmax.f32 %v3686, 0.0
      %v3723 = vmax.f32 %v3687, 0.0
      %v3724 = vmax.f32 %v3688, 0.0
      %v3725 = vmax.f32 %v3689, 0.0
      %v3726 = vmax.f32 %v3690, 0.0
      %v3727 = vmax.f32 %v3691, 0.0
      %v3728 = vmax.f32 %v3692, 0.0
      %v3729 = vld [vmem:[%s3] sm:$0xff]
      %v3730 = vld [vmem:[%s3 + $0x8] sm:$0xff]
      %v3731 = vld [vmem:[%s3 + $0x10] sm:$0xff]
      %v3732 = vld [vmem:[%s3 + $0x18] sm:$0xff]
      %v3733 = vld [vmem:[%s3 + $0x20] sm:$0xff]
      %v3734 = vld [vmem:[%s3 + $0x28] sm:$0xff]
      %v3735 = vld [vmem:[%s3 + $0x30] sm:$0xff]
      %v3736 = vld [vmem:[%s3 + $0x38] sm:$0xff]
      %v3737 = vld [vmem:[%s3 + $0x40] sm:$0xff]
      %v3738 = vld [vmem:[%s3 + $0x48] sm:$0xff]
      %v3739 = vld [vmem:[%s3 + $0x50] sm:$0xff]
      %v3740 = vld [vmem:[%s3 + $0x58] sm:$0xff]
      %v3741 = vld [vmem:[%s3 + $0x60] sm:$0xff]
      %v3742 = vld [vmem:[%s3 + $0x68] sm:$0xff]
      %v3743 = vld [vmem:[%s3 + $0x70] sm:$0xff]
      %v3744 = vld [vmem:[%s3 + $0x78] sm:$0xff]
      %v3745 = vld [vmem:[%s3 + $0x80] sm:$0xff]
      %v3746 = vld [vmem:[%s3 + $0x88] sm:$0xff]
      %v3747 = vld [vmem:[%s3 + $0x90] sm:$0xff]
      %v3748 = vld [vmem:[%s3 + $0x98] sm:$0xff]
      %v3749 = vld [vmem:[%s3 + $0xa0] sm:$0xff]
      %v3750 = vld [vmem:[%s3 + $0xa8] sm:$0xff]
      %v3751 = vld [vmem:[%s3 + $0xb0] sm:$0xff]
      %v3752 = vld [vmem:[%s3 + $0xb8] sm:$0xff]
      %v3753 = vld [vmem:[%s3 + $0xc0] sm:$0xff]
      %v3754 = vld [vmem:[%s3 + $0xc8] sm:$0xff]
      %v3755 = vld [vmem:[%s3 + $0xd0] sm:$0xff]
      %v3756 = vld [vmem:[%s3 + $0xd8] sm:$0xff]
      %v3757 = vld [vmem:[%s3 + $0xe0] sm:$0xff]
      %v3758 = vld [vmem:[%s3 + $0xe8] sm:$0xff]
      %v3759 = vld [vmem:[%s3 + $0xf0] sm:$0xff]
      %v3760 = vld [vmem:[%s3 + $0xf8] sm:$0xff]
      %v3761 = vld [vmem:[%s3 + $0x100] sm:$0xff]
      %v3762 = vld [vmem:[%s3 + $0x108] sm:$0xff]
      %v3763 = vld [vmem:[%s3 + $0x110] sm:$0xff]
      %v3764 = vld [vmem:[%s3 + $0x118] sm:$0xff]
      %3766 = vset.pattern.permute.xlu0 0
      %3767 = vperm.xlu0 %3766, %v3729
      %v3768 = vpop.permute.xlu0 %3767
      %3771 = vset.pattern.permute.xlu0 0
      %3772 = vperm.xlu0 %3771, %v3730
      %v3773 = vpop.permute.xlu0 %3772
      %3776 = vset.pattern.permute.xlu0 0
      %3777 = vperm.xlu0 %3776, %v3731
      %v3778 = vpop.permute.xlu0 %3777
      %3781 = vset.pattern.permute.xlu0 0
      %3782 = vperm.xlu0 %3781, %v3732
      %v3783 = vpop.permute.xlu0 %3782
      %3786 = vset.pattern.permute.xlu0 0
      %3787 = vperm.xlu0 %3786, %v3733
      %v3788 = vpop.permute.xlu0 %3787
      %3791 = vset.pattern.permute.xlu0 0
      %3792 = vperm.xlu0 %3791, %v3734
      %v3793 = vpop.permute.xlu0 %3792
      %3796 = vset.pattern.permute.xlu0 0
      %3797 = vperm.xlu0 %3796, %v3735
      %v3798 = vpop.permute.xlu0 %3797
      %3801 = vset.pattern.permute.xlu0 0
      %3802 = vperm.xlu0 %3801, %v3736
      %v3803 = vpop.permute.xlu0 %3802
      %3806 = vset.pattern.permute.xlu0 0
      %3807 = vperm.xlu0 %3806, %v3737
      %v3808 = vpop.permute.xlu0 %3807
      %3811 = vset.pattern.permute.xlu0 0
      %3812 = vperm.xlu0 %3811, %v3738
      %v3813 = vpop.permute.xlu0 %3812
      %3816 = vset.pattern.permute.xlu0 0
      %3817 = vperm.xlu0 %3816, %v3739
      %v3818 = vpop.permute.xlu0 %3817
      %3821 = vset.pattern.permute.xlu0 0
      %3822 = vperm.xlu0 %3821, %v3740
      %v3823 = vpop.permute.xlu0 %3822
      %3826 = vset.pattern.permute.xlu0 0
      %3827 = vperm.xlu0 %3826, %v3741
      %v3828 = vpop.permute.xlu0 %3827
      %3831 = vset.pattern.permute.xlu0 0
      %3832 = vperm.xlu0 %3831, %v3742
      %v3833 = vpop.permute.xlu0 %3832
      %3836 = vset.pattern.permute.xlu0 0
      %3837 = vperm.xlu0 %3836, %v3743
      %v3838 = vpop.permute.xlu0 %3837
      %3841 = vset.pattern.permute.xlu0 0
      %3842 = vperm.xlu0 %3841, %v3744
      %v3843 = vpop.permute.xlu0 %3842
      %3846 = vset.pattern.permute.xlu0 0
      %3847 = vperm.xlu0 %3846, %v3745
      %v3848 = vpop.permute.xlu0 %3847
      %3851 = vset.pattern.permute.xlu0 0
      %3852 = vperm.xlu0 %3851, %v3746
      %v3853 = vpop.permute.xlu0 %3852
      %3856 = vset.pattern.permute.xlu0 0
      %3857 = vperm.xlu0 %3856, %v3747
      %v3858 = vpop.permute.xlu0 %3857
      %3861 = vset.pattern.permute.xlu0 0
      %3862 = vperm.xlu0 %3861, %v3748
      %v3863 = vpop.permute.xlu0 %3862
      %3866 = vset.pattern.permute.xlu0 0
      %3867 = vperm.xlu0 %3866, %v3749
      %v3868 = vpop.permute.xlu0 %3867
      %3871 = vset.pattern.permute.xlu0 0
      %3872 = vperm.xlu0 %3871, %v3750
      %v3873 = vpop.permute.xlu0 %3872
      %3876 = vset.pattern.permute.xlu0 0
      %3877 = vperm.xlu0 %3876, %v3751
      %v3878 = vpop.permute.xlu0 %3877
      %3881 = vset.pattern.permute.xlu0 0
      %3882 = vperm.xlu0 %3881, %v3752
      %v3883 = vpop.permute.xlu0 %3882
      %3886 = vset.pattern.permute.xlu0 0
      %3887 = vperm.xlu0 %3886, %v3753
      %v3888 = vpop.permute.xlu0 %3887
      %3891 = vset.pattern.permute.xlu0 0
      %3892 = vperm.xlu0 %3891, %v3754
      %v3893 = vpop.permute.xlu0 %3892
      %3896 = vset.pattern.permute.xlu0 0
      %3897 = vperm.xlu0 %3896, %v3755
      %v3898 = vpop.permute.xlu0 %3897
      %3901 = vset.pattern.permute.xlu0 0
      %3902 = vperm.xlu0 %3901, %v3756
      %v3903 = vpop.permute.xlu0 %3902
      %3906 = vset.pattern.permute.xlu0 0
      %3907 = vperm.xlu0 %3906, %v3757
      %v3908 = vpop.permute.xlu0 %3907
      %3911 = vset.pattern.permute.xlu0 0
      %3912 = vperm.xlu0 %3911, %v3758
      %v3913 = vpop.permute.xlu0 %3912
      %3916 = vset.pattern.permute.xlu0 0
      %3917 = vperm.xlu0 %3916, %v3759
      %v3918 = vpop.permute.xlu0 %3917
      %3921 = vset.pattern.permute.xlu0 0
      %3922 = vperm.xlu0 %3921, %v3760
      %v3923 = vpop.permute.xlu0 %3922
      %3926 = vset.pattern.permute.xlu0 0
      %3927 = vperm.xlu0 %3926, %v3761
      %v3928 = vpop.permute.xlu0 %3927
      %3931 = vset.pattern.permute.xlu0 0
      %3932 = vperm.xlu0 %3931, %v3762
      %v3933 = vpop.permute.xlu0 %3932
      %3936 = vset.pattern.permute.xlu0 0
      %3937 = vperm.xlu0 %3936, %v3763
      %v3938 = vpop.permute.xlu0 %3937
      %3941 = vset.pattern.permute.xlu0 0
      %3942 = vperm.xlu0 %3941, %v3764
      %v3943 = vpop.permute.xlu0 %3942
      %v3945 = vmul.f32 %v3693, %v3768
      %v3946 = vmul.f32 %v3694, %v3773
      %v3947 = vmul.f32 %v3695, %v3778
      %v3948 = vmul.f32 %v3696, %v3783
      %v3949 = vmul.f32 %v3697, %v3788
      %v3950 = vmul.f32 %v3698, %v3793
      %v3951 = vmul.f32 %v3699, %v3798
      %v3952 = vmul.f32 %v3700, %v3803
      %v3953 = vmul.f32 %v3701, %v3808
      %v3954 = vmul.f32 %v3702, %v3813
      %v3955 = vmul.f32 %v3703, %v3818
      %v3956 = vmul.f32 %v3704, %v3823
      %v3957 = vmul.f32 %v3705, %v3828
      %v3958 = vmul.f32 %v3706, %v3833
      %v3959 = vmul.f32 %v3707, %v3838
      %v3960 = vmul.f32 %v3708, %v3843
      %v3961 = vmul.f32 %v3709, %v3848
      %v3962 = vmul.f32 %v3710, %v3853
      %v3963 = vmul.f32 %v3711, %v3858
      %v3964 = vmul.f32 %v3712, %v3863
      %v3965 = vmul.f32 %v3713, %v3868
      %v3966 = vmul.f32 %v3714, %v3873
      %v3967 = vmul.f32 %v3715, %v3878
      %v3968 = vmul.f32 %v3716, %v3883
      %v3969 = vmul.f32 %v3717, %v3888
      %v3970 = vmul.f32 %v3718, %v3893
      %v3971 = vmul.f32 %v3719, %v3898
      %v3972 = vmul.f32 %v3720, %v3903
      %v3973 = vmul.f32 %v3721, %v3908
      %v3974 = vmul.f32 %v3722, %v3913
      %v3975 = vmul.f32 %v3723, %v3918
      %v3976 = vmul.f32 %v3724, %v3923
      %v3977 = vmul.f32 %v3725, %v3928
      %v3978 = vmul.f32 %v3726, %v3933
      %v3979 = vmul.f32 %v3727, %v3938
      %v3980 = vmul.f32 %v3728, %v3943
      %v3981 = vpack.c.bf16 %v3946, %v3945
      %v3982 = vpack.c.bf16 %v3948, %v3947
      %v3983 = vpack.c.bf16 %v3950, %v3949
      %v3984 = vpack.c.bf16 %v3952, %v3951
      %v3985 = vpack.c.bf16 %v3954, %v3953
      %v3986 = vpack.c.bf16 %v3956, %v3955
      %v3987 = vpack.c.bf16 %v3958, %v3957
      %v3988 = vpack.c.bf16 %v3960, %v3959
      %v3989 = vpack.c.bf16 %v3962, %v3961
      %v3990 = vpack.c.bf16 %v3964, %v3963
      %v3991 = vpack.c.bf16 %v3966, %v3965
      %v3992 = vpack.c.bf16 %v3968, %v3967
      %v3993 = vpack.c.bf16 %v3970, %v3969
      %v3994 = vpack.c.bf16 %v3972, %v3971
      %v3995 = vpack.c.bf16 %v3974, %v3973
      %v3996 = vpack.c.bf16 %v3976, %v3975
      %v3997 = vpack.c.bf16 %v3978, %v3977
      %v3998 = vpack.c.bf16 %v3980, %v3979
      %v4017 = vunpack.c.l.b16 %v3981
      %v4018 = vunpack.c.h.b16 %v3981
      %v4019 = vunpack.c.l.b16 %v3982
      %v4020 = vunpack.c.h.b16 %v3982
      %v4021 = vunpack.c.l.b16 %v3983
      %v4022 = vunpack.c.h.b16 %v3983
      %v4023 = vunpack.c.l.b16 %v3984
      %v4024 = vunpack.c.h.b16 %v3984
      %v4025 = vunpack.c.l.b16 %v3985
      %v4026 = vunpack.c.h.b16 %v3985
      %v4027 = vunpack.c.l.b16 %v3986
      %v4028 = vunpack.c.h.b16 %v3986
      %v4029 = vunpack.c.l.b16 %v3987
      %v4030 = vunpack.c.h.b16 %v3987
      %v4031 = vunpack.c.l.b16 %v3988
      %v4032 = vunpack.c.h.b16 %v3988
      %v4033 = vunpack.c.l.b16 %v3989
      %v4034 = vunpack.c.h.b16 %v3989
      %v4035 = vunpack.c.l.b16 %v3990
      %v4036 = vunpack.c.h.b16 %v3990
      %v4037 = vunpack.c.l.b16 %v3991
      %v4038 = vunpack.c.h.b16 %v3991
      %v4039 = vunpack.c.l.b16 %v3992
      %v4040 = vunpack.c.h.b16 %v3992
      %v4041 = vunpack.c.l.b16 %v3993
      %v4042 = vunpack.c.h.b16 %v3993
      %v4043 = vunpack.c.l.b16 %v3994
      %v4044 = vunpack.c.h.b16 %v3994
      %v4045 = vunpack.c.l.b16 %v3995
      %v4046 = vunpack.c.h.b16 %v3995
      %v4047 = vunpack.c.l.b16 %v3996
      %v4048 = vunpack.c.h.b16 %v3996
      %v4049 = vunpack.c.l.b16 %v3997
      %v4050 = vunpack.c.h.b16 %v3997
      %v4051 = vunpack.c.l.b16 %v3998
      %v4052 = vunpack.c.h.b16 %v3998
      %v4053 = vpack.c.b16 %v4017, %v4017
      %v4054 = vpack.c.b16 %v4018, %v4018
      %v4055 = vpack.c.b16 %v4019, %v4019
      %v4056 = vpack.c.b16 %v4020, %v4020
      %v4057 = vpack.c.b16 %v4021, %v4021
      %v4058 = vpack.c.b16 %v4022, %v4022
      %v4059 = vpack.c.b16 %v4023, %v4023
      %v4060 = vpack.c.b16 %v4024, %v4024
      %v4061 = vpack.c.b16 %v4025, %v4025
      %v4062 = vpack.c.b16 %v4026, %v4026
      %v4063 = vpack.c.b16 %v4027, %v4027
      %v4064 = vpack.c.b16 %v4028, %v4028
      %v4065 = vpack.c.b16 %v4029, %v4029
      %v4066 = vpack.c.b16 %v4030, %v4030
      %v4067 = vpack.c.b16 %v4031, %v4031
      %v4068 = vpack.c.b16 %v4032, %v4032
      %v4069 = vpack.c.b16 %v4033, %v4033
      %v4070 = vpack.c.b16 %v4034, %v4034
      %v4071 = vpack.c.b16 %v4035, %v4035
      %v4072 = vpack.c.b16 %v4036, %v4036
      %v4073 = vpack.c.b16 %v4037, %v4037
      %v4074 = vpack.c.b16 %v4038, %v4038
      %v4075 = vpack.c.b16 %v4039, %v4039
      %v4076 = vpack.c.b16 %v4040, %v4040
      %v4077 = vpack.c.b16 %v4041, %v4041
      %v4078 = vpack.c.b16 %v4042, %v4042
      %v4079 = vpack.c.b16 %v4043, %v4043
      %v4080 = vpack.c.b16 %v4044, %v4044
      %v4081 = vpack.c.b16 %v4045, %v4045
      %v4082 = vpack.c.b16 %v4046, %v4046
      %v4083 = vpack.c.b16 %v4047, %v4047
      %v4084 = vpack.c.b16 %v4048, %v4048
      %v4085 = vpack.c.b16 %v4049, %v4049
      %v4086 = vpack.c.b16 %v4050, %v4050
      %v4087 = vpack.c.b16 %v4051, %v4051
      %v4088 = vpack.c.b16 %v4052, %v4052
      %vm4125 = vcmask 125952
      %4126 = vst.msk [vmem:[%s197] sm:$0xf] %vm4125, %v4053
      %4127 = vst.msk [vmem:[%s197 + $0x4] sm:$0xf] %vm4125, %v4054
      %4128 = vst.msk [vmem:[%s197 + $0x8] sm:$0xf] %vm4125, %v4055
      %4129 = vst.msk [vmem:[%s197 + $0xc] sm:$0xf] %vm4125, %v4056
      %4130 = vst.msk [vmem:[%s197 + $0x10] sm:$0xf] %vm4125, %v4057
      %4131 = vst.msk [vmem:[%s197 + $0x14] sm:$0xf] %vm4125, %v4058
      %4132 = vst.msk [vmem:[%s197 + $0x18] sm:$0xf] %vm4125, %v4059
      %4133 = vst.msk [vmem:[%s197 + $0x1c] sm:$0xf] %vm4125, %v4060
      %4134 = vst.msk [vmem:[%s197 + $0x20] sm:$0xf] %vm4125, %v4061
      %4135 = vst.msk [vmem:[%s197 + $0x24] sm:$0xf] %vm4125, %v4062
      %4136 = vst.msk [vmem:[%s197 + $0x28] sm:$0xf] %vm4125, %v4063
      %4137 = vst.msk [vmem:[%s197 + $0x2c] sm:$0xf] %vm4125, %v4064
      %4138 = vst.msk [vmem:[%s197 + $0x30] sm:$0xf] %vm4125, %v4065
      %4139 = vst.msk [vmem:[%s197 + $0x34] sm:$0xf] %vm4125, %v4066
      %4140 = vst.msk [vmem:[%s197 + $0x38] sm:$0xf] %vm4125, %v4067
      %4141 = vst.msk [vmem:[%s197 + $0x3c] sm:$0xf] %vm4125, %v4068
      %4142 = vst.msk [vmem:[%s197 + $0x40] sm:$0xf] %vm4125, %v4069
      %4143 = vst.msk [vmem:[%s197 + $0x44] sm:$0xf] %vm4125, %v4070
      %4144 = vst.msk [vmem:[%s197 + $0x48] sm:$0xf] %vm4125, %v4071
      %4145 = vst.msk [vmem:[%s197 + $0x4c] sm:$0xf] %vm4125, %v4072
      %4146 = vst.msk [vmem:[%s197 + $0x50] sm:$0xf] %vm4125, %v4073
      %4147 = vst.msk [vmem:[%s197 + $0x54] sm:$0xf] %vm4125, %v4074
      %4148 = vst.msk [vmem:[%s197 + $0x58] sm:$0xf] %vm4125, %v4075
      %4149 = vst.msk [vmem:[%s197 + $0x5c] sm:$0xf] %vm4125, %v4076
      %4150 = vst.msk [vmem:[%s197 + $0x60] sm:$0xf] %vm4125, %v4077
      %4151 = vst.msk [vmem:[%s197 + $0x64] sm:$0xf] %vm4125, %v4078
      %4152 = vst.msk [vmem:[%s197 + $0x68] sm:$0xf] %vm4125, %v4079
      %4153 = vst.msk [vmem:[%s197 + $0x6c] sm:$0xf] %vm4125, %v4080
      %4154 = vst.msk [vmem:[%s197 + $0x70] sm:$0xf] %vm4125, %v4081
      %4155 = vst.msk [vmem:[%s197 + $0x74] sm:$0xf] %vm4125, %v4082
      %4156 = vst.msk [vmem:[%s197 + $0x78] sm:$0xf] %vm4125, %v4083
      %4157 = vst.msk [vmem:[%s197 + $0x7c] sm:$0xf] %vm4125, %v4084
      %4158 = vst.msk [vmem:[%s197 + $0x80] sm:$0xf] %vm4125, %v4085
      %4159 = vst.msk [vmem:[%s197 + $0x84] sm:$0xf] %vm4125, %v4086
      %4160 = vst.msk [vmem:[%s197 + $0x88] sm:$0xf] %vm4125, %v4087
      %4161 = vst.msk [vmem:[%s197 + $0x8c] sm:$0xf] %vm4125, %v4088
      %p4162 = scmp.lt.s32.totalorder %s15, 3
      %s4163 = scalar_select %p4162, %s15, 3
      %s4164 = smul.addr %s4163, 36
      %s4165 = smul.addr %s4164, 4
      %s4166 = scalar_lea.vmem %s4, %s4165
      // Predicated region
      $region37: #{perceptual_loss_function.6} parent=35 // pred_check
        %p4167 = pneg %p122
      $region38: #{perceptual_loss_function.6} parent=35 // pred_check_branch
        %4169 = sbr.rel (%p4167) target = $region40
      $region39: #{perceptual_loss_function.6} parent=35 // pred_region
        _
      $region40: #{perceptual_loss_function.6} parent=35 // pred_fallthru
        _
    $region36: #{perceptual_loss_function.6} parent=5 // pred_fallthru
      _
    %p4170 = scmp.le.s32.totalorder 2, %s10
    // Predicated region
    $region41: #{perceptual_loss_function.6} parent=5 // pred_check
      %p4171 = pneg %p4170
    $region42: #{perceptual_loss_function.6} parent=5 // pred_check_branch
      %4173 = sbr.rel (%p4171) target = $region44
    $region43: #{perceptual_loss_function.6} parent=5 // pred_region
      %s4174 = ssub.s32 %s10, 2
      // Predicated region
      $region45: #{perceptual_loss_function.6} parent=43 // pred_check
        %p4175 = pneg %p128
      $region46: #{perceptual_loss_function.6} parent=43 // pred_check_branch
        %4177 = sbr.rel (%p4175) target = $region48
      $region47: #{perceptual_loss_function.6} parent=43 // pred_region
        %p4178 = scmp.lt.s32.totalorder %s16, 3
        %s4179 = scalar_select %p4178, %s16, 3
        %s4180 = smul.addr %s4179, 36
        %s4181 = smul.addr %s4180, 4
        %s4182 = scalar_lea.vmem %s4, %s4181
      $region48: #{perceptual_loss_function.6} parent=43 // pred_fallthru
        _
    $region44: #{perceptual_loss_function.6} parent=5 // pred_fallthru
      _
  $region6: #{perceptual_loss_function.6} parent=0 // loop_footer
    %s14 = sadd.s32 1, %s10
  $region7: #{perceptual_loss_function.6} parent=0 // loop_footer_branch
    %9 = sbr.rel target = $region3
  $region8: #{perceptual_loss_function.6} parent=0 // loop_exit
    _

// kernel: perceptual_loss_function.9
$region0: #{perceptual_loss_function.9}
  #allocation0 [shape = 'u32[]', space=smem, size = 0x4, offset = 0x4, fixed_abs, tag = 'smem constant byte address 0x4 - core index']
  #allocation1 [shape = 'u32[144,128]{1,0:T(1,128)}', space=vmem, size = 0x12000, scoped, tag = 'internal scratch']
  #allocation2 [shape = 'f32[1,1]{1,0:T(1,128)}', space=vmem, size = 0x200, scoped, tag = 'scratch operand']
  %s0 = inlined_call_operand.vmem [shape: bf16[4,80,32], index: 0, kind: input, shape index: {}, may-alias: {0,1}]
  %s1 = inlined_call_operand.vmem [shape: bf16[4,80,32], index: 1, kind: input, shape index: {}, may-alias: {0,1}]
  %s2 = inlined_call_operand.vmem [shape: f32[1,32], index: 2, kind: input, shape index: {}]
  %s3 = inlined_call_operand.hbm [shape: f32[1,1], index: 3, kind: output, shape index: {}]
  %s4 = sld [smem:[#allocation0]]
  $region53: #{perceptual_loss_function.9} parent=0
    _
  %s6 = ssub.s32 1, %s4
  %s7 = scalar_select 0, %s6, %s4
  $region1: #{perceptual_loss_function.9} parent=0
    #allocation3 [shape = 'u8[512]{0}', space=vmem, size = 0x400, scoped, tag = 'output window, operand 0, single buffered']
    #allocation4 [shape = 's32[2]{0}', space=sflag, size = 0x8, scoped, tag = 'scoped memory for perceptual_loss_function.9']
    %8 = vsyncpa [#allocation4], 0
    loop: start=0, step=1, limit=4
    $region2: #{perceptual_loss_function.9} parent=1 // loop_pre_header
      _
    $region3: #{perceptual_loss_function.9} parent=1 // loop_header
      %s10 = sphi 0, %s14
      %p11 = scmp.ge.s32.totalorder %s10, 4
      %s20 = sphi 0, %s22
      %s23 = sphi 0, %s20
      %s24 = sphi 0, %s23
      %s40 = sphi 0, %s24
      %s48 = sphi 0, %s50
      %s51 = sphi 0, %s48
      %s52 = sphi 0, %s51
      %s68 = sphi 0, %s52
      %s72 = sphi 0, %s72
      %s74 = sphi 0, %s72
      %s75 = sphi 0, %s74
      %s89 = sphi 0, %s75
      %s93 = sphi 0, %s93
      %s95 = sphi 0, %s93
      %s96 = sphi 0, %s95
      %s110 = sphi 0, %s96
    $region4: #{perceptual_loss_function.9} parent=1 // loop_header_branch
      %13 = sbr.rel (%p11) target = $region8
    $region5: #{perceptual_loss_function.9} parent=1 // loop_body
      %s15 = ssub.s32 %s10, 1
      %s16 = ssub.s32 %s10, 2
      %s17 = sadd.s32 %s10, 1
      %s18 = ssub.s32 %s10, %s17
      %p19 = scmp.eq.s32.totalorder %s18, 0
      %s21 = sadd.s32 %s20, 1
      %s22 = scalar_select %p19, %s20, %s21
      %p25 = pneg %p19
      %p26 = scmp.eq.s32.totalorder %s10, 1
      %p27 = por %p25, %p26
      %p28 = scmp.ne.s32.totalorder %s20, %s23
      %p29 = scmp.eq.s32.totalorder %s10, 0
      %p30 = por %p28, %p29
      %p31 = scmp.ne.s32.totalorder %s20, %s23
      %p32 = scmp.eq.s32.totalorder %s15, 1
      %p33 = por %p31, %p32
      %p34 = scmp.ne.s32.totalorder %s23, %s24
      %p35 = scmp.eq.s32.totalorder %s15, 0
      %p36 = por %p34, %p35
      %p37 = scmp.ne.s32.totalorder %s23, %s24
      %p38 = scmp.eq.s32.totalorder %s16, 1
      %p39 = por %p37, %p38
      %p41 = scmp.ne.s32.totalorder %s24, %s40
      %p42 = scmp.eq.s32.totalorder %s16, 0
      %p43 = por %p41, %p42
      %s44 = sadd.s32 %s10, 2
      %s45 = sadd.s32 %s17, 2
      %s46 = ssub.s32 %s44, %s45
      %p47 = scmp.eq.s32.totalorder %s46, 0
      %s49 = sadd.s32 %s48, 1
      %s50 = scalar_select %p47, %s48, %s49
      %p53 = pneg %p47
      %p54 = scmp.eq.s32.totalorder %s10, 1
      %p55 = por %p53, %p54
      %p56 = scmp.ne.s32.totalorder %s48, %s51
      %p57 = scmp.eq.s32.totalorder %s10, 0
      %p58 = por %p56, %p57
      %p59 = scmp.ne.s32.totalorder %s48, %s51
      %p60 = scmp.eq.s32.totalorder %s15, 1
      %p61 = por %p59, %p60
      %p62 = scmp.ne.s32.totalorder %s51, %s52
      %p63 = scmp.eq.s32.totalorder %s15, 0
      %p64 = por %p62, %p63
      %p65 = scmp.ne.s32.totalorder %s51, %s52
      %p66 = scmp.eq.s32.totalorder %s16, 1
      %p67 = por %p65, %p66
      %p69 = scmp.ne.s32.totalorder %s52, %s68
      %p70 = scmp.eq.s32.totalorder %s16, 0
      %p71 = por %p69, %p70
      %s73 = sadd.s32 %s72, 1
      %p76 = scmp.eq.s32.totalorder %s10, 1
      %p77 = scmp.ne.s32.totalorder %s72, %s74
      %p78 = scmp.eq.s32.totalorder %s10, 0
      %p79 = por %p77, %p78
      %p80 = scmp.ne.s32.totalorder %s72, %s74
      %p81 = scmp.eq.s32.totalorder %s15, 1
      %p82 = por %p80, %p81
      %p83 = scmp.ne.s32.totalorder %s74, %s75
      %p84 = scmp.eq.s32.totalorder %s15, 0
      %p85 = por %p83, %p84
      %p86 = scmp.ne.s32.totalorder %s74, %s75
      %p87 = scmp.eq.s32.totalorder %s16, 1
      %p88 = por %p86, %p87
      %p90 = scmp.ne.s32.totalorder %s75, %s89
      %p91 = scmp.eq.s32.totalorder %s16, 0
      %p92 = por %p90, %p91
      %s94 = sadd.s32 %s93, 1
      %p97 = scmp.eq.s32.totalorder %s10, 1
      %p98 = scmp.ne.s32.totalorder %s93, %s95
      %p99 = scmp.eq.s32.totalorder %s10, 0
      %p100 = por %p98, %p99
      %p101 = scmp.ne.s32.totalorder %s93, %s95
      %p102 = scmp.eq.s32.totalorder %s15, 1
      %p103 = por %p101, %p102
      %p104 = scmp.ne.s32.totalorder %s95, %s96
      %p105 = scmp.eq.s32.totalorder %s15, 0
      %p106 = por %p104, %p105
      %p107 = scmp.ne.s32.totalorder %s95, %s96
      %p108 = scmp.eq.s32.totalorder %s16, 1
      %p109 = por %p107, %p108
      %p111 = scmp.ne.s32.totalorder %s96, %s110
      %p112 = scmp.eq.s32.totalorder %s16, 0
      %p113 = por %p111, %p112
      %p114 = scmp.le.s32.totalorder 1, %s10
      %p115 = scmp.lt.s32.totalorder %s10, 3
      %p116 = pnand %p114, %p115
      %p117 = pneg %p116
      // Predicated region
      $region9: #{perceptual_loss_function.9} parent=5 // pred_check
        _
      $region10: #{perceptual_loss_function.9} parent=5 // pred_check_branch
        %119 = sbr.rel (%p116) target = $region12
      $region11: #{perceptual_loss_function.9} parent=5 // pred_region
        %s120 = ssub.s32 %s10, 1
        // Predicated region
        $region13: #{perceptual_loss_function.9} parent=11 // pred_check
          %p121 = pneg %p85
        $region14: #{perceptual_loss_function.9} parent=11 // pred_check_branch
          %123 = sbr.rel (%p121) target = $region16
        $region15: #{perceptual_loss_function.9} parent=11 // pred_region
          _
        $region16: #{perceptual_loss_function.9} parent=11 // pred_fallthru
          _
      $region12: #{perceptual_loss_function.9} parent=5 // pred_fallthru
        _
      %p124 = scmp.lt.s32.totalorder %s10, 2
      // Predicated region
      $region17: #{perceptual_loss_function.9} parent=5 // pred_check
        %p125 = pneg %p124
      $region18: #{perceptual_loss_function.9} parent=5 // pred_check_branch
        %127 = sbr.rel (%p125) target = $region20
      $region19: #{perceptual_loss_function.9} parent=5 // pred_region
        // Predicated region
        $region21: #{perceptual_loss_function.9} parent=19 // pred_check
          %p128 = pneg %p30
        $region22: #{perceptual_loss_function.9} parent=19 // pred_check_branch
          %130 = sbr.rel (%p128) target = $region24
        $region23: #{perceptual_loss_function.9} parent=19 // pred_region
          %p131 = scmp.lt.s32.totalorder %s10, 3
          %s132 = scalar_select %p131, %s10, 3
          %s133 = smul.addr %s132, 10
          %s134 = smul.addr %s133, 4
          %s135 = scalar_lea.vmem %s0, %s134
        $region24: #{perceptual_loss_function.9} parent=19 // pred_fallthru
          _
        // Predicated region
        $region25: #{perceptual_loss_function.9} parent=19 // pred_check
          %p136 = pneg %p58
        $region26: #{perceptual_loss_function.9} parent=19 // pred_check_branch
          %138 = sbr.rel (%p136) target = $region28
        $region27: #{perceptual_loss_function.9} parent=19 // pred_region
          %s139 = sadd.s32 %s10, 2
          %p140 = scmp.lt.s32.totalorder %s139, 3
          %s141 = scalar_select %p140, %s139, 3
          %s142 = smul.addr %s141, 10
          %s143 = smul.addr %s142, 4
          %s144 = scalar_lea.vmem %s1, %s143
          %s145 = sadd.s32 %s10, 2
        $region28: #{perceptual_loss_function.9} parent=19 // pred_fallthru
          _
      $region20: #{perceptual_loss_function.9} parent=5 // pred_fallthru
        _
      %p146 = scmp.le.s32.totalorder 1, %s10
      %p147 = scmp.lt.s32.totalorder %s10, 3
      %p148 = pnand %p146, %p147
      %p149 = pneg %p148
      // Predicated region
      $region29: #{perceptual_loss_function.9} parent=5 // pred_check
        _
      $region30: #{perceptual_loss_function.9} parent=5 // pred_check_branch
        %151 = sbr.rel (%p148) target = $region32
      $region31: #{perceptual_loss_function.9} parent=5 // pred_region
        %s152 = ssub.s32 %s10, 1
        %p153 = scmp.lt.s32.totalorder %s15, 3
        %s154 = scalar_select %p153, %s15, 3
        %s155 = smul.addr %s154, 10
        %s156 = smul.addr %s155, 4
        %s157 = scalar_lea.vmem %s0, %s156
        %p158 = pneg %p36
        %p159 = pneg %p33
        %s160 = sadd.s32 %s15, 2
        %p161 = scmp.lt.s32.totalorder %s160, 3
        %s162 = scalar_select %p161, %s160, 3
        %s163 = smul.addr %s162, 10
        %s164 = smul.addr %s163, 4
        %s165 = scalar_lea.vmem %s1, %s164
        %p166 = pneg %p64
        %p167 = pneg %p61
        %p168 = pneg %p85
        %p169 = pneg %p82
        %p170 = pneg %p106
        %p171 = pneg %p103
        %p172 = scmp.lt.s32.totalorder %s15, 3
        %s173 = scalar_select %p172, %s15, 3
        %s174 = smul.addr %s173, 10
        %s175 = smul.addr %s174, 4
        %s176 = scalar_lea.vmem %s0, %s175
        %s177 = sadd.s32 %s15, 2
        %p178 = scmp.lt.s32.totalorder %s177, 3
        %s179 = scalar_select %p178, %s177, 3
        %s180 = smul.addr %s179, 10
        %s181 = smul.addr %s180, 4
        %s182 = scalar_lea.vmem %s1, %s181
        %s183 = sadd.s32 %s15, 2
        %p184 = scmp.eq.s32.totalorder %s15, 0
        // Predicated region
        $region33: #{perceptual_loss_function.9} parent=31 // pred_check
          %p185 = pneg %p184
        $region34: #{perceptual_loss_function.9} parent=31 // pred_check_branch
          %187 = sbr.rel (%p185) target = $region36
        $region35: #{perceptual_loss_function.9} parent=31 // pred_region
          %vm188 = vcmask 0
          %189 = vst.msk [vmem:[#allocation2] sm:$0x1] %vm188, 0.0
        $region36: #{perceptual_loss_function.9} parent=31 // pred_fallthru
          _
        %v190 = vld [vmem:[%s176] sm:$0xf]
        %v191 = vld [vmem:[%s176 + $0x4] sm:$0xf]
        %v192 = vld [vmem:[%s176 + $0x8] sm:$0xf]
        %v193 = vld [vmem:[%s176 + $0xc] sm:$0xf]
        %v194 = vld [vmem:[%s176 + $0x10] sm:$0xf]
        %v195 = vld [vmem:[%s176 + $0x14] sm:$0xf]
        %v196 = vld [vmem:[%s176 + $0x18] sm:$0xf]
        %v197 = vld [vmem:[%s176 + $0x1c] sm:$0xf]
        %v198 = vld [vmem:[%s176 + $0x20] sm:$0xf]
        %v199 = vld [vmem:[%s176 + $0x24] sm:$0xf]
        %v200 = vunpack.c.l.bf16 %v190
        %v201 = vunpack.c.l.bf16 %v191
        %v202 = vunpack.c.l.bf16 %v192
        %v203 = vunpack.c.l.bf16 %v193
        %v204 = vunpack.c.l.bf16 %v194
        %v205 = vunpack.c.l.bf16 %v195
        %v206 = vunpack.c.l.bf16 %v196
        %v207 = vunpack.c.l.bf16 %v197
        %v208 = vunpack.c.l.bf16 %v198
        %v209 = vunpack.c.l.bf16 %v199
        %v210 = vld [vmem:[%s182] sm:$0xf]
        %v211 = vld [vmem:[%s182 + $0x4] sm:$0xf]
        %v212 = vld [vmem:[%s182 + $0x8] sm:$0xf]
        %v213 = vld [vmem:[%s182 + $0xc] sm:$0xf]
        %v214 = vld [vmem:[%s182 + $0x10] sm:$0xf]
        %v215 = vld [vmem:[%s182 + $0x14] sm:$0xf]
        %v216 = vld [vmem:[%s182 + $0x18] sm:$0xf]
        %v217 = vld [vmem:[%s182 + $0x1c] sm:$0xf]
        %v218 = vld [vmem:[%s182 + $0x20] sm:$0xf]
        %v219 = vld [vmem:[%s182 + $0x24] sm:$0xf]
        %v220 = vunpack.c.l.bf16 %v210
        %v221 = vunpack.c.l.bf16 %v211
        %v222 = vunpack.c.l.bf16 %v212
        %v223 = vunpack.c.l.bf16 %v213
        %v224 = vunpack.c.l.bf16 %v214
        %v225 = vunpack.c.l.bf16 %v215
        %v226 = vunpack.c.l.bf16 %v216
        %v227 = vunpack.c.l.bf16 %v217
        %v228 = vunpack.c.l.bf16 %v218
        %v229 = vunpack.c.l.bf16 %v219
        %v230 = vmul.f32 %v200, %v200
        %v231 = vmul.f32 %v201, %v201
        %v232 = vmul.f32 %v202, %v202
        %v233 = vmul.f32 %v203, %v203
        %v234 = vmul.f32 %v204, %v204
        %v235 = vmul.f32 %v205, %v205
        %v236 = vmul.f32 %v206, %v206
        %v237 = vmul.f32 %v207, %v207
        %v238 = vmul.f32 %v208, %v208
        %v239 = vmul.f32 %v209, %v209
        %vm240 = vcmask 261120
        %v241 = vsel %vm240, %v230, 0.0
        %242 = vadd.xlane.f32.xlu0 %v241
        %v243 = vpop.xlane.xlu0 %242
        %v244 = vsel %vm240, %v231, 0.0
        %245 = vadd.xlane.f32.xlu0 %v244
        %v246 = vpop.xlane.xlu0 %245
        %v247 = vsel %vm240, %v232, 0.0
        %248 = vadd.xlane.f32.xlu0 %v247
        %v249 = vpop.xlane.xlu0 %248
        %v250 = vsel %vm240, %v233, 0.0
        %251 = vadd.xlane.f32.xlu0 %v250
        %v252 = vpop.xlane.xlu0 %251
        %v253 = vsel %vm240, %v234, 0.0
        %254 = vadd.xlane.f32.xlu0 %v253
        %v255 = vpop.xlane.xlu0 %254
        %v256 = vsel %vm240, %v235, 0.0
        %257 = vadd.xlane.f32.xlu0 %v256
        %v258 = vpop.xlane.xlu0 %257
        %v259 = vsel %vm240, %v236, 0.0
        %260 = vadd.xlane.f32.xlu0 %v259
        %v261 = vpop.xlane.xlu0 %260
        %v262 = vsel %vm240, %v237, 0.0
        %263 = vadd.xlane.f32.xlu0 %v262
        %v264 = vpop.xlane.xlu0 %263
        %v265 = vsel %vm240, %v238, 0.0
        %266 = vadd.xlane.f32.xlu0 %v265
        %v267 = vpop.xlane.xlu0 %266
        %v268 = vsel %vm240, %v239, 0.0
        %269 = vadd.xlane.f32.xlu0 %v268
        %v270 = vpop.xlane.xlu0 %269
        %v271 = vadd.f32 %v243, 1e-20
        %v272 = vadd.f32 %v246, 1e-20
        %v273 = vadd.f32 %v249, 1e-20
        %v274 = vadd.f32 %v252, 1e-20
        %v275 = vadd.f32 %v255, 1e-20
        %v276 = vadd.f32 %v258, 1e-20
        %v277 = vadd.f32 %v261, 1e-20
        %v278 = vadd.f32 %v264, 1e-20
        %v279 = vadd.f32 %v267, 1e-20
        %v280 = vadd.f32 %v270, 1e-20
        %v281 = vrsqrt.pop %v271
        %v282 = vrsqrt.pop %v272
        %v283 = vrsqrt.pop %v273
        %v284 = vrsqrt.pop %v274
        %v285 = vrsqrt.pop %v275
        %v286 = vrsqrt.pop %v276
        %v287 = vrsqrt.pop %v277
        %v288 = vrsqrt.pop %v278
        %v289 = vrsqrt.pop %v279
        %v290 = vrsqrt.pop %v280
        %v291 = vmul.f32 %v200, %v281
        %v292 = vmul.f32 %v201, %v282
        %v293 = vmul.f32 %v202, %v283
        %v294 = vmul.f32 %v203, %v284
        %v295 = vmul.f32 %v204, %v285
        %v296 = vmul.f32 %v205, %v286
        %v297 = vmul.f32 %v206, %v287
        %v298 = vmul.f32 %v207, %v288
        %v299 = vmul.f32 %v208, %v289
        %v300 = vmul.f32 %v209, %v290
        %v301 = vmul.f32 %v220, %v220
        %v302 = vmul.f32 %v221, %v221
        %v303 = vmul.f32 %v222, %v222
        %v304 = vmul.f32 %v223, %v223
        %v305 = vmul.f32 %v224, %v224
        %v306 = vmul.f32 %v225, %v225
        %v307 = vmul.f32 %v226, %v226
        %v308 = vmul.f32 %v227, %v227
        %v309 = vmul.f32 %v228, %v228
        %v310 = vmul.f32 %v229, %v229
        %v311 = vsel %vm240, %v301, 0.0
        %312 = vadd.xlane.f32.xlu0 %v311
        %v313 = vpop.xlane.xlu0 %312
        %v314 = vsel %vm240, %v302, 0.0
        %315 = vadd.xlane.f32.xlu0 %v314
        %v316 = vpop.xlane.xlu0 %315
        %v317 = vsel %vm240, %v303, 0.0
        %318 = vadd.xlane.f32.xlu0 %v317
        %v319 = vpop.xlane.xlu0 %318
        %v320 = vsel %vm240, %v304, 0.0
        %321 = vadd.xlane.f32.xlu0 %v320
        %v322 = vpop.xlane.xlu0 %321
        %v323 = vsel %vm240, %v305, 0.0
        %324 = vadd.xlane.f32.xlu0 %v323
        %v325 = vpop.xlane.xlu0 %324
        %v326 = vsel %vm240, %v306, 0.0
        %327 = vadd.xlane.f32.xlu0 %v326
        %v328 = vpop.xlane.xlu0 %327
        %v329 = vsel %vm240, %v307, 0.0
        %330 = vadd.xlane.f32.xlu0 %v329
        %v331 = vpop.xlane.xlu0 %330
        %v332 = vsel %vm240, %v308, 0.0
        %333 = vadd.xlane.f32.xlu0 %v332
        %v334 = vpop.xlane.xlu0 %333
        %v335 = vsel %vm240, %v309, 0.0
        %336 = vadd.xlane.f32.xlu0 %v335
        %v337 = vpop.xlane.xlu0 %336
        %v338 = vsel %vm240, %v310, 0.0
        %339 = vadd.xlane.f32.xlu0 %v338
        %v340 = vpop.xlane.xlu0 %339
        %v341 = vadd.f32 %v313, 1e-20
        %v342 = vadd.f32 %v316, 1e-20
        %v343 = vadd.f32 %v319, 1e-20
        %v344 = vadd.f32 %v322, 1e-20
        %v345 = vadd.f32 %v325, 1e-20
        %v346 = vadd.f32 %v328, 1e-20
        %v347 = vadd.f32 %v331, 1e-20
        %v348 = vadd.f32 %v334, 1e-20
        %v349 = vadd.f32 %v337, 1e-20
        %v350 = vadd.f32 %v340, 1e-20
        %v351 = vrsqrt.pop %v341
        %v352 = vrsqrt.pop %v342
        %v353 = vrsqrt.pop %v343
        %v354 = vrsqrt.pop %v344
        %v355 = vrsqrt.pop %v345
        %v356 = vrsqrt.pop %v346
        %v357 = vrsqrt.pop %v347
        %v358 = vrsqrt.pop %v348
        %v359 = vrsqrt.pop %v349
        %v360 = vrsqrt.pop %v350
        %v361 = vmul.f32 %v220, %v351
        %v362 = vmul.f32 %v221, %v352
        %v363 = vmul.f32 %v222, %v353
        %v364 = vmul.f32 %v223, %v354
        %v365 = vmul.f32 %v224, %v355
        %v366 = vmul.f32 %v225, %v356
        %v367 = vmul.f32 %v226, %v357
        %v368 = vmul.f32 %v227, %v358
        %v369 = vmul.f32 %v228, %v359
        %v370 = vmul.f32 %v229, %v360
        %v371 = vsub.f32 %v291, %v361
        %v372 = vsub.f32 %v292, %v362
        %v373 = vsub.f32 %v293, %v363
        %v374 = vsub.f32 %v294, %v364
        %v375 = vsub.f32 %v295, %v365
        %v376 = vsub.f32 %v296, %v366
        %v377 = vsub.f32 %v297, %v367
        %v378 = vsub.f32 %v298, %v368
        %v379 = vsub.f32 %v299, %v369
        %v380 = vsub.f32 %v300, %v370
        %v381 = vmul.f32 %v371, %v371
        %v382 = vmul.f32 %v372, %v372
        %v383 = vmul.f32 %v373, %v373
        %v384 = vmul.f32 %v374, %v374
        %v385 = vmul.f32 %v375, %v375
        %v386 = vmul.f32 %v376, %v376
        %v387 = vmul.f32 %v377, %v377
        %v388 = vmul.f32 %v378, %v378
        %v389 = vmul.f32 %v379, %v379
        %v390 = vmul.f32 %v380, %v380
        %v391 = vld [vmem:[%s2] sm:$0x1]
        %v393 = vlaneseq
        %v394 = vshrl.u32 %v393, 7
        %v395 = vsub.s32 0, %v394
        %v396 = vrot.slane %v391, %v395
        %v398 = vmul.f32 %v381, %v396
        %v399 = vmul.f32 %v382, %v396
        %v400 = vmul.f32 %v383, %v396
        %v401 = vmul.f32 %v384, %v396
        %v402 = vmul.f32 %v385, %v396
        %v403 = vmul.f32 %v386, %v396
        %v404 = vmul.f32 %v387, %v396
        %v405 = vmul.f32 %v388, %v396
        %v406 = vmul.f32 %v389, %v396
        %v407 = vmul.f32 %v390, %v396
        %v408 = vsel %vm240, %v398, 0.0
        %409 = vadd.xlane.f32.xlu0 %v408
        %v410 = vpop.xlane.xlu0 %409
        %v411 = vsel %vm240, %v399, 0.0
        %412 = vadd.xlane.f32.xlu0 %v411
        %v413 = vpop.xlane.xlu0 %412
        %v414 = vsel %vm240, %v400, 0.0
        %415 = vadd.xlane.f32.xlu0 %v414
        %v416 = vpop.xlane.xlu0 %415
        %v417 = vsel %vm240, %v401, 0.0
        %418 = vadd.xlane.f32.xlu0 %v417
        %v419 = vpop.xlane.xlu0 %418
        %v420 = vsel %vm240, %v402, 0.0
        %421 = vadd.xlane.f32.xlu0 %v420
        %v422 = vpop.xlane.xlu0 %421
        %v423 = vsel %vm240, %v403, 0.0
        %424 = vadd.xlane.f32.xlu0 %v423
        %v425 = vpop.xlane.xlu0 %424
        %v426 = vsel %vm240, %v404, 0.0
        %427 = vadd.xlane.f32.xlu0 %v426
        %v428 = vpop.xlane.xlu0 %427
        %v429 = vsel %vm240, %v405, 0.0
        %430 = vadd.xlane.f32.xlu0 %v429
        %v431 = vpop.xlane.xlu0 %430
        %v432 = vsel %vm240, %v406, 0.0
        %433 = vadd.xlane.f32.xlu0 %v432
        %v434 = vpop.xlane.xlu0 %433
        %v435 = vsel %vm240, %v407, 0.0
        %436 = vadd.xlane.f32.xlu0 %v435
        %v437 = vpop.xlane.xlu0 %436
        %v438 = vld [vmem:[#allocation2] sm:$0x1]
        %vm439 = vcmask 7168
        %v440 = vsel %vm439, %v410, 0.0
        %v441 = vsel %vm439, %v413, 0.0
        %v442 = vadd.f32 %v440, %v441
        %v443 = vsel %vm439, %v416, 0.0
        %v444 = vadd.f32 %v442, %v443
        %v445 = vsel %vm439, %v419, 0.0
        %v446 = vadd.f32 %v444, %v445
        %v447 = vsel %vm439, %v422, 0.0
        %v448 = vadd.f32 %v446, %v447
        %v449 = vsel %vm439, %v425, 0.0
        %v450 = vadd.f32 %v448, %v449
        %v451 = vsel %vm439, %v428, 0.0
        %v452 = vadd.f32 %v450, %v451
        %v453 = vsel %vm439, %v431, 0.0
        %v454 = vadd.f32 %v452, %v453
        %v455 = vsel %vm439, %v434, 0.0
        %v456 = vadd.f32 %v454, %v455
        %v457 = vsel %vm439, %v437, 0.0
        %v458 = vadd.f32 %v456, %v457
        %459 = vadd.xlane.f32.xlu0 %v458
        %v460 = vpop.xlane.xlu0 %459
        %v461 = vrot.slane %v460, 4
        %v462 = vadd.f32 %v460, %v461
        %v463 = vrot.slane %v462, 2
        %v464 = vadd.f32 %v462, %v463
        %v465 = vrot.slane %v464, 1
        %v466 = vadd.f32 %v464, %v465
        %s467 = vtos %v466
        %v468 = vstv %s467
        %v469 = vadd.f32 %v438, %v468
        %vm470 = vcmask 0
        %471 = vst.msk [vmem:[#allocation2] sm:$0x1] %vm470, %v469
        %p472 = scmp.eq.s32.totalorder %s15, 1
        // Predicated region
        $region37: #{perceptual_loss_function.9} parent=31 // pred_check
          %p473 = pneg %p472
        $region38: #{perceptual_loss_function.9} parent=31 // pred_check_branch
          %475 = sbr.rel (%p473) target = $region40
        $region39: #{perceptual_loss_function.9} parent=31 // pred_region
          %v476 = vld [vmem:[#allocation2] sm:$0x1]
          %v477 = vmul.f32 %v476, 0.0078125
          %478 = vst.msk [vmem:[#allocation3] sm:$0x1] %vm470, %v477
        $region40: #{perceptual_loss_function.9} parent=31 // pred_fallthru
          _
        // Predicated region
        $region41: #{perceptual_loss_function.9} parent=31 // pred_check
          %p479 = pneg %p103
        $region42: #{perceptual_loss_function.9} parent=31 // pred_check_branch
          %481 = sbr.rel (%p479) target = $region44
        $region43: #{perceptual_loss_function.9} parent=31 // pred_region
          %s483 = ssub.s32 16, 16
          %484 = vsyncadd [#allocation4], %s483
          %s486 = sshll.u32 [#allocation3], 4
          %s487 = int_to_ptr.vmem [resolvable:$true] %s486
          %489 = dma.vmem_to_hbm [thread:$0]  %s487, 16, %s3, [#allocation4]
        $region44: #{perceptual_loss_function.9} parent=31 // pred_fallthru
          _
        // Predicated region
        $region45: #{perceptual_loss_function.9} parent=31 // pred_check
          %p490 = pneg %p103
        $region46: #{perceptual_loss_function.9} parent=31 // pred_check_branch
          %492 = sbr.rel (%p490) target = $region48
        $region47: #{perceptual_loss_function.9} parent=31 // pred_region
          %493 = dma.done [#allocation4], 16
        $region48: #{perceptual_loss_function.9} parent=31 // pred_fallthru
          _
      $region32: #{perceptual_loss_function.9} parent=5 // pred_fallthru
        _
      %p494 = scmp.le.s32.totalorder 2, %s10
      // Predicated region
      $region49: #{perceptual_loss_function.9} parent=5 // pred_check
        %p495 = pneg %p494
      $region50: #{perceptual_loss_function.9} parent=5 // pred_check_branch
        %497 = sbr.rel (%p495) target = $region52
      $region51: #{perceptual_loss_function.9} parent=5 // pred_region
        %s498 = ssub.s32 %s10, 2
      $region52: #{perceptual_loss_function.9} parent=5 // pred_fallthru
        _
    $region6: #{perceptual_loss_function.9} parent=1 // loop_footer
      %s14 = sadd.s32 1, %s10
    $region7: #{perceptual_loss_function.9} parent=1 // loop_footer_branch
      %9 = sbr.rel target = $region3
    $region8: #{perceptual_loss_function.9} parent=1 // loop_exit
      _
    %499 = vsyncpa [#allocation4], 1
    %s500 = scalar_lea.sflag [#allocation4], 1
    %501 = vsyncpa %s500, 1

// kernel: perceptual_loss_function.7
$region0: #{perceptual_loss_function.7}
  #allocation0 [shape = 'u32[]', space=smem, size = 0x4, offset = 0x4, fixed_abs, tag = 'smem constant byte address 0x4 - core index']
  #allocation1 [shape = 'u32[144,128]{1,0:T(1,128)}', space=vmem, size = 0x12000, scoped, tag = 'internal scratch']
  %s0 = inlined_call_operand.vmem [shape: bf16[4,110,16], index: 0, kind: input, shape index: {}]
  %s1 = inlined_call_operand.vmem [shape: bf16[9,16,32], index: 1, kind: input, shape index: {}]
  %s2 = inlined_call_operand.vmem [shape: f32[1,32], index: 2, kind: input, shape index: {}]
  %s3 = inlined_call_operand.vmem [shape: f32[80,1], index: 3, kind: input, shape index: {}]
  %s4 = inlined_call_operand.vmem [shape: bf16[4,80,32], index: 4, kind: output, shape index: {}]
  %s5 = sld [smem:[#allocation0]]
  $region49: #{perceptual_loss_function.7} parent=0
    _
  %s7 = ssub.s32 1, %s5
  %s8 = scalar_select 0, %s7, %s5
  loop: start=0, step=1, limit=6
  $region2: #{perceptual_loss_function.7} parent=0 // loop_pre_header
    _
  $region3: #{perceptual_loss_function.7} parent=0 // loop_header
    %s10 = sphi 0, %s14
    %p11 = scmp.ge.s32.totalorder %s10, 6
    %s20 = sphi 0, %s22
    %s23 = sphi 0, %s20
    %s24 = sphi 0, %s23
    %s40 = sphi 0, %s24
    %s44 = sphi 0, %s44
    %s46 = sphi 0, %s44
    %s47 = sphi 0, %s46
    %s61 = sphi 0, %s47
    %s65 = sphi 0, %s65
    %s67 = sphi 0, %s65
    %s68 = sphi 0, %s67
    %s82 = sphi 0, %s68
    %s86 = sphi 0, %s86
    %s88 = sphi 0, %s86
    %s89 = sphi 0, %s88
    %s103 = sphi 0, %s89
    %s109 = sphi 0, %s111
    %s112 = sphi 0, %s109
    %s113 = sphi 0, %s112
    %s129 = sphi 0, %s113
  $region4: #{perceptual_loss_function.7} parent=0 // loop_header_branch
    %13 = sbr.rel (%p11) target = $region8
  $region5: #{perceptual_loss_function.7} parent=0 // loop_body
    %s15 = ssub.s32 %s10, 1
    %s16 = ssub.s32 %s10, 2
    %s17 = sadd.s32 %s10, 1
    %s18 = ssub.s32 %s10, %s17
    %p19 = scmp.eq.s32.totalorder %s18, 0
    %s21 = sadd.s32 %s20, 1
    %s22 = scalar_select %p19, %s20, %s21
    %p25 = pneg %p19
    %p26 = scmp.eq.s32.totalorder %s10, 3
    %p27 = por %p25, %p26
    %p28 = scmp.ne.s32.totalorder %s20, %s23
    %p29 = scmp.eq.s32.totalorder %s10, 0
    %p30 = por %p28, %p29
    %p31 = scmp.ne.s32.totalorder %s20, %s23
    %p32 = scmp.eq.s32.totalorder %s15, 3
    %p33 = por %p31, %p32
    %p34 = scmp.ne.s32.totalorder %s23, %s24
    %p35 = scmp.eq.s32.totalorder %s15, 0
    %p36 = por %p34, %p35
    %p37 = scmp.ne.s32.totalorder %s23, %s24
    %p38 = scmp.eq.s32.totalorder %s16, 3
    %p39 = por %p37, %p38
    %p41 = scmp.ne.s32.totalorder %s24, %s40
    %p42 = scmp.eq.s32.totalorder %s16, 0
    %p43 = por %p41, %p42
    %s45 = sadd.s32 %s44, 1
    %p48 = scmp.eq.s32.totalorder %s10, 3
    %p49 = scmp.ne.s32.totalorder %s44, %s46
    %p50 = scmp.eq.s32.totalorder %s10, 0
    %p51 = por %p49, %p50
    %p52 = scmp.ne.s32.totalorder %s44, %s46
    %p53 = scmp.eq.s32.totalorder %s15, 3
    %p54 = por %p52, %p53
    %p55 = scmp.ne.s32.totalorder %s46, %s47
    %p56 = scmp.eq.s32.totalorder %s15, 0
    %p57 = por %p55, %p56
    %p58 = scmp.ne.s32.totalorder %s46, %s47
    %p59 = scmp.eq.s32.totalorder %s16, 3
    %p60 = por %p58, %p59
    %p62 = scmp.ne.s32.totalorder %s47, %s61
    %p63 = scmp.eq.s32.totalorder %s16, 0
    %p64 = por %p62, %p63
    %s66 = sadd.s32 %s65, 1
    %p69 = scmp.eq.s32.totalorder %s10, 3
    %p70 = scmp.ne.s32.totalorder %s65, %s67
    %p71 = scmp.eq.s32.totalorder %s10, 0
    %p72 = por %p70, %p71
    %p73 = scmp.ne.s32.totalorder %s65, %s67
    %p74 = scmp.eq.s32.totalorder %s15, 3
    %p75 = por %p73, %p74
    %p76 = scmp.ne.s32.totalorder %s67, %s68
    %p77 = scmp.eq.s32.totalorder %s15, 0
    %p78 = por %p76, %p77
    %p79 = scmp.ne.s32.totalorder %s67, %s68
    %p80 = scmp.eq.s32.totalorder %s16, 3
    %p81 = por %p79, %p80
    %p83 = scmp.ne.s32.totalorder %s68, %s82
    %p84 = scmp.eq.s32.totalorder %s16, 0
    %p85 = por %p83, %p84
    %s87 = sadd.s32 %s86, 1
    %p90 = scmp.eq.s32.totalorder %s10, 3
    %p91 = scmp.ne.s32.totalorder %s86, %s88
    %p92 = scmp.eq.s32.totalorder %s10, 0
    %p93 = por %p91, %p92
    %p94 = scmp.ne.s32.totalorder %s86, %s88
    %p95 = scmp.eq.s32.totalorder %s15, 3
    %p96 = por %p94, %p95
    %p97 = scmp.ne.s32.totalorder %s88, %s89
    %p98 = scmp.eq.s32.totalorder %s15, 0
    %p99 = por %p97, %p98
    %p100 = scmp.ne.s32.totalorder %s88, %s89
    %p101 = scmp.eq.s32.totalorder %s16, 3
    %p102 = por %p100, %p101
    %p104 = scmp.ne.s32.totalorder %s89, %s103
    %p105 = scmp.eq.s32.totalorder %s16, 0
    %p106 = por %p104, %p105
    %s107 = ssub.s32 %s10, %s17
    %p108 = scmp.eq.s32.totalorder %s107, 0
    %s110 = sadd.s32 %s109, 1
    %s111 = scalar_select %p108, %s109, %s110
    %p114 = pneg %p108
    %p115 = scmp.eq.s32.totalorder %s10, 3
    %p116 = por %p114, %p115
    %p117 = scmp.ne.s32.totalorder %s109, %s112
    %p118 = scmp.eq.s32.totalorder %s10, 0
    %p119 = por %p117, %p118
    %p120 = scmp.ne.s32.totalorder %s109, %s112
    %p121 = scmp.eq.s32.totalorder %s15, 3
    %p122 = por %p120, %p121
    %p123 = scmp.ne.s32.totalorder %s112, %s113
    %p124 = scmp.eq.s32.totalorder %s15, 0
    %p125 = por %p123, %p124
    %p126 = scmp.ne.s32.totalorder %s112, %s113
    %p127 = scmp.eq.s32.totalorder %s16, 3
    %p128 = por %p126, %p127
    %p130 = scmp.ne.s32.totalorder %s113, %s129
    %p131 = scmp.eq.s32.totalorder %s16, 0
    %p132 = por %p130, %p131
    %p133 = scmp.le.s32.totalorder 1, %s10
    %p134 = scmp.lt.s32.totalorder %s10, 5
    %p135 = pnand %p133, %p134
    %p136 = pneg %p135
    // Predicated region
    $region9: #{perceptual_loss_function.7} parent=5 // pred_check
      _
    $region10: #{perceptual_loss_function.7} parent=5 // pred_check_branch
      %138 = sbr.rel (%p135) target = $region12
    $region11: #{perceptual_loss_function.7} parent=5 // pred_region
      %s139 = ssub.s32 %s10, 1
      // Predicated region
      $region13: #{perceptual_loss_function.7} parent=11 // pred_check
        %p140 = pneg %p57
      $region14: #{perceptual_loss_function.7} parent=11 // pred_check_branch
        %142 = sbr.rel (%p140) target = $region16
      $region15: #{perceptual_loss_function.7} parent=11 // pred_region
        _
      $region16: #{perceptual_loss_function.7} parent=11 // pred_fallthru
        _
      // Predicated region
      $region17: #{perceptual_loss_function.7} parent=11 // pred_check
        %p143 = pneg %p78
      $region18: #{perceptual_loss_function.7} parent=11 // pred_check_branch
        %145 = sbr.rel (%p143) target = $region20
      $region19: #{perceptual_loss_function.7} parent=11 // pred_region
        _
      $region20: #{perceptual_loss_function.7} parent=11 // pred_fallthru
        _
      // Predicated region
      $region21: #{perceptual_loss_function.7} parent=11 // pred_check
        %p146 = pneg %p99
      $region22: #{perceptual_loss_function.7} parent=11 // pred_check_branch
        %148 = sbr.rel (%p146) target = $region24
      $region23: #{perceptual_loss_function.7} parent=11 // pred_region
        _
      $region24: #{perceptual_loss_function.7} parent=11 // pred_fallthru
        _
    $region12: #{perceptual_loss_function.7} parent=5 // pred_fallthru
      _
    %p149 = scmp.lt.s32.totalorder %s10, 4
    // Predicated region
    $region25: #{perceptual_loss_function.7} parent=5 // pred_check
      %p150 = pneg %p149
    $region26: #{perceptual_loss_function.7} parent=5 // pred_check_branch
      %152 = sbr.rel (%p150) target = $region28
    $region27: #{perceptual_loss_function.7} parent=5 // pred_region
      // Predicated region
      $region29: #{perceptual_loss_function.7} parent=27 // pred_check
        %p153 = pneg %p30
      $region30: #{perceptual_loss_function.7} parent=27 // pred_check_branch
        %155 = sbr.rel (%p153) target = $region32
      $region31: #{perceptual_loss_function.7} parent=27 // pred_region
        %p156 = scmp.lt.s32.totalorder %s10, 3
        %s157 = scalar_select %p156, %s10, 3
        %s158 = smul.addr %s157, 14
        %s159 = smul.addr %s158, 4
        %s160 = scalar_lea.vmem %s0, %s159
      $region32: #{perceptual_loss_function.7} parent=27 // pred_fallthru
        _
    $region28: #{perceptual_loss_function.7} parent=5 // pred_fallthru
      _
    %p161 = scmp.le.s32.totalorder 1, %s10
    %p162 = scmp.lt.s32.totalorder %s10, 5
    %p163 = pnand %p161, %p162
    %p164 = pneg %p163
    // Predicated region
    $region33: #{perceptual_loss_function.7} parent=5 // pred_check
      _
    $region34: #{perceptual_loss_function.7} parent=5 // pred_check_branch
      %166 = sbr.rel (%p163) target = $region36
    $region35: #{perceptual_loss_function.7} parent=5 // pred_region
      %s167 = ssub.s32 %s10, 1
      %p168 = scmp.lt.s32.totalorder %s15, 3
      %s169 = scalar_select %p168, %s15, 3
      %s170 = smul.addr %s169, 14
      %s171 = smul.addr %s170, 4
      %s172 = scalar_lea.vmem %s0, %s171
      %p173 = pneg %p36
      %p174 = pneg %p33
      %p175 = pneg %p57
      %p176 = pneg %p54
      %p177 = pneg %p78
      %p178 = pneg %p75
      %p179 = pneg %p99
      %p180 = pneg %p96
      %p181 = pneg %p125
      %p182 = pneg %p122
      %p183 = scmp.lt.s32.totalorder %s15, 3
      %s184 = scalar_select %p183, %s15, 3
      %s185 = smul.addr %s184, 10
      %s186 = smul.addr %s185, 4
      %s187 = scalar_lea.vmem %s4, %s186
      %p188 = scmp.lt.s32.totalorder %s15, 3
      %s189 = scalar_select %p188, %s15, 3
      %s190 = smul.addr %s189, 14
      %s191 = smul.addr %s190, 4
      %s192 = scalar_lea.vmem %s0, %s191
      %p193 = scmp.lt.s32.totalorder %s15, 3
      %s194 = scalar_select %p193, %s15, 3
      %s195 = smul.addr %s194, 10
      %s196 = smul.addr %s195, 4
      %s197 = scalar_lea.vmem %s4, %s196
      %v199 = vld [vmem:[%s192] sm:$0xf]
      %v200 = vld [vmem:[%s192 + $0x4] sm:$0xf]
      %v201 = vld [vmem:[%s192 + $0x8] sm:$0xf]
      %v202 = vld [vmem:[%s192 + $0xc] sm:$0xf]
      %v203 = vld [vmem:[%s192 + $0x10] sm:$0xf]
      %v204 = vld [vmem:[%s192 + $0x14] sm:$0xf]
      %v205 = vld [vmem:[%s192 + $0x18] sm:$0xf]
      %v206 = vld [vmem:[%s192 + $0x1c] sm:$0xf]
      %v207 = vld [vmem:[%s192 + $0x20] sm:$0xf]
      %v208 = vld [vmem:[%s192 + $0x24] sm:$0xf]
      %v209 = vld [vmem:[%s1] sm:$0xf]
      %v210 = vld [vmem:[%s1 + $0x4] sm:$0xf]
      %v211 = vld [vmem:[%s192 + $0x28] sm:$0x1]
      %s212 = scalar_lea.vmem %s1, 8
      %v213 = vld [vmem:[%s212] sm:$0xf]
      %v214 = vld [vmem:[%s212 + $0x4] sm:$0xf]
      %v226 = vunpack.c.l.b16 %v199
      %v227 = vunpack.c.l.b16 %v200
      %v228 = vunpack.c.l.b16 %v201
      %v229 = vunpack.c.l.b16 %v202
      %v230 = vunpack.c.l.b16 %v203
      %v231 = vunpack.c.l.b16 %v204
      %v232 = vunpack.c.l.b16 %v205
      %v233 = vunpack.c.l.b16 %v206
      %v234 = vunpack.c.l.b16 %v207
      %v235 = vunpack.c.l.b16 %v208
      %v236 = vunpack.c.l.b16 %v211
      %v237 = vpack.c.b16 %v227, %v226
      %v238 = vpack.c.b16 %v229, %v228
      %v239 = vpack.c.b16 %v231, %v230
      %v240 = vpack.c.b16 %v233, %v232
      %v241 = vpack.c.b16 %v235, %v234
      %v242 = vpack.c.b16 %v236, %v236
      %vm243 = vsmask.f32 7424
      %v245 = vshrl.u32 %v237, 16
      %v247 = vshll.u32 %v237, 16
      %v249 = vrot.slane %v247, 1
      %v250 = vor.u32 %v245, %v249
      %v252 = vshll.u32 %v238, 16
      %v254 = vrot.slane %v252, 1
      %v255 = vsel %vm243, %v250, %v254
      %v256 = vshrl.u32 %v238, 16
      %v258 = vor.u32 %v256, %v254
      %v260 = vshll.u32 %v239, 16
      %v262 = vrot.slane %v260, 1
      %v263 = vsel %vm243, %v258, %v262
      %v264 = vshrl.u32 %v239, 16
      %v266 = vor.u32 %v264, %v262
      %v268 = vshll.u32 %v240, 16
      %v270 = vrot.slane %v268, 1
      %v271 = vsel %vm243, %v266, %v270
      %v272 = vshrl.u32 %v240, 16
      %v274 = vor.u32 %v272, %v270
      %v276 = vshll.u32 %v241, 16
      %v278 = vrot.slane %v276, 1
      %v279 = vsel %vm243, %v274, %v278
      %v280 = vshrl.u32 %v241, 16
      %v282 = vor.u32 %v280, %v278
      %v284 = vshll.u32 %v242, 16
      %v286 = vrot.slane %v284, 1
      %v287 = vsel %vm243, %v282, %v286
      %v290 = vunpack.c.l.b16 %v213
      %v291 = vunpack.c.l.b16 %v214
      %v292 = vpack.c.b16 %v291, %v290
      %vm294 = vcmask 130048
      %v296 = vsel %vm294, %v255, 0
      %v299 = vsel %vm294, %v263, 0
      %v302 = vsel %vm294, %v271, 0
      %v305 = vsel %vm294, %v279, 0
      %v308 = vsel %vm294, %v287, 0
      %310 = vmatprep.subr.bf16.mxu0 0
      %311 = vmatpush1.bf16.msra.mxu0 0
      %312 = vmatprep.subr.bf16.mxu0 0
      %313 = vmatpush1.bf16.msra.mxu0 0
      %314 = vmatprep.subr.bf16.mxu0 0
      %315 = vmatpush1.bf16.msra.mxu0 0
      %316 = vmatprep.subr.bf16.mxu0 0
      %317 = vmatpush1.bf16.msra.mxu0 0
      %318 = vmatprep.subr.bf16.mxu0 0
      %319 = vmatpush1.bf16.msra.mxu0 0
      %320 = vmatprep.subr.bf16.mxu0 0
      %321 = vmatpush1.bf16.msra.mxu0 0
      %322 = vmatprep.subr.bf16.mxu0 0
      %323 = vmatpush1.bf16.msra.mxu0 0
      %324 = vmatprep.subr.bf16.mxu0 0
      %325 = vmatpush1.bf16.msra.mxu0 %v292
      %326 = vmatprep.subr.bf16.mxu0 0
      %327 = vmatpush2.bf16.msra.mxu0 0
      %328 = vmatprep.subr.bf16.mxu0 0
      %329 = vmatpush2.bf16.msra.mxu0 0
      %330 = vmatprep.subr.bf16.mxu0 0
      %331 = vmatpush2.bf16.msra.mxu0 0
      %332 = vmatprep.subr.bf16.mxu0 0
      %333 = vmatpush2.bf16.msra.mxu0 0
      %334 = vmatprep.subr.bf16.mxu0 0
      %335 = vmatpush2.bf16.msra.mxu0 0
      %336 = vmatprep.subr.bf16.mxu0 0
      %337 = vmatpush2.bf16.msra.mxu0 0
      %338 = vmatprep.subr.bf16.mxu0 0
      %339 = vmatpush2.bf16.msra.mxu0 0
      %340 = vmatprep.subr.bf16.mxu0 0
      %341 = vmatpush2.bf16.msra.mxu0 0
      %342 = vmatprep.mubr.bf16.mxu0 0
      %343 = vmatmul.mubr.bf16.gmra.mxu0 %v296
      %v344 = vpop.f32.mrf.mxu0
      %v345 = vadd.f32 0.0, %v344
      %v346 = vpop.f32.mrf.mxu0
      %v347 = vpop.f32.mrf.mxu0
      %v348 = vadd.f32 0.0, %v347
      %v349 = vpop.f32.mrf.mxu0
      %350 = vmatprep.mubr.bf16.mxu0 0
      %351 = vmatmul.mubr.bf16.gmra.mxu0 %v299
      %v352 = vpop.f32.mrf.mxu0
      %v353 = vadd.f32 0.0, %v352
      %v354 = vpop.f32.mrf.mxu0
      %v355 = vpop.f32.mrf.mxu0
      %v356 = vadd.f32 0.0, %v355
      %v357 = vpop.f32.mrf.mxu0
      %358 = vmatprep.mubr.bf16.mxu0 0
      %359 = vmatmul.mubr.bf16.gmra.mxu0 %v302
      %v360 = vpop.f32.mrf.mxu0
      %v361 = vadd.f32 0.0, %v360
      %v362 = vpop.f32.mrf.mxu0
      %v363 = vpop.f32.mrf.mxu0
      %v364 = vadd.f32 0.0, %v363
      %v365 = vpop.f32.mrf.mxu0
      %366 = vmatprep.mubr.bf16.mxu0 0
      %367 = vmatmul.mubr.bf16.gmra.mxu0 %v305
      %v368 = vpop.f32.mrf.mxu0
      %v369 = vadd.f32 0.0, %v368
      %v370 = vpop.f32.mrf.mxu0
      %v371 = vpop.f32.mrf.mxu0
      %v372 = vadd.f32 0.0, %v371
      %v373 = vpop.f32.mrf.mxu0
      %374 = vmatprep.mubr.bf16.mxu0 0
      %375 = vmatmul.mubr.bf16.gmra.mxu0 %v308
      %v376 = vpop.f32.mrf.mxu0
      %v377 = vadd.f32 0.0, %v376
      %v378 = vpop.f32.mrf.mxu0
      %v379 = vpop.f32.mrf.mxu0
      %v380 = vadd.f32 0.0, %v379
      %v381 = vpop.f32.mrf.mxu0
      %382 = vdwg.mxu0
      %v385 = vunpack.c.l.b16 %v209
      %v386 = vunpack.c.l.b16 %v210
      %v387 = vpack.c.b16 %v386, %v385
      %v389 = vsel %vm294, %v237, 0
      %v391 = vsel %vm294, %v238, 0
      %v393 = vsel %vm294, %v239, 0
      %v395 = vsel %vm294, %v240, 0
      %v397 = vsel %vm294, %v241, 0
      %399 = vmatprep.subr.bf16.mxu0 0
      %400 = vmatpush1.bf16.msra.mxu0 0
      %401 = vmatprep.subr.bf16.mxu0 0
      %402 = vmatpush1.bf16.msra.mxu0 0
      %403 = vmatprep.subr.bf16.mxu0 0
      %404 = vmatpush1.bf16.msra.mxu0 0
      %405 = vmatprep.subr.bf16.mxu0 0
      %406 = vmatpush1.bf16.msra.mxu0 0
      %407 = vmatprep.subr.bf16.mxu0 0
      %408 = vmatpush1.bf16.msra.mxu0 0
      %409 = vmatprep.subr.bf16.mxu0 0
      %410 = vmatpush1.bf16.msra.mxu0 0
      %411 = vmatprep.subr.bf16.mxu0 0
      %412 = vmatpush1.bf16.msra.mxu0 0
      %413 = vmatprep.subr.bf16.mxu0 0
      %414 = vmatpush1.bf16.msra.mxu0 %v387
      %415 = vmatprep.subr.bf16.mxu0 0
      %416 = vmatpush2.bf16.msra.mxu0 0
      %417 = vmatprep.subr.bf16.mxu0 0
      %418 = vmatpush2.bf16.msra.mxu0 0
      %419 = vmatprep.subr.bf16.mxu0 0
      %420 = vmatpush2.bf16.msra.mxu0 0
      %421 = vmatprep.subr.bf16.mxu0 0
      %422 = vmatpush2.bf16.msra.mxu0 0
      %423 = vmatprep.subr.bf16.mxu0 0
      %424 = vmatpush2.bf16.msra.mxu0 0
      %425 = vmatprep.subr.bf16.mxu0 0
      %426 = vmatpush2.bf16.msra.mxu0 0
      %427 = vmatprep.subr.bf16.mxu0 0
      %428 = vmatpush2.bf16.msra.mxu0 0
      %429 = vmatprep.subr.bf16.mxu0 0
      %430 = vmatpush2.bf16.msra.mxu0 0
      %431 = vmatprep.mubr.bf16.mxu0 0
      %432 = vmatmul.mubr.bf16.gmra.mxu0 %v389
      %v433 = vpop.f32.mrf.mxu0
      %v434 = vadd.f32 %v345, %v433
      %v435 = vpop.f32.mrf.mxu0
      %v436 = vpop.f32.mrf.mxu0
      %v437 = vadd.f32 %v348, %v436
      %v438 = vpop.f32.mrf.mxu0
      %439 = vmatprep.mubr.bf16.mxu0 0
      %440 = vmatmul.mubr.bf16.gmra.mxu0 %v391
      %v441 = vpop.f32.mrf.mxu0
      %v442 = vadd.f32 %v353, %v441
      %v443 = vpop.f32.mrf.mxu0
      %v444 = vpop.f32.mrf.mxu0
      %v445 = vadd.f32 %v356, %v444
      %v446 = vpop.f32.mrf.mxu0
      %447 = vmatprep.mubr.bf16.mxu0 0
      %448 = vmatmul.mubr.bf16.gmra.mxu0 %v393
      %v449 = vpop.f32.mrf.mxu0
      %v450 = vadd.f32 %v361, %v449
      %v451 = vpop.f32.mrf.mxu0
      %v452 = vpop.f32.mrf.mxu0
      %v453 = vadd.f32 %v364, %v452
      %v454 = vpop.f32.mrf.mxu0
      %455 = vmatprep.mubr.bf16.mxu0 0
      %456 = vmatmul.mubr.bf16.gmra.mxu0 %v395
      %v457 = vpop.f32.mrf.mxu0
      %v458 = vadd.f32 %v369, %v457
      %v459 = vpop.f32.mrf.mxu0
      %v460 = vpop.f32.mrf.mxu0
      %v461 = vadd.f32 %v372, %v460
      %v462 = vpop.f32.mrf.mxu0
      %463 = vmatprep.mubr.bf16.mxu0 0
      %464 = vmatmul.mubr.bf16.gmra.mxu0 %v397
      %v465 = vpop.f32.mrf.mxu0
      %v466 = vadd.f32 %v377, %v465
      %v467 = vpop.f32.mrf.mxu0
      %v468 = vpop.f32.mrf.mxu0
      %v469 = vadd.f32 %v380, %v468
      %v470 = vpop.f32.mrf.mxu0
      %471 = vdwg.mxu0
      %v472 = vld [vmem:[%s192] sm:$0xe]
      %s473 = scalar_lea.vmem %s1, 16
      %v474 = vld [vmem:[%s473] sm:$0xf]
      %v475 = vld [vmem:[%s473 + $0x4] sm:$0xf]
      %v477 = vunpack.c.l.b16 %v472
      %v478 = vpack.c.b16 %v227, %v477
      %vm479 = vcmask 1046528
      %v480 = vrot.slane %v478, 1
      %v481 = vrot.slane %v238, 1
      %v482 = vsel %vm479, %v480, %v481
      %v483 = vrot.slane %v239, 1
      %v484 = vsel %vm479, %v481, %v483
      %v485 = vrot.slane %v240, 1
      %v486 = vsel %vm479, %v483, %v485
      %v487 = vrot.slane %v241, 1
      %v488 = vsel %vm479, %v485, %v487
      %v489 = vrot.slane %v242, 1
      %v490 = vsel %vm479, %v487, %v489
      %v493 = vunpack.c.l.b16 %v474
      %v494 = vunpack.c.l.b16 %v475
      %v495 = vpack.c.b16 %v494, %v493
      %v498 = vsel %vm294, %v482, 0
      %v501 = vsel %vm294, %v484, 0
      %v504 = vsel %vm294, %v486, 0
      %v507 = vsel %vm294, %v488, 0
      %v510 = vsel %vm294, %v490, 0
      %512 = vmatprep.subr.bf16.mxu0 0
      %513 = vmatpush1.bf16.msra.mxu0 0
      %514 = vmatprep.subr.bf16.mxu0 0
      %515 = vmatpush1.bf16.msra.mxu0 0
      %516 = vmatprep.subr.bf16.mxu0 0
      %517 = vmatpush1.bf16.msra.mxu0 0
      %518 = vmatprep.subr.bf16.mxu0 0
      %519 = vmatpush1.bf16.msra.mxu0 0
      %520 = vmatprep.subr.bf16.mxu0 0
      %521 = vmatpush1.bf16.msra.mxu0 0
      %522 = vmatprep.subr.bf16.mxu0 0
      %523 = vmatpush1.bf16.msra.mxu0 0
      %524 = vmatprep.subr.bf16.mxu0 0
      %525 = vmatpush1.bf16.msra.mxu0 0
      %526 = vmatprep.subr.bf16.mxu0 0
      %527 = vmatpush1.bf16.msra.mxu0 %v495
      %528 = vmatprep.subr.bf16.mxu0 0
      %529 = vmatpush2.bf16.msra.mxu0 0
      %530 = vmatprep.subr.bf16.mxu0 0
      %531 = vmatpush2.bf16.msra.mxu0 0
      %532 = vmatprep.subr.bf16.mxu0 0
      %533 = vmatpush2.bf16.msra.mxu0 0
      %534 = vmatprep.subr.bf16.mxu0 0
      %535 = vmatpush2.bf16.msra.mxu0 0
      %536 = vmatprep.subr.bf16.mxu0 0
      %537 = vmatpush2.bf16.msra.mxu0 0
      %538 = vmatprep.subr.bf16.mxu0 0
      %539 = vmatpush2.bf16.msra.mxu0 0
      %540 = vmatprep.subr.bf16.mxu0 0
      %541 = vmatpush2.bf16.msra.mxu0 0
      %542 = vmatprep.subr.bf16.mxu0 0
      %543 = vmatpush2.bf16.msra.mxu0 0
      %544 = vmatprep.mubr.bf16.mxu0 0
      %545 = vmatmul.mubr.bf16.gmra.mxu0 %v498
      %v546 = vpop.f32.mrf.mxu0
      %v547 = vadd.f32 0.0, %v546
      %v548 = vpop.f32.mrf.mxu0
      %v549 = vpop.f32.mrf.mxu0
      %v550 = vadd.f32 0.0, %v549
      %v551 = vpop.f32.mrf.mxu0
      %552 = vmatprep.mubr.bf16.mxu0 0
      %553 = vmatmul.mubr.bf16.gmra.mxu0 %v501
      %v554 = vpop.f32.mrf.mxu0
      %v555 = vadd.f32 0.0, %v554
      %v556 = vpop.f32.mrf.mxu0
      %v557 = vpop.f32.mrf.mxu0
      %v558 = vadd.f32 0.0, %v557
      %v559 = vpop.f32.mrf.mxu0
      %560 = vmatprep.mubr.bf16.mxu0 0
      %561 = vmatmul.mubr.bf16.gmra.mxu0 %v504
      %v562 = vpop.f32.mrf.mxu0
      %v563 = vadd.f32 0.0, %v562
      %v564 = vpop.f32.mrf.mxu0
      %v565 = vpop.f32.mrf.mxu0
      %v566 = vadd.f32 0.0, %v565
      %v567 = vpop.f32.mrf.mxu0
      %568 = vmatprep.mubr.bf16.mxu0 0
      %569 = vmatmul.mubr.bf16.gmra.mxu0 %v507
      %v570 = vpop.f32.mrf.mxu0
      %v571 = vadd.f32 0.0, %v570
      %v572 = vpop.f32.mrf.mxu0
      %v573 = vpop.f32.mrf.mxu0
      %v574 = vadd.f32 0.0, %v573
      %v575 = vpop.f32.mrf.mxu0
      %576 = vmatprep.mubr.bf16.mxu0 0
      %577 = vmatmul.mubr.bf16.gmra.mxu0 %v510
      %v578 = vpop.f32.mrf.mxu0
      %v579 = vadd.f32 0.0, %v578
      %v580 = vpop.f32.mrf.mxu0
      %v581 = vpop.f32.mrf.mxu0
      %v582 = vadd.f32 0.0, %v581
      %v583 = vpop.f32.mrf.mxu0
      %584 = vdwg.mxu0
      %v585 = vadd.f32 %v434, %v547
      %v586 = vadd.f32 %v437, %v550
      %v587 = vadd.f32 %v442, %v555
      %v588 = vadd.f32 %v445, %v558
      %v589 = vadd.f32 %v450, %v563
      %v590 = vadd.f32 %v453, %v566
      %v591 = vadd.f32 %v458, %v571
      %v592 = vadd.f32 %v461, %v574
      %v593 = vadd.f32 %v466, %v579
      %v594 = vadd.f32 %v469, %v582
      %v595 = vld [vmem:[%s192 + $0x4] sm:$0xe]
      %v596 = vld [vmem:[%s192 + $0x8] sm:$0xf]
      %v597 = vld [vmem:[%s192 + $0xc] sm:$0xf]
      %v598 = vld [vmem:[%s192 + $0x10] sm:$0xf]
      %v599 = vld [vmem:[%s192 + $0x14] sm:$0xf]
      %v600 = vld [vmem:[%s192 + $0x18] sm:$0xf]
      %v601 = vld [vmem:[%s192 + $0x1c] sm:$0xf]
      %v602 = vld [vmem:[%s192 + $0x20] sm:$0xf]
      %v603 = vld [vmem:[%s192 + $0x24] sm:$0xf]
      %v604 = vld [vmem:[%s192 + $0x28] sm:$0xf]
      %v605 = vld [vmem:[%s192 + $0x2c] sm:$0x1]
      %s606 = scalar_lea.vmem %s1, 24
      %v607 = vld [vmem:[%s606] sm:$0xf]
      %v608 = vld [vmem:[%s606 + $0x4] sm:$0xf]
      %v620 = vunpack.c.l.b16 %v595
      %v621 = vunpack.c.l.b16 %v596
      %v622 = vunpack.c.l.b16 %v597
      %v623 = vunpack.c.l.b16 %v598
      %v624 = vunpack.c.l.b16 %v599
      %v625 = vunpack.c.l.b16 %v600
      %v626 = vunpack.c.l.b16 %v601
      %v627 = vunpack.c.l.b16 %v602
      %v628 = vunpack.c.l.b16 %v603
      %v629 = vunpack.c.l.b16 %v604
      %v630 = vunpack.c.l.b16 %v605
      %v631 = vpack.c.b16 %v621, %v620
      %v632 = vpack.c.b16 %v623, %v622
      %v633 = vpack.c.b16 %v625, %v624
      %v634 = vpack.c.b16 %v627, %v626
      %v635 = vpack.c.b16 %v629, %v628
      %v636 = vpack.c.b16 %v630, %v630
      %v637 = vrot.slane %v631, 1
      %v638 = vrot.slane %v632, 1
      %v639 = vsel %vm479, %v637, %v638
      %v640 = vrot.slane %v633, 1
      %v641 = vsel %vm479, %v638, %v640
      %v642 = vrot.slane %v634, 1
      %v643 = vsel %vm479, %v640, %v642
      %v644 = vrot.slane %v635, 1
      %v645 = vsel %vm479, %v642, %v644
      %v646 = vrot.slane %v636, 1
      %v647 = vsel %vm479, %v644, %v646
      %v650 = vunpack.c.l.b16 %v607
      %v651 = vunpack.c.l.b16 %v608
      %v652 = vpack.c.b16 %v651, %v650
      %v655 = vsel %vm294, %v639, 0
      %v658 = vsel %vm294, %v641, 0
      %v661 = vsel %vm294, %v643, 0
      %v664 = vsel %vm294, %v645, 0
      %v667 = vsel %vm294, %v647, 0
      %669 = vmatprep.subr.bf16.mxu0 0
      %670 = vmatpush1.bf16.msra.mxu0 0
      %671 = vmatprep.subr.bf16.mxu0 0
      %672 = vmatpush1.bf16.msra.mxu0 0
      %673 = vmatprep.subr.bf16.mxu0 0
      %674 = vmatpush1.bf16.msra.mxu0 0
      %675 = vmatprep.subr.bf16.mxu0 0
      %676 = vmatpush1.bf16.msra.mxu0 0
      %677 = vmatprep.subr.bf16.mxu0 0
      %678 = vmatpush1.bf16.msra.mxu0 0
      %679 = vmatprep.subr.bf16.mxu0 0
      %680 = vmatpush1.bf16.msra.mxu0 0
      %681 = vmatprep.subr.bf16.mxu0 0
      %682 = vmatpush1.bf16.msra.mxu0 0
      %683 = vmatprep.subr.bf16.mxu0 0
      %684 = vmatpush1.bf16.msra.mxu0 %v652
      %685 = vmatprep.subr.bf16.mxu0 0
      %686 = vmatpush2.bf16.msra.mxu0 0
      %687 = vmatprep.subr.bf16.mxu0 0
      %688 = vmatpush2.bf16.msra.mxu0 0
      %689 = vmatprep.subr.bf16.mxu0 0
      %690 = vmatpush2.bf16.msra.mxu0 0
      %691 = vmatprep.subr.bf16.mxu0 0
      %692 = vmatpush2.bf16.msra.mxu0 0
      %693 = vmatprep.subr.bf16.mxu0 0
      %694 = vmatpush2.bf16.msra.mxu0 0
      %695 = vmatprep.subr.bf16.mxu0 0
      %696 = vmatpush2.bf16.msra.mxu0 0
      %697 = vmatprep.subr.bf16.mxu0 0
      %698 = vmatpush2.bf16.msra.mxu0 0
      %699 = vmatprep.subr.bf16.mxu0 0
      %700 = vmatpush2.bf16.msra.mxu0 0
      %701 = vmatprep.mubr.bf16.mxu0 0
      %702 = vmatmul.mubr.bf16.gmra.mxu0 %v655
      %v703 = vpop.f32.mrf.mxu0
      %v704 = vadd.f32 0.0, %v703
      %v705 = vpop.f32.mrf.mxu0
      %v706 = vpop.f32.mrf.mxu0
      %v707 = vadd.f32 0.0, %v706
      %v708 = vpop.f32.mrf.mxu0
      %709 = vmatprep.mubr.bf16.mxu0 0
      %710 = vmatmul.mubr.bf16.gmra.mxu0 %v658
      %v711 = vpop.f32.mrf.mxu0
      %v712 = vadd.f32 0.0, %v711
      %v713 = vpop.f32.mrf.mxu0
      %v714 = vpop.f32.mrf.mxu0
      %v715 = vadd.f32 0.0, %v714
      %v716 = vpop.f32.mrf.mxu0
      %717 = vmatprep.mubr.bf16.mxu0 0
      %718 = vmatmul.mubr.bf16.gmra.mxu0 %v661
      %v719 = vpop.f32.mrf.mxu0
      %v720 = vadd.f32 0.0, %v719
      %v721 = vpop.f32.mrf.mxu0
      %v722 = vpop.f32.mrf.mxu0
      %v723 = vadd.f32 0.0, %v722
      %v724 = vpop.f32.mrf.mxu0
      %725 = vmatprep.mubr.bf16.mxu0 0
      %726 = vmatmul.mubr.bf16.gmra.mxu0 %v664
      %v727 = vpop.f32.mrf.mxu0
      %v728 = vadd.f32 0.0, %v727
      %v729 = vpop.f32.mrf.mxu0
      %v730 = vpop.f32.mrf.mxu0
      %v731 = vadd.f32 0.0, %v730
      %v732 = vpop.f32.mrf.mxu0
      %733 = vmatprep.mubr.bf16.mxu0 0
      %734 = vmatmul.mubr.bf16.gmra.mxu0 %v667
      %v735 = vpop.f32.mrf.mxu0
      %v736 = vadd.f32 0.0, %v735
      %v737 = vpop.f32.mrf.mxu0
      %v738 = vpop.f32.mrf.mxu0
      %v739 = vadd.f32 0.0, %v738
      %v740 = vpop.f32.mrf.mxu0
      %741 = vdwg.mxu0
      %v742 = vadd.f32 %v585, %v704
      %v743 = vadd.f32 %v586, %v707
      %v744 = vadd.f32 %v587, %v712
      %v745 = vadd.f32 %v588, %v715
      %v746 = vadd.f32 %v589, %v720
      %v747 = vadd.f32 %v590, %v723
      %v748 = vadd.f32 %v591, %v728
      %v749 = vadd.f32 %v592, %v731
      %v750 = vadd.f32 %v593, %v736
      %v751 = vadd.f32 %v594, %v739
      %v752 = vld [vmem:[%s192 + $0x2c] sm:$0x3]
      %s753 = scalar_lea.vmem %s1, 32
      %v754 = vld [vmem:[%s753] sm:$0xf]
      %v755 = vld [vmem:[%s753 + $0x4] sm:$0xf]
      %v757 = vunpack.c.l.b16 %v752
      %v758 = vpack.c.b16 %v757, %v757
      %vm759 = vsmask.f32 6400
      %v761 = vshrl.u32 %v631, 16
      %v763 = vrot.slane %v761, 1
      %v764 = vshll.u32 %v631, 16
      %v766 = vrot.slane %v764, 2
      %v767 = vor.u32 %v763, %v766
      %v769 = vshrl.u32 %v632, 16
      %v771 = vrot.slane %v769, 1
      %v772 = vshll.u32 %v632, 16
      %v774 = vrot.slane %v772, 2
      %v775 = vor.u32 %v771, %v774
      %v776 = vsel %vm759, %v767, %v775
      %v778 = vshrl.u32 %v633, 16
      %v780 = vrot.slane %v778, 1
      %v781 = vshll.u32 %v633, 16
      %v783 = vrot.slane %v781, 2
      %v784 = vor.u32 %v780, %v783
      %v785 = vsel %vm759, %v775, %v784
      %v787 = vshrl.u32 %v634, 16
      %v789 = vrot.slane %v787, 1
      %v790 = vshll.u32 %v634, 16
      %v792 = vrot.slane %v790, 2
      %v793 = vor.u32 %v789, %v792
      %v794 = vsel %vm759, %v784, %v793
      %v796 = vshrl.u32 %v635, 16
      %v798 = vrot.slane %v796, 1
      %v799 = vshll.u32 %v635, 16
      %v801 = vrot.slane %v799, 2
      %v802 = vor.u32 %v798, %v801
      %v803 = vsel %vm759, %v793, %v802
      %v805 = vshrl.u32 %v758, 16
      %v807 = vrot.slane %v805, 1
      %v808 = vshll.u32 %v758, 16
      %v810 = vrot.slane %v808, 2
      %v811 = vor.u32 %v807, %v810
      %v812 = vsel %vm759, %v802, %v811
      %v815 = vunpack.c.l.b16 %v754
      %v816 = vunpack.c.l.b16 %v755
      %v817 = vpack.c.b16 %v816, %v815
      %v820 = vsel %vm294, %v776, 0
      %v823 = vsel %vm294, %v785, 0
      %v826 = vsel %vm294, %v794, 0
      %v829 = vsel %vm294, %v803, 0
      %v832 = vsel %vm294, %v812, 0
      %834 = vmatprep.subr.bf16.mxu0 0
      %835 = vmatpush1.bf16.msra.mxu0 0
      %836 = vmatprep.subr.bf16.mxu0 0
      %837 = vmatpush1.bf16.msra.mxu0 0
      %838 = vmatprep.subr.bf16.mxu0 0
      %839 = vmatpush1.bf16.msra.mxu0 0
      %840 = vmatprep.subr.bf16.mxu0 0
      %841 = vmatpush1.bf16.msra.mxu0 0
      %842 = vmatprep.subr.bf16.mxu0 0
      %843 = vmatpush1.bf16.msra.mxu0 0
      %844 = vmatprep.subr.bf16.mxu0 0
      %845 = vmatpush1.bf16.msra.mxu0 0
      %846 = vmatprep.subr.bf16.mxu0 0
      %847 = vmatpush1.bf16.msra.mxu0 0
      %848 = vmatprep.subr.bf16.mxu0 0
      %849 = vmatpush1.bf16.msra.mxu0 %v817
      %850 = vmatprep.subr.bf16.mxu0 0
      %851 = vmatpush2.bf16.msra.mxu0 0
      %852 = vmatprep.subr.bf16.mxu0 0
      %853 = vmatpush2.bf16.msra.mxu0 0
      %854 = vmatprep.subr.bf16.mxu0 0
      %855 = vmatpush2.bf16.msra.mxu0 0
      %856 = vmatprep.subr.bf16.mxu0 0
      %857 = vmatpush2.bf16.msra.mxu0 0
      %858 = vmatprep.subr.bf16.mxu0 0
      %859 = vmatpush2.bf16.msra.mxu0 0
      %860 = vmatprep.subr.bf16.mxu0 0
      %861 = vmatpush2.bf16.msra.mxu0 0
      %862 = vmatprep.subr.bf16.mxu0 0
      %863 = vmatpush2.bf16.msra.mxu0 0
      %864 = vmatprep.subr.bf16.mxu0 0
      %865 = vmatpush2.bf16.msra.mxu0 0
      %866 = vmatprep.mubr.bf16.mxu0 0
      %867 = vmatmul.mubr.bf16.gmra.mxu0 %v820
      %v868 = vpop.f32.mrf.mxu0
      %v869 = vadd.f32 0.0, %v868
      %v870 = vpop.f32.mrf.mxu0
      %v871 = vpop.f32.mrf.mxu0
      %v872 = vadd.f32 0.0, %v871
      %v873 = vpop.f32.mrf.mxu0
      %874 = vmatprep.mubr.bf16.mxu0 0
      %875 = vmatmul.mubr.bf16.gmra.mxu0 %v823
      %v876 = vpop.f32.mrf.mxu0
      %v877 = vadd.f32 0.0, %v876
      %v878 = vpop.f32.mrf.mxu0
      %v879 = vpop.f32.mrf.mxu0
      %v880 = vadd.f32 0.0, %v879
      %v881 = vpop.f32.mrf.mxu0
      %882 = vmatprep.mubr.bf16.mxu0 0
      %883 = vmatmul.mubr.bf16.gmra.mxu0 %v826
      %v884 = vpop.f32.mrf.mxu0
      %v885 = vadd.f32 0.0, %v884
      %v886 = vpop.f32.mrf.mxu0
      %v887 = vpop.f32.mrf.mxu0
      %v888 = vadd.f32 0.0, %v887
      %v889 = vpop.f32.mrf.mxu0
      %890 = vmatprep.mubr.bf16.mxu0 0
      %891 = vmatmul.mubr.bf16.gmra.mxu0 %v829
      %v892 = vpop.f32.mrf.mxu0
      %v893 = vadd.f32 0.0, %v892
      %v894 = vpop.f32.mrf.mxu0
      %v895 = vpop.f32.mrf.mxu0
      %v896 = vadd.f32 0.0, %v895
      %v897 = vpop.f32.mrf.mxu0
      %898 = vmatprep.mubr.bf16.mxu0 0
      %899 = vmatmul.mubr.bf16.gmra.mxu0 %v832
      %v900 = vpop.f32.mrf.mxu0
      %v901 = vadd.f32 0.0, %v900
      %v902 = vpop.f32.mrf.mxu0
      %v903 = vpop.f32.mrf.mxu0
      %v904 = vadd.f32 0.0, %v903
      %v905 = vpop.f32.mrf.mxu0
      %906 = vdwg.mxu0
      %v907 = vadd.f32 %v742, %v869
      %v908 = vadd.f32 %v743, %v872
      %v909 = vadd.f32 %v744, %v877
      %v910 = vadd.f32 %v745, %v880
      %v911 = vadd.f32 %v746, %v885
      %v912 = vadd.f32 %v747, %v888
      %v913 = vadd.f32 %v748, %v893
      %v914 = vadd.f32 %v749, %v896
      %v915 = vadd.f32 %v750, %v901
      %v916 = vadd.f32 %v751, %v904
      %v917 = vld [vmem:[%s192 + $0x4] sm:$0xc]
      %s918 = scalar_lea.vmem %s1, 40
      %v919 = vld [vmem:[%s918] sm:$0xf]
      %v920 = vld [vmem:[%s918 + $0x4] sm:$0xf]
      %v922 = vunpack.c.l.b16 %v917
      %v923 = vpack.c.b16 %v621, %v922
      %vm924 = vcmask 1045504
      %v925 = vrot.slane %v923, 2
      %v926 = vrot.slane %v632, 2
      %v927 = vsel %vm924, %v925, %v926
      %v928 = vrot.slane %v633, 2
      %v929 = vsel %vm924, %v926, %v928
      %v930 = vrot.slane %v634, 2
      %v931 = vsel %vm924, %v928, %v930
      %v932 = vrot.slane %v635, 2
      %v933 = vsel %vm924, %v930, %v932
      %v934 = vrot.slane %v758, 2
      %v935 = vsel %vm924, %v932, %v934
      %v938 = vunpack.c.l.b16 %v919
      %v939 = vunpack.c.l.b16 %v920
      %v940 = vpack.c.b16 %v939, %v938
      %v943 = vsel %vm294, %v927, 0
      %v946 = vsel %vm294, %v929, 0
      %v949 = vsel %vm294, %v931, 0
      %v952 = vsel %vm294, %v933, 0
      %v955 = vsel %vm294, %v935, 0
      %957 = vmatprep.subr.bf16.mxu0 0
      %958 = vmatpush1.bf16.msra.mxu0 0
      %959 = vmatprep.subr.bf16.mxu0 0
      %960 = vmatpush1.bf16.msra.mxu0 0
      %961 = vmatprep.subr.bf16.mxu0 0
      %962 = vmatpush1.bf16.msra.mxu0 0
      %963 = vmatprep.subr.bf16.mxu0 0
      %964 = vmatpush1.bf16.msra.mxu0 0
      %965 = vmatprep.subr.bf16.mxu0 0
      %966 = vmatpush1.bf16.msra.mxu0 0
      %967 = vmatprep.subr.bf16.mxu0 0
      %968 = vmatpush1.bf16.msra.mxu0 0
      %969 = vmatprep.subr.bf16.mxu0 0
      %970 = vmatpush1.bf16.msra.mxu0 0
      %971 = vmatprep.subr.bf16.mxu0 0
      %972 = vmatpush1.bf16.msra.mxu0 %v940
      %973 = vmatprep.subr.bf16.mxu0 0
      %974 = vmatpush2.bf16.msra.mxu0 0
      %975 = vmatprep.subr.bf16.mxu0 0
      %976 = vmatpush2.bf16.msra.mxu0 0
      %977 = vmatprep.subr.bf16.mxu0 0
      %978 = vmatpush2.bf16.msra.mxu0 0
      %979 = vmatprep.subr.bf16.mxu0 0
      %980 = vmatpush2.bf16.msra.mxu0 0
      %981 = vmatprep.subr.bf16.mxu0 0
      %982 = vmatpush2.bf16.msra.mxu0 0
      %983 = vmatprep.subr.bf16.mxu0 0
      %984 = vmatpush2.bf16.msra.mxu0 0
      %985 = vmatprep.subr.bf16.mxu0 0
      %986 = vmatpush2.bf16.msra.mxu0 0
      %987 = vmatprep.subr.bf16.mxu0 0
      %988 = vmatpush2.bf16.msra.mxu0 0
      %989 = vmatprep.mubr.bf16.mxu0 0
      %990 = vmatmul.mubr.bf16.gmra.mxu0 %v943
      %v991 = vpop.f32.mrf.mxu0
      %v992 = vadd.f32 0.0, %v991
      %v993 = vpop.f32.mrf.mxu0
      %v994 = vpop.f32.mrf.mxu0
      %v995 = vadd.f32 0.0, %v994
      %v996 = vpop.f32.mrf.mxu0
      %997 = vmatprep.mubr.bf16.mxu0 0
      %998 = vmatmul.mubr.bf16.gmra.mxu0 %v946
      %v999 = vpop.f32.mrf.mxu0
      %v1000 = vadd.f32 0.0, %v999
      %v1001 = vpop.f32.mrf.mxu0
      %v1002 = vpop.f32.mrf.mxu0
      %v1003 = vadd.f32 0.0, %v1002
      %v1004 = vpop.f32.mrf.mxu0
      %1005 = vmatprep.mubr.bf16.mxu0 0
      %1006 = vmatmul.mubr.bf16.gmra.mxu0 %v949
      %v1007 = vpop.f32.mrf.mxu0
      %v1008 = vadd.f32 0.0, %v1007
      %v1009 = vpop.f32.mrf.mxu0
      %v1010 = vpop.f32.mrf.mxu0
      %v1011 = vadd.f32 0.0, %v1010
      %v1012 = vpop.f32.mrf.mxu0
      %1013 = vmatprep.mubr.bf16.mxu0 0
      %1014 = vmatmul.mubr.bf16.gmra.mxu0 %v952
      %v1015 = vpop.f32.mrf.mxu0
      %v1016 = vadd.f32 0.0, %v1015
      %v1017 = vpop.f32.mrf.mxu0
      %v1018 = vpop.f32.mrf.mxu0
      %v1019 = vadd.f32 0.0, %v1018
      %v1020 = vpop.f32.mrf.mxu0
      %1021 = vmatprep.mubr.bf16.mxu0 0
      %1022 = vmatmul.mubr.bf16.gmra.mxu0 %v955
      %v1023 = vpop.f32.mrf.mxu0
      %v1024 = vadd.f32 0.0, %v1023
      %v1025 = vpop.f32.mrf.mxu0
      %v1026 = vpop.f32.mrf.mxu0
      %v1027 = vadd.f32 0.0, %v1026
      %v1028 = vpop.f32.mrf.mxu0
      %1029 = vdwg.mxu0
      %v1030 = vadd.f32 %v907, %v992
      %v1031 = vadd.f32 %v908, %v995
      %v1032 = vadd.f32 %v909, %v1000
      %v1033 = vadd.f32 %v910, %v1003
      %v1034 = vadd.f32 %v911, %v1008
      %v1035 = vadd.f32 %v912, %v1011
      %v1036 = vadd.f32 %v913, %v1016
      %v1037 = vadd.f32 %v914, %v1019
      %v1038 = vadd.f32 %v915, %v1024
      %v1039 = vadd.f32 %v916, %v1027
      %v1040 = vld [vmem:[%s192 + $0x8] sm:$0xc]
      %v1041 = vld [vmem:[%s192 + $0xc] sm:$0xf]
      %v1042 = vld [vmem:[%s192 + $0x10] sm:$0xf]
      %v1043 = vld [vmem:[%s192 + $0x14] sm:$0xf]
      %v1044 = vld [vmem:[%s192 + $0x18] sm:$0xf]
      %v1045 = vld [vmem:[%s192 + $0x1c] sm:$0xf]
      %v1046 = vld [vmem:[%s192 + $0x20] sm:$0xf]
      %v1047 = vld [vmem:[%s192 + $0x24] sm:$0xf]
      %v1048 = vld [vmem:[%s192 + $0x28] sm:$0xf]
      %v1049 = vld [vmem:[%s192 + $0x2c] sm:$0xf]
      %v1050 = vld [vmem:[%s192 + $0x30] sm:$0x3]
      %s1051 = scalar_lea.vmem %s1, 48
      %v1052 = vld [vmem:[%s1051] sm:$0xf]
      %v1053 = vld [vmem:[%s1051 + $0x4] sm:$0xf]
      %v1065 = vunpack.c.l.b16 %v1040
      %v1066 = vunpack.c.l.b16 %v1041
      %v1067 = vunpack.c.l.b16 %v1042
      %v1068 = vunpack.c.l.b16 %v1043
      %v1069 = vunpack.c.l.b16 %v1044
      %v1070 = vunpack.c.l.b16 %v1045
      %v1071 = vunpack.c.l.b16 %v1046
      %v1072 = vunpack.c.l.b16 %v1047
      %v1073 = vunpack.c.l.b16 %v1048
      %v1074 = vunpack.c.l.b16 %v1049
      %v1075 = vunpack.c.l.b16 %v1050
      %v1076 = vpack.c.b16 %v1066, %v1065
      %v1077 = vpack.c.b16 %v1068, %v1067
      %v1078 = vpack.c.b16 %v1070, %v1069
      %v1079 = vpack.c.b16 %v1072, %v1071
      %v1080 = vpack.c.b16 %v1074, %v1073
      %v1081 = vpack.c.b16 %v1075, %v1075
      %v1082 = vrot.slane %v1076, 2
      %v1083 = vrot.slane %v1077, 2
      %v1084 = vsel %vm924, %v1082, %v1083
      %v1085 = vrot.slane %v1078, 2
      %v1086 = vsel %vm924, %v1083, %v1085
      %v1087 = vrot.slane %v1079, 2
      %v1088 = vsel %vm924, %v1085, %v1087
      %v1089 = vrot.slane %v1080, 2
      %v1090 = vsel %vm924, %v1087, %v1089
      %v1091 = vrot.slane %v1081, 2
      %v1092 = vsel %vm924, %v1089, %v1091
      %v1095 = vunpack.c.l.b16 %v1052
      %v1096 = vunpack.c.l.b16 %v1053
      %v1097 = vpack.c.b16 %v1096, %v1095
      %v1100 = vsel %vm294, %v1084, 0
      %v1103 = vsel %vm294, %v1086, 0
      %v1106 = vsel %vm294, %v1088, 0
      %v1109 = vsel %vm294, %v1090, 0
      %v1112 = vsel %vm294, %v1092, 0
      %1114 = vmatprep.subr.bf16.mxu0 0
      %1115 = vmatpush1.bf16.msra.mxu0 0
      %1116 = vmatprep.subr.bf16.mxu0 0
      %1117 = vmatpush1.bf16.msra.mxu0 0
      %1118 = vmatprep.subr.bf16.mxu0 0
      %1119 = vmatpush1.bf16.msra.mxu0 0
      %1120 = vmatprep.subr.bf16.mxu0 0
      %1121 = vmatpush1.bf16.msra.mxu0 0
      %1122 = vmatprep.subr.bf16.mxu0 0
      %1123 = vmatpush1.bf16.msra.mxu0 0
      %1124 = vmatprep.subr.bf16.mxu0 0
      %1125 = vmatpush1.bf16.msra.mxu0 0
      %1126 = vmatprep.subr.bf16.mxu0 0
      %1127 = vmatpush1.bf16.msra.mxu0 0
      %1128 = vmatprep.subr.bf16.mxu0 0
      %1129 = vmatpush1.bf16.msra.mxu0 %v1097
      %1130 = vmatprep.subr.bf16.mxu0 0
      %1131 = vmatpush2.bf16.msra.mxu0 0
      %1132 = vmatprep.subr.bf16.mxu0 0
      %1133 = vmatpush2.bf16.msra.mxu0 0
      %1134 = vmatprep.subr.bf16.mxu0 0
      %1135 = vmatpush2.bf16.msra.mxu0 0
      %1136 = vmatprep.subr.bf16.mxu0 0
      %1137 = vmatpush2.bf16.msra.mxu0 0
      %1138 = vmatprep.subr.bf16.mxu0 0
      %1139 = vmatpush2.bf16.msra.mxu0 0
      %1140 = vmatprep.subr.bf16.mxu0 0
      %1141 = vmatpush2.bf16.msra.mxu0 0
      %1142 = vmatprep.subr.bf16.mxu0 0
      %1143 = vmatpush2.bf16.msra.mxu0 0
      %1144 = vmatprep.subr.bf16.mxu0 0
      %1145 = vmatpush2.bf16.msra.mxu0 0
      %1146 = vmatprep.mubr.bf16.mxu0 0
      %1147 = vmatmul.mubr.bf16.gmra.mxu0 %v1100
      %v1148 = vpop.f32.mrf.mxu0
      %v1149 = vadd.f32 0.0, %v1148
      %v1150 = vpop.f32.mrf.mxu0
      %v1151 = vpop.f32.mrf.mxu0
      %v1152 = vadd.f32 0.0, %v1151
      %v1153 = vpop.f32.mrf.mxu0
      %1154 = vmatprep.mubr.bf16.mxu0 0
      %1155 = vmatmul.mubr.bf16.gmra.mxu0 %v1103
      %v1156 = vpop.f32.mrf.mxu0
      %v1157 = vadd.f32 0.0, %v1156
      %v1158 = vpop.f32.mrf.mxu0
      %v1159 = vpop.f32.mrf.mxu0
      %v1160 = vadd.f32 0.0, %v1159
      %v1161 = vpop.f32.mrf.mxu0
      %1162 = vmatprep.mubr.bf16.mxu0 0
      %1163 = vmatmul.mubr.bf16.gmra.mxu0 %v1106
      %v1164 = vpop.f32.mrf.mxu0
      %v1165 = vadd.f32 0.0, %v1164
      %v1166 = vpop.f32.mrf.mxu0
      %v1167 = vpop.f32.mrf.mxu0
      %v1168 = vadd.f32 0.0, %v1167
      %v1169 = vpop.f32.mrf.mxu0
      %1170 = vmatprep.mubr.bf16.mxu0 0
      %1171 = vmatmul.mubr.bf16.gmra.mxu0 %v1109
      %v1172 = vpop.f32.mrf.mxu0
      %v1173 = vadd.f32 0.0, %v1172
      %v1174 = vpop.f32.mrf.mxu0
      %v1175 = vpop.f32.mrf.mxu0
      %v1176 = vadd.f32 0.0, %v1175
      %v1177 = vpop.f32.mrf.mxu0
      %1178 = vmatprep.mubr.bf16.mxu0 0
      %1179 = vmatmul.mubr.bf16.gmra.mxu0 %v1112
      %v1180 = vpop.f32.mrf.mxu0
      %v1181 = vadd.f32 0.0, %v1180
      %v1182 = vpop.f32.mrf.mxu0
      %v1183 = vpop.f32.mrf.mxu0
      %v1184 = vadd.f32 0.0, %v1183
      %v1185 = vpop.f32.mrf.mxu0
      %1186 = vdwg.mxu0
      %v1187 = vadd.f32 %v1030, %v1149
      %v1188 = vadd.f32 %v1031, %v1152
      %v1189 = vadd.f32 %v1032, %v1157
      %v1190 = vadd.f32 %v1033, %v1160
      %v1191 = vadd.f32 %v1034, %v1165
      %v1192 = vadd.f32 %v1035, %v1168
      %v1193 = vadd.f32 %v1036, %v1173
      %v1194 = vadd.f32 %v1037, %v1176
      %v1195 = vadd.f32 %v1038, %v1181
      %v1196 = vadd.f32 %v1039, %v1184
      %v1197 = vld [vmem:[%s192 + $0x30] sm:$0x7]
      %s1198 = scalar_lea.vmem %s1, 56
      %v1199 = vld [vmem:[%s1198] sm:$0xf]
      %v1200 = vld [vmem:[%s1198 + $0x4] sm:$0xf]
      %v1202 = vunpack.c.l.b16 %v1197
      %v1203 = vpack.c.b16 %v1202, %v1202
      %vm1204 = vsmask.f32 5376
      %v1206 = vshrl.u32 %v1076, 16
      %v1208 = vrot.slane %v1206, 2
      %v1209 = vshll.u32 %v1076, 16
      %v1211 = vrot.slane %v1209, 3
      %v1212 = vor.u32 %v1208, %v1211
      %v1214 = vshrl.u32 %v1077, 16
      %v1216 = vrot.slane %v1214, 2
      %v1217 = vshll.u32 %v1077, 16
      %v1219 = vrot.slane %v1217, 3
      %v1220 = vor.u32 %v1216, %v1219
      %v1221 = vsel %vm1204, %v1212, %v1220
      %v1223 = vshrl.u32 %v1078, 16
      %v1225 = vrot.slane %v1223, 2
      %v1226 = vshll.u32 %v1078, 16
      %v1228 = vrot.slane %v1226, 3
      %v1229 = vor.u32 %v1225, %v1228
      %v1230 = vsel %vm1204, %v1220, %v1229
      %v1232 = vshrl.u32 %v1079, 16
      %v1234 = vrot.slane %v1232, 2
      %v1235 = vshll.u32 %v1079, 16
      %v1237 = vrot.slane %v1235, 3
      %v1238 = vor.u32 %v1234, %v1237
      %v1239 = vsel %vm1204, %v1229, %v1238
      %v1241 = vshrl.u32 %v1080, 16
      %v1243 = vrot.slane %v1241, 2
      %v1244 = vshll.u32 %v1080, 16
      %v1246 = vrot.slane %v1244, 3
      %v1247 = vor.u32 %v1243, %v1246
      %v1248 = vsel %vm1204, %v1238, %v1247
      %v1250 = vshrl.u32 %v1203, 16
      %v1252 = vrot.slane %v1250, 2
      %v1253 = vshll.u32 %v1203, 16
      %v1255 = vrot.slane %v1253, 3
      %v1256 = vor.u32 %v1252, %v1255
      %v1257 = vsel %vm1204, %v1247, %v1256
      %v1260 = vunpack.c.l.b16 %v1199
      %v1261 = vunpack.c.l.b16 %v1200
      %v1262 = vpack.c.b16 %v1261, %v1260
      %v1265 = vsel %vm294, %v1221, 0
      %v1268 = vsel %vm294, %v1230, 0
      %v1271 = vsel %vm294, %v1239, 0
      %v1274 = vsel %vm294, %v1248, 0
      %v1277 = vsel %vm294, %v1257, 0
      %1279 = vmatprep.subr.bf16.mxu0 0
      %1280 = vmatpush1.bf16.msra.mxu0 0
      %1281 = vmatprep.subr.bf16.mxu0 0
      %1282 = vmatpush1.bf16.msra.mxu0 0
      %1283 = vmatprep.subr.bf16.mxu0 0
      %1284 = vmatpush1.bf16.msra.mxu0 0
      %1285 = vmatprep.subr.bf16.mxu0 0
      %1286 = vmatpush1.bf16.msra.mxu0 0
      %1287 = vmatprep.subr.bf16.mxu0 0
      %1288 = vmatpush1.bf16.msra.mxu0 0
      %1289 = vmatprep.subr.bf16.mxu0 0
      %1290 = vmatpush1.bf16.msra.mxu0 0
      %1291 = vmatprep.subr.bf16.mxu0 0
      %1292 = vmatpush1.bf16.msra.mxu0 0
      %1293 = vmatprep.subr.bf16.mxu0 0
      %1294 = vmatpush1.bf16.msra.mxu0 %v1262
      %1295 = vmatprep.subr.bf16.mxu0 0
      %1296 = vmatpush2.bf16.msra.mxu0 0
      %1297 = vmatprep.subr.bf16.mxu0 0
      %1298 = vmatpush2.bf16.msra.mxu0 0
      %1299 = vmatprep.subr.bf16.mxu0 0
      %1300 = vmatpush2.bf16.msra.mxu0 0
      %1301 = vmatprep.subr.bf16.mxu0 0
      %1302 = vmatpush2.bf16.msra.mxu0 0
      %1303 = vmatprep.subr.bf16.mxu0 0
      %1304 = vmatpush2.bf16.msra.mxu0 0
      %1305 = vmatprep.subr.bf16.mxu0 0
      %1306 = vmatpush2.bf16.msra.mxu0 0
      %1307 = vmatprep.subr.bf16.mxu0 0
      %1308 = vmatpush2.bf16.msra.mxu0 0
      %1309 = vmatprep.subr.bf16.mxu0 0
      %1310 = vmatpush2.bf16.msra.mxu0 0
      %1311 = vmatprep.mubr.bf16.mxu0 0
      %1312 = vmatmul.mubr.bf16.gmra.mxu0 %v1265
      %v1313 = vpop.f32.mrf.mxu0
      %v1314 = vadd.f32 0.0, %v1313
      %v1315 = vpop.f32.mrf.mxu0
      %v1316 = vpop.f32.mrf.mxu0
      %v1317 = vadd.f32 0.0, %v1316
      %v1318 = vpop.f32.mrf.mxu0
      %1319 = vmatprep.mubr.bf16.mxu0 0
      %1320 = vmatmul.mubr.bf16.gmra.mxu0 %v1268
      %v1321 = vpop.f32.mrf.mxu0
      %v1322 = vadd.f32 0.0, %v1321
      %v1323 = vpop.f32.mrf.mxu0
      %v1324 = vpop.f32.mrf.mxu0
      %v1325 = vadd.f32 0.0, %v1324
      %v1326 = vpop.f32.mrf.mxu0
      %1327 = vmatprep.mubr.bf16.mxu0 0
      %1328 = vmatmul.mubr.bf16.gmra.mxu0 %v1271
      %v1329 = vpop.f32.mrf.mxu0
      %v1330 = vadd.f32 0.0, %v1329
      %v1331 = vpop.f32.mrf.mxu0
      %v1332 = vpop.f32.mrf.mxu0
      %v1333 = vadd.f32 0.0, %v1332
      %v1334 = vpop.f32.mrf.mxu0
      %1335 = vmatprep.mubr.bf16.mxu0 0
      %1336 = vmatmul.mubr.bf16.gmra.mxu0 %v1274
      %v1337 = vpop.f32.mrf.mxu0
      %v1338 = vadd.f32 0.0, %v1337
      %v1339 = vpop.f32.mrf.mxu0
      %v1340 = vpop.f32.mrf.mxu0
      %v1341 = vadd.f32 0.0, %v1340
      %v1342 = vpop.f32.mrf.mxu0
      %1343 = vmatprep.mubr.bf16.mxu0 0
      %1344 = vmatmul.mubr.bf16.gmra.mxu0 %v1277
      %v1345 = vpop.f32.mrf.mxu0
      %v1346 = vadd.f32 0.0, %v1345
      %v1347 = vpop.f32.mrf.mxu0
      %v1348 = vpop.f32.mrf.mxu0
      %v1349 = vadd.f32 0.0, %v1348
      %v1350 = vpop.f32.mrf.mxu0
      %1351 = vdwg.mxu0
      %v1352 = vadd.f32 %v1187, %v1314
      %v1353 = vadd.f32 %v1188, %v1317
      %v1354 = vadd.f32 %v1189, %v1322
      %v1355 = vadd.f32 %v1190, %v1325
      %v1356 = vadd.f32 %v1191, %v1330
      %v1357 = vadd.f32 %v1192, %v1333
      %v1358 = vadd.f32 %v1193, %v1338
      %v1359 = vadd.f32 %v1194, %v1341
      %v1360 = vadd.f32 %v1195, %v1346
      %v1361 = vadd.f32 %v1196, %v1349
      %v1362 = vld [vmem:[%s192 + $0x8] sm:$0x8]
      %s1363 = scalar_lea.vmem %s1, 64
      %v1364 = vld [vmem:[%s1363] sm:$0xf]
      %v1365 = vld [vmem:[%s1363 + $0x4] sm:$0xf]
      %v1367 = vunpack.c.l.b16 %v1362
      %v1368 = vpack.c.b16 %v1066, %v1367
      %vm1369 = vcmask 1044480
      %v1370 = vrot.slane %v1368, 3
      %v1371 = vrot.slane %v1077, 3
      %v1372 = vsel %vm1369, %v1370, %v1371
      %v1373 = vrot.slane %v1078, 3
      %v1374 = vsel %vm1369, %v1371, %v1373
      %v1375 = vrot.slane %v1079, 3
      %v1376 = vsel %vm1369, %v1373, %v1375
      %v1377 = vrot.slane %v1080, 3
      %v1378 = vsel %vm1369, %v1375, %v1377
      %v1379 = vrot.slane %v1203, 3
      %v1380 = vsel %vm1369, %v1377, %v1379
      %v1383 = vunpack.c.l.b16 %v1364
      %v1384 = vunpack.c.l.b16 %v1365
      %v1385 = vpack.c.b16 %v1384, %v1383
      %v1388 = vsel %vm294, %v1372, 0
      %v1391 = vsel %vm294, %v1374, 0
      %v1394 = vsel %vm294, %v1376, 0
      %v1397 = vsel %vm294, %v1378, 0
      %v1400 = vsel %vm294, %v1380, 0
      %1402 = vmatprep.subr.bf16.mxu0 0
      %1403 = vmatpush1.bf16.msra.mxu0 0
      %1404 = vmatprep.subr.bf16.mxu0 0
      %1405 = vmatpush1.bf16.msra.mxu0 0
      %1406 = vmatprep.subr.bf16.mxu0 0
      %1407 = vmatpush1.bf16.msra.mxu0 0
      %1408 = vmatprep.subr.bf16.mxu0 0
      %1409 = vmatpush1.bf16.msra.mxu0 0
      %1410 = vmatprep.subr.bf16.mxu0 0
      %1411 = vmatpush1.bf16.msra.mxu0 0
      %1412 = vmatprep.subr.bf16.mxu0 0
      %1413 = vmatpush1.bf16.msra.mxu0 0
      %1414 = vmatprep.subr.bf16.mxu0 0
      %1415 = vmatpush1.bf16.msra.mxu0 0
      %1416 = vmatprep.subr.bf16.mxu0 0
      %1417 = vmatpush1.bf16.msra.mxu0 %v1385
      %1418 = vmatprep.subr.bf16.mxu0 0
      %1419 = vmatpush2.bf16.msra.mxu0 0
      %1420 = vmatprep.subr.bf16.mxu0 0
      %1421 = vmatpush2.bf16.msra.mxu0 0
      %1422 = vmatprep.subr.bf16.mxu0 0
      %1423 = vmatpush2.bf16.msra.mxu0 0
      %1424 = vmatprep.subr.bf16.mxu0 0
      %1425 = vmatpush2.bf16.msra.mxu0 0
      %1426 = vmatprep.subr.bf16.mxu0 0
      %1427 = vmatpush2.bf16.msra.mxu0 0
      %1428 = vmatprep.subr.bf16.mxu0 0
      %1429 = vmatpush2.bf16.msra.mxu0 0
      %1430 = vmatprep.subr.bf16.mxu0 0
      %1431 = vmatpush2.bf16.msra.mxu0 0
      %1432 = vmatprep.subr.bf16.mxu0 0
      %1433 = vmatpush2.bf16.msra.mxu0 0
      %1434 = vmatprep.mubr.bf16.mxu0 0
      %1435 = vmatmul.mubr.bf16.gmra.mxu0 %v1388
      %v1436 = vpop.f32.mrf.mxu0
      %v1437 = vadd.f32 0.0, %v1436
      %v1438 = vpop.f32.mrf.mxu0
      %v1439 = vpop.f32.mrf.mxu0
      %v1440 = vadd.f32 0.0, %v1439
      %v1441 = vpop.f32.mrf.mxu0
      %1442 = vmatprep.mubr.bf16.mxu0 0
      %1443 = vmatmul.mubr.bf16.gmra.mxu0 %v1391
      %v1444 = vpop.f32.mrf.mxu0
      %v1445 = vadd.f32 0.0, %v1444
      %v1446 = vpop.f32.mrf.mxu0
      %v1447 = vpop.f32.mrf.mxu0
      %v1448 = vadd.f32 0.0, %v1447
      %v1449 = vpop.f32.mrf.mxu0
      %1450 = vmatprep.mubr.bf16.mxu0 0
      %1451 = vmatmul.mubr.bf16.gmra.mxu0 %v1394
      %v1452 = vpop.f32.mrf.mxu0
      %v1453 = vadd.f32 0.0, %v1452
      %v1454 = vpop.f32.mrf.mxu0
      %v1455 = vpop.f32.mrf.mxu0
      %v1456 = vadd.f32 0.0, %v1455
      %v1457 = vpop.f32.mrf.mxu0
      %1458 = vmatprep.mubr.bf16.mxu0 0
      %1459 = vmatmul.mubr.bf16.gmra.mxu0 %v1397
      %v1460 = vpop.f32.mrf.mxu0
      %v1461 = vadd.f32 0.0, %v1460
      %v1462 = vpop.f32.mrf.mxu0
      %v1463 = vpop.f32.mrf.mxu0
      %v1464 = vadd.f32 0.0, %v1463
      %v1465 = vpop.f32.mrf.mxu0
      %1466 = vmatprep.mubr.bf16.mxu0 0
      %1467 = vmatmul.mubr.bf16.gmra.mxu0 %v1400
      %v1468 = vpop.f32.mrf.mxu0
      %v1469 = vadd.f32 0.0, %v1468
      %v1470 = vpop.f32.mrf.mxu0
      %v1471 = vpop.f32.mrf.mxu0
      %v1472 = vadd.f32 0.0, %v1471
      %v1473 = vpop.f32.mrf.mxu0
      %1474 = vdwg.mxu0
      %v1475 = vadd.f32 %v1352, %v1437
      %v1476 = vadd.f32 %v1353, %v1440
      %v1477 = vadd.f32 %v1354, %v1445
      %v1478 = vadd.f32 %v1355, %v1448
      %v1479 = vadd.f32 %v1356, %v1453
      %v1480 = vadd.f32 %v1357, %v1456
      %v1481 = vadd.f32 %v1358, %v1461
      %v1482 = vadd.f32 %v1359, %v1464
      %v1483 = vadd.f32 %v1360, %v1469
      %v1484 = vadd.f32 %v1361, %v1472
      %v1485 = vld [vmem:[%s2] sm:$0x1]
      %v1487 = vlaneseq
      %v1488 = vshrl.u32 %v1487, 7
      %v1489 = vsub.s32 0, %v1488
      %v1490 = vrot.slane %v1485, %v1489
      %v1492 = vadd.f32 %v1475, %v1490
      %v1493 = vadd.f32 %v1476, %v1490
      %v1494 = vadd.f32 %v1477, %v1490
      %v1495 = vadd.f32 %v1478, %v1490
      %v1496 = vadd.f32 %v1479, %v1490
      %v1497 = vadd.f32 %v1480, %v1490
      %v1498 = vadd.f32 %v1481, %v1490
      %v1499 = vadd.f32 %v1482, %v1490
      %v1500 = vadd.f32 %v1483, %v1490
      %v1501 = vadd.f32 %v1484, %v1490
      %v1502 = vmax.f32 %v1492, 0.0
      %v1503 = vmax.f32 %v1493, 0.0
      %v1504 = vmax.f32 %v1494, 0.0
      %v1505 = vmax.f32 %v1495, 0.0
      %v1506 = vmax.f32 %v1496, 0.0
      %v1507 = vmax.f32 %v1497, 0.0
      %v1508 = vmax.f32 %v1498, 0.0
      %v1509 = vmax.f32 %v1499, 0.0
      %v1510 = vmax.f32 %v1500, 0.0
      %v1511 = vmax.f32 %v1501, 0.0
      %v1512 = vld [vmem:[%s3] sm:$0xff]
      %v1513 = vld [vmem:[%s3 + $0x8] sm:$0xff]
      %v1514 = vld [vmem:[%s3 + $0x10] sm:$0xff]
      %v1515 = vld [vmem:[%s3 + $0x18] sm:$0xff]
      %v1516 = vld [vmem:[%s3 + $0x20] sm:$0xff]
      %v1517 = vld [vmem:[%s3 + $0x28] sm:$0xff]
      %v1518 = vld [vmem:[%s3 + $0x30] sm:$0xff]
      %v1519 = vld [vmem:[%s3 + $0x38] sm:$0xff]
      %v1520 = vld [vmem:[%s3 + $0x40] sm:$0xff]
      %v1521 = vld [vmem:[%s3 + $0x48] sm:$0xff]
      %1523 = vset.pattern.permute.xlu0 0
      %1524 = vperm.xlu0 %1523, %v1512
      %v1525 = vpop.permute.xlu0 %1524
      %1528 = vset.pattern.permute.xlu0 0
      %1529 = vperm.xlu0 %1528, %v1513
      %v1530 = vpop.permute.xlu0 %1529
      %1533 = vset.pattern.permute.xlu0 0
      %1534 = vperm.xlu0 %1533, %v1514
      %v1535 = vpop.permute.xlu0 %1534
      %1538 = vset.pattern.permute.xlu0 0
      %1539 = vperm.xlu0 %1538, %v1515
      %v1540 = vpop.permute.xlu0 %1539
      %1543 = vset.pattern.permute.xlu0 0
      %1544 = vperm.xlu0 %1543, %v1516
      %v1545 = vpop.permute.xlu0 %1544
      %1548 = vset.pattern.permute.xlu0 0
      %1549 = vperm.xlu0 %1548, %v1517
      %v1550 = vpop.permute.xlu0 %1549
      %1553 = vset.pattern.permute.xlu0 0
      %1554 = vperm.xlu0 %1553, %v1518
      %v1555 = vpop.permute.xlu0 %1554
      %1558 = vset.pattern.permute.xlu0 0
      %1559 = vperm.xlu0 %1558, %v1519
      %v1560 = vpop.permute.xlu0 %1559
      %1563 = vset.pattern.permute.xlu0 0
      %1564 = vperm.xlu0 %1563, %v1520
      %v1565 = vpop.permute.xlu0 %1564
      %1568 = vset.pattern.permute.xlu0 0
      %1569 = vperm.xlu0 %1568, %v1521
      %v1570 = vpop.permute.xlu0 %1569
      %v1572 = vmul.f32 %v1502, %v1525
      %v1573 = vmul.f32 %v1503, %v1530
      %v1574 = vmul.f32 %v1504, %v1535
      %v1575 = vmul.f32 %v1505, %v1540
      %v1576 = vmul.f32 %v1506, %v1545
      %v1577 = vmul.f32 %v1507, %v1550
      %v1578 = vmul.f32 %v1508, %v1555
      %v1579 = vmul.f32 %v1509, %v1560
      %v1580 = vmul.f32 %v1510, %v1565
      %v1581 = vmul.f32 %v1511, %v1570
      %v1582 = vpack.c.bf16 %v1573, %v1572
      %v1583 = vpack.c.bf16 %v1575, %v1574
      %v1584 = vpack.c.bf16 %v1577, %v1576
      %v1585 = vpack.c.bf16 %v1579, %v1578
      %v1586 = vpack.c.bf16 %v1581, %v1580
      %v1592 = vunpack.c.l.b16 %v1582
      %v1593 = vunpack.c.h.b16 %v1582
      %v1594 = vunpack.c.l.b16 %v1583
      %v1595 = vunpack.c.h.b16 %v1583
      %v1596 = vunpack.c.l.b16 %v1584
      %v1597 = vunpack.c.h.b16 %v1584
      %v1598 = vunpack.c.l.b16 %v1585
      %v1599 = vunpack.c.h.b16 %v1585
      %v1600 = vunpack.c.l.b16 %v1586
      %v1601 = vunpack.c.h.b16 %v1586
      %v1602 = vpack.c.b16 %v1592, %v1592
      %v1603 = vpack.c.b16 %v1593, %v1593
      %v1604 = vpack.c.b16 %v1594, %v1594
      %v1605 = vpack.c.b16 %v1595, %v1595
      %v1606 = vpack.c.b16 %v1596, %v1596
      %v1607 = vpack.c.b16 %v1597, %v1597
      %v1608 = vpack.c.b16 %v1598, %v1598
      %v1609 = vpack.c.b16 %v1599, %v1599
      %v1610 = vpack.c.b16 %v1600, %v1600
      %v1611 = vpack.c.b16 %v1601, %v1601
      %vm1622 = vcmask 257024
      %1623 = vst.msk [vmem:[%s197] sm:$0xf] %vm1622, %v1602
      %1624 = vst.msk [vmem:[%s197 + $0x4] sm:$0xf] %vm1622, %v1603
      %1625 = vst.msk [vmem:[%s197 + $0x8] sm:$0xf] %vm1622, %v1604
      %1626 = vst.msk [vmem:[%s197 + $0xc] sm:$0xf] %vm1622, %v1605
      %1627 = vst.msk [vmem:[%s197 + $0x10] sm:$0xf] %vm1622, %v1606
      %1628 = vst.msk [vmem:[%s197 + $0x14] sm:$0xf] %vm1622, %v1607
      %1629 = vst.msk [vmem:[%s197 + $0x18] sm:$0xf] %vm1622, %v1608
      %1630 = vst.msk [vmem:[%s197 + $0x1c] sm:$0xf] %vm1622, %v1609
      %1631 = vst.msk [vmem:[%s197 + $0x20] sm:$0xf] %vm1622, %v1610
      %1632 = vst.msk [vmem:[%s197 + $0x24] sm:$0xf] %vm1622, %v1611
      %p1633 = scmp.lt.s32.totalorder %s15, 3
      %s1634 = scalar_select %p1633, %s15, 3
      %s1635 = smul.addr %s1634, 10
      %s1636 = smul.addr %s1635, 4
      %s1637 = scalar_lea.vmem %s4, %s1636
      // Predicated region
      $region37: #{perceptual_loss_function.7} parent=35 // pred_check
        %p1638 = pneg %p122
      $region38: #{perceptual_loss_function.7} parent=35 // pred_check_branch
        %1640 = sbr.rel (%p1638) target = $region40
      $region39: #{perceptual_loss_function.7} parent=35 // pred_region
        _
      $region40: #{perceptual_loss_function.7} parent=35 // pred_fallthru
        _
    $region36: #{perceptual_loss_function.7} parent=5 // pred_fallthru
      _
    %p1641 = scmp.le.s32.totalorder 2, %s10
    // Predicated region
    $region41: #{perceptual_loss_function.7} parent=5 // pred_check
      %p1642 = pneg %p1641
    $region42: #{perceptual_loss_function.7} parent=5 // pred_check_branch
      %1644 = sbr.rel (%p1642) target = $region44
    $region43: #{perceptual_loss_function.7} parent=5 // pred_region
      %s1645 = ssub.s32 %s10, 2
      // Predicated region
      $region45: #{perceptual_loss_function.7} parent=43 // pred_check
        %p1646 = pneg %p128
      $region46: #{perceptual_loss_function.7} parent=43 // pred_check_branch
        %1648 = sbr.rel (%p1646) target = $region48
      $region47: #{perceptual_loss_function.7} parent=43 // pred_region
        %p1649 = scmp.lt.s32.totalorder %s16, 3
        %s1650 = scalar_select %p1649, %s16, 3
        %s1651 = smul.addr %s1650, 10
        %s1652 = smul.addr %s1651, 4
        %s1653 = scalar_lea.vmem %s4, %s1652
      $region48: #{perceptual_loss_function.7} parent=43 // pred_fallthru
        _
    $region44: #{perceptual_loss_function.7} parent=5 // pred_fallthru
      _
  $region6: #{perceptual_loss_function.7} parent=0 // loop_footer
    %s14 = sadd.s32 1, %s10
  $region7: #{perceptual_loss_function.7} parent=0 // loop_footer_branch
    %9 = sbr.rel target = $region3
  $region8: #{perceptual_loss_function.7} parent=0 // loop_exit
    _

// kernel: perceptual_loss_function.8
$region0: #{perceptual_loss_function.8}
  #allocation0 [shape = 'u32[]', space=smem, size = 0x4, offset = 0x4, fixed_abs, tag = 'smem constant byte address 0x4 - core index']
  #allocation1 [shape = 'u32[144,128]{1,0:T(1,128)}', space=vmem, size = 0x12000, scoped, tag = 'internal scratch']
  #allocation2 [shape = 'f32[1,1]{1,0:T(1,128)}', space=vmem, size = 0x200, scoped, tag = 'scratch operand']
  %s0 = inlined_call_operand.vmem [shape: bf16[4,288,16], index: 0, kind: input, shape index: {}, may-alias: {0,1}]
  %s1 = inlined_call_operand.vmem [shape: bf16[4,288,16], index: 1, kind: input, shape index: {}, may-alias: {0,1}]
  %s2 = inlined_call_operand.vmem [shape: f32[1,16], index: 2, kind: input, shape index: {}]
  %s3 = inlined_call_operand.hbm [shape: f32[1,1], index: 3, kind: output, shape index: {}]
  %s4 = sld [smem:[#allocation0]]
  $region53: #{perceptual_loss_function.8} parent=0
    _
  %s6 = ssub.s32 1, %s4
  %s7 = scalar_select 0, %s6, %s4
  $region1: #{perceptual_loss_function.8} parent=0
    #allocation3 [shape = 'u8[512]{0}', space=vmem, size = 0x400, scoped, tag = 'output window, operand 0, single buffered']
    #allocation4 [shape = 's32[2]{0}', space=sflag, size = 0x8, scoped, tag = 'scoped memory for perceptual_loss_function.8']
    %8 = vsyncpa [#allocation4], 0
    loop: start=0, step=1, limit=4
    $region2: #{perceptual_loss_function.8} parent=1 // loop_pre_header
      _
    $region3: #{perceptual_loss_function.8} parent=1 // loop_header
      %s10 = sphi 0, %s14
      %p11 = scmp.ge.s32.totalorder %s10, 4
      %s20 = sphi 0, %s22
      %s23 = sphi 0, %s20
      %s24 = sphi 0, %s23
      %s40 = sphi 0, %s24
      %s48 = sphi 0, %s50
      %s51 = sphi 0, %s48
      %s52 = sphi 0, %s51
      %s68 = sphi 0, %s52
      %s72 = sphi 0, %s72
      %s74 = sphi 0, %s72
      %s75 = sphi 0, %s74
      %s89 = sphi 0, %s75
      %s93 = sphi 0, %s93
      %s95 = sphi 0, %s93
      %s96 = sphi 0, %s95
      %s110 = sphi 0, %s96
    $region4: #{perceptual_loss_function.8} parent=1 // loop_header_branch
      %13 = sbr.rel (%p11) target = $region8
    $region5: #{perceptual_loss_function.8} parent=1 // loop_body
      %s15 = ssub.s32 %s10, 1
      %s16 = ssub.s32 %s10, 2
      %s17 = sadd.s32 %s10, 1
      %s18 = ssub.s32 %s10, %s17
      %p19 = scmp.eq.s32.totalorder %s18, 0
      %s21 = sadd.s32 %s20, 1
      %s22 = scalar_select %p19, %s20, %s21
      %p25 = pneg %p19
      %p26 = scmp.eq.s32.totalorder %s10, 1
      %p27 = por %p25, %p26
      %p28 = scmp.ne.s32.totalorder %s20, %s23
      %p29 = scmp.eq.s32.totalorder %s10, 0
      %p30 = por %p28, %p29
      %p31 = scmp.ne.s32.totalorder %s20, %s23
      %p32 = scmp.eq.s32.totalorder %s15, 1
      %p33 = por %p31, %p32
      %p34 = scmp.ne.s32.totalorder %s23, %s24
      %p35 = scmp.eq.s32.totalorder %s15, 0
      %p36 = por %p34, %p35
      %p37 = scmp.ne.s32.totalorder %s23, %s24
      %p38 = scmp.eq.s32.totalorder %s16, 1
      %p39 = por %p37, %p38
      %p41 = scmp.ne.s32.totalorder %s24, %s40
      %p42 = scmp.eq.s32.totalorder %s16, 0
      %p43 = por %p41, %p42
      %s44 = sadd.s32 %s10, 2
      %s45 = sadd.s32 %s17, 2
      %s46 = ssub.s32 %s44, %s45
      %p47 = scmp.eq.s32.totalorder %s46, 0
      %s49 = sadd.s32 %s48, 1
      %s50 = scalar_select %p47, %s48, %s49
      %p53 = pneg %p47
      %p54 = scmp.eq.s32.totalorder %s10, 1
      %p55 = por %p53, %p54
      %p56 = scmp.ne.s32.totalorder %s48, %s51
      %p57 = scmp.eq.s32.totalorder %s10, 0
      %p58 = por %p56, %p57
      %p59 = scmp.ne.s32.totalorder %s48, %s51
      %p60 = scmp.eq.s32.totalorder %s15, 1
      %p61 = por %p59, %p60
      %p62 = scmp.ne.s32.totalorder %s51, %s52
      %p63 = scmp.eq.s32.totalorder %s15, 0
      %p64 = por %p62, %p63
      %p65 = scmp.ne.s32.totalorder %s51, %s52
      %p66 = scmp.eq.s32.totalorder %s16, 1
      %p67 = por %p65, %p66
      %p69 = scmp.ne.s32.totalorder %s52, %s68
      %p70 = scmp.eq.s32.totalorder %s16, 0
      %p71 = por %p69, %p70
      %s73 = sadd.s32 %s72, 1
      %p76 = scmp.eq.s32.totalorder %s10, 1
      %p77 = scmp.ne.s32.totalorder %s72, %s74
      %p78 = scmp.eq.s32.totalorder %s10, 0
      %p79 = por %p77, %p78
      %p80 = scmp.ne.s32.totalorder %s72, %s74
      %p81 = scmp.eq.s32.totalorder %s15, 1
      %p82 = por %p80, %p81
      %p83 = scmp.ne.s32.totalorder %s74, %s75
      %p84 = scmp.eq.s32.totalorder %s15, 0
      %p85 = por %p83, %p84
      %p86 = scmp.ne.s32.totalorder %s74, %s75
      %p87 = scmp.eq.s32.totalorder %s16, 1
      %p88 = por %p86, %p87
      %p90 = scmp.ne.s32.totalorder %s75, %s89
      %p91 = scmp.eq.s32.totalorder %s16, 0
      %p92 = por %p90, %p91
      %s94 = sadd.s32 %s93, 1
      %p97 = scmp.eq.s32.totalorder %s10, 1
      %p98 = scmp.ne.s32.totalorder %s93, %s95
      %p99 = scmp.eq.s32.totalorder %s10, 0
      %p100 = por %p98, %p99
      %p101 = scmp.ne.s32.totalorder %s93, %s95
      %p102 = scmp.eq.s32.totalorder %s15, 1
      %p103 = por %p101, %p102
      %p104 = scmp.ne.s32.totalorder %s95, %s96
      %p105 = scmp.eq.s32.totalorder %s15, 0
      %p106 = por %p104, %p105
      %p107 = scmp.ne.s32.totalorder %s95, %s96
      %p108 = scmp.eq.s32.totalorder %s16, 1
      %p109 = por %p107, %p108
      %p111 = scmp.ne.s32.totalorder %s96, %s110
      %p112 = scmp.eq.s32.totalorder %s16, 0
      %p113 = por %p111, %p112
      %p114 = scmp.le.s32.totalorder 1, %s10
      %p115 = scmp.lt.s32.totalorder %s10, 3
      %p116 = pnand %p114, %p115
      %p117 = pneg %p116
      // Predicated region
      $region9: #{perceptual_loss_function.8} parent=5 // pred_check
        _
      $region10: #{perceptual_loss_function.8} parent=5 // pred_check_branch
        %119 = sbr.rel (%p116) target = $region12
      $region11: #{perceptual_loss_function.8} parent=5 // pred_region
        %s120 = ssub.s32 %s10, 1
        // Predicated region
        $region13: #{perceptual_loss_function.8} parent=11 // pred_check
          %p121 = pneg %p85
        $region14: #{perceptual_loss_function.8} parent=11 // pred_check_branch
          %123 = sbr.rel (%p121) target = $region16
        $region15: #{perceptual_loss_function.8} parent=11 // pred_region
          _
        $region16: #{perceptual_loss_function.8} parent=11 // pred_fallthru
          _
      $region12: #{perceptual_loss_function.8} parent=5 // pred_fallthru
        _
      %p124 = scmp.lt.s32.totalorder %s10, 2
      // Predicated region
      $region17: #{perceptual_loss_function.8} parent=5 // pred_check
        %p125 = pneg %p124
      $region18: #{perceptual_loss_function.8} parent=5 // pred_check_branch
        %127 = sbr.rel (%p125) target = $region20
      $region19: #{perceptual_loss_function.8} parent=5 // pred_region
        // Predicated region
        $region21: #{perceptual_loss_function.8} parent=19 // pred_check
          %p128 = pneg %p30
        $region22: #{perceptual_loss_function.8} parent=19 // pred_check_branch
          %130 = sbr.rel (%p128) target = $region24
        $region23: #{perceptual_loss_function.8} parent=19 // pred_region
          %p131 = scmp.lt.s32.totalorder %s10, 3
          %s132 = scalar_select %p131, %s10, 3
          %s133 = smul.addr %s132, 36
          %s134 = smul.addr %s133, 4
          %s135 = scalar_lea.vmem %s0, %s134
        $region24: #{perceptual_loss_function.8} parent=19 // pred_fallthru
          _
        // Predicated region
        $region25: #{perceptual_loss_function.8} parent=19 // pred_check
          %p136 = pneg %p58
        $region26: #{perceptual_loss_function.8} parent=19 // pred_check_branch
          %138 = sbr.rel (%p136) target = $region28
        $region27: #{perceptual_loss_function.8} parent=19 // pred_region
          %s139 = sadd.s32 %s10, 2
          %p140 = scmp.lt.s32.totalorder %s139, 3
          %s141 = scalar_select %p140, %s139, 3
          %s142 = smul.addr %s141, 36
          %s143 = smul.addr %s142, 4
          %s144 = scalar_lea.vmem %s1, %s143
          %s145 = sadd.s32 %s10, 2
        $region28: #{perceptual_loss_function.8} parent=19 // pred_fallthru
          _
      $region20: #{perceptual_loss_function.8} parent=5 // pred_fallthru
        _
      %p146 = scmp.le.s32.totalorder 1, %s10
      %p147 = scmp.lt.s32.totalorder %s10, 3
      %p148 = pnand %p146, %p147
      %p149 = pneg %p148
      // Predicated region
      $region29: #{perceptual_loss_function.8} parent=5 // pred_check
        _
      $region30: #{perceptual_loss_function.8} parent=5 // pred_check_branch
        %151 = sbr.rel (%p148) target = $region32
      $region31: #{perceptual_loss_function.8} parent=5 // pred_region
        %s152 = ssub.s32 %s10, 1
        %p153 = scmp.lt.s32.totalorder %s15, 3
        %s154 = scalar_select %p153, %s15, 3
        %s155 = smul.addr %s154, 36
        %s156 = smul.addr %s155, 4
        %s157 = scalar_lea.vmem %s0, %s156
        %p158 = pneg %p36
        %p159 = pneg %p33
        %s160 = sadd.s32 %s15, 2
        %p161 = scmp.lt.s32.totalorder %s160, 3
        %s162 = scalar_select %p161, %s160, 3
        %s163 = smul.addr %s162, 36
        %s164 = smul.addr %s163, 4
        %s165 = scalar_lea.vmem %s1, %s164
        %p166 = pneg %p64
        %p167 = pneg %p61
        %p168 = pneg %p85
        %p169 = pneg %p82
        %p170 = pneg %p106
        %p171 = pneg %p103
        %p172 = scmp.lt.s32.totalorder %s15, 3
        %s173 = scalar_select %p172, %s15, 3
        %s174 = smul.addr %s173, 36
        %s175 = smul.addr %s174, 4
        %s176 = scalar_lea.vmem %s0, %s175
        %s177 = sadd.s32 %s15, 2
        %p178 = scmp.lt.s32.totalorder %s177, 3
        %s179 = scalar_select %p178, %s177, 3
        %s180 = smul.addr %s179, 36
        %s181 = smul.addr %s180, 4
        %s182 = scalar_lea.vmem %s1, %s181
        %s183 = sadd.s32 %s15, 2
        %p184 = scmp.eq.s32.totalorder %s15, 0
        // Predicated region
        $region33: #{perceptual_loss_function.8} parent=31 // pred_check
          %p185 = pneg %p184
        $region34: #{perceptual_loss_function.8} parent=31 // pred_check_branch
          %187 = sbr.rel (%p185) target = $region36
        $region35: #{perceptual_loss_function.8} parent=31 // pred_region
          %vm188 = vcmask 0
          %189 = vst.msk [vmem:[#allocation2] sm:$0x1] %vm188, 0.0
        $region36: #{perceptual_loss_function.8} parent=31 // pred_fallthru
          _
        %v190 = vld [vmem:[%s176] sm:$0xf]
        %v191 = vld [vmem:[%s176 + $0x4] sm:$0xf]
        %v192 = vld [vmem:[%s176 + $0x8] sm:$0xf]
        %v193 = vld [vmem:[%s176 + $0xc] sm:$0xf]
        %v194 = vld [vmem:[%s176 + $0x10] sm:$0xf]
        %v195 = vld [vmem:[%s176 + $0x14] sm:$0xf]
        %v196 = vld [vmem:[%s176 + $0x18] sm:$0xf]
        %v197 = vld [vmem:[%s176 + $0x1c] sm:$0xf]
        %v198 = vld [vmem:[%s176 + $0x20] sm:$0xf]
        %v199 = vld [vmem:[%s176 + $0x24] sm:$0xf]
        %v200 = vld [vmem:[%s176 + $0x28] sm:$0xf]
        %v201 = vld [vmem:[%s176 + $0x2c] sm:$0xf]
        %v202 = vld [vmem:[%s176 + $0x30] sm:$0xf]
        %v203 = vld [vmem:[%s176 + $0x34] sm:$0xf]
        %v204 = vld [vmem:[%s176 + $0x38] sm:$0xf]
        %v205 = vld [vmem:[%s176 + $0x3c] sm:$0xf]
        %v206 = vld [vmem:[%s176 + $0x40] sm:$0xf]
        %v207 = vld [vmem:[%s176 + $0x44] sm:$0xf]
        %v208 = vld [vmem:[%s176 + $0x48] sm:$0xf]
        %v209 = vld [vmem:[%s176 + $0x4c] sm:$0xf]
        %v210 = vld [vmem:[%s176 + $0x50] sm:$0xf]
        %v211 = vld [vmem:[%s176 + $0x54] sm:$0xf]
        %v212 = vld [vmem:[%s176 + $0x58] sm:$0xf]
        %v213 = vld [vmem:[%s176 + $0x5c] sm:$0xf]
        %v214 = vld [vmem:[%s176 + $0x60] sm:$0xf]
        %v215 = vld [vmem:[%s176 + $0x64] sm:$0xf]
        %v216 = vld [vmem:[%s176 + $0x68] sm:$0xf]
        %v217 = vld [vmem:[%s176 + $0x6c] sm:$0xf]
        %v218 = vld [vmem:[%s176 + $0x70] sm:$0xf]
        %v219 = vld [vmem:[%s176 + $0x74] sm:$0xf]
        %v220 = vld [vmem:[%s176 + $0x78] sm:$0xf]
        %v221 = vld [vmem:[%s176 + $0x7c] sm:$0xf]
        %v222 = vld [vmem:[%s176 + $0x80] sm:$0xf]
        %v223 = vld [vmem:[%s176 + $0x84] sm:$0xf]
        %v224 = vld [vmem:[%s176 + $0x88] sm:$0xf]
        %v225 = vld [vmem:[%s176 + $0x8c] sm:$0xf]
        %v226 = vunpack.c.l.bf16 %v190
        %v227 = vunpack.c.l.bf16 %v191
        %v228 = vunpack.c.l.bf16 %v192
        %v229 = vunpack.c.l.bf16 %v193
        %v230 = vunpack.c.l.bf16 %v194
        %v231 = vunpack.c.l.bf16 %v195
        %v232 = vunpack.c.l.bf16 %v196
        %v233 = vunpack.c.l.bf16 %v197
        %v234 = vunpack.c.l.bf16 %v198
        %v235 = vunpack.c.l.bf16 %v199
        %v236 = vunpack.c.l.bf16 %v200
        %v237 = vunpack.c.l.bf16 %v201
        %v238 = vunpack.c.l.bf16 %v202
        %v239 = vunpack.c.l.bf16 %v203
        %v240 = vunpack.c.l.bf16 %v204
        %v241 = vunpack.c.l.bf16 %v205
        %v242 = vunpack.c.l.bf16 %v206
        %v243 = vunpack.c.l.bf16 %v207
        %v244 = vunpack.c.l.bf16 %v208
        %v245 = vunpack.c.l.bf16 %v209
        %v246 = vunpack.c.l.bf16 %v210
        %v247 = vunpack.c.l.bf16 %v211
        %v248 = vunpack.c.l.bf16 %v212
        %v249 = vunpack.c.l.bf16 %v213
        %v250 = vunpack.c.l.bf16 %v214
        %v251 = vunpack.c.l.bf16 %v215
        %v252 = vunpack.c.l.bf16 %v216
        %v253 = vunpack.c.l.bf16 %v217
        %v254 = vunpack.c.l.bf16 %v218
        %v255 = vunpack.c.l.bf16 %v219
        %v256 = vunpack.c.l.bf16 %v220
        %v257 = vunpack.c.l.bf16 %v221
        %v258 = vunpack.c.l.bf16 %v222
        %v259 = vunpack.c.l.bf16 %v223
        %v260 = vunpack.c.l.bf16 %v224
        %v261 = vunpack.c.l.bf16 %v225
        %v262 = vld [vmem:[%s182] sm:$0xf]
        %v263 = vld [vmem:[%s182 + $0x4] sm:$0xf]
        %v264 = vld [vmem:[%s182 + $0x8] sm:$0xf]
        %v265 = vld [vmem:[%s182 + $0xc] sm:$0xf]
        %v266 = vld [vmem:[%s182 + $0x10] sm:$0xf]
        %v267 = vld [vmem:[%s182 + $0x14] sm:$0xf]
        %v268 = vld [vmem:[%s182 + $0x18] sm:$0xf]
        %v269 = vld [vmem:[%s182 + $0x1c] sm:$0xf]
        %v270 = vld [vmem:[%s182 + $0x20] sm:$0xf]
        %v271 = vld [vmem:[%s182 + $0x24] sm:$0xf]
        %v272 = vld [vmem:[%s182 + $0x28] sm:$0xf]
        %v273 = vld [vmem:[%s182 + $0x2c] sm:$0xf]
        %v274 = vld [vmem:[%s182 + $0x30] sm:$0xf]
        %v275 = vld [vmem:[%s182 + $0x34] sm:$0xf]
        %v276 = vld [vmem:[%s182 + $0x38] sm:$0xf]
        %v277 = vld [vmem:[%s182 + $0x3c] sm:$0xf]
        %v278 = vld [vmem:[%s182 + $0x40] sm:$0xf]
        %v279 = vld [vmem:[%s182 + $0x44] sm:$0xf]
        %v280 = vld [vmem:[%s182 + $0x48] sm:$0xf]
        %v281 = vld [vmem:[%s182 + $0x4c] sm:$0xf]
        %v282 = vld [vmem:[%s182 + $0x50] sm:$0xf]
        %v283 = vld [vmem:[%s182 + $0x54] sm:$0xf]
        %v284 = vld [vmem:[%s182 + $0x58] sm:$0xf]
        %v285 = vld [vmem:[%s182 + $0x5c] sm:$0xf]
        %v286 = vld [vmem:[%s182 + $0x60] sm:$0xf]
        %v287 = vld [vmem:[%s182 + $0x64] sm:$0xf]
        %v288 = vld [vmem:[%s182 + $0x68] sm:$0xf]
        %v289 = vld [vmem:[%s182 + $0x6c] sm:$0xf]
        %v290 = vld [vmem:[%s182 + $0x70] sm:$0xf]
        %v291 = vld [vmem:[%s182 + $0x74] sm:$0xf]
        %v292 = vld [vmem:[%s182 + $0x78] sm:$0xf]
        %v293 = vld [vmem:[%s182 + $0x7c] sm:$0xf]
        %v294 = vld [vmem:[%s182 + $0x80] sm:$0xf]
        %v295 = vld [vmem:[%s182 + $0x84] sm:$0xf]
        %v296 = vld [vmem:[%s182 + $0x88] sm:$0xf]
        %v297 = vld [vmem:[%s182 + $0x8c] sm:$0xf]
        %v298 = vunpack.c.l.bf16 %v262
        %v299 = vunpack.c.l.bf16 %v263
        %v300 = vunpack.c.l.bf16 %v264
        %v301 = vunpack.c.l.bf16 %v265
        %v302 = vunpack.c.l.bf16 %v266
        %v303 = vunpack.c.l.bf16 %v267
        %v304 = vunpack.c.l.bf16 %v268
        %v305 = vunpack.c.l.bf16 %v269
        %v306 = vunpack.c.l.bf16 %v270
        %v307 = vunpack.c.l.bf16 %v271
        %v308 = vunpack.c.l.bf16 %v272
        %v309 = vunpack.c.l.bf16 %v273
        %v310 = vunpack.c.l.bf16 %v274
        %v311 = vunpack.c.l.bf16 %v275
        %v312 = vunpack.c.l.bf16 %v276
        %v313 = vunpack.c.l.bf16 %v277
        %v314 = vunpack.c.l.bf16 %v278
        %v315 = vunpack.c.l.bf16 %v279
        %v316 = vunpack.c.l.bf16 %v280
        %v317 = vunpack.c.l.bf16 %v281
        %v318 = vunpack.c.l.bf16 %v282
        %v319 = vunpack.c.l.bf16 %v283
        %v320 = vunpack.c.l.bf16 %v284
        %v321 = vunpack.c.l.bf16 %v285
        %v322 = vunpack.c.l.bf16 %v286
        %v323 = vunpack.c.l.bf16 %v287
        %v324 = vunpack.c.l.bf16 %v288
        %v325 = vunpack.c.l.bf16 %v289
        %v326 = vunpack.c.l.bf16 %v290
        %v327 = vunpack.c.l.bf16 %v291
        %v328 = vunpack.c.l.bf16 %v292
        %v329 = vunpack.c.l.bf16 %v293
        %v330 = vunpack.c.l.bf16 %v294
        %v331 = vunpack.c.l.bf16 %v295
        %v332 = vunpack.c.l.bf16 %v296
        %v333 = vunpack.c.l.bf16 %v297
        %v334 = vmul.f32 %v226, %v226
        %v335 = vmul.f32 %v227, %v227
        %v336 = vmul.f32 %v228, %v228
        %v337 = vmul.f32 %v229, %v229
        %v338 = vmul.f32 %v230, %v230
        %v339 = vmul.f32 %v231, %v231
        %v340 = vmul.f32 %v232, %v232
        %v341 = vmul.f32 %v233, %v233
        %v342 = vmul.f32 %v234, %v234
        %v343 = vmul.f32 %v235, %v235
        %v344 = vmul.f32 %v236, %v236
        %v345 = vmul.f32 %v237, %v237
        %v346 = vmul.f32 %v238, %v238
        %v347 = vmul.f32 %v239, %v239
        %v348 = vmul.f32 %v240, %v240
        %v349 = vmul.f32 %v241, %v241
        %v350 = vmul.f32 %v242, %v242
        %v351 = vmul.f32 %v243, %v243
        %v352 = vmul.f32 %v244, %v244
        %v353 = vmul.f32 %v245, %v245
        %v354 = vmul.f32 %v246, %v246
        %v355 = vmul.f32 %v247, %v247
        %v356 = vmul.f32 %v248, %v248
        %v357 = vmul.f32 %v249, %v249
        %v358 = vmul.f32 %v250, %v250
        %v359 = vmul.f32 %v251, %v251
        %v360 = vmul.f32 %v252, %v252
        %v361 = vmul.f32 %v253, %v253
        %v362 = vmul.f32 %v254, %v254
        %v363 = vmul.f32 %v255, %v255
        %v364 = vmul.f32 %v256, %v256
        %v365 = vmul.f32 %v257, %v257
        %v366 = vmul.f32 %v258, %v258
        %v367 = vmul.f32 %v259, %v259
        %v368 = vmul.f32 %v260, %v260
        %v369 = vmul.f32 %v261, %v261
        %vm370 = vcmask 130048
        %v371 = vsel %vm370, %v334, 0.0
        %372 = vadd.xlane.f32.xlu0 %v371
        %v373 = vpop.xlane.xlu0 %372
        %v374 = vsel %vm370, %v335, 0.0
        %375 = vadd.xlane.f32.xlu0 %v374
        %v376 = vpop.xlane.xlu0 %375
        %v377 = vsel %vm370, %v336, 0.0
        %378 = vadd.xlane.f32.xlu0 %v377
        %v379 = vpop.xlane.xlu0 %378
        %v380 = vsel %vm370, %v337, 0.0
        %381 = vadd.xlane.f32.xlu0 %v380
        %v382 = vpop.xlane.xlu0 %381
        %v383 = vsel %vm370, %v338, 0.0
        %384 = vadd.xlane.f32.xlu0 %v383
        %v385 = vpop.xlane.xlu0 %384
        %v386 = vsel %vm370, %v339, 0.0
        %387 = vadd.xlane.f32.xlu0 %v386
        %v388 = vpop.xlane.xlu0 %387
        %v389 = vsel %vm370, %v340, 0.0
        %390 = vadd.xlane.f32.xlu0 %v389
        %v391 = vpop.xlane.xlu0 %390
        %v392 = vsel %vm370, %v341, 0.0
        %393 = vadd.xlane.f32.xlu0 %v392
        %v394 = vpop.xlane.xlu0 %393
        %v395 = vsel %vm370, %v342, 0.0
        %396 = vadd.xlane.f32.xlu0 %v395
        %v397 = vpop.xlane.xlu0 %396
        %v398 = vsel %vm370, %v343, 0.0
        %399 = vadd.xlane.f32.xlu0 %v398
        %v400 = vpop.xlane.xlu0 %399
        %v401 = vsel %vm370, %v344, 0.0
        %402 = vadd.xlane.f32.xlu0 %v401
        %v403 = vpop.xlane.xlu0 %402
        %v404 = vsel %vm370, %v345, 0.0
        %405 = vadd.xlane.f32.xlu0 %v404
        %v406 = vpop.xlane.xlu0 %405
        %v407 = vsel %vm370, %v346, 0.0
        %408 = vadd.xlane.f32.xlu0 %v407
        %v409 = vpop.xlane.xlu0 %408
        %v410 = vsel %vm370, %v347, 0.0
        %411 = vadd.xlane.f32.xlu0 %v410
        %v412 = vpop.xlane.xlu0 %411
        %v413 = vsel %vm370, %v348, 0.0
        %414 = vadd.xlane.f32.xlu0 %v413
        %v415 = vpop.xlane.xlu0 %414
        %v416 = vsel %vm370, %v349, 0.0
        %417 = vadd.xlane.f32.xlu0 %v416
        %v418 = vpop.xlane.xlu0 %417
        %v419 = vsel %vm370, %v350, 0.0
        %420 = vadd.xlane.f32.xlu0 %v419
        %v421 = vpop.xlane.xlu0 %420
        %v422 = vsel %vm370, %v351, 0.0
        %423 = vadd.xlane.f32.xlu0 %v422
        %v424 = vpop.xlane.xlu0 %423
        %v425 = vsel %vm370, %v352, 0.0
        %426 = vadd.xlane.f32.xlu0 %v425
        %v427 = vpop.xlane.xlu0 %426
        %v428 = vsel %vm370, %v353, 0.0
        %429 = vadd.xlane.f32.xlu0 %v428
        %v430 = vpop.xlane.xlu0 %429
        %v431 = vsel %vm370, %v354, 0.0
        %432 = vadd.xlane.f32.xlu0 %v431
        %v433 = vpop.xlane.xlu0 %432
        %v434 = vsel %vm370, %v355, 0.0
        %435 = vadd.xlane.f32.xlu0 %v434
        %v436 = vpop.xlane.xlu0 %435
        %v437 = vsel %vm370, %v356, 0.0
        %438 = vadd.xlane.f32.xlu0 %v437
        %v439 = vpop.xlane.xlu0 %438
        %v440 = vsel %vm370, %v357, 0.0
        %441 = vadd.xlane.f32.xlu0 %v440
        %v442 = vpop.xlane.xlu0 %441
        %v443 = vsel %vm370, %v358, 0.0
        %444 = vadd.xlane.f32.xlu0 %v443
        %v445 = vpop.xlane.xlu0 %444
        %v446 = vsel %vm370, %v359, 0.0
        %447 = vadd.xlane.f32.xlu0 %v446
        %v448 = vpop.xlane.xlu0 %447
        %v449 = vsel %vm370, %v360, 0.0
        %450 = vadd.xlane.f32.xlu0 %v449
        %v451 = vpop.xlane.xlu0 %450
        %v452 = vsel %vm370, %v361, 0.0
        %453 = vadd.xlane.f32.xlu0 %v452
        %v454 = vpop.xlane.xlu0 %453
        %v455 = vsel %vm370, %v362, 0.0
        %456 = vadd.xlane.f32.xlu0 %v455
        %v457 = vpop.xlane.xlu0 %456
        %v458 = vsel %vm370, %v363, 0.0
        %459 = vadd.xlane.f32.xlu0 %v458
        %v460 = vpop.xlane.xlu0 %459
        %v461 = vsel %vm370, %v364, 0.0
        %462 = vadd.xlane.f32.xlu0 %v461
        %v463 = vpop.xlane.xlu0 %462
        %v464 = vsel %vm370, %v365, 0.0
        %465 = vadd.xlane.f32.xlu0 %v464
        %v466 = vpop.xlane.xlu0 %465
        %v467 = vsel %vm370, %v366, 0.0
        %468 = vadd.xlane.f32.xlu0 %v467
        %v469 = vpop.xlane.xlu0 %468
        %v470 = vsel %vm370, %v367, 0.0
        %471 = vadd.xlane.f32.xlu0 %v470
        %v472 = vpop.xlane.xlu0 %471
        %v473 = vsel %vm370, %v368, 0.0
        %474 = vadd.xlane.f32.xlu0 %v473
        %v475 = vpop.xlane.xlu0 %474
        %v476 = vsel %vm370, %v369, 0.0
        %477 = vadd.xlane.f32.xlu0 %v476
        %v478 = vpop.xlane.xlu0 %477
        %v479 = vadd.f32 %v373, 1e-20
        %v480 = vadd.f32 %v376, 1e-20
        %v481 = vadd.f32 %v379, 1e-20
        %v482 = vadd.f32 %v382, 1e-20
        %v483 = vadd.f32 %v385, 1e-20
        %v484 = vadd.f32 %v388, 1e-20
        %v485 = vadd.f32 %v391, 1e-20
        %v486 = vadd.f32 %v394, 1e-20
        %v487 = vadd.f32 %v397, 1e-20
        %v488 = vadd.f32 %v400, 1e-20
        %v489 = vadd.f32 %v403, 1e-20
        %v490 = vadd.f32 %v406, 1e-20
        %v491 = vadd.f32 %v409, 1e-20
        %v492 = vadd.f32 %v412, 1e-20
        %v493 = vadd.f32 %v415, 1e-20
        %v494 = vadd.f32 %v418, 1e-20
        %v495 = vadd.f32 %v421, 1e-20
        %v496 = vadd.f32 %v424, 1e-20
        %v497 = vadd.f32 %v427, 1e-20
        %v498 = vadd.f32 %v430, 1e-20
        %v499 = vadd.f32 %v433, 1e-20
        %v500 = vadd.f32 %v436, 1e-20
        %v501 = vadd.f32 %v439, 1e-20
        %v502 = vadd.f32 %v442, 1e-20
        %v503 = vadd.f32 %v445, 1e-20
        %v504 = vadd.f32 %v448, 1e-20
        %v505 = vadd.f32 %v451, 1e-20
        %v506 = vadd.f32 %v454, 1e-20
        %v507 = vadd.f32 %v457, 1e-20
        %v508 = vadd.f32 %v460, 1e-20
        %v509 = vadd.f32 %v463, 1e-20
        %v510 = vadd.f32 %v466, 1e-20
        %v511 = vadd.f32 %v469, 1e-20
        %v512 = vadd.f32 %v472, 1e-20
        %v513 = vadd.f32 %v475, 1e-20
        %v514 = vadd.f32 %v478, 1e-20
        %v515 = vrsqrt.pop %v479
        %v516 = vrsqrt.pop %v480
        %v517 = vrsqrt.pop %v481
        %v518 = vrsqrt.pop %v482
        %v519 = vrsqrt.pop %v483
        %v520 = vrsqrt.pop %v484
        %v521 = vrsqrt.pop %v485
        %v522 = vrsqrt.pop %v486
        %v523 = vrsqrt.pop %v487
        %v524 = vrsqrt.pop %v488
        %v525 = vrsqrt.pop %v489
        %v526 = vrsqrt.pop %v490
        %v527 = vrsqrt.pop %v491
        %v528 = vrsqrt.pop %v492
        %v529 = vrsqrt.pop %v493
        %v530 = vrsqrt.pop %v494
        %v531 = vrsqrt.pop %v495
        %v532 = vrsqrt.pop %v496
        %v533 = vrsqrt.pop %v497
        %v534 = vrsqrt.pop %v498
        %v535 = vrsqrt.pop %v499
        %v536 = vrsqrt.pop %v500
        %v537 = vrsqrt.pop %v501
        %v538 = vrsqrt.pop %v502
        %v539 = vrsqrt.pop %v503
        %v540 = vrsqrt.pop %v504
        %v541 = vrsqrt.pop %v505
        %v542 = vrsqrt.pop %v506
        %v543 = vrsqrt.pop %v507
        %v544 = vrsqrt.pop %v508
        %v545 = vrsqrt.pop %v509
        %v546 = vrsqrt.pop %v510
        %v547 = vrsqrt.pop %v511
        %v548 = vrsqrt.pop %v512
        %v549 = vrsqrt.pop %v513
        %v550 = vrsqrt.pop %v514
        %v551 = vmul.f32 %v226, %v515
        %v552 = vmul.f32 %v227, %v516
        %v553 = vmul.f32 %v228, %v517
        %v554 = vmul.f32 %v229, %v518
        %v555 = vmul.f32 %v230, %v519
        %v556 = vmul.f32 %v231, %v520
        %v557 = vmul.f32 %v232, %v521
        %v558 = vmul.f32 %v233, %v522
        %v559 = vmul.f32 %v234, %v523
        %v560 = vmul.f32 %v235, %v524
        %v561 = vmul.f32 %v236, %v525
        %v562 = vmul.f32 %v237, %v526
        %v563 = vmul.f32 %v238, %v527
        %v564 = vmul.f32 %v239, %v528
        %v565 = vmul.f32 %v240, %v529
        %v566 = vmul.f32 %v241, %v530
        %v567 = vmul.f32 %v242, %v531
        %v568 = vmul.f32 %v243, %v532
        %v569 = vmul.f32 %v244, %v533
        %v570 = vmul.f32 %v245, %v534
        %v571 = vmul.f32 %v246, %v535
        %v572 = vmul.f32 %v247, %v536
        %v573 = vmul.f32 %v248, %v537
        %v574 = vmul.f32 %v249, %v538
        %v575 = vmul.f32 %v250, %v539
        %v576 = vmul.f32 %v251, %v540
        %v577 = vmul.f32 %v252, %v541
        %v578 = vmul.f32 %v253, %v542
        %v579 = vmul.f32 %v254, %v543
        %v580 = vmul.f32 %v255, %v544
        %v581 = vmul.f32 %v256, %v545
        %v582 = vmul.f32 %v257, %v546
        %v583 = vmul.f32 %v258, %v547
        %v584 = vmul.f32 %v259, %v548
        %v585 = vmul.f32 %v260, %v549
        %v586 = vmul.f32 %v261, %v550
        %v587 = vmul.f32 %v298, %v298
        %v588 = vmul.f32 %v299, %v299
        %v589 = vmul.f32 %v300, %v300
        %v590 = vmul.f32 %v301, %v301
        %v591 = vmul.f32 %v302, %v302
        %v592 = vmul.f32 %v303, %v303
        %v593 = vmul.f32 %v304, %v304
        %v594 = vmul.f32 %v305, %v305
        %v595 = vmul.f32 %v306, %v306
        %v596 = vmul.f32 %v307, %v307
        %v597 = vmul.f32 %v308, %v308
        %v598 = vmul.f32 %v309, %v309
        %v599 = vmul.f32 %v310, %v310
        %v600 = vmul.f32 %v311, %v311
        %v601 = vmul.f32 %v312, %v312
        %v602 = vmul.f32 %v313, %v313
        %v603 = vmul.f32 %v314, %v314
        %v604 = vmul.f32 %v315, %v315
        %v605 = vmul.f32 %v316, %v316
        %v606 = vmul.f32 %v317, %v317
        %v607 = vmul.f32 %v318, %v318
        %v608 = vmul.f32 %v319, %v319
        %v609 = vmul.f32 %v320, %v320
        %v610 = vmul.f32 %v321, %v321
        %v611 = vmul.f32 %v322, %v322
        %v612 = vmul.f32 %v323, %v323
        %v613 = vmul.f32 %v324, %v324
        %v614 = vmul.f32 %v325, %v325
        %v615 = vmul.f32 %v326, %v326
        %v616 = vmul.f32 %v327, %v327
        %v617 = vmul.f32 %v328, %v328
        %v618 = vmul.f32 %v329, %v329
        %v619 = vmul.f32 %v330, %v330
        %v620 = vmul.f32 %v331, %v331
        %v621 = vmul.f32 %v332, %v332
        %v622 = vmul.f32 %v333, %v333
        %v623 = vsel %vm370, %v587, 0.0
        %624 = vadd.xlane.f32.xlu0 %v623
        %v625 = vpop.xlane.xlu0 %624
        %v626 = vsel %vm370, %v588, 0.0
        %627 = vadd.xlane.f32.xlu0 %v626
        %v628 = vpop.xlane.xlu0 %627
        %v629 = vsel %vm370, %v589, 0.0
        %630 = vadd.xlane.f32.xlu0 %v629
        %v631 = vpop.xlane.xlu0 %630
        %v632 = vsel %vm370, %v590, 0.0
        %633 = vadd.xlane.f32.xlu0 %v632
        %v634 = vpop.xlane.xlu0 %633
        %v635 = vsel %vm370, %v591, 0.0
        %636 = vadd.xlane.f32.xlu0 %v635
        %v637 = vpop.xlane.xlu0 %636
        %v638 = vsel %vm370, %v592, 0.0
        %639 = vadd.xlane.f32.xlu0 %v638
        %v640 = vpop.xlane.xlu0 %639
        %v641 = vsel %vm370, %v593, 0.0
        %642 = vadd.xlane.f32.xlu0 %v641
        %v643 = vpop.xlane.xlu0 %642
        %v644 = vsel %vm370, %v594, 0.0
        %645 = vadd.xlane.f32.xlu0 %v644
        %v646 = vpop.xlane.xlu0 %645
        %v647 = vsel %vm370, %v595, 0.0
        %648 = vadd.xlane.f32.xlu0 %v647
        %v649 = vpop.xlane.xlu0 %648
        %v650 = vsel %vm370, %v596, 0.0
        %651 = vadd.xlane.f32.xlu0 %v650
        %v652 = vpop.xlane.xlu0 %651
        %v653 = vsel %vm370, %v597, 0.0
        %654 = vadd.xlane.f32.xlu0 %v653
        %v655 = vpop.xlane.xlu0 %654
        %v656 = vsel %vm370, %v598, 0.0
        %657 = vadd.xlane.f32.xlu0 %v656
        %v658 = vpop.xlane.xlu0 %657
        %v659 = vsel %vm370, %v599, 0.0
        %660 = vadd.xlane.f32.xlu0 %v659
        %v661 = vpop.xlane.xlu0 %660
        %v662 = vsel %vm370, %v600, 0.0
        %663 = vadd.xlane.f32.xlu0 %v662
        %v664 = vpop.xlane.xlu0 %663
        %v665 = vsel %vm370, %v601, 0.0
        %666 = vadd.xlane.f32.xlu0 %v665
        %v667 = vpop.xlane.xlu0 %666
        %v668 = vsel %vm370, %v602, 0.0
        %669 = vadd.xlane.f32.xlu0 %v668
        %v670 = vpop.xlane.xlu0 %669
        %v671 = vsel %vm370, %v603, 0.0
        %672 = vadd.xlane.f32.xlu0 %v671
        %v673 = vpop.xlane.xlu0 %672
        %v674 = vsel %vm370, %v604, 0.0
        %675 = vadd.xlane.f32.xlu0 %v674
        %v676 = vpop.xlane.xlu0 %675
        %v677 = vsel %vm370, %v605, 0.0
        %678 = vadd.xlane.f32.xlu0 %v677
        %v679 = vpop.xlane.xlu0 %678
        %v680 = vsel %vm370, %v606, 0.0
        %681 = vadd.xlane.f32.xlu0 %v680
        %v682 = vpop.xlane.xlu0 %681
        %v683 = vsel %vm370, %v607, 0.0
        %684 = vadd.xlane.f32.xlu0 %v683
        %v685 = vpop.xlane.xlu0 %684
        %v686 = vsel %vm370, %v608, 0.0
        %687 = vadd.xlane.f32.xlu0 %v686
        %v688 = vpop.xlane.xlu0 %687
        %v689 = vsel %vm370, %v609, 0.0
        %690 = vadd.xlane.f32.xlu0 %v689
        %v691 = vpop.xlane.xlu0 %690
        %v692 = vsel %vm370, %v610, 0.0
        %693 = vadd.xlane.f32.xlu0 %v692
        %v694 = vpop.xlane.xlu0 %693
        %v695 = vsel %vm370, %v611, 0.0
        %696 = vadd.xlane.f32.xlu0 %v695
        %v697 = vpop.xlane.xlu0 %696
        %v698 = vsel %vm370, %v612, 0.0
        %699 = vadd.xlane.f32.xlu0 %v698
        %v700 = vpop.xlane.xlu0 %699
        %v701 = vsel %vm370, %v613, 0.0
        %702 = vadd.xlane.f32.xlu0 %v701
        %v703 = vpop.xlane.xlu0 %702
        %v704 = vsel %vm370, %v614, 0.0
        %705 = vadd.xlane.f32.xlu0 %v704
        %v706 = vpop.xlane.xlu0 %705
        %v707 = vsel %vm370, %v615, 0.0
        %708 = vadd.xlane.f32.xlu0 %v707
        %v709 = vpop.xlane.xlu0 %708
        %v710 = vsel %vm370, %v616, 0.0
        %711 = vadd.xlane.f32.xlu0 %v710
        %v712 = vpop.xlane.xlu0 %711
        %v713 = vsel %vm370, %v617, 0.0
        %714 = vadd.xlane.f32.xlu0 %v713
        %v715 = vpop.xlane.xlu0 %714
        %v716 = vsel %vm370, %v618, 0.0
        %717 = vadd.xlane.f32.xlu0 %v716
        %v718 = vpop.xlane.xlu0 %717
        %v719 = vsel %vm370, %v619, 0.0
        %720 = vadd.xlane.f32.xlu0 %v719
        %v721 = vpop.xlane.xlu0 %720
        %v722 = vsel %vm370, %v620, 0.0
        %723 = vadd.xlane.f32.xlu0 %v722
        %v724 = vpop.xlane.xlu0 %723
        %v725 = vsel %vm370, %v621, 0.0
        %726 = vadd.xlane.f32.xlu0 %v725
        %v727 = vpop.xlane.xlu0 %726
        %v728 = vsel %vm370, %v622, 0.0
        %729 = vadd.xlane.f32.xlu0 %v728
        %v730 = vpop.xlane.xlu0 %729
        %v731 = vadd.f32 %v625, 1e-20
        %v732 = vadd.f32 %v628, 1e-20
        %v733 = vadd.f32 %v631, 1e-20
        %v734 = vadd.f32 %v634, 1e-20
        %v735 = vadd.f32 %v637, 1e-20
        %v736 = vadd.f32 %v640, 1e-20
        %v737 = vadd.f32 %v643, 1e-20
        %v738 = vadd.f32 %v646, 1e-20
        %v739 = vadd.f32 %v649, 1e-20
        %v740 = vadd.f32 %v652, 1e-20
        %v741 = vadd.f32 %v655, 1e-20
        %v742 = vadd.f32 %v658, 1e-20
        %v743 = vadd.f32 %v661, 1e-20
        %v744 = vadd.f32 %v664, 1e-20
        %v745 = vadd.f32 %v667, 1e-20
        %v746 = vadd.f32 %v670, 1e-20
        %v747 = vadd.f32 %v673, 1e-20
        %v748 = vadd.f32 %v676, 1e-20
        %v749 = vadd.f32 %v679, 1e-20
        %v750 = vadd.f32 %v682, 1e-20
        %v751 = vadd.f32 %v685, 1e-20
        %v752 = vadd.f32 %v688, 1e-20
        %v753 = vadd.f32 %v691, 1e-20
        %v754 = vadd.f32 %v694, 1e-20
        %v755 = vadd.f32 %v697, 1e-20
        %v756 = vadd.f32 %v700, 1e-20
        %v757 = vadd.f32 %v703, 1e-20
        %v758 = vadd.f32 %v706, 1e-20
        %v759 = vadd.f32 %v709, 1e-20
        %v760 = vadd.f32 %v712, 1e-20
        %v761 = vadd.f32 %v715, 1e-20
        %v762 = vadd.f32 %v718, 1e-20
        %v763 = vadd.f32 %v721, 1e-20
        %v764 = vadd.f32 %v724, 1e-20
        %v765 = vadd.f32 %v727, 1e-20
        %v766 = vadd.f32 %v730, 1e-20
        %v767 = vrsqrt.pop %v731
        %v768 = vrsqrt.pop %v732
        %v769 = vrsqrt.pop %v733
        %v770 = vrsqrt.pop %v734
        %v771 = vrsqrt.pop %v735
        %v772 = vrsqrt.pop %v736
        %v773 = vrsqrt.pop %v737
        %v774 = vrsqrt.pop %v738
        %v775 = vrsqrt.pop %v739
        %v776 = vrsqrt.pop %v740
        %v777 = vrsqrt.pop %v741
        %v778 = vrsqrt.pop %v742
        %v779 = vrsqrt.pop %v743
        %v780 = vrsqrt.pop %v744
        %v781 = vrsqrt.pop %v745
        %v782 = vrsqrt.pop %v746
        %v783 = vrsqrt.pop %v747
        %v784 = vrsqrt.pop %v748
        %v785 = vrsqrt.pop %v749
        %v786 = vrsqrt.pop %v750
        %v787 = vrsqrt.pop %v751
        %v788 = vrsqrt.pop %v752
        %v789 = vrsqrt.pop %v753
        %v790 = vrsqrt.pop %v754
        %v791 = vrsqrt.pop %v755
        %v792 = vrsqrt.pop %v756
        %v793 = vrsqrt.pop %v757
        %v794 = vrsqrt.pop %v758
        %v795 = vrsqrt.pop %v759
        %v796 = vrsqrt.pop %v760
        %v797 = vrsqrt.pop %v761
        %v798 = vrsqrt.pop %v762
        %v799 = vrsqrt.pop %v763
        %v800 = vrsqrt.pop %v764
        %v801 = vrsqrt.pop %v765
        %v802 = vrsqrt.pop %v766
        %v803 = vmul.f32 %v298, %v767
        %v804 = vmul.f32 %v299, %v768
        %v805 = vmul.f32 %v300, %v769
        %v806 = vmul.f32 %v301, %v770
        %v807 = vmul.f32 %v302, %v771
        %v808 = vmul.f32 %v303, %v772
        %v809 = vmul.f32 %v304, %v773
        %v810 = vmul.f32 %v305, %v774
        %v811 = vmul.f32 %v306, %v775
        %v812 = vmul.f32 %v307, %v776
        %v813 = vmul.f32 %v308, %v777
        %v814 = vmul.f32 %v309, %v778
        %v815 = vmul.f32 %v310, %v779
        %v816 = vmul.f32 %v311, %v780
        %v817 = vmul.f32 %v312, %v781
        %v818 = vmul.f32 %v313, %v782
        %v819 = vmul.f32 %v314, %v783
        %v820 = vmul.f32 %v315, %v784
        %v821 = vmul.f32 %v316, %v785
        %v822 = vmul.f32 %v317, %v786
        %v823 = vmul.f32 %v318, %v787
        %v824 = vmul.f32 %v319, %v788
        %v825 = vmul.f32 %v320, %v789
        %v826 = vmul.f32 %v321, %v790
        %v827 = vmul.f32 %v322, %v791
        %v828 = vmul.f32 %v323, %v792
        %v829 = vmul.f32 %v324, %v793
        %v830 = vmul.f32 %v325, %v794
        %v831 = vmul.f32 %v326, %v795
        %v832 = vmul.f32 %v327, %v796
        %v833 = vmul.f32 %v328, %v797
        %v834 = vmul.f32 %v329, %v798
        %v835 = vmul.f32 %v330, %v799
        %v836 = vmul.f32 %v331, %v800
        %v837 = vmul.f32 %v332, %v801
        %v838 = vmul.f32 %v333, %v802
        %v839 = vsub.f32 %v551, %v803
        %v840 = vsub.f32 %v552, %v804
        %v841 = vsub.f32 %v553, %v805
        %v842 = vsub.f32 %v554, %v806
        %v843 = vsub.f32 %v555, %v807
        %v844 = vsub.f32 %v556, %v808
        %v845 = vsub.f32 %v557, %v809
        %v846 = vsub.f32 %v558, %v810
        %v847 = vsub.f32 %v559, %v811
        %v848 = vsub.f32 %v560, %v812
        %v849 = vsub.f32 %v561, %v813
        %v850 = vsub.f32 %v562, %v814
        %v851 = vsub.f32 %v563, %v815
        %v852 = vsub.f32 %v564, %v816
        %v853 = vsub.f32 %v565, %v817
        %v854 = vsub.f32 %v566, %v818
        %v855 = vsub.f32 %v567, %v819
        %v856 = vsub.f32 %v568, %v820
        %v857 = vsub.f32 %v569, %v821
        %v858 = vsub.f32 %v570, %v822
        %v859 = vsub.f32 %v571, %v823
        %v860 = vsub.f32 %v572, %v824
        %v861 = vsub.f32 %v573, %v825
        %v862 = vsub.f32 %v574, %v826
        %v863 = vsub.f32 %v575, %v827
        %v864 = vsub.f32 %v576, %v828
        %v865 = vsub.f32 %v577, %v829
        %v866 = vsub.f32 %v578, %v830
        %v867 = vsub.f32 %v579, %v831
        %v868 = vsub.f32 %v580, %v832
        %v869 = vsub.f32 %v581, %v833
        %v870 = vsub.f32 %v582, %v834
        %v871 = vsub.f32 %v583, %v835
        %v872 = vsub.f32 %v584, %v836
        %v873 = vsub.f32 %v585, %v837
        %v874 = vsub.f32 %v586, %v838
        %v875 = vmul.f32 %v839, %v839
        %v876 = vmul.f32 %v840, %v840
        %v877 = vmul.f32 %v841, %v841
        %v878 = vmul.f32 %v842, %v842
        %v879 = vmul.f32 %v843, %v843
        %v880 = vmul.f32 %v844, %v844
        %v881 = vmul.f32 %v845, %v845
        %v882 = vmul.f32 %v846, %v846
        %v883 = vmul.f32 %v847, %v847
        %v884 = vmul.f32 %v848, %v848
        %v885 = vmul.f32 %v849, %v849
        %v886 = vmul.f32 %v850, %v850
        %v887 = vmul.f32 %v851, %v851
        %v888 = vmul.f32 %v852, %v852
        %v889 = vmul.f32 %v853, %v853
        %v890 = vmul.f32 %v854, %v854
        %v891 = vmul.f32 %v855, %v855
        %v892 = vmul.f32 %v856, %v856
        %v893 = vmul.f32 %v857, %v857
        %v894 = vmul.f32 %v858, %v858
        %v895 = vmul.f32 %v859, %v859
        %v896 = vmul.f32 %v860, %v860
        %v897 = vmul.f32 %v861, %v861
        %v898 = vmul.f32 %v862, %v862
        %v899 = vmul.f32 %v863, %v863
        %v900 = vmul.f32 %v864, %v864
        %v901 = vmul.f32 %v865, %v865
        %v902 = vmul.f32 %v866, %v866
        %v903 = vmul.f32 %v867, %v867
        %v904 = vmul.f32 %v868, %v868
        %v905 = vmul.f32 %v869, %v869
        %v906 = vmul.f32 %v870, %v870
        %v907 = vmul.f32 %v871, %v871
        %v908 = vmul.f32 %v872, %v872
        %v909 = vmul.f32 %v873, %v873
        %v910 = vmul.f32 %v874, %v874
        %v911 = vld [vmem:[%s2] sm:$0x1]
        %v913 = vlaneseq
        %v914 = vshrl.u32 %v913, 7
        %v915 = vsub.s32 0, %v914
        %v916 = vrot.slane %v911, %v915
        %v918 = vmul.f32 %v875, %v916
        %v919 = vmul.f32 %v876, %v916
        %v920 = vmul.f32 %v877, %v916
        %v921 = vmul.f32 %v878, %v916
        %v922 = vmul.f32 %v879, %v916
        %v923 = vmul.f32 %v880, %v916
        %v924 = vmul.f32 %v881, %v916
        %v925 = vmul.f32 %v882, %v916
        %v926 = vmul.f32 %v883, %v916
        %v927 = vmul.f32 %v884, %v916
        %v928 = vmul.f32 %v885, %v916
        %v929 = vmul.f32 %v886, %v916
        %v930 = vmul.f32 %v887, %v916
        %v931 = vmul.f32 %v888, %v916
        %v932 = vmul.f32 %v889, %v916
        %v933 = vmul.f32 %v890, %v916
        %v934 = vmul.f32 %v891, %v916
        %v935 = vmul.f32 %v892, %v916
        %v936 = vmul.f32 %v893, %v916
        %v937 = vmul.f32 %v894, %v916
        %v938 = vmul.f32 %v895, %v916
        %v939 = vmul.f32 %v896, %v916
        %v940 = vmul.f32 %v897, %v916
        %v941 = vmul.f32 %v898, %v916
        %v942 = vmul.f32 %v899, %v916
        %v943 = vmul.f32 %v900, %v916
        %v944 = vmul.f32 %v901, %v916
        %v945 = vmul.f32 %v902, %v916
        %v946 = vmul.f32 %v903, %v916
        %v947 = vmul.f32 %v904, %v916
        %v948 = vmul.f32 %v905, %v916
        %v949 = vmul.f32 %v906, %v916
        %v950 = vmul.f32 %v907, %v916
        %v951 = vmul.f32 %v908, %v916
        %v952 = vmul.f32 %v909, %v916
        %v953 = vmul.f32 %v910, %v916
        %v954 = vsel %vm370, %v918, 0.0
        %955 = vadd.xlane.f32.xlu0 %v954
        %v956 = vpop.xlane.xlu0 %955
        %v957 = vsel %vm370, %v919, 0.0
        %958 = vadd.xlane.f32.xlu0 %v957
        %v959 = vpop.xlane.xlu0 %958
        %v960 = vsel %vm370, %v920, 0.0
        %961 = vadd.xlane.f32.xlu0 %v960
        %v962 = vpop.xlane.xlu0 %961
        %v963 = vsel %vm370, %v921, 0.0
        %964 = vadd.xlane.f32.xlu0 %v963
        %v965 = vpop.xlane.xlu0 %964
        %v966 = vsel %vm370, %v922, 0.0
        %967 = vadd.xlane.f32.xlu0 %v966
        %v968 = vpop.xlane.xlu0 %967
        %v969 = vsel %vm370, %v923, 0.0
        %970 = vadd.xlane.f32.xlu0 %v969
        %v971 = vpop.xlane.xlu0 %970
        %v972 = vsel %vm370, %v924, 0.0
        %973 = vadd.xlane.f32.xlu0 %v972
        %v974 = vpop.xlane.xlu0 %973
        %v975 = vsel %vm370, %v925, 0.0
        %976 = vadd.xlane.f32.xlu0 %v975
        %v977 = vpop.xlane.xlu0 %976
        %v978 = vsel %vm370, %v926, 0.0
        %979 = vadd.xlane.f32.xlu0 %v978
        %v980 = vpop.xlane.xlu0 %979
        %v981 = vsel %vm370, %v927, 0.0
        %982 = vadd.xlane.f32.xlu0 %v981
        %v983 = vpop.xlane.xlu0 %982
        %v984 = vsel %vm370, %v928, 0.0
        %985 = vadd.xlane.f32.xlu0 %v984
        %v986 = vpop.xlane.xlu0 %985
        %v987 = vsel %vm370, %v929, 0.0
        %988 = vadd.xlane.f32.xlu0 %v987
        %v989 = vpop.xlane.xlu0 %988
        %v990 = vsel %vm370, %v930, 0.0
        %991 = vadd.xlane.f32.xlu0 %v990
        %v992 = vpop.xlane.xlu0 %991
        %v993 = vsel %vm370, %v931, 0.0
        %994 = vadd.xlane.f32.xlu0 %v993
        %v995 = vpop.xlane.xlu0 %994
        %v996 = vsel %vm370, %v932, 0.0
        %997 = vadd.xlane.f32.xlu0 %v996
        %v998 = vpop.xlane.xlu0 %997
        %v999 = vsel %vm370, %v933, 0.0
        %1000 = vadd.xlane.f32.xlu0 %v999
        %v1001 = vpop.xlane.xlu0 %1000
        %v1002 = vsel %vm370, %v934, 0.0
        %1003 = vadd.xlane.f32.xlu0 %v1002
        %v1004 = vpop.xlane.xlu0 %1003
        %v1005 = vsel %vm370, %v935, 0.0
        %1006 = vadd.xlane.f32.xlu0 %v1005
        %v1007 = vpop.xlane.xlu0 %1006
        %v1008 = vsel %vm370, %v936, 0.0
        %1009 = vadd.xlane.f32.xlu0 %v1008
        %v1010 = vpop.xlane.xlu0 %1009
        %v1011 = vsel %vm370, %v937, 0.0
        %1012 = vadd.xlane.f32.xlu0 %v1011
        %v1013 = vpop.xlane.xlu0 %1012
        %v1014 = vsel %vm370, %v938, 0.0
        %1015 = vadd.xlane.f32.xlu0 %v1014
        %v1016 = vpop.xlane.xlu0 %1015
        %v1017 = vsel %vm370, %v939, 0.0
        %1018 = vadd.xlane.f32.xlu0 %v1017
        %v1019 = vpop.xlane.xlu0 %1018
        %v1020 = vsel %vm370, %v940, 0.0
        %1021 = vadd.xlane.f32.xlu0 %v1020
        %v1022 = vpop.xlane.xlu0 %1021
        %v1023 = vsel %vm370, %v941, 0.0
        %1024 = vadd.xlane.f32.xlu0 %v1023
        %v1025 = vpop.xlane.xlu0 %1024
        %v1026 = vsel %vm370, %v942, 0.0
        %1027 = vadd.xlane.f32.xlu0 %v1026
        %v1028 = vpop.xlane.xlu0 %1027
        %v1029 = vsel %vm370, %v943, 0.0
        %1030 = vadd.xlane.f32.xlu0 %v1029
        %v1031 = vpop.xlane.xlu0 %1030
        %v1032 = vsel %vm370, %v944, 0.0
        %1033 = vadd.xlane.f32.xlu0 %v1032
        %v1034 = vpop.xlane.xlu0 %1033
        %v1035 = vsel %vm370, %v945, 0.0
        %1036 = vadd.xlane.f32.xlu0 %v1035
        %v1037 = vpop.xlane.xlu0 %1036
        %v1038 = vsel %vm370, %v946, 0.0
        %1039 = vadd.xlane.f32.xlu0 %v1038
        %v1040 = vpop.xlane.xlu0 %1039
        %v1041 = vsel %vm370, %v947, 0.0
        %1042 = vadd.xlane.f32.xlu0 %v1041
        %v1043 = vpop.xlane.xlu0 %1042
        %v1044 = vsel %vm370, %v948, 0.0
        %1045 = vadd.xlane.f32.xlu0 %v1044
        %v1046 = vpop.xlane.xlu0 %1045
        %v1047 = vsel %vm370, %v949, 0.0
        %1048 = vadd.xlane.f32.xlu0 %v1047
        %v1049 = vpop.xlane.xlu0 %1048
        %v1050 = vsel %vm370, %v950, 0.0
        %1051 = vadd.xlane.f32.xlu0 %v1050
        %v1052 = vpop.xlane.xlu0 %1051
        %v1053 = vsel %vm370, %v951, 0.0
        %1054 = vadd.xlane.f32.xlu0 %v1053
        %v1055 = vpop.xlane.xlu0 %1054
        %v1056 = vsel %vm370, %v952, 0.0
        %1057 = vadd.xlane.f32.xlu0 %v1056
        %v1058 = vpop.xlane.xlu0 %1057
        %v1059 = vsel %vm370, %v953, 0.0
        %1060 = vadd.xlane.f32.xlu0 %v1059
        %v1061 = vpop.xlane.xlu0 %1060
        %v1062 = vld [vmem:[#allocation2] sm:$0x1]
        %vm1063 = vcmask 7168
        %v1064 = vsel %vm1063, %v956, 0.0
        %v1065 = vsel %vm1063, %v959, 0.0
        %v1066 = vadd.f32 %v1064, %v1065
        %v1067 = vsel %vm1063, %v962, 0.0
        %v1068 = vadd.f32 %v1066, %v1067
        %v1069 = vsel %vm1063, %v965, 0.0
        %v1070 = vadd.f32 %v1068, %v1069
        %v1071 = vsel %vm1063, %v968, 0.0
        %v1072 = vadd.f32 %v1070, %v1071
        %v1073 = vsel %vm1063, %v971, 0.0
        %v1074 = vadd.f32 %v1072, %v1073
        %v1075 = vsel %vm1063, %v974, 0.0
        %v1076 = vadd.f32 %v1074, %v1075
        %v1077 = vsel %vm1063, %v977, 0.0
        %v1078 = vadd.f32 %v1076, %v1077
        %v1079 = vsel %vm1063, %v980, 0.0
        %v1080 = vadd.f32 %v1078, %v1079
        %v1081 = vsel %vm1063, %v983, 0.0
        %v1082 = vadd.f32 %v1080, %v1081
        %v1083 = vsel %vm1063, %v986, 0.0
        %v1084 = vadd.f32 %v1082, %v1083
        %v1085 = vsel %vm1063, %v989, 0.0
        %v1086 = vadd.f32 %v1084, %v1085
        %v1087 = vsel %vm1063, %v992, 0.0
        %v1088 = vadd.f32 %v1086, %v1087
        %v1089 = vsel %vm1063, %v995, 0.0
        %v1090 = vadd.f32 %v1088, %v1089
        %v1091 = vsel %vm1063, %v998, 0.0
        %v1092 = vadd.f32 %v1090, %v1091
        %v1093 = vsel %vm1063, %v1001, 0.0
        %v1094 = vadd.f32 %v1092, %v1093
        %v1095 = vsel %vm1063, %v1004, 0.0
        %v1096 = vadd.f32 %v1094, %v1095
        %v1097 = vsel %vm1063, %v1007, 0.0
        %v1098 = vadd.f32 %v1096, %v1097
        %v1099 = vsel %vm1063, %v1010, 0.0
        %v1100 = vadd.f32 %v1098, %v1099
        %v1101 = vsel %vm1063, %v1013, 0.0
        %v1102 = vadd.f32 %v1100, %v1101
        %v1103 = vsel %vm1063, %v1016, 0.0
        %v1104 = vadd.f32 %v1102, %v1103
        %v1105 = vsel %vm1063, %v1019, 0.0
        %v1106 = vadd.f32 %v1104, %v1105
        %v1107 = vsel %vm1063, %v1022, 0.0
        %v1108 = vadd.f32 %v1106, %v1107
        %v1109 = vsel %vm1063, %v1025, 0.0
        %v1110 = vadd.f32 %v1108, %v1109
        %v1111 = vsel %vm1063, %v1028, 0.0
        %v1112 = vadd.f32 %v1110, %v1111
        %v1113 = vsel %vm1063, %v1031, 0.0
        %v1114 = vadd.f32 %v1112, %v1113
        %v1115 = vsel %vm1063, %v1034, 0.0
        %v1116 = vadd.f32 %v1114, %v1115
        %v1117 = vsel %vm1063, %v1037, 0.0
        %v1118 = vadd.f32 %v1116, %v1117
        %v1119 = vsel %vm1063, %v1040, 0.0
        %v1120 = vadd.f32 %v1118, %v1119
        %v1121 = vsel %vm1063, %v1043, 0.0
        %v1122 = vadd.f32 %v1120, %v1121
        %v1123 = vsel %vm1063, %v1046, 0.0
        %v1124 = vadd.f32 %v1122, %v1123
        %v1125 = vsel %vm1063, %v1049, 0.0
        %v1126 = vadd.f32 %v1124, %v1125
        %v1127 = vsel %vm1063, %v1052, 0.0
        %v1128 = vadd.f32 %v1126, %v1127
        %v1129 = vsel %vm1063, %v1055, 0.0
        %v1130 = vadd.f32 %v1128, %v1129
        %v1131 = vsel %vm1063, %v1058, 0.0
        %v1132 = vadd.f32 %v1130, %v1131
        %v1133 = vsel %vm1063, %v1061, 0.0
        %v1134 = vadd.f32 %v1132, %v1133
        %1135 = vadd.xlane.f32.xlu0 %v1134
        %v1136 = vpop.xlane.xlu0 %1135
        %v1137 = vrot.slane %v1136, 4
        %v1138 = vadd.f32 %v1136, %v1137
        %v1139 = vrot.slane %v1138, 2
        %v1140 = vadd.f32 %v1138, %v1139
        %v1141 = vrot.slane %v1140, 1
        %v1142 = vadd.f32 %v1140, %v1141
        %s1143 = vtos %v1142
        %v1144 = vstv %s1143
        %v1145 = vadd.f32 %v1062, %v1144
        %vm1146 = vcmask 0
        %1147 = vst.msk [vmem:[#allocation2] sm:$0x1] %vm1146, %v1145
        %p1148 = scmp.eq.s32.totalorder %s15, 1
        // Predicated region
        $region37: #{perceptual_loss_function.8} parent=31 // pred_check
          %p1149 = pneg %p1148
        $region38: #{perceptual_loss_function.8} parent=31 // pred_check_branch
          %1151 = sbr.rel (%p1149) target = $region40
        $region39: #{perceptual_loss_function.8} parent=31 // pred_region
          %v1152 = vld [vmem:[#allocation2] sm:$0x1]
          %v1153 = vmul.f32 %v1152, 0.001953125
          %1154 = vst.msk [vmem:[#allocation3] sm:$0x1] %vm1146, %v1153
        $region40: #{perceptual_loss_function.8} parent=31 // pred_fallthru
          _
        // Predicated region
        $region41: #{perceptual_loss_function.8} parent=31 // pred_check
          %p1155 = pneg %p103
        $region42: #{perceptual_loss_function.8} parent=31 // pred_check_branch
          %1157 = sbr.rel (%p1155) target = $region44
        $region43: #{perceptual_loss_function.8} parent=31 // pred_region
          %s1159 = ssub.s32 16, 16
          %1160 = vsyncadd [#allocation4], %s1159
          %s1162 = sshll.u32 [#allocation3], 4
          %s1163 = int_to_ptr.vmem [resolvable:$true] %s1162
          %1165 = dma.vmem_to_hbm [thread:$0]  %s1163, 16, %s3, [#allocation4]
        $region44: #{perceptual_loss_function.8} parent=31 // pred_fallthru
          _
        // Predicated region
        $region45: #{perceptual_loss_function.8} parent=31 // pred_check
          %p1166 = pneg %p103
        $region46: #{perceptual_loss_function.8} parent=31 // pred_check_branch
          %1168 = sbr.rel (%p1166) target = $region48
        $region47: #{perceptual_loss_function.8} parent=31 // pred_region
          %1169 = dma.done [#allocation4], 16
        $region48: #{perceptual_loss_function.8} parent=31 // pred_fallthru
          _
      $region32: #{perceptual_loss_function.8} parent=5 // pred_fallthru
        _
      %p1170 = scmp.le.s32.totalorder 2, %s10
      // Predicated region
      $region49: #{perceptual_loss_function.8} parent=5 // pred_check
        %p1171 = pneg %p1170
      $region50: #{perceptual_loss_function.8} parent=5 // pred_check_branch
        %1173 = sbr.rel (%p1171) target = $region52
      $region51: #{perceptual_loss_function.8} parent=5 // pred_region
        %s1174 = ssub.s32 %s10, 2
      $region52: #{perceptual_loss_function.8} parent=5 // pred_fallthru
        _
    $region6: #{perceptual_loss_function.8} parent=1 // loop_footer
      %s14 = sadd.s32 1, %s10
    $region7: #{perceptual_loss_function.8} parent=1 // loop_footer_branch
      %9 = sbr.rel target = $region3
    $region8: #{perceptual_loss_function.8} parent=1 // loop_exit
      _
    %1175 = vsyncpa [#allocation4], 1
    %s1176 = scalar_lea.sflag [#allocation4], 1
    %1177 = vsyncpa %s1176, 1

</llo_original>
